<compile_context>
chip_gen: v7x
topology: tpu7x:2x2x1
jax: 0.10.0
libtpu: 0.0.40
codegen_flags: <defaults>
</compile_context>

<pallas_src>
import functools

import jax
import jax.numpy as jnp
from jax import lax
from jax.experimental import pallas as pl
from jax.experimental.pallas import tpu as pltpu


# ----------------------------------------------------------------------------
# Fused kernel (no grid).  Ref layout:
#   ei_ref (SMEM int32 [2E]), ea_ref (SMEM f32 [E]), x_ref (VMEM [N,F0]),
#   b_1..b_L (VMEM [1,Fo]), W_1..W_L (HBM, pl.ANY),
#   o_ref (VMEM [N,3]),
#   Wv_1..Wv_L (VMEM scratch), sem (DMA semaphores [L])
# ----------------------------------------------------------------------------
def _fused_gnn_kernel(n_layers, num_edges, num_nodes, ei_ref, ea_ref, x_ref, *rest):
    L, E, N = n_layers, num_edges, num_nodes
    b_refs = rest[:L]
    w_hbm = rest[L:2 * L]
    o_ref = rest[2 * L]
    w_vmem = rest[2 * L + 1:3 * L + 1]
    sem = rest[3 * L + 1]

    # ---- 1. kick off every layer's weight DMA (HBM -> VMEM) immediately -----
    copies = []
    for i in range(L):
        cp = pltpu.make_async_copy(w_hbm[i], w_vmem[i], sem.at[i])
        cp.start()
        copies.append(cp)

    # ---- 2. build A_hat on the VPU from SMEM edge data (overlaps the DMAs) --
    # (scalar SMEM reads happen before any .wait(), preserving sst->sld fwd)
    rows = lax.broadcasted_iota(jnp.int32, (N, N), 0)
    cols = lax.broadcasted_iota(jnp.int32, (N, N), 1)
    a = jnp.zeros((N, N), jnp.float32)
    for e in range(E):                      # E is small & static: unrolled VPU ops
        src = ei_ref[e]
        dst = ei_ref[E + e]
        w = ea_ref[e]
        a = a + jnp.where((rows == dst) & (cols == src), w, 0.0)
    eye = rows == cols
    # add_remaining_self_loops: weight-1 self loop only where none exists
    diag = jnp.sum(jnp.where(eye, a, 0.0), axis=1, keepdims=True)      # (N,1)
    a = a + jnp.where(eye, jnp.where(diag == 0.0, 1.0, 0.0), 0.0)
    deg = jnp.sum(a, axis=1, keepdims=True)                            # (N,1)
    dinv = jnp.where(deg > 0.0, lax.rsqrt(deg), 0.0)                   # (N,1)
    d_mat = jnp.where(eye, dinv, 0.0)                                  # diag(dinv)
    a_hat = dinv * jnp.dot(a, d_mat, preferred_element_type=jnp.float32)

    # layer-1 associativity: (A_hat @ X) @ W1   (Fin << Fout)
    h = jnp.dot(a_hat, x_ref[...], preferred_element_type=jnp.float32)

    # ---- 3. layers: wait on each weight right before its MXU matmul ---------
    for i in range(L):
        copies[i].wait()
        w = w_vmem[i][...]
        b = b_refs[i][...]
        y = jnp.dot(h, w, preferred_element_type=jnp.float32)
        if i == 0:
            h = jnp.maximum(y + b, 0.0)            # aggregation already applied
        elif i < L - 1:
            y = jnp.dot(a_hat, y, preferred_element_type=jnp.float32)
            h = jnp.maximum(y + b, 0.0)
        else:
            h = y + b                              # color_picker: no agg, no relu

    o_ref[...] = h.astype(o_ref.dtype)


# ----------------------------------------------------------------------------
# Wrapper: one pallas_call, weights in HBM, edge data in SMEM.
# ----------------------------------------------------------------------------
def _forward_impl(x, edge_index, edge_attr, params):
    n = x.shape[0]
    num_edges = edge_index.shape[1]
    n_layers = len(params)

    ws = [w.astype(jnp.float32) for (w, _) in params]
    bs = [b.astype(jnp.float32).reshape(1, -1) for (_, b) in params]
    out_dim = ws[-1].shape[1]

    ei = edge_index.reshape(-1).astype(jnp.int32)    # [src_0..src_E-1, dst_0..dst_E-1]
    ea = edge_attr.reshape(-1).astype(jnp.float32)

    # advisory cost estimate (feature transforms + aggregations; glue is noise)
    flops = 2 * n * sum(w.shape[0] * w.shape[1] for w in ws)
    flops += 2 * n * n * ws[0].shape[0]                          # (A_hat @ X)
    flops += 2 * n * n * sum(w.shape[1] for w in ws[1:-1])       # post-aggregation
    bytes_accessed = 4 * (sum(w.size for w in ws) + sum(b.size for b in bs)
                          + x.size + ei.size + ea.size + n * out_dim)

    kernel = functools.partial(_fused_gnn_kernel, n_layers, num_edges, n)

    smem_spec = pl.BlockSpec(memory_space=pltpu.MemorySpace.SMEM)
    vmem_spec = pl.BlockSpec(memory_space=pltpu.MemorySpace.VMEM)
    hbm_spec = pl.BlockSpec(memory_space=pl.ANY)

    return pl.pallas_call(
        kernel,
        out_shape=jax.ShapeDtypeStruct((n, out_dim), jnp.float32),
        in_specs=[smem_spec, smem_spec, vmem_spec]
                 + [vmem_spec] * n_layers            # biases (tiny, auto-copied)
                 + [hbm_spec] * n_layers,            # weights stay in HBM
        out_specs=vmem_spec,
        scratch_shapes=[pltpu.VMEM(w.shape, jnp.float32) for w in ws]
                       + [pltpu.SemaphoreType.DMA((n_layers,))],
        compiler_params=pltpu.CompilerParams(vmem_limit_bytes=32 * 1024 * 1024),
        cost_estimate=pl.CostEstimate(flops=int(flops), transcendentals=0,
                                      bytes_accessed=int(bytes_accessed)),
    )(ei, ea, x, *bs, *ws)


color_gnn_bigger_forward = jax.jit(_forward_impl)


# ----------------------------------------------------------------------------
# Pure-JAX reference (same GCN semantics, incl. add-remaining-self-loops).
# ----------------------------------------------------------------------------
def build_gcn_adj(edge_index, edge_attr, num_nodes):
    src = edge_index[0]
    dst = edge_index[1]
    w = edge_attr.reshape(-1).astype(jnp.float32)
    a = jnp.zeros((num_nodes, num_nodes), jnp.float32).at[dst, src].add(w)
    diag = jnp.diagonal(a)
    a = a + jnp.diag(jnp.where(diag == 0.0, 1.0, 0.0))   # add self-loop only if missing
    deg = a.sum(axis=1)
    dinv = jnp.where(deg > 0, 1.0 / jnp.sqrt(deg), 0.0)
    return dinv[:, None] * a * dinv[None, :]


def reference_forward(x, edge_index, edge_attr, params):
    a_hat = build_gcn_adj(edge_index, edge_attr, x.shape[0])
    h = x
    for (w, b) in params[:-1]:
        h = jnp.maximum(a_hat @ (h @ w) + b, 0.0)
    w, b = params[-1]
    return h @ w + b


if __name__ == "__main__":
    key = jax.random.PRNGKey(0)

    # small synthetic graph: 8 nodes, feature_size = 16, 16 directed edges (no self loops)
    N, F0 = 8, 16
    src = jnp.array([i for i in range(N)] + [i for i in range(N)], dtype=jnp.int32)
    dst = jnp.array([(i + 1) % N for i in range(N)] + [(i + 3) % N for i in range(N)],
                    dtype=jnp.int32)
    edge_index = jnp.stack([src, dst])               # [2, 16]

    key, kx, ke = jax.random.split(key, 3)
    x = jax.random.normal(kx, (N, F0), jnp.float32)
    edge_attr = jax.random.uniform(ke, (edge_index.shape[1],), jnp.float32, 0.1, 1.0)

    # deterministic parameter init (glorot-uniform weights, zero bias)
    layer_dims = [(F0, 2048), (2048, 1024), (1024, 512), (512, 128), (128, 64), (64, 3)]
    params = []
    for fi, fo in layer_dims:
        key, kw = jax.random.split(key)
        scale = jnp.sqrt(6.0 / (fi + fo))
        w = jax.random.uniform(kw, (fi, fo), jnp.float32, -scale, scale)
        b = jnp.zeros((fo,), jnp.float32)
        params.append((w, b))
    params = tuple(params)

    out = color_gnn_bigger_forward(x, edge_index, edge_attr, params)
    out = jax.block_until_ready(out)

    ref = reference_forward(x, edge_index, edge_attr, params)
    assert out.shape == (N, 3), out.shape
    max_err = jnp.max(jnp.abs(out - ref))
    assert jnp.allclose(out, ref, atol=1e-3, rtol=1e-3), f"max abs err {max_err}"

    print("KERNEL_OK")
</pallas_src>

<mosaic_0001>
module attributes {stable_mosaic.version = 11 : i64} {
  func.func @_fused_gnn_kernel(%arg0: memref<32xi32, #tpu.memory_space<smem>>, %arg1: memref<16xf32, #tpu.memory_space<smem>>, %arg2: memref<8x16xf32, #tpu.memory_space<vmem>>, %arg3: memref<1x2048xf32, #tpu.memory_space<vmem>>, %arg4: memref<1x1024xf32, #tpu.memory_space<vmem>>, %arg5: memref<1x512xf32, #tpu.memory_space<vmem>>, %arg6: memref<1x128xf32, #tpu.memory_space<vmem>>, %arg7: memref<1x64xf32, #tpu.memory_space<vmem>>, %arg8: memref<1x3xf32, #tpu.memory_space<vmem>>, %arg9: memref<16x2048xf32, #tpu.memory_space<any>>, %arg10: memref<2048x1024xf32, #tpu.memory_space<any>>, %arg11: memref<1024x512xf32, #tpu.memory_space<any>>, %arg12: memref<512x128xf32, #tpu.memory_space<any>>, %arg13: memref<128x64xf32, #tpu.memory_space<any>>, %arg14: memref<64x3xf32, #tpu.memory_space<any>>, %arg15: memref<8x3xf32, #tpu.memory_space<vmem>>, %arg16: memref<16x2048xf32, #tpu.memory_space<vmem>>, %arg17: memref<2048x1024xf32, #tpu.memory_space<vmem>>, %arg18: memref<1024x512xf32, #tpu.memory_space<vmem>>, %arg19: memref<512x128xf32, #tpu.memory_space<vmem>>, %arg20: memref<128x64xf32, #tpu.memory_space<vmem>>, %arg21: memref<64x3xf32, #tpu.memory_space<vmem>>, %arg22: memref<6x!tpu.dma_semaphore, #tpu.memory_space<semaphore_mem>>) attributes {dimension_semantics = [], scalar_prefetch = 0 : i64, scratch_operands = 7 : i64, tpu.core_type = #tpu.core_type<tc>} {
    %c0_i32 = arith.constant 0 : i32
    %0 = tpu.memref_slice %arg22[%c0_i32] : memref<6x!tpu.dma_semaphore, #tpu.memory_space<semaphore_mem>> -> memref<1x!tpu.dma_semaphore, #tpu.memory_space<semaphore_mem>>
    %1 = tpu.memref_squeeze %0 : memref<1x!tpu.dma_semaphore, #tpu.memory_space<semaphore_mem>> -> memref<!tpu.dma_semaphore, #tpu.memory_space<semaphore_mem>>
    tpu.enqueue_dma source(%arg9 : memref<16x2048xf32, #tpu.memory_space<any>>) target(%arg16 : memref<16x2048xf32, #tpu.memory_space<vmem>>) target_semaphore(%1 : memref<!tpu.dma_semaphore, #tpu.memory_space<semaphore_mem>>)
    %c1_i32 = arith.constant 1 : i32
    %2 = tpu.memref_slice %arg22[%c1_i32] : memref<6x!tpu.dma_semaphore, #tpu.memory_space<semaphore_mem>> -> memref<1x!tpu.dma_semaphore, #tpu.memory_space<semaphore_mem>>
    %3 = tpu.memref_squeeze %2 : memref<1x!tpu.dma_semaphore, #tpu.memory_space<semaphore_mem>> -> memref<!tpu.dma_semaphore, #tpu.memory_space<semaphore_mem>>
    tpu.enqueue_dma source(%arg10 : memref<2048x1024xf32, #tpu.memory_space<any>>) target(%arg17 : memref<2048x1024xf32, #tpu.memory_space<vmem>>) target_semaphore(%3 : memref<!tpu.dma_semaphore, #tpu.memory_space<semaphore_mem>>)
    %c2_i32 = arith.constant 2 : i32
    %4 = tpu.memref_slice %arg22[%c2_i32] : memref<6x!tpu.dma_semaphore, #tpu.memory_space<semaphore_mem>> -> memref<1x!tpu.dma_semaphore, #tpu.memory_space<semaphore_mem>>
    %5 = tpu.memref_squeeze %4 : memref<1x!tpu.dma_semaphore, #tpu.memory_space<semaphore_mem>> -> memref<!tpu.dma_semaphore, #tpu.memory_space<semaphore_mem>>
    tpu.enqueue_dma source(%arg11 : memref<1024x512xf32, #tpu.memory_space<any>>) target(%arg18 : memref<1024x512xf32, #tpu.memory_space<vmem>>) target_semaphore(%5 : memref<!tpu.dma_semaphore, #tpu.memory_space<semaphore_mem>>)
    %c3_i32 = arith.constant 3 : i32
    %6 = tpu.memref_slice %arg22[%c3_i32] : memref<6x!tpu.dma_semaphore, #tpu.memory_space<semaphore_mem>> -> memref<1x!tpu.dma_semaphore, #tpu.memory_space<semaphore_mem>>
    %7 = tpu.memref_squeeze %6 : memref<1x!tpu.dma_semaphore, #tpu.memory_space<semaphore_mem>> -> memref<!tpu.dma_semaphore, #tpu.memory_space<semaphore_mem>>
    tpu.enqueue_dma source(%arg12 : memref<512x128xf32, #tpu.memory_space<any>>) target(%arg19 : memref<512x128xf32, #tpu.memory_space<vmem>>) target_semaphore(%7 : memref<!tpu.dma_semaphore, #tpu.memory_space<semaphore_mem>>)
    %c4_i32 = arith.constant 4 : i32
    %8 = tpu.memref_slice %arg22[%c4_i32] : memref<6x!tpu.dma_semaphore, #tpu.memory_space<semaphore_mem>> -> memref<1x!tpu.dma_semaphore, #tpu.memory_space<semaphore_mem>>
    %9 = tpu.memref_squeeze %8 : memref<1x!tpu.dma_semaphore, #tpu.memory_space<semaphore_mem>> -> memref<!tpu.dma_semaphore, #tpu.memory_space<semaphore_mem>>
    tpu.enqueue_dma source(%arg13 : memref<128x64xf32, #tpu.memory_space<any>>) target(%arg20 : memref<128x64xf32, #tpu.memory_space<vmem>>) target_semaphore(%9 : memref<!tpu.dma_semaphore, #tpu.memory_space<semaphore_mem>>)
    %c5_i32 = arith.constant 5 : i32
    %10 = tpu.memref_slice %arg22[%c5_i32] : memref<6x!tpu.dma_semaphore, #tpu.memory_space<semaphore_mem>> -> memref<1x!tpu.dma_semaphore, #tpu.memory_space<semaphore_mem>>
    %11 = tpu.memref_squeeze %10 : memref<1x!tpu.dma_semaphore, #tpu.memory_space<semaphore_mem>> -> memref<!tpu.dma_semaphore, #tpu.memory_space<semaphore_mem>>
    tpu.enqueue_dma source(%arg14 : memref<64x3xf32, #tpu.memory_space<any>>) target(%arg21 : memref<64x3xf32, #tpu.memory_space<vmem>>) target_semaphore(%11 : memref<!tpu.dma_semaphore, #tpu.memory_space<semaphore_mem>>)
    %12 = tpu.iota {dimensions = array<i32: 0>} : vector<8x8xi32>
    %13 = tpu.iota {dimensions = array<i32: 1>} : vector<8x8xi32>
    %cst = arith.constant 0.000000e+00 : f32
    %14 = vector.broadcast %cst : f32 to vector<8x8xf32>
    %c0 = arith.constant 0 : index
    %15 = memref.load %arg0[%c0] : memref<32xi32, #tpu.memory_space<smem>>
    %c16 = arith.constant 16 : index
    %16 = memref.load %arg0[%c16] : memref<32xi32, #tpu.memory_space<smem>>
    %c0_0 = arith.constant 0 : index
    %17 = memref.load %arg1[%c0_0] : memref<16xf32, #tpu.memory_space<smem>>
    %18 = vector.broadcast %16 : i32 to vector<8x8xi32>
    %19 = arith.cmpi eq, %12, %18 : vector<8x8xi32>
    %20 = vector.broadcast %15 : i32 to vector<8x8xi32>
    %21 = arith.cmpi eq, %13, %20 : vector<8x8xi32>
    %22 = arith.andi %19, %21 : vector<8x8xi1>
    %cst_1 = arith.constant 0.000000e+00 : f32
    %23 = vector.broadcast %17 : f32 to vector<8x8xf32>
    %24 = vector.broadcast %cst_1 : f32 to vector<8x8xf32>
    %25 = arith.select %22, %23, %24 : vector<8x8xi1>, vector<8x8xf32>
    %26 = arith.addf %14, %25 : vector<8x8xf32>
    %c1 = arith.constant 1 : index
    %27 = memref.load %arg0[%c1] : memref<32xi32, #tpu.memory_space<smem>>
    %c17 = arith.constant 17 : index
    %28 = memref.load %arg0[%c17] : memref<32xi32, #tpu.memory_space<smem>>
    %c1_2 = arith.constant 1 : index
    %29 = memref.load %arg1[%c1_2] : memref<16xf32, #tpu.memory_space<smem>>
    %30 = vector.broadcast %28 : i32 to vector<8x8xi32>
    %31 = arith.cmpi eq, %12, %30 : vector<8x8xi32>
    %32 = vector.broadcast %27 : i32 to vector<8x8xi32>
    %33 = arith.cmpi eq, %13, %32 : vector<8x8xi32>
    %34 = arith.andi %31, %33 : vector<8x8xi1>
    %cst_3 = arith.constant 0.000000e+00 : f32
    %35 = vector.broadcast %29 : f32 to vector<8x8xf32>
    %36 = vector.broadcast %cst_3 : f32 to vector<8x8xf32>
    %37 = arith.select %34, %35, %36 : vector<8x8xi1>, vector<8x8xf32>
    %38 = arith.addf %26, %37 : vector<8x8xf32>
    %c2 = arith.constant 2 : index
    %39 = memref.load %arg0[%c2] : memref<32xi32, #tpu.memory_space<smem>>
    %c18 = arith.constant 18 : index
    %40 = memref.load %arg0[%c18] : memref<32xi32, #tpu.memory_space<smem>>
    %c2_4 = arith.constant 2 : index
    %41 = memref.load %arg1[%c2_4] : memref<16xf32, #tpu.memory_space<smem>>
    %42 = vector.broadcast %40 : i32 to vector<8x8xi32>
    %43 = arith.cmpi eq, %12, %42 : vector<8x8xi32>
    %44 = vector.broadcast %39 : i32 to vector<8x8xi32>
    %45 = arith.cmpi eq, %13, %44 : vector<8x8xi32>
    %46 = arith.andi %43, %45 : vector<8x8xi1>
    %cst_5 = arith.constant 0.000000e+00 : f32
    %47 = vector.broadcast %41 : f32 to vector<8x8xf32>
    %48 = vector.broadcast %cst_5 : f32 to vector<8x8xf32>
    %49 = arith.select %46, %47, %48 : vector<8x8xi1>, vector<8x8xf32>
    %50 = arith.addf %38, %49 : vector<8x8xf32>
    %c3 = arith.constant 3 : index
    %51 = memref.load %arg0[%c3] : memref<32xi32, #tpu.memory_space<smem>>
    %c19 = arith.constant 19 : index
    %52 = memref.load %arg0[%c19] : memref<32xi32, #tpu.memory_space<smem>>
    %c3_6 = arith.constant 3 : index
    %53 = memref.load %arg1[%c3_6] : memref<16xf32, #tpu.memory_space<smem>>
    %54 = vector.broadcast %52 : i32 to vector<8x8xi32>
    %55 = arith.cmpi eq, %12, %54 : vector<8x8xi32>
    %56 = vector.broadcast %51 : i32 to vector<8x8xi32>
    %57 = arith.cmpi eq, %13, %56 : vector<8x8xi32>
    %58 = arith.andi %55, %57 : vector<8x8xi1>
    %cst_7 = arith.constant 0.000000e+00 : f32
    %59 = vector.broadcast %53 : f32 to vector<8x8xf32>
    %60 = vector.broadcast %cst_7 : f32 to vector<8x8xf32>
    %61 = arith.select %58, %59, %60 : vector<8x8xi1>, vector<8x8xf32>
    %62 = arith.addf %50, %61 : vector<8x8xf32>
    %c4 = arith.constant 4 : index
    %63 = memref.load %arg0[%c4] : memref<32xi32, #tpu.memory_space<smem>>
    %c20 = arith.constant 20 : index
    %64 = memref.load %arg0[%c20] : memref<32xi32, #tpu.memory_space<smem>>
    %c4_8 = arith.constant 4 : index
    %65 = memref.load %arg1[%c4_8] : memref<16xf32, #tpu.memory_space<smem>>
    %66 = vector.broadcast %64 : i32 to vector<8x8xi32>
    %67 = arith.cmpi eq, %12, %66 : vector<8x8xi32>
    %68 = vector.broadcast %63 : i32 to vector<8x8xi32>
    %69 = arith.cmpi eq, %13, %68 : vector<8x8xi32>
    %70 = arith.andi %67, %69 : vector<8x8xi1>
    %cst_9 = arith.constant 0.000000e+00 : f32
    %71 = vector.broadcast %65 : f32 to vector<8x8xf32>
    %72 = vector.broadcast %cst_9 : f32 to vector<8x8xf32>
    %73 = arith.select %70, %71, %72 : vector<8x8xi1>, vector<8x8xf32>
    %74 = arith.addf %62, %73 : vector<8x8xf32>
    %c5 = arith.constant 5 : index
    %75 = memref.load %arg0[%c5] : memref<32xi32, #tpu.memory_space<smem>>
    %c21 = arith.constant 21 : index
    %76 = memref.load %arg0[%c21] : memref<32xi32, #tpu.memory_space<smem>>
    %c5_10 = arith.constant 5 : index
    %77 = memref.load %arg1[%c5_10] : memref<16xf32, #tpu.memory_space<smem>>
    %78 = vector.broadcast %76 : i32 to vector<8x8xi32>
    %79 = arith.cmpi eq, %12, %78 : vector<8x8xi32>
    %80 = vector.broadcast %75 : i32 to vector<8x8xi32>
    %81 = arith.cmpi eq, %13, %80 : vector<8x8xi32>
    %82 = arith.andi %79, %81 : vector<8x8xi1>
    %cst_11 = arith.constant 0.000000e+00 : f32
    %83 = vector.broadcast %77 : f32 to vector<8x8xf32>
    %84 = vector.broadcast %cst_11 : f32 to vector<8x8xf32>
    %85 = arith.select %82, %83, %84 : vector<8x8xi1>, vector<8x8xf32>
    %86 = arith.addf %74, %85 : vector<8x8xf32>
    %c6 = arith.constant 6 : index
    %87 = memref.load %arg0[%c6] : memref<32xi32, #tpu.memory_space<smem>>
    %c22 = arith.constant 22 : index
    %88 = memref.load %arg0[%c22] : memref<32xi32, #tpu.memory_space<smem>>
    %c6_12 = arith.constant 6 : index
    %89 = memref.load %arg1[%c6_12] : memref<16xf32, #tpu.memory_space<smem>>
    %90 = vector.broadcast %88 : i32 to vector<8x8xi32>
    %91 = arith.cmpi eq, %12, %90 : vector<8x8xi32>
    %92 = vector.broadcast %87 : i32 to vector<8x8xi32>
    %93 = arith.cmpi eq, %13, %92 : vector<8x8xi32>
    %94 = arith.andi %91, %93 : vector<8x8xi1>
    %cst_13 = arith.constant 0.000000e+00 : f32
    %95 = vector.broadcast %89 : f32 to vector<8x8xf32>
    %96 = vector.broadcast %cst_13 : f32 to vector<8x8xf32>
    %97 = arith.select %94, %95, %96 : vector<8x8xi1>, vector<8x8xf32>
    %98 = arith.addf %86, %97 : vector<8x8xf32>
    %c7 = arith.constant 7 : index
    %99 = memref.load %arg0[%c7] : memref<32xi32, #tpu.memory_space<smem>>
    %c23 = arith.constant 23 : index
    %100 = memref.load %arg0[%c23] : memref<32xi32, #tpu.memory_space<smem>>
    %c7_14 = arith.constant 7 : index
    %101 = memref.load %arg1[%c7_14] : memref<16xf32, #tpu.memory_space<smem>>
    %102 = vector.broadcast %100 : i32 to vector<8x8xi32>
    %103 = arith.cmpi eq, %12, %102 : vector<8x8xi32>
    %104 = vector.broadcast %99 : i32 to vector<8x8xi32>
    %105 = arith.cmpi eq, %13, %104 : vector<8x8xi32>
    %106 = arith.andi %103, %105 : vector<8x8xi1>
    %cst_15 = arith.constant 0.000000e+00 : f32
    %107 = vector.broadcast %101 : f32 to vector<8x8xf32>
    %108 = vector.broadcast %cst_15 : f32 to vector<8x8xf32>
    %109 = arith.select %106, %107, %108 : vector<8x8xi1>, vector<8x8xf32>
    %110 = arith.addf %98, %109 : vector<8x8xf32>
    %c8 = arith.constant 8 : index
    %111 = memref.load %arg0[%c8] : memref<32xi32, #tpu.memory_space<smem>>
    %c24 = arith.constant 24 : index
    %112 = memref.load %arg0[%c24] : memref<32xi32, #tpu.memory_space<smem>>
    %c8_16 = arith.constant 8 : index
    %113 = memref.load %arg1[%c8_16] : memref<16xf32, #tpu.memory_space<smem>>
    %114 = vector.broadcast %112 : i32 to vector<8x8xi32>
    %115 = arith.cmpi eq, %12, %114 : vector<8x8xi32>
    %116 = vector.broadcast %111 : i32 to vector<8x8xi32>
    %117 = arith.cmpi eq, %13, %116 : vector<8x8xi32>
    %118 = arith.andi %115, %117 : vector<8x8xi1>
    %cst_17 = arith.constant 0.000000e+00 : f32
    %119 = vector.broadcast %113 : f32 to vector<8x8xf32>
    %120 = vector.broadcast %cst_17 : f32 to vector<8x8xf32>
    %121 = arith.select %118, %119, %120 : vector<8x8xi1>, vector<8x8xf32>
    %122 = arith.addf %110, %121 : vector<8x8xf32>
    %c9 = arith.constant 9 : index
    %123 = memref.load %arg0[%c9] : memref<32xi32, #tpu.memory_space<smem>>
    %c25 = arith.constant 25 : index
    %124 = memref.load %arg0[%c25] : memref<32xi32, #tpu.memory_space<smem>>
    %c9_18 = arith.constant 9 : index
    %125 = memref.load %arg1[%c9_18] : memref<16xf32, #tpu.memory_space<smem>>
    %126 = vector.broadcast %124 : i32 to vector<8x8xi32>
    %127 = arith.cmpi eq, %12, %126 : vector<8x8xi32>
    %128 = vector.broadcast %123 : i32 to vector<8x8xi32>
    %129 = arith.cmpi eq, %13, %128 : vector<8x8xi32>
    %130 = arith.andi %127, %129 : vector<8x8xi1>
    %cst_19 = arith.constant 0.000000e+00 : f32
    %131 = vector.broadcast %125 : f32 to vector<8x8xf32>
    %132 = vector.broadcast %cst_19 : f32 to vector<8x8xf32>
    %133 = arith.select %130, %131, %132 : vector<8x8xi1>, vector<8x8xf32>
    %134 = arith.addf %122, %133 : vector<8x8xf32>
    %c10 = arith.constant 10 : index
    %135 = memref.load %arg0[%c10] : memref<32xi32, #tpu.memory_space<smem>>
    %c26 = arith.constant 26 : index
    %136 = memref.load %arg0[%c26] : memref<32xi32, #tpu.memory_space<smem>>
    %c10_20 = arith.constant 10 : index
    %137 = memref.load %arg1[%c10_20] : memref<16xf32, #tpu.memory_space<smem>>
    %138 = vector.broadcast %136 : i32 to vector<8x8xi32>
    %139 = arith.cmpi eq, %12, %138 : vector<8x8xi32>
    %140 = vector.broadcast %135 : i32 to vector<8x8xi32>
    %141 = arith.cmpi eq, %13, %140 : vector<8x8xi32>
    %142 = arith.andi %139, %141 : vector<8x8xi1>
    %cst_21 = arith.constant 0.000000e+00 : f32
    %143 = vector.broadcast %137 : f32 to vector<8x8xf32>
    %144 = vector.broadcast %cst_21 : f32 to vector<8x8xf32>
    %145 = arith.select %142, %143, %144 : vector<8x8xi1>, vector<8x8xf32>
    %146 = arith.addf %134, %145 : vector<8x8xf32>
    %c11 = arith.constant 11 : index
    %147 = memref.load %arg0[%c11] : memref<32xi32, #tpu.memory_space<smem>>
    %c27 = arith.constant 27 : index
    %148 = memref.load %arg0[%c27] : memref<32xi32, #tpu.memory_space<smem>>
    %c11_22 = arith.constant 11 : index
    %149 = memref.load %arg1[%c11_22] : memref<16xf32, #tpu.memory_space<smem>>
    %150 = vector.broadcast %148 : i32 to vector<8x8xi32>
    %151 = arith.cmpi eq, %12, %150 : vector<8x8xi32>
    %152 = vector.broadcast %147 : i32 to vector<8x8xi32>
    %153 = arith.cmpi eq, %13, %152 : vector<8x8xi32>
    %154 = arith.andi %151, %153 : vector<8x8xi1>
    %cst_23 = arith.constant 0.000000e+00 : f32
    %155 = vector.broadcast %149 : f32 to vector<8x8xf32>
    %156 = vector.broadcast %cst_23 : f32 to vector<8x8xf32>
    %157 = arith.select %154, %155, %156 : vector<8x8xi1>, vector<8x8xf32>
    %158 = arith.addf %146, %157 : vector<8x8xf32>
    %c12 = arith.constant 12 : index
    %159 = memref.load %arg0[%c12] : memref<32xi32, #tpu.memory_space<smem>>
    %c28 = arith.constant 28 : index
    %160 = memref.load %arg0[%c28] : memref<32xi32, #tpu.memory_space<smem>>
    %c12_24 = arith.constant 12 : index
    %161 = memref.load %arg1[%c12_24] : memref<16xf32, #tpu.memory_space<smem>>
    %162 = vector.broadcast %160 : i32 to vector<8x8xi32>
    %163 = arith.cmpi eq, %12, %162 : vector<8x8xi32>
    %164 = vector.broadcast %159 : i32 to vector<8x8xi32>
    %165 = arith.cmpi eq, %13, %164 : vector<8x8xi32>
    %166 = arith.andi %163, %165 : vector<8x8xi1>
    %cst_25 = arith.constant 0.000000e+00 : f32
    %167 = vector.broadcast %161 : f32 to vector<8x8xf32>
    %168 = vector.broadcast %cst_25 : f32 to vector<8x8xf32>
    %169 = arith.select %166, %167, %168 : vector<8x8xi1>, vector<8x8xf32>
    %170 = arith.addf %158, %169 : vector<8x8xf32>
    %c13 = arith.constant 13 : index
    %171 = memref.load %arg0[%c13] : memref<32xi32, #tpu.memory_space<smem>>
    %c29 = arith.constant 29 : index
    %172 = memref.load %arg0[%c29] : memref<32xi32, #tpu.memory_space<smem>>
    %c13_26 = arith.constant 13 : index
    %173 = memref.load %arg1[%c13_26] : memref<16xf32, #tpu.memory_space<smem>>
    %174 = vector.broadcast %172 : i32 to vector<8x8xi32>
    %175 = arith.cmpi eq, %12, %174 : vector<8x8xi32>
    %176 = vector.broadcast %171 : i32 to vector<8x8xi32>
    %177 = arith.cmpi eq, %13, %176 : vector<8x8xi32>
    %178 = arith.andi %175, %177 : vector<8x8xi1>
    %cst_27 = arith.constant 0.000000e+00 : f32
    %179 = vector.broadcast %173 : f32 to vector<8x8xf32>
    %180 = vector.broadcast %cst_27 : f32 to vector<8x8xf32>
    %181 = arith.select %178, %179, %180 : vector<8x8xi1>, vector<8x8xf32>
    %182 = arith.addf %170, %181 : vector<8x8xf32>
    %c14 = arith.constant 14 : index
    %183 = memref.load %arg0[%c14] : memref<32xi32, #tpu.memory_space<smem>>
    %c30 = arith.constant 30 : index
    %184 = memref.load %arg0[%c30] : memref<32xi32, #tpu.memory_space<smem>>
    %c14_28 = arith.constant 14 : index
    %185 = memref.load %arg1[%c14_28] : memref<16xf32, #tpu.memory_space<smem>>
    %186 = vector.broadcast %184 : i32 to vector<8x8xi32>
    %187 = arith.cmpi eq, %12, %186 : vector<8x8xi32>
    %188 = vector.broadcast %183 : i32 to vector<8x8xi32>
    %189 = arith.cmpi eq, %13, %188 : vector<8x8xi32>
    %190 = arith.andi %187, %189 : vector<8x8xi1>
    %cst_29 = arith.constant 0.000000e+00 : f32
    %191 = vector.broadcast %185 : f32 to vector<8x8xf32>
    %192 = vector.broadcast %cst_29 : f32 to vector<8x8xf32>
    %193 = arith.select %190, %191, %192 : vector<8x8xi1>, vector<8x8xf32>
    %194 = arith.addf %182, %193 : vector<8x8xf32>
    %c15 = arith.constant 15 : index
    %195 = memref.load %arg0[%c15] : memref<32xi32, #tpu.memory_space<smem>>
    %c31 = arith.constant 31 : index
    %196 = memref.load %arg0[%c31] : memref<32xi32, #tpu.memory_space<smem>>
    %c15_30 = arith.constant 15 : index
    %197 = memref.load %arg1[%c15_30] : memref<16xf32, #tpu.memory_space<smem>>
    %198 = vector.broadcast %196 : i32 to vector<8x8xi32>
    %199 = arith.cmpi eq, %12, %198 : vector<8x8xi32>
    %200 = vector.broadcast %195 : i32 to vector<8x8xi32>
    %201 = arith.cmpi eq, %13, %200 : vector<8x8xi32>
    %202 = arith.andi %199, %201 : vector<8x8xi1>
    %cst_31 = arith.constant 0.000000e+00 : f32
    %203 = vector.broadcast %197 : f32 to vector<8x8xf32>
    %204 = vector.broadcast %cst_31 : f32 to vector<8x8xf32>
    %205 = arith.select %202, %203, %204 : vector<8x8xi1>, vector<8x8xf32>
    %206 = arith.addf %194, %205 : vector<8x8xf32>
    %207 = arith.cmpi eq, %12, %13 : vector<8x8xi32>
    %cst_32 = arith.constant 0.000000e+00 : f32
    %208 = vector.broadcast %cst_32 : f32 to vector<8x8xf32>
    %209 = arith.select %207, %206, %208 : vector<8x8xi1>, vector<8x8xf32>
    %cst_33 = arith.constant dense<0.000000e+00> : vector<8xf32>
    %210 = vector.multi_reduction <add>, %209, %cst_33 [1] : vector<8x8xf32> to vector<8xf32>
    %211 = vector.shape_cast %210 : vector<8xf32> to vector<8x1xf32>
    %cst_34 = arith.constant 0.000000e+00 : f32
    %212 = vector.broadcast %cst_34 : f32 to vector<8x1xf32>
    %213 = arith.cmpf oeq, %211, %212 : vector<8x1xf32>
    %cst_35 = arith.constant 1.000000e+00 : f32
    %cst_36 = arith.constant 0.000000e+00 : f32
    %214 = vector.broadcast %cst_35 : f32 to vector<8x1xf32>
    %215 = vector.broadcast %cst_36 : f32 to vector<8x1xf32>
    %216 = arith.select %213, %214, %215 : vector<8x1xi1>, vector<8x1xf32>
    %cst_37 = arith.constant 0.000000e+00 : f32
    %217 = vector.shape_cast %216 : vector<8x1xf32> to vector<8x1xf32>
    %218 = vector.broadcast %217 : vector<8x1xf32> to vector<8x8xf32>
    %219 = vector.broadcast %cst_37 : f32 to vector<8x8xf32>
    %220 = arith.select %207, %218, %219 : vector<8x8xi1>, vector<8x8xf32>
    %221 = arith.addf %206, %220 : vector<8x8xf32>
    %cst_38 = arith.constant dense<0.000000e+00> : vector<8xf32>
    %222 = vector.multi_reduction <add>, %221, %cst_38 [1] : vector<8x8xf32> to vector<8xf32>
    %223 = vector.shape_cast %222 : vector<8xf32> to vector<8x1xf32>
    %cst_39 = arith.constant 0.000000e+00 : f32
    %224 = vector.broadcast %cst_39 : f32 to vector<8x1xf32>
    %225 = arith.cmpf ogt, %223, %224 : vector<8x1xf32>
    %226 = math.rsqrt %223 : vector<8x1xf32>
    %cst_40 = arith.constant 0.000000e+00 : f32
    %227 = vector.broadcast %cst_40 : f32 to vector<8x1xf32>
    %228 = arith.select %225, %226, %227 : vector<8x1xi1>, vector<8x1xf32>
    %cst_41 = arith.constant 0.000000e+00 : f32
    %229 = vector.shape_cast %228 : vector<8x1xf32> to vector<8x1xf32>
    %230 = vector.broadcast %229 : vector<8x1xf32> to vector<8x8xf32>
    %231 = vector.broadcast %cst_41 : f32 to vector<8x8xf32>
    %232 = arith.select %207, %230, %231 : vector<8x8xi1>, vector<8x8xf32>
    %cst_42 = arith.constant dense<0.000000e+00> : vector<8x8xf32>
    %233 = tpu.matmul %221, %232, %cst_42 {dimension_numbers = #tpu.dot_dimension_numbers<[1], [0], [0], [1], [0, 0, 1, 1], [], []>} : vector<8x8xf32>, vector<8x8xf32>, vector<8x8xf32> -> vector<8x8xf32>
    %234 = vector.broadcast %228 : vector<8x1xf32> to vector<8x8xf32>
    %235 = arith.mulf %234, %233 : vector<8x8xf32>
    %c0_43 = arith.constant 0 : index
    %c0_44 = arith.constant 0 : index
    %236 = vector.load %arg2[%c0_43, %c0_44] : memref<8x16xf32, #tpu.memory_space<vmem>>, vector<8x16xf32>
    %cst_45 = arith.constant dense<0.000000e+00> : vector<8x16xf32>
    %237 = tpu.matmul %235, %236, %cst_45 {dimension_numbers = #tpu.dot_dimension_numbers<[1], [0], [0], [1], [0, 0, 1, 1], [], []>} : vector<8x8xf32>, vector<8x16xf32>, vector<8x16xf32> -> vector<8x16xf32>
    %c0_i32_46 = arith.constant 0 : i32
    %238 = tpu.memref_slice %arg22[%c0_i32_46] : memref<6x!tpu.dma_semaphore, #tpu.memory_space<semaphore_mem>> -> memref<1x!tpu.dma_semaphore, #tpu.memory_space<semaphore_mem>>
    %239 = tpu.memref_squeeze %238 : memref<1x!tpu.dma_semaphore, #tpu.memory_space<semaphore_mem>> -> memref<!tpu.dma_semaphore, #tpu.memory_space<semaphore_mem>>
    tpu.wait_dma2 semaphore(%239 : memref<!tpu.dma_semaphore, #tpu.memory_space<semaphore_mem>>) src(%arg9 : memref<16x2048xf32, #tpu.memory_space<any>>) dst(%arg16 : memref<16x2048xf32, #tpu.memory_space<vmem>>)
    %c0_47 = arith.constant 0 : index
    %c0_48 = arith.constant 0 : index
    %240 = vector.load %arg16[%c0_47, %c0_48] : memref<16x2048xf32, #tpu.memory_space<vmem>>, vector<16x2048xf32>
    %c0_49 = arith.constant 0 : index
    %c0_50 = arith.constant 0 : index
    %241 = vector.load %arg3[%c0_49, %c0_50] : memref<1x2048xf32, #tpu.memory_space<vmem>>, vector<1x2048xf32>
    %cst_51 = arith.constant dense<0.000000e+00> : vector<8x2048xf32>
    %242 = tpu.matmul %237, %240, %cst_51 {dimension_numbers = #tpu.dot_dimension_numbers<[1], [0], [0], [1], [0, 0, 1, 1], [], []>} : vector<8x16xf32>, vector<16x2048xf32>, vector<8x2048xf32> -> vector<8x2048xf32>
    %243 = vector.broadcast %241 : vector<1x2048xf32> to vector<8x2048xf32>
    %244 = arith.addf %242, %243 : vector<8x2048xf32>
    %cst_52 = arith.constant 0.000000e+00 : f32
    %245 = vector.broadcast %cst_52 : f32 to vector<8x2048xf32>
    %246 = arith.maximumf %244, %245 : vector<8x2048xf32>
    %c1_i32_53 = arith.constant 1 : i32
    %247 = tpu.memref_slice %arg22[%c1_i32_53] : memref<6x!tpu.dma_semaphore, #tpu.memory_space<semaphore_mem>> -> memref<1x!tpu.dma_semaphore, #tpu.memory_space<semaphore_mem>>
    %248 = tpu.memref_squeeze %247 : memref<1x!tpu.dma_semaphore, #tpu.memory_space<semaphore_mem>> -> memref<!tpu.dma_semaphore, #tpu.memory_space<semaphore_mem>>
    tpu.wait_dma2 semaphore(%248 : memref<!tpu.dma_semaphore, #tpu.memory_space<semaphore_mem>>) src(%arg10 : memref<2048x1024xf32, #tpu.memory_space<any>>) dst(%arg17 : memref<2048x1024xf32, #tpu.memory_space<vmem>>)
    %c0_54 = arith.constant 0 : index
    %c0_55 = arith.constant 0 : index
    %249 = vector.load %arg17[%c0_54, %c0_55] : memref<2048x1024xf32, #tpu.memory_space<vmem>>, vector<2048x1024xf32>
    %c0_56 = arith.constant 0 : index
    %c0_57 = arith.constant 0 : index
    %250 = vector.load %arg4[%c0_56, %c0_57] : memref<1x1024xf32, #tpu.memory_space<vmem>>, vector<1x1024xf32>
    %cst_58 = arith.constant dense<0.000000e+00> : vector<8x1024xf32>
    %251 = tpu.matmul %246, %249, %cst_58 {dimension_numbers = #tpu.dot_dimension_numbers<[1], [0], [0], [1], [0, 0, 1, 1], [], []>} : vector<8x2048xf32>, vector<2048x1024xf32>, vector<8x1024xf32> -> vector<8x1024xf32>
    %cst_59 = arith.constant dense<0.000000e+00> : vector<8x1024xf32>
    %252 = tpu.matmul %235, %251, %cst_59 {dimension_numbers = #tpu.dot_dimension_numbers<[1], [0], [0], [1], [0, 0, 1, 1], [], []>} : vector<8x8xf32>, vector<8x1024xf32>, vector<8x1024xf32> -> vector<8x1024xf32>
    %253 = vector.broadcast %250 : vector<1x1024xf32> to vector<8x1024xf32>
    %254 = arith.addf %252, %253 : vector<8x1024xf32>
    %cst_60 = arith.constant 0.000000e+00 : f32
    %255 = vector.broadcast %cst_60 : f32 to vector<8x1024xf32>
    %256 = arith.maximumf %254, %255 : vector<8x1024xf32>
    %c2_i32_61 = arith.constant 2 : i32
    %257 = tpu.memref_slice %arg22[%c2_i32_61] : memref<6x!tpu.dma_semaphore, #tpu.memory_space<semaphore_mem>> -> memref<1x!tpu.dma_semaphore, #tpu.memory_space<semaphore_mem>>
    %258 = tpu.memref_squeeze %257 : memref<1x!tpu.dma_semaphore, #tpu.memory_space<semaphore_mem>> -> memref<!tpu.dma_semaphore, #tpu.memory_space<semaphore_mem>>
    tpu.wait_dma2 semaphore(%258 : memref<!tpu.dma_semaphore, #tpu.memory_space<semaphore_mem>>) src(%arg11 : memref<1024x512xf32, #tpu.memory_space<any>>) dst(%arg18 : memref<1024x512xf32, #tpu.memory_space<vmem>>)
    %c0_62 = arith.constant 0 : index
    %c0_63 = arith.constant 0 : index
    %259 = vector.load %arg18[%c0_62, %c0_63] : memref<1024x512xf32, #tpu.memory_space<vmem>>, vector<1024x512xf32>
    %c0_64 = arith.constant 0 : index
    %c0_65 = arith.constant 0 : index
    %260 = vector.load %arg5[%c0_64, %c0_65] : memref<1x512xf32, #tpu.memory_space<vmem>>, vector<1x512xf32>
    %cst_66 = arith.constant dense<0.000000e+00> : vector<8x512xf32>
    %261 = tpu.matmul %256, %259, %cst_66 {dimension_numbers = #tpu.dot_dimension_numbers<[1], [0], [0], [1], [0, 0, 1, 1], [], []>} : vector<8x1024xf32>, vector<1024x512xf32>, vector<8x512xf32> -> vector<8x512xf32>
    %cst_67 = arith.constant dense<0.000000e+00> : vector<8x512xf32>
    %262 = tpu.matmul %235, %261, %cst_67 {dimension_numbers = #tpu.dot_dimension_numbers<[1], [0], [0], [1], [0, 0, 1, 1], [], []>} : vector<8x8xf32>, vector<8x512xf32>, vector<8x512xf32> -> vector<8x512xf32>
    %263 = vector.broadcast %260 : vector<1x512xf32> to vector<8x512xf32>
    %264 = arith.addf %262, %263 : vector<8x512xf32>
    %cst_68 = arith.constant 0.000000e+00 : f32
    %265 = vector.broadcast %cst_68 : f32 to vector<8x512xf32>
    %266 = arith.maximumf %264, %265 : vector<8x512xf32>
    %c3_i32_69 = arith.constant 3 : i32
    %267 = tpu.memref_slice %arg22[%c3_i32_69] : memref<6x!tpu.dma_semaphore, #tpu.memory_space<semaphore_mem>> -> memref<1x!tpu.dma_semaphore, #tpu.memory_space<semaphore_mem>>
    %268 = tpu.memref_squeeze %267 : memref<1x!tpu.dma_semaphore, #tpu.memory_space<semaphore_mem>> -> memref<!tpu.dma_semaphore, #tpu.memory_space<semaphore_mem>>
    tpu.wait_dma2 semaphore(%268 : memref<!tpu.dma_semaphore, #tpu.memory_space<semaphore_mem>>) src(%arg12 : memref<512x128xf32, #tpu.memory_space<any>>) dst(%arg19 : memref<512x128xf32, #tpu.memory_space<vmem>>)
    %c0_70 = arith.constant 0 : index
    %c0_71 = arith.constant 0 : index
    %269 = vector.load %arg19[%c0_70, %c0_71] : memref<512x128xf32, #tpu.memory_space<vmem>>, vector<512x128xf32>
    %c0_72 = arith.constant 0 : index
    %c0_73 = arith.constant 0 : index
    %270 = vector.load %arg6[%c0_72, %c0_73] : memref<1x128xf32, #tpu.memory_space<vmem>>, vector<1x128xf32>
    %cst_74 = arith.constant dense<0.000000e+00> : vector<8x128xf32>
    %271 = tpu.matmul %266, %269, %cst_74 {dimension_numbers = #tpu.dot_dimension_numbers<[1], [0], [0], [1], [0, 0, 1, 1], [], []>} : vector<8x512xf32>, vector<512x128xf32>, vector<8x128xf32> -> vector<8x128xf32>
    %cst_75 = arith.constant dense<0.000000e+00> : vector<8x128xf32>
    %272 = tpu.matmul %235, %271, %cst_75 {dimension_numbers = #tpu.dot_dimension_numbers<[1], [0], [0], [1], [0, 0, 1, 1], [], []>} : vector<8x8xf32>, vector<8x128xf32>, vector<8x128xf32> -> vector<8x128xf32>
    %273 = vector.broadcast %270 : vector<1x128xf32> to vector<8x128xf32>
    %274 = arith.addf %272, %273 : vector<8x128xf32>
    %cst_76 = arith.constant 0.000000e+00 : f32
    %275 = vector.broadcast %cst_76 : f32 to vector<8x128xf32>
    %276 = arith.maximumf %274, %275 : vector<8x128xf32>
    %c4_i32_77 = arith.constant 4 : i32
    %277 = tpu.memref_slice %arg22[%c4_i32_77] : memref<6x!tpu.dma_semaphore, #tpu.memory_space<semaphore_mem>> -> memref<1x!tpu.dma_semaphore, #tpu.memory_space<semaphore_mem>>
    %278 = tpu.memref_squeeze %277 : memref<1x!tpu.dma_semaphore, #tpu.memory_space<semaphore_mem>> -> memref<!tpu.dma_semaphore, #tpu.memory_space<semaphore_mem>>
    tpu.wait_dma2 semaphore(%278 : memref<!tpu.dma_semaphore, #tpu.memory_space<semaphore_mem>>) src(%arg13 : memref<128x64xf32, #tpu.memory_space<any>>) dst(%arg20 : memref<128x64xf32, #tpu.memory_space<vmem>>)
    %c0_78 = arith.constant 0 : index
    %c0_79 = arith.constant 0 : index
    %279 = vector.load %arg20[%c0_78, %c0_79] : memref<128x64xf32, #tpu.memory_space<vmem>>, vector<128x64xf32>
    %c0_80 = arith.constant 0 : index
    %c0_81 = arith.constant 0 : index
    %280 = vector.load %arg7[%c0_80, %c0_81] : memref<1x64xf32, #tpu.memory_space<vmem>>, vector<1x64xf32>
    %cst_82 = arith.constant dense<0.000000e+00> : vector<8x64xf32>
    %281 = tpu.matmul %276, %279, %cst_82 {dimension_numbers = #tpu.dot_dimension_numbers<[1], [0], [0], [1], [0, 0, 1, 1], [], []>} : vector<8x128xf32>, vector<128x64xf32>, vector<8x64xf32> -> vector<8x64xf32>
    %cst_83 = arith.constant dense<0.000000e+00> : vector<8x64xf32>
    %282 = tpu.matmul %235, %281, %cst_83 {dimension_numbers = #tpu.dot_dimension_numbers<[1], [0], [0], [1], [0, 0, 1, 1], [], []>} : vector<8x8xf32>, vector<8x64xf32>, vector<8x64xf32> -> vector<8x64xf32>
    %283 = vector.broadcast %280 : vector<1x64xf32> to vector<8x64xf32>
    %284 = arith.addf %282, %283 : vector<8x64xf32>
    %cst_84 = arith.constant 0.000000e+00 : f32
    %285 = vector.broadcast %cst_84 : f32 to vector<8x64xf32>
    %286 = arith.maximumf %284, %285 : vector<8x64xf32>
    %c5_i32_85 = arith.constant 5 : i32
    %287 = tpu.memref_slice %arg22[%c5_i32_85] : memref<6x!tpu.dma_semaphore, #tpu.memory_space<semaphore_mem>> -> memref<1x!tpu.dma_semaphore, #tpu.memory_space<semaphore_mem>>
    %288 = tpu.memref_squeeze %287 : memref<1x!tpu.dma_semaphore, #tpu.memory_space<semaphore_mem>> -> memref<!tpu.dma_semaphore, #tpu.memory_space<semaphore_mem>>
    tpu.wait_dma2 semaphore(%288 : memref<!tpu.dma_semaphore, #tpu.memory_space<semaphore_mem>>) src(%arg14 : memref<64x3xf32, #tpu.memory_space<any>>) dst(%arg21 : memref<64x3xf32, #tpu.memory_space<vmem>>)
    %c0_86 = arith.constant 0 : index
    %c0_87 = arith.constant 0 : index
    %289 = vector.load %arg21[%c0_86, %c0_87] : memref<64x3xf32, #tpu.memory_space<vmem>>, vector<64x3xf32>
    %c0_88 = arith.constant 0 : index
    %c0_89 = arith.constant 0 : index
    %290 = vector.load %arg8[%c0_88, %c0_89] : memref<1x3xf32, #tpu.memory_space<vmem>>, vector<1x3xf32>
    %cst_90 = arith.constant dense<0.000000e+00> : vector<8x3xf32>
    %291 = tpu.matmul %286, %289, %cst_90 {dimension_numbers = #tpu.dot_dimension_numbers<[1], [0], [0], [1], [0, 0, 1, 1], [], []>} : vector<8x64xf32>, vector<64x3xf32>, vector<8x3xf32> -> vector<8x3xf32>
    %292 = vector.broadcast %290 : vector<1x3xf32> to vector<8x3xf32>
    %293 = arith.addf %291, %292 : vector<8x3xf32>
    %c0_91 = arith.constant 0 : index
    %c0_92 = arith.constant 0 : index
    %294 = vector.load %arg15[%c0_91, %c0_92] : memref<8x3xf32, #tpu.memory_space<vmem>>, vector<8x3xf32>
    tpu.vector_store %arg15[%c0_91, %c0_92], %293 {strides = array<i32>} : memref<8x3xf32, #tpu.memory_space<vmem>>, vector<8x3xf32>,
    return
  }
}

</mosaic_0001>

<llo_original>
// kernel: _forward_impl.1
$region0: #{_forward_impl.1}
  #allocation0 [shape = 'u32[]', space=smem, size = 0x4, offset = 0x4, fixed_abs, tag = 'smem constant byte address 0x4 - core index']
  #allocation1 [shape = 'u32[144,128]{1,0:T(1,128)}', space=vmem, size = 0x12000, scoped, tag = 'internal scratch']
  #allocation2 [shape = 'f32[16,2048]{1,0:T(8,128)}', space=vmem, size = 0x20000, scoped, tag = 'scratch operand']
  #allocation3 [shape = 'f32[2048,1024]{1,0:T(8,128)}', space=vmem, size = 0x800000, scoped, tag = 'scratch operand']
  #allocation4 [shape = 'f32[1024,512]{1,0:T(8,128)}', space=vmem, size = 0x200000, scoped, tag = 'scratch operand']
  #allocation5 [shape = 'f32[512,128]{1,0:T(8,128)}', space=vmem, size = 0x40000, scoped, tag = 'scratch operand']
  #allocation6 [shape = 'f32[128,64]{1,0:T(8,128)}', space=vmem, size = 0x10000, scoped, tag = 'scratch operand']
  #allocation7 [shape = 'f32[64,3]{1,0:T(8,128)}', space=vmem, size = 0x8000, scoped, tag = 'scratch operand']
  #allocation8 [shape = 's32[6]{0}', space=sflag, size = 0x18, scoped, tag = 'scratch operand']
  #allocation24 [shape = 's32[]', space=sflag, size = 0x4, offset = 0, fixed_abs, tag = 'sflag constant byte address 0x0 - dummy sync flag']
  #allocation25 [shape = 's32[]', space=sflag, size = 0x4, offset = 0, fixed_abs, tag = 'sflag constant byte address 0x0 - dummy sync flag']
  #allocation26 [shape = 'u32[]', space=smem, size = 0x4, offset = 0x44, fixed_abs, tag = 'smem constant byte address 0x44 - assertion arg 0']
  #allocation27 [shape = 'u32[]', space=smem, size = 0x4, offset = 0x48, fixed_abs, tag = 'smem constant byte address 0x48 - assertion arg 1']
  #allocation28 [shape = 's32[]', space=sflag, size = 0x4, offset = 0, fixed_abs, tag = 'sflag constant byte address 0x0 - dummy sync flag']
  #allocation29 [shape = 's32[]', space=sflag, size = 0x4, offset = 0, fixed_abs, tag = 'sflag constant byte address 0x0 - dummy sync flag']
  #allocation30 [shape = 's32[]', space=sflag, size = 0x4, offset = 0, fixed_abs, tag = 'sflag constant byte address 0x0 - dummy sync flag']
  #allocation31 [shape = 's32[]', space=sflag, size = 0x4, offset = 0, fixed_abs, tag = 'sflag constant byte address 0x0 - dummy sync flag']
  #allocation32 [shape = 's32[]', space=sflag, size = 0x4, offset = 0, fixed_abs, tag = 'sflag constant byte address 0x0 - dummy sync flag']
  #allocation33 [shape = 's32[]', space=sflag, size = 0x4, offset = 0, fixed_abs, tag = 'sflag constant byte address 0x0 - dummy sync flag']
  #allocation34 [shape = 's32[]', space=sflag, size = 0x4, offset = 0, fixed_abs, tag = 'sflag constant byte address 0x0 - dummy sync flag']
  #allocation35 [shape = 's32[]', space=sflag, size = 0x4, offset = 0, fixed_abs, tag = 'sflag constant byte address 0x0 - dummy sync flag']
  %s0 = inlined_call_operand.vmem [shape: s32[32], index: 0, kind: input, shape index: {}]
  %s1 = inlined_call_operand.hbm [shape: f32[16], index: 1, kind: input, shape index: {}]
  %s2 = inlined_call_operand.hbm [shape: f32[8,16], index: 2, kind: input, shape index: {}]
  %s3 = inlined_call_operand.hbm [shape: f32[1,2048], index: 3, kind: input, shape index: {}]
  %s4 = inlined_call_operand.hbm [shape: f32[1,1024], index: 4, kind: input, shape index: {}]
  %s5 = inlined_call_operand.hbm [shape: f32[1,512], index: 5, kind: input, shape index: {}]
  %s6 = inlined_call_operand.hbm [shape: f32[1,128], index: 6, kind: input, shape index: {}]
  %s7 = inlined_call_operand.hbm [shape: f32[1,64], index: 7, kind: input, shape index: {}]
  %s8 = inlined_call_operand.hbm [shape: f32[1,3], index: 8, kind: input, shape index: {}]
  %s9 = inlined_call_operand.hbm [shape: f32[16,2048], index: 9, kind: input, shape index: {}]
  %s10 = inlined_call_operand.hbm [shape: f32[2048,1024], index: 10, kind: input, shape index: {}]
  %s11 = inlined_call_operand.hbm [shape: f32[1024,512], index: 11, kind: input, shape index: {}]
  %s12 = inlined_call_operand.hbm [shape: f32[512,128], index: 12, kind: input, shape index: {}]
  %s13 = inlined_call_operand.vmem [shape: f32[128,64], index: 13, kind: input, shape index: {}]
  %s14 = inlined_call_operand.vmem [shape: f32[64,3], index: 14, kind: input, shape index: {}]
  %s15 = inlined_call_operand.vmem [shape: f32[8,3], index: 15, kind: output, shape index: {}]
  %s16 = sld [smem:[#allocation0]]
  $region166: #{_forward_impl.1} parent=0
    _
  %s18 = ssub.s32 1, %s16
  %s19 = scalar_select 0, %s18, %s16
  $region1: #{_forward_impl.1} parent=0
    #allocation9 [shape = 'u8[512]{0}', space=smem, size = 0x200, scoped, tag = 'input window, operand 0, single buffered']
    #allocation10 [shape = 's32[1]{0}', space=sflag, size = 0x4, scoped, tag = 'scoped memory for _forward_impl.1']
    #allocation11 [shape = 's32[1]{0}', space=sflag, size = 0x4, scoped, tag = 'scoped memory for _forward_impl.1']
    #allocation12 [shape = 's32[1]{0}', space=sflag, size = 0x4, scoped, tag = 'scoped memory for _forward_impl.1']
    #allocation13 [shape = 'u8[512]{0}', space=smem, size = 0x200, scoped, tag = 'input window, operand 1, single buffered']
    #allocation14 [shape = 'u8[4096]{0}', space=vmem, size = 0x1000, scoped, tag = 'input window, operand 2, single buffered']
    #allocation15 [shape = 'u8[8192]{0}', space=vmem, size = 0x2000, scoped, tag = 'input window, operand 3, single buffered']
    #allocation16 [shape = 's32[1]{0}', space=sflag, size = 0x4, scoped, tag = 'scoped memory for _forward_impl.1']
    #allocation17 [shape = 'u8[4096]{0}', space=vmem, size = 0x1000, scoped, tag = 'input window, operand 4, single buffered']
    #allocation18 [shape = 'u8[2048]{0}', space=vmem, size = 0x800, scoped, tag = 'input window, operand 5, single buffered']
    #allocation19 [shape = 's32[1]{0}', space=sflag, size = 0x4, scoped, tag = 'scoped memory for _forward_impl.1']
    #allocation20 [shape = 'u8[512]{0}', space=vmem, size = 0x400, scoped, tag = 'input window, operand 6, single buffered']
    #allocation21 [shape = 'u8[512]{0}', space=vmem, size = 0x400, scoped, tag = 'input window, operand 7, single buffered']
    #allocation22 [shape = 's32[1]{0}', space=sflag, size = 0x4, scoped, tag = 'scoped memory for _forward_impl.1']
    #allocation23 [shape = 'u8[512]{0}', space=vmem, size = 0x400, scoped, tag = 'input window, operand 8, single buffered']
    %20 = vsyncpa [#allocation12], 0
    %21 = vsyncpa [#allocation11], 0
    %22 = vsyncpa [#allocation10], 0
    %23 = vsyncpa [#allocation16], 0
    %24 = vsyncpa [#allocation19], 0
    %25 = vsyncpa [#allocation22], 0
    // Predicated region
    $region2: #{_forward_impl.1} parent=1 // pred_check
      _
    $region3: #{_forward_impl.1} parent=1 // pred_check_branch
      %27 = sbr.rel (0) target = $region5
    $region4: #{_forward_impl.1} parent=1 // pred_region
      %s29 = ssub.s32 16, 16
      %30 = vsyncadd [#allocation12], %s29
      %s32 = sshll.u32 %s0, 4
      %s33 = int_to_ptr.vmem [resolvable:$true] %s32
      %35 = dma.vmem_to_smem %s33, 16, [#allocation9], [#allocation12]
    $region5: #{_forward_impl.1} parent=1 // pred_fallthru
      _
    // Predicated region
    $region6: #{_forward_impl.1} parent=1 // pred_check
      _
    $region7: #{_forward_impl.1} parent=1 // pred_check_branch
      %37 = sbr.rel (0) target = $region9
    $region8: #{_forward_impl.1} parent=1 // pred_region
      %s39 = ssub.s32 16, 16
      %40 = vsyncadd [#allocation11], %s39
      %43 = dma.hbm_to_smem %s1, 16, [#allocation13], [#allocation11]
    $region9: #{_forward_impl.1} parent=1 // pred_fallthru
      _
    // Predicated region
    $region10: #{_forward_impl.1} parent=1 // pred_check
      _
    $region11: #{_forward_impl.1} parent=1 // pred_check_branch
      %45 = sbr.rel (0) target = $region13
    $region12: #{_forward_impl.1} parent=1 // pred_region
      %s47 = ssub.s32 128, 128
      %48 = vsyncadd [#allocation10], %s47
      %s50 = sshll.u32 [#allocation14], 4
      %s51 = int_to_ptr.vmem [resolvable:$true] %s50
      %53 = dma.hbm_to_vmem [thread:$0]  %s2, 128, %s51, [#allocation10]
    $region13: #{_forward_impl.1} parent=1 // pred_fallthru
      _
    // Predicated region
    $region14: #{_forward_impl.1} parent=1 // pred_check
      _
    $region15: #{_forward_impl.1} parent=1 // pred_check_branch
      %55 = sbr.rel (0) target = $region17
    $region16: #{_forward_impl.1} parent=1 // pred_region
      %s57 = ssub.s32 256, 256
      %58 = vsyncadd [#allocation16], %s57
      %s60 = sshll.u32 [#allocation15], 4
      %s61 = int_to_ptr.vmem [resolvable:$true] %s60
      %63 = dma.hbm_to_vmem [thread:$0]  %s3, 256, %s61, [#allocation16]
    $region17: #{_forward_impl.1} parent=1 // pred_fallthru
      _
    // Predicated region
    $region18: #{_forward_impl.1} parent=1 // pred_check
      _
    $region19: #{_forward_impl.1} parent=1 // pred_check_branch
      %65 = sbr.rel (0) target = $region21
    $region20: #{_forward_impl.1} parent=1 // pred_region
      %s67 = ssub.s32 128, 128
      %68 = vsyncadd [#allocation16], %s67
      %s70 = sshll.u32 [#allocation17], 4
      %s71 = int_to_ptr.vmem [resolvable:$true] %s70
      %73 = dma.hbm_to_vmem [thread:$0]  %s4, 128, %s71, [#allocation16]
    $region21: #{_forward_impl.1} parent=1 // pred_fallthru
      _
    // Predicated region
    $region22: #{_forward_impl.1} parent=1 // pred_check
      _
    $region23: #{_forward_impl.1} parent=1 // pred_check_branch
      %75 = sbr.rel (0) target = $region25
    $region24: #{_forward_impl.1} parent=1 // pred_region
      %s77 = ssub.s32 64, 64
      %78 = vsyncadd [#allocation19], %s77
      %s80 = sshll.u32 [#allocation18], 4
      %s81 = int_to_ptr.vmem [resolvable:$true] %s80
      %83 = dma.hbm_to_vmem [thread:$0]  %s5, 64, %s81, [#allocation19]
    $region25: #{_forward_impl.1} parent=1 // pred_fallthru
      _
    // Predicated region
    $region26: #{_forward_impl.1} parent=1 // pred_check
      _
    $region27: #{_forward_impl.1} parent=1 // pred_check_branch
      %85 = sbr.rel (0) target = $region29
    $region28: #{_forward_impl.1} parent=1 // pred_region
      %s87 = ssub.s32 16, 16
      %88 = vsyncadd [#allocation19], %s87
      %s90 = sshll.u32 [#allocation20], 4
      %s91 = int_to_ptr.vmem [resolvable:$true] %s90
      %93 = dma.hbm_to_vmem [thread:$0]  %s6, 16, %s91, [#allocation19]
    $region29: #{_forward_impl.1} parent=1 // pred_fallthru
      _
    // Predicated region
    $region30: #{_forward_impl.1} parent=1 // pred_check
      _
    $region31: #{_forward_impl.1} parent=1 // pred_check_branch
      %95 = sbr.rel (0) target = $region33
    $region32: #{_forward_impl.1} parent=1 // pred_region
      %s97 = ssub.s32 16, 16
      %98 = vsyncadd [#allocation22], %s97
      %s100 = sshll.u32 [#allocation21], 4
      %s101 = int_to_ptr.vmem [resolvable:$true] %s100
      %103 = dma.hbm_to_vmem [thread:$0]  %s7, 16, %s101, [#allocation22]
    $region33: #{_forward_impl.1} parent=1 // pred_fallthru
      _
    // Predicated region
    $region34: #{_forward_impl.1} parent=1 // pred_check
      _
    $region35: #{_forward_impl.1} parent=1 // pred_check_branch
      %105 = sbr.rel (0) target = $region37
    $region36: #{_forward_impl.1} parent=1 // pred_region
      %s107 = ssub.s32 16, 16
      %108 = vsyncadd [#allocation22], %s107
      %s110 = sshll.u32 [#allocation23], 4
      %s111 = int_to_ptr.vmem [resolvable:$true] %s110
      %113 = dma.hbm_to_vmem [thread:$0]  %s8, 16, %s111, [#allocation22]
    $region37: #{_forward_impl.1} parent=1 // pred_fallthru
      _
    // Predicated region
    $region38: #{_forward_impl.1} parent=1 // pred_check
      _
    $region39: #{_forward_impl.1} parent=1 // pred_check_branch
      %115 = sbr.rel (0) target = $region41
    $region40: #{_forward_impl.1} parent=1 // pred_region
      %116 = dma.done [#allocation12], 16
    $region41: #{_forward_impl.1} parent=1 // pred_fallthru
      _
    // Predicated region
    $region42: #{_forward_impl.1} parent=1 // pred_check
      _
    $region43: #{_forward_impl.1} parent=1 // pred_check_branch
      %118 = sbr.rel (0) target = $region45
    $region44: #{_forward_impl.1} parent=1 // pred_region
      %119 = dma.done [#allocation11], 16
    $region45: #{_forward_impl.1} parent=1 // pred_fallthru
      _
    // Predicated region
    $region46: #{_forward_impl.1} parent=1 // pred_check
      _
    $region47: #{_forward_impl.1} parent=1 // pred_check_branch
      %121 = sbr.rel (0) target = $region49
    $region48: #{_forward_impl.1} parent=1 // pred_region
      %122 = dma.done [#allocation10], 128
    $region49: #{_forward_impl.1} parent=1 // pred_fallthru
      _
    // Predicated region
    $region50: #{_forward_impl.1} parent=1 // pred_check
      _
    $region51: #{_forward_impl.1} parent=1 // pred_check_branch
      %124 = sbr.rel (0) target = $region53
    $region52: #{_forward_impl.1} parent=1 // pred_region
      %125 = dma.done [#allocation16], 256
    $region53: #{_forward_impl.1} parent=1 // pred_fallthru
      _
    // Predicated region
    $region54: #{_forward_impl.1} parent=1 // pred_check
      _
    $region55: #{_forward_impl.1} parent=1 // pred_check_branch
      %127 = sbr.rel (0) target = $region57
    $region56: #{_forward_impl.1} parent=1 // pred_region
      %128 = dma.done [#allocation16], 128
    $region57: #{_forward_impl.1} parent=1 // pred_fallthru
      _
    // Predicated region
    $region58: #{_forward_impl.1} parent=1 // pred_check
      _
    $region59: #{_forward_impl.1} parent=1 // pred_check_branch
      %130 = sbr.rel (0) target = $region61
    $region60: #{_forward_impl.1} parent=1 // pred_region
      %131 = dma.done [#allocation19], 64
    $region61: #{_forward_impl.1} parent=1 // pred_fallthru
      _
    // Predicated region
    $region62: #{_forward_impl.1} parent=1 // pred_check
      _
    $region63: #{_forward_impl.1} parent=1 // pred_check_branch
      %133 = sbr.rel (0) target = $region65
    $region64: #{_forward_impl.1} parent=1 // pred_region
      %134 = dma.done [#allocation19], 16
    $region65: #{_forward_impl.1} parent=1 // pred_fallthru
      _
    // Predicated region
    $region66: #{_forward_impl.1} parent=1 // pred_check
      _
    $region67: #{_forward_impl.1} parent=1 // pred_check_branch
      %136 = sbr.rel (0) target = $region69
    $region68: #{_forward_impl.1} parent=1 // pred_region
      %137 = dma.done [#allocation22], 16
    $region69: #{_forward_impl.1} parent=1 // pred_fallthru
      _
    // Predicated region
    $region70: #{_forward_impl.1} parent=1 // pred_check
      _
    $region71: #{_forward_impl.1} parent=1 // pred_check_branch
      %139 = sbr.rel (0) target = $region73
    $region72: #{_forward_impl.1} parent=1 // pred_region
      %140 = dma.done [#allocation22], 16
    $region73: #{_forward_impl.1} parent=1 // pred_fallthru
      _
    %141 = sfence
    // Predicated region
    $region74: #{_forward_impl.1} parent=1 // pred_check
      _
    $region75: #{_forward_impl.1} parent=1 // pred_check_branch
      %143 = sbr.rel target = $region77
    $region76: #{_forward_impl.1} parent=1 // pred_region
      %144 = sst [smem:[#allocation26]] [#allocation25]
      %145 = sst [smem:[#allocation27]] [#allocation24]
    $region77: #{_forward_impl.1} parent=1 // pred_fallthru
      _
    %147 = shalt.err (0)
    %s149 = sshll.u32 [#allocation2], 4
    %s150 = int_to_ptr.vmem [resolvable:$true] %s149
    %152 = dma.hbm_to_vmem [thread:$0]  %s9, 4096, %s150, [#allocation8]
    %s153 = scalar_lea.sflag [#allocation8], 1
    // Predicated region
    $region78: #{_forward_impl.1} parent=1 // pred_check
      _
    $region79: #{_forward_impl.1} parent=1 // pred_check_branch
      %155 = sbr.rel target = $region81
    $region80: #{_forward_impl.1} parent=1 // pred_region
      %156 = sst [smem:[#allocation26]] [#allocation29]
      %157 = sst [smem:[#allocation27]] [#allocation28]
    $region81: #{_forward_impl.1} parent=1 // pred_fallthru
      _
    %159 = shalt.err (0)
    %s161 = sshll.u32 [#allocation3], 4
    %s162 = int_to_ptr.vmem [resolvable:$true] %s161
    %164 = dma.hbm_to_vmem [thread:$0]  %s10, 262144, %s162, %s153
    %s165 = scalar_lea.sflag [#allocation8], 2
    // Predicated region
    $region82: #{_forward_impl.1} parent=1 // pred_check
      _
    $region83: #{_forward_impl.1} parent=1 // pred_check_branch
      %167 = sbr.rel target = $region85
    $region84: #{_forward_impl.1} parent=1 // pred_region
      %168 = sst [smem:[#allocation26]] [#allocation31]
      %169 = sst [smem:[#allocation27]] [#allocation30]
    $region85: #{_forward_impl.1} parent=1 // pred_fallthru
      _
    %171 = shalt.err (0)
    %s173 = sshll.u32 [#allocation4], 4
    %s174 = int_to_ptr.vmem [resolvable:$true] %s173
    %176 = dma.hbm_to_vmem [thread:$0]  %s11, 65536, %s174, %s165
    %s177 = scalar_lea.sflag [#allocation8], 3
    // Predicated region
    $region86: #{_forward_impl.1} parent=1 // pred_check
      _
    $region87: #{_forward_impl.1} parent=1 // pred_check_branch
      %179 = sbr.rel target = $region89
    $region88: #{_forward_impl.1} parent=1 // pred_region
      %180 = sst [smem:[#allocation26]] [#allocation33]
      %181 = sst [smem:[#allocation27]] [#allocation32]
    $region89: #{_forward_impl.1} parent=1 // pred_fallthru
      _
    %183 = shalt.err (0)
    %s185 = sshll.u32 [#allocation5], 4
    %s186 = int_to_ptr.vmem [resolvable:$true] %s185
    %188 = dma.hbm_to_vmem [thread:$0]  %s12, 8192, %s186, %s177
    %s189 = scalar_lea.sflag [#allocation8], 4
    %p191 = scmp.lt.u32.totalorder 128, 8
    %p192 = pneg %p191
    // Predicated region
    $region90: #{_forward_impl.1} parent=1 // pred_check
      _
    $region91: #{_forward_impl.1} parent=1 // pred_check_branch
      %194 = sbr.rel (%p191) target = $region93
    $region92: #{_forward_impl.1} parent=1 // pred_region
      %s209 = sand.u32 128, 7
      %p210 = scmp.eq.s32.totalorder %s209, 0
      // Predicated region
      $region105: #{_forward_impl.1} parent=92 // pred_check
        %p211 = pneg %p210
      $region106: #{_forward_impl.1} parent=92 // pred_check_branch
        %213 = sbr.rel (%p211) target = $region108
      $region107: #{_forward_impl.1} parent=92 // pred_region
        loop: start=0, step=1, limit=1
        $region109: #{_forward_impl.1} parent=107 // loop_pre_header
          _
        $region110: #{_forward_impl.1} parent=107 // loop_header
          %s215 = sphi 0, %s219
          %p216 = scmp.ge.s32.totalorder %s215, 1
          %s220 = sphi %s13, %s13
          %s221 = sphi [#allocation6], [#allocation6]
        $region111: #{_forward_impl.1} parent=107 // loop_header_branch
          %218 = sbr.rel (%p216) target = $region115
        $region112: #{_forward_impl.1} parent=107 // loop_body
          %v222 = vld [vmem:[%s220] sm:$0xff]
          %223 = vst [vmem:[%s221] sm:$0xff] %v222
          %v224 = vld [vmem:[%s220 + $0x8] sm:$0xff]
          %225 = vst [vmem:[%s221 + $0x8] sm:$0xff] %v224
          %v226 = vld [vmem:[%s220 + $0x10] sm:$0xff]
          %227 = vst [vmem:[%s221 + $0x10] sm:$0xff] %v226
          %v228 = vld [vmem:[%s220 + $0x18] sm:$0xff]
          %229 = vst [vmem:[%s221 + $0x18] sm:$0xff] %v228
          %v230 = vld [vmem:[%s220 + $0x20] sm:$0xff]
          %231 = vst [vmem:[%s221 + $0x20] sm:$0xff] %v230
          %v232 = vld [vmem:[%s220 + $0x28] sm:$0xff]
          %233 = vst [vmem:[%s221 + $0x28] sm:$0xff] %v232
          %v234 = vld [vmem:[%s220 + $0x30] sm:$0xff]
          %235 = vst [vmem:[%s221 + $0x30] sm:$0xff] %v234
          %v236 = vld [vmem:[%s220 + $0x38] sm:$0xff]
          %237 = vst [vmem:[%s221 + $0x38] sm:$0xff] %v236
          %v238 = vld [vmem:[%s220 + $0x40] sm:$0xff]
          %239 = vst [vmem:[%s221 + $0x40] sm:$0xff] %v238
          %v240 = vld [vmem:[%s220 + $0x48] sm:$0xff]
          %241 = vst [vmem:[%s221 + $0x48] sm:$0xff] %v240
          %v242 = vld [vmem:[%s220 + $0x50] sm:$0xff]
          %243 = vst [vmem:[%s221 + $0x50] sm:$0xff] %v242
          %v244 = vld [vmem:[%s220 + $0x58] sm:$0xff]
          %245 = vst [vmem:[%s221 + $0x58] sm:$0xff] %v244
          %v246 = vld [vmem:[%s220 + $0x60] sm:$0xff]
          %247 = vst [vmem:[%s221 + $0x60] sm:$0xff] %v246
          %v248 = vld [vmem:[%s220 + $0x68] sm:$0xff]
          %249 = vst [vmem:[%s221 + $0x68] sm:$0xff] %v248
          %v250 = vld [vmem:[%s220 + $0x70] sm:$0xff]
          %251 = vst [vmem:[%s221 + $0x70] sm:$0xff] %v250
          %v252 = vld [vmem:[%s220 + $0x78] sm:$0xff]
          %253 = vst [vmem:[%s221 + $0x78] sm:$0xff] %v252
        $region113: #{_forward_impl.1} parent=107 // loop_footer
          %s219 = sadd.s32 1, %s215
        $region114: #{_forward_impl.1} parent=107 // loop_footer_branch
          %214 = sbr.rel target = $region110
        $region115: #{_forward_impl.1} parent=107 // loop_exit
          _
      $region108: #{_forward_impl.1} parent=92 // pred_fallthru
        _
      %p254 = pneg %p210
      // Predicated region
      $region116: #{_forward_impl.1} parent=92 // pred_check
        _
      $region117: #{_forward_impl.1} parent=92 // pred_check_branch
        %256 = sbr.rel (%p210) target = $region119
      $region118: #{_forward_impl.1} parent=92 // pred_region
        %s257 = sand.u32 128, 7
      $region119: #{_forward_impl.1} parent=92 // pred_fallthru
        _
    $region93: #{_forward_impl.1} parent=1 // pred_fallthru
      _
    // Predicated region
    $region94: #{_forward_impl.1} parent=1 // pred_check
      %p195 = pneg %p191
    $region95: #{_forward_impl.1} parent=1 // pred_check_branch
      %197 = sbr.rel (%p195) target = $region97
    $region96: #{_forward_impl.1} parent=1 // pred_region
      %s198 = sshllo.u32 0, 128
      loop: start=0, step=1, limit=1
      $region98: #{_forward_impl.1} parent=96 // loop_pre_header
        _
      $region99: #{_forward_impl.1} parent=96 // loop_header
        %s200 = sphi 0, %s204
        %p201 = scmp.ge.s32.totalorder %s200, 1
        %s205 = sphi %s13, %s13
        %s206 = sphi [#allocation6], [#allocation6]
      $region100: #{_forward_impl.1} parent=96 // loop_header_branch
        %203 = sbr.rel (%p201) target = $region104
      $region101: #{_forward_impl.1} parent=96 // loop_body
        %v207 = vld [vmem:[%s205] sm:%s198]
        %208 = vst [vmem:[%s206] sm:%s198] %v207
      $region102: #{_forward_impl.1} parent=96 // loop_footer
        %s204 = sadd.s32 1, %s200
      $region103: #{_forward_impl.1} parent=96 // loop_footer_branch
        %199 = sbr.rel target = $region99
      $region104: #{_forward_impl.1} parent=96 // loop_exit
        _
    $region97: #{_forward_impl.1} parent=1 // pred_fallthru
      _
    // Predicated region
    $region120: #{_forward_impl.1} parent=1 // pred_check
      _
    $region121: #{_forward_impl.1} parent=1 // pred_check_branch
      %260 = sbr.rel (0) target = $region123
    $region122: #{_forward_impl.1} parent=1 // pred_region
      %261 = vsyncadd %s189, 2048
    $region123: #{_forward_impl.1} parent=1 // pred_fallthru
      _
    %s262 = scalar_lea.sflag [#allocation8], 5
    %p264 = scmp.lt.u32.totalorder 64, 8
    %p265 = pneg %p264
    // Predicated region
    $region124: #{_forward_impl.1} parent=1 // pred_check
      _
    $region125: #{_forward_impl.1} parent=1 // pred_check_branch
      %267 = sbr.rel (%p264) target = $region127
    $region126: #{_forward_impl.1} parent=1 // pred_region
      %s282 = sand.u32 64, 7
      %p283 = scmp.eq.s32.totalorder %s282, 0
      // Predicated region
      $region139: #{_forward_impl.1} parent=126 // pred_check
        %p284 = pneg %p283
      $region140: #{_forward_impl.1} parent=126 // pred_check_branch
        %286 = sbr.rel (%p284) target = $region142
      $region141: #{_forward_impl.1} parent=126 // pred_region
        loop: start=0, step=1, limit=1
        $region143: #{_forward_impl.1} parent=141 // loop_pre_header
          _
        $region144: #{_forward_impl.1} parent=141 // loop_header
          %s288 = sphi 0, %s292
          %p289 = scmp.ge.s32.totalorder %s288, 1
          %s293 = sphi %s14, %s14
          %s294 = sphi [#allocation7], [#allocation7]
        $region145: #{_forward_impl.1} parent=141 // loop_header_branch
          %291 = sbr.rel (%p289) target = $region149
        $region146: #{_forward_impl.1} parent=141 // loop_body
          %v295 = vld [vmem:[%s293] sm:$0xff]
          %296 = vst [vmem:[%s294] sm:$0xff] %v295
          %v297 = vld [vmem:[%s293 + $0x8] sm:$0xff]
          %298 = vst [vmem:[%s294 + $0x8] sm:$0xff] %v297
          %v299 = vld [vmem:[%s293 + $0x10] sm:$0xff]
          %300 = vst [vmem:[%s294 + $0x10] sm:$0xff] %v299
          %v301 = vld [vmem:[%s293 + $0x18] sm:$0xff]
          %302 = vst [vmem:[%s294 + $0x18] sm:$0xff] %v301
          %v303 = vld [vmem:[%s293 + $0x20] sm:$0xff]
          %304 = vst [vmem:[%s294 + $0x20] sm:$0xff] %v303
          %v305 = vld [vmem:[%s293 + $0x28] sm:$0xff]
          %306 = vst [vmem:[%s294 + $0x28] sm:$0xff] %v305
          %v307 = vld [vmem:[%s293 + $0x30] sm:$0xff]
          %308 = vst [vmem:[%s294 + $0x30] sm:$0xff] %v307
          %v309 = vld [vmem:[%s293 + $0x38] sm:$0xff]
          %310 = vst [vmem:[%s294 + $0x38] sm:$0xff] %v309
        $region147: #{_forward_impl.1} parent=141 // loop_footer
          %s292 = sadd.s32 1, %s288
        $region148: #{_forward_impl.1} parent=141 // loop_footer_branch
          %287 = sbr.rel target = $region144
        $region149: #{_forward_impl.1} parent=141 // loop_exit
          _
      $region142: #{_forward_impl.1} parent=126 // pred_fallthru
        _
      %p311 = pneg %p283
      // Predicated region
      $region150: #{_forward_impl.1} parent=126 // pred_check
        _
      $region151: #{_forward_impl.1} parent=126 // pred_check_branch
        %313 = sbr.rel (%p283) target = $region153
      $region152: #{_forward_impl.1} parent=126 // pred_region
        %s314 = sand.u32 64, 7
      $region153: #{_forward_impl.1} parent=126 // pred_fallthru
        _
    $region127: #{_forward_impl.1} parent=1 // pred_fallthru
      _
    // Predicated region
    $region128: #{_forward_impl.1} parent=1 // pred_check
      %p268 = pneg %p264
    $region129: #{_forward_impl.1} parent=1 // pred_check_branch
      %270 = sbr.rel (%p268) target = $region131
    $region130: #{_forward_impl.1} parent=1 // pred_region
      %s271 = sshllo.u32 0, 64
      loop: start=0, step=1, limit=1
      $region132: #{_forward_impl.1} parent=130 // loop_pre_header
        _
      $region133: #{_forward_impl.1} parent=130 // loop_header
        %s273 = sphi 0, %s277
        %p274 = scmp.ge.s32.totalorder %s273, 1
        %s278 = sphi %s14, %s14
        %s279 = sphi [#allocation7], [#allocation7]
      $region134: #{_forward_impl.1} parent=130 // loop_header_branch
        %276 = sbr.rel (%p274) target = $region138
      $region135: #{_forward_impl.1} parent=130 // loop_body
        %v280 = vld [vmem:[%s278] sm:%s271]
        %281 = vst [vmem:[%s279] sm:%s271] %v280
      $region136: #{_forward_impl.1} parent=130 // loop_footer
        %s277 = sadd.s32 1, %s273
      $region137: #{_forward_impl.1} parent=130 // loop_footer_branch
        %272 = sbr.rel target = $region133
      $region138: #{_forward_impl.1} parent=130 // loop_exit
        _
    $region131: #{_forward_impl.1} parent=1 // pred_fallthru
      _
    // Predicated region
    $region154: #{_forward_impl.1} parent=1 // pred_check
      _
    $region155: #{_forward_impl.1} parent=1 // pred_check_branch
      %317 = sbr.rel (0) target = $region157
    $region156: #{_forward_impl.1} parent=1 // pred_region
      %318 = vsyncadd %s262, 1024
    $region157: #{_forward_impl.1} parent=1 // pred_fallthru
      _
    %v319 = vlaneseq
    %v320 = vshrl.u32 %v319, 7
    %v321 = vlaneseq
    %v322 = vand.u32 %v321, 127
    %s323 = sld [smem:[#allocation9]]
    %s324 = sld [smem:[#allocation9 + $0x10]]
    %s325 = sld [smem:[#allocation13]]
    %v326 = vstv %s324
    %vm327 = vcmp.eq.s32.totalorder %v320, %v326
    %v328 = vstv %s323
    %vm329 = vcmp.eq.s32.totalorder %v322, %v328
    %vm330 = vmand %vm327, %vm329
    %v331 = vstv %s325
    %v332 = vsel %vm330, %v331, 0.0
    %v333 = vadd.f32 %v332, 0.0
    %s334 = sld [smem:[#allocation9 + $0x1]]
    %s335 = sld [smem:[#allocation9 + $0x11]]
    %s336 = sld [smem:[#allocation13 + $0x1]]
    %v337 = vstv %s335
    %vm338 = vcmp.eq.s32.totalorder %v320, %v337
    %v339 = vstv %s334
    %vm340 = vcmp.eq.s32.totalorder %v322, %v339
    %vm341 = vmand %vm338, %vm340
    %v342 = vstv %s336
    %v343 = vsel %vm341, %v342, 0.0
    %v344 = vadd.f32 %v333, %v343
    %s345 = sld [smem:[#allocation9 + $0x2]]
    %s346 = sld [smem:[#allocation9 + $0x12]]
    %s347 = sld [smem:[#allocation13 + $0x2]]
    %v348 = vstv %s346
    %vm349 = vcmp.eq.s32.totalorder %v320, %v348
    %v350 = vstv %s345
    %vm351 = vcmp.eq.s32.totalorder %v322, %v350
    %vm352 = vmand %vm349, %vm351
    %v353 = vstv %s347
    %v354 = vsel %vm352, %v353, 0.0
    %v355 = vadd.f32 %v344, %v354
    %s356 = sld [smem:[#allocation9 + $0x3]]
    %s357 = sld [smem:[#allocation9 + $0x13]]
    %s358 = sld [smem:[#allocation13 + $0x3]]
    %v359 = vstv %s357
    %vm360 = vcmp.eq.s32.totalorder %v320, %v359
    %v361 = vstv %s356
    %vm362 = vcmp.eq.s32.totalorder %v322, %v361
    %vm363 = vmand %vm360, %vm362
    %v364 = vstv %s358
    %v365 = vsel %vm363, %v364, 0.0
    %v366 = vadd.f32 %v355, %v365
    %s367 = sld [smem:[#allocation9 + $0x4]]
    %s368 = sld [smem:[#allocation9 + $0x14]]
    %s369 = sld [smem:[#allocation13 + $0x4]]
    %v370 = vstv %s368
    %vm371 = vcmp.eq.s32.totalorder %v320, %v370
    %v372 = vstv %s367
    %vm373 = vcmp.eq.s32.totalorder %v322, %v372
    %vm374 = vmand %vm371, %vm373
    %v375 = vstv %s369
    %v376 = vsel %vm374, %v375, 0.0
    %v377 = vadd.f32 %v366, %v376
    %s378 = sld [smem:[#allocation9 + $0x5]]
    %s379 = sld [smem:[#allocation9 + $0x15]]
    %s380 = sld [smem:[#allocation13 + $0x5]]
    %v381 = vstv %s379
    %vm382 = vcmp.eq.s32.totalorder %v320, %v381
    %v383 = vstv %s378
    %vm384 = vcmp.eq.s32.totalorder %v322, %v383
    %vm385 = vmand %vm382, %vm384
    %v386 = vstv %s380
    %v387 = vsel %vm385, %v386, 0.0
    %v388 = vadd.f32 %v377, %v387
    %s389 = sld [smem:[#allocation9 + $0x6]]
    %s390 = sld [smem:[#allocation9 + $0x16]]
    %s391 = sld [smem:[#allocation13 + $0x6]]
    %v392 = vstv %s390
    %vm393 = vcmp.eq.s32.totalorder %v320, %v392
    %v394 = vstv %s389
    %vm395 = vcmp.eq.s32.totalorder %v322, %v394
    %vm396 = vmand %vm393, %vm395
    %v397 = vstv %s391
    %v398 = vsel %vm396, %v397, 0.0
    %v399 = vadd.f32 %v388, %v398
    %s400 = sld [smem:[#allocation9 + $0x7]]
    %s401 = sld [smem:[#allocation9 + $0x17]]
    %s402 = sld [smem:[#allocation13 + $0x7]]
    %v403 = vstv %s401
    %vm404 = vcmp.eq.s32.totalorder %v320, %v403
    %v405 = vstv %s400
    %vm406 = vcmp.eq.s32.totalorder %v322, %v405
    %vm407 = vmand %vm404, %vm406
    %v408 = vstv %s402
    %v409 = vsel %vm407, %v408, 0.0
    %v410 = vadd.f32 %v399, %v409
    %s411 = sld [smem:[#allocation9 + $0x8]]
    %s412 = sld [smem:[#allocation9 + $0x18]]
    %s413 = sld [smem:[#allocation13 + $0x8]]
    %v414 = vstv %s412
    %vm415 = vcmp.eq.s32.totalorder %v320, %v414
    %v416 = vstv %s411
    %vm417 = vcmp.eq.s32.totalorder %v322, %v416
    %vm418 = vmand %vm415, %vm417
    %v419 = vstv %s413
    %v420 = vsel %vm418, %v419, 0.0
    %v421 = vadd.f32 %v410, %v420
    %s422 = sld [smem:[#allocation9 + $0x9]]
    %s423 = sld [smem:[#allocation9 + $0x19]]
    %s424 = sld [smem:[#allocation13 + $0x9]]
    %v425 = vstv %s423
    %vm426 = vcmp.eq.s32.totalorder %v320, %v425
    %v427 = vstv %s422
    %vm428 = vcmp.eq.s32.totalorder %v322, %v427
    %vm429 = vmand %vm426, %vm428
    %v430 = vstv %s424
    %v431 = vsel %vm429, %v430, 0.0
    %v432 = vadd.f32 %v421, %v431
    %s433 = sld [smem:[#allocation9 + $0xa]]
    %s434 = sld [smem:[#allocation9 + $0x1a]]
    %s435 = sld [smem:[#allocation13 + $0xa]]
    %v436 = vstv %s434
    %vm437 = vcmp.eq.s32.totalorder %v320, %v436
    %v438 = vstv %s433
    %vm439 = vcmp.eq.s32.totalorder %v322, %v438
    %vm440 = vmand %vm437, %vm439
    %v441 = vstv %s435
    %v442 = vsel %vm440, %v441, 0.0
    %v443 = vadd.f32 %v432, %v442
    %s444 = sld [smem:[#allocation9 + $0xb]]
    %s445 = sld [smem:[#allocation9 + $0x1b]]
    %s446 = sld [smem:[#allocation13 + $0xb]]
    %v447 = vstv %s445
    %vm448 = vcmp.eq.s32.totalorder %v320, %v447
    %v449 = vstv %s444
    %vm450 = vcmp.eq.s32.totalorder %v322, %v449
    %vm451 = vmand %vm448, %vm450
    %v452 = vstv %s446
    %v453 = vsel %vm451, %v452, 0.0
    %v454 = vadd.f32 %v443, %v453
    %s455 = sld [smem:[#allocation9 + $0xc]]
    %s456 = sld [smem:[#allocation9 + $0x1c]]
    %s457 = sld [smem:[#allocation13 + $0xc]]
    %v458 = vstv %s456
    %vm459 = vcmp.eq.s32.totalorder %v320, %v458
    %v460 = vstv %s455
    %vm461 = vcmp.eq.s32.totalorder %v322, %v460
    %vm462 = vmand %vm459, %vm461
    %v463 = vstv %s457
    %v464 = vsel %vm462, %v463, 0.0
    %v465 = vadd.f32 %v454, %v464
    %s466 = sld [smem:[#allocation9 + $0xd]]
    %s467 = sld [smem:[#allocation9 + $0x1d]]
    %s468 = sld [smem:[#allocation13 + $0xd]]
    %v469 = vstv %s467
    %vm470 = vcmp.eq.s32.totalorder %v320, %v469
    %v471 = vstv %s466
    %vm472 = vcmp.eq.s32.totalorder %v322, %v471
    %vm473 = vmand %vm470, %vm472
    %v474 = vstv %s468
    %v475 = vsel %vm473, %v474, 0.0
    %v476 = vadd.f32 %v465, %v475
    %s477 = sld [smem:[#allocation9 + $0xe]]
    %s478 = sld [smem:[#allocation9 + $0x1e]]
    %s479 = sld [smem:[#allocation13 + $0xe]]
    %v480 = vstv %s478
    %vm481 = vcmp.eq.s32.totalorder %v320, %v480
    %v482 = vstv %s477
    %vm483 = vcmp.eq.s32.totalorder %v322, %v482
    %vm484 = vmand %vm481, %vm483
    %v485 = vstv %s479
    %v486 = vsel %vm484, %v485, 0.0
    %v487 = vadd.f32 %v476, %v486
    %s488 = sld [smem:[#allocation9 + $0xf]]
    %s489 = sld [smem:[#allocation9 + $0x1f]]
    %s490 = sld [smem:[#allocation13 + $0xf]]
    %v491 = vstv %s489
    %vm492 = vcmp.eq.s32.totalorder %v320, %v491
    %v493 = vstv %s488
    %vm494 = vcmp.eq.s32.totalorder %v322, %v493
    %vm495 = vmand %vm492, %vm494
    %v496 = vstv %s490
    %v497 = vsel %vm495, %v496, 0.0
    %v498 = vadd.f32 %v487, %v497
    %vm499 = vcmp.eq.s32.totalorder %v320, %v322
    %v500 = vsel %vm499, %v498, 0.0
    %vm501 = vcmask 64512
    %v502 = vsel %vm501, %v500, 0.0
    %503 = vadd.xlane.f32.xlu0 %v502
    %v504 = vpop.xlane.xlu0 %503
    %vm505 = vcmp.eq.f32.partialorder %v504, 0.0
    %v506 = vsel %vm505, 1.0, 0.0
    %v507 = vsel %vm499, %v506, 0.0
    %v508 = vadd.f32 %v498, %v507
    %v509 = vsel %vm501, %v508, 0.0
    %510 = vadd.xlane.f32.xlu0 %v509
    %v511 = vpop.xlane.xlu0 %510
    %vm512 = vcmp.gt.f32.partialorder %v511, 0.0
    %v513 = vrsqrt.pop %v511
    %v514 = vsel %vm512, %v513, 0.0
    %v515 = vsel %vm499, %v514, 0.0
    %v517 = vsel %vm501, %v508, 0
    %519 = vmatprep.subr.mxu0 0.0
    %520 = vmatpush1.msra.mxu0 %v515
    %521 = vmatprep.subr.mxu0 0.0
    %522 = vmatpush1.msra.mxu0 0.0
    %523 = vmatprep.subr.mxu0 0.0
    %524 = vmatpush1.msra.mxu0 0.0
    %525 = vmatprep.subr.mxu0 0.0
    %526 = vmatpush1.msra.mxu0 0.0
    %527 = vmatprep.subr.mxu0 0.0
    %528 = vmatpush1.msra.mxu0 0.0
    %529 = vmatprep.subr.mxu0 0.0
    %530 = vmatpush1.msra.mxu0 0.0
    %531 = vmatprep.subr.mxu0 0.0
    %532 = vmatpush1.msra.mxu0 0.0
    %533 = vmatprep.subr.mxu0 0.0
    %534 = vmatpush1.msra.mxu0 0.0
    %535 = vmatprep.subr.mxu0 0.0
    %536 = vmatpush1.msra.mxu0 0.0
    %537 = vmatprep.subr.mxu0 0.0
    %538 = vmatpush1.msra.mxu0 0.0
    %539 = vmatprep.subr.mxu0 0.0
    %540 = vmatpush1.msra.mxu0 0.0
    %541 = vmatprep.subr.mxu0 0.0
    %542 = vmatpush1.msra.mxu0 0.0
    %543 = vmatprep.subr.mxu0 0.0
    %544 = vmatpush1.msra.mxu0 0.0
    %545 = vmatprep.subr.mxu0 0.0
    %546 = vmatpush1.msra.mxu0 0.0
    %547 = vmatprep.subr.mxu0 0.0
    %548 = vmatpush1.msra.mxu0 0.0
    %549 = vmatprep.subr.mxu0 0.0
    %550 = vmatpush1.msra.mxu0 0.0
    %551 = vmatprep.subr.mxu0 0.0
    %552 = vmatpush1.msra.mxu0 0.0
    %553 = vmatprep.subr.mxu0 0.0
    %554 = vmatpush1.msra.mxu0 0.0
    %555 = vmatprep.subr.mxu0 0.0
    %556 = vmatpush1.msra.mxu0 0.0
    %557 = vmatprep.subr.mxu0 0.0
    %558 = vmatpush1.msra.mxu0 0.0
    %559 = vmatprep.subr.mxu0 0.0
    %560 = vmatpush1.msra.mxu0 0.0
    %561 = vmatprep.subr.mxu0 0.0
    %562 = vmatpush1.msra.mxu0 0.0
    %563 = vmatprep.subr.mxu0 0.0
    %564 = vmatpush1.msra.mxu0 0.0
    %565 = vmatprep.subr.mxu0 0.0
    %566 = vmatpush1.msra.mxu0 0.0
    %567 = vmatprep.subr.mxu0 0.0
    %568 = vmatpush1.msra.mxu0 0.0
    %569 = vmatprep.subr.mxu0 0.0
    %570 = vmatpush1.msra.mxu0 0.0
    %571 = vmatprep.subr.mxu0 0.0
    %572 = vmatpush1.msra.mxu0 0.0
    %573 = vmatprep.subr.mxu0 0.0
    %574 = vmatpush1.msra.mxu0 0.0
    %575 = vmatprep.subr.mxu0 0.0
    %576 = vmatpush1.msra.mxu0 0.0
    %577 = vmatprep.subr.mxu0 0.0
    %578 = vmatpush1.msra.mxu0 0.0
    %579 = vmatprep.subr.mxu0 0.0
    %580 = vmatpush1.msra.mxu0 0.0
    %581 = vmatprep.subr.mxu0 0.0
    %582 = vmatpush1.msra.mxu0 0.0
    %583 = vmatprep.mubr.f32.mxu0 0.0
    %584 = vmatmul.mubr.f32.gmra.mrb[0].mxu0 %v517
    %v585 = vpop.f32.mrb[0].mxu0
    %v586 = vadd.f32 0.0, %v585
    %v587 = vpop.f32.mrb[0].mxu0
    %588 = vdwg.mxu0
    %v589 = vmul.f32 %v514, %v586
    %v590 = vld [vmem:[#allocation14] sm:$0xff]
    %v592 = vsel %vm501, %v589, 0
    %594 = vmatprep.subr.mxu0 0.0
    %595 = vmatpush1.msra.mxu0 %v590
    %596 = vmatprep.subr.mxu0 0.0
    %597 = vmatpush1.msra.mxu0 0.0
    %598 = vmatprep.subr.mxu0 0.0
    %599 = vmatpush1.msra.mxu0 0.0
    %600 = vmatprep.subr.mxu0 0.0
    %601 = vmatpush1.msra.mxu0 0.0
    %602 = vmatprep.subr.mxu0 0.0
    %603 = vmatpush1.msra.mxu0 0.0
    %604 = vmatprep.subr.mxu0 0.0
    %605 = vmatpush1.msra.mxu0 0.0
    %606 = vmatprep.subr.mxu0 0.0
    %607 = vmatpush1.msra.mxu0 0.0
    %608 = vmatprep.subr.mxu0 0.0
    %609 = vmatpush1.msra.mxu0 0.0
    %610 = vmatprep.subr.mxu0 0.0
    %611 = vmatpush1.msra.mxu0 0.0
    %612 = vmatprep.subr.mxu0 0.0
    %613 = vmatpush1.msra.mxu0 0.0
    %614 = vmatprep.subr.mxu0 0.0
    %615 = vmatpush1.msra.mxu0 0.0
    %616 = vmatprep.subr.mxu0 0.0
    %617 = vmatpush1.msra.mxu0 0.0
    %618 = vmatprep.subr.mxu0 0.0
    %619 = vmatpush1.msra.mxu0 0.0
    %620 = vmatprep.subr.mxu0 0.0
    %621 = vmatpush1.msra.mxu0 0.0
    %622 = vmatprep.subr.mxu0 0.0
    %623 = vmatpush1.msra.mxu0 0.0
    %624 = vmatprep.subr.mxu0 0.0
    %625 = vmatpush1.msra.mxu0 0.0
    %626 = vmatprep.subr.mxu0 0.0
    %627 = vmatpush1.msra.mxu0 0.0
    %628 = vmatprep.subr.mxu0 0.0
    %629 = vmatpush1.msra.mxu0 0.0
    %630 = vmatprep.subr.mxu0 0.0
    %631 = vmatpush1.msra.mxu0 0.0
    %632 = vmatprep.subr.mxu0 0.0
    %633 = vmatpush1.msra.mxu0 0.0
    %634 = vmatprep.subr.mxu0 0.0
    %635 = vmatpush1.msra.mxu0 0.0
    %636 = vmatprep.subr.mxu0 0.0
    %637 = vmatpush1.msra.mxu0 0.0
    %638 = vmatprep.subr.mxu0 0.0
    %639 = vmatpush1.msra.mxu0 0.0
    %640 = vmatprep.subr.mxu0 0.0
    %641 = vmatpush1.msra.mxu0 0.0
    %642 = vmatprep.subr.mxu0 0.0
    %643 = vmatpush1.msra.mxu0 0.0
    %644 = vmatprep.subr.mxu0 0.0
    %645 = vmatpush1.msra.mxu0 0.0
    %646 = vmatprep.subr.mxu0 0.0
    %647 = vmatpush1.msra.mxu0 0.0
    %648 = vmatprep.subr.mxu0 0.0
    %649 = vmatpush1.msra.mxu0 0.0
    %650 = vmatprep.subr.mxu0 0.0
    %651 = vmatpush1.msra.mxu0 0.0
    %652 = vmatprep.subr.mxu0 0.0
    %653 = vmatpush1.msra.mxu0 0.0
    %654 = vmatprep.subr.mxu0 0.0
    %655 = vmatpush1.msra.mxu0 0.0
    %656 = vmatprep.subr.mxu0 0.0
    %657 = vmatpush1.msra.mxu0 0.0
    %658 = vmatprep.mubr.f32.mxu0 0.0
    %659 = vmatmul.mubr.f32.gmra.mrb[0].mxu0 %v592
    %v660 = vpop.f32.mrb[0].mxu0
    %v661 = vadd.f32 0.0, %v660
    %v662 = vpop.f32.mrb[0].mxu0
    %663 = vdwg.mxu0
    %s664 = smul.u32 8, 2
    %s665 = smul.u32 %s664, 16
    %s666 = sshll.u32 %s665, 4
    %667 = dma.done [#allocation8], %s666
    %v668 = vld [vmem:[#allocation2] sm:$0xff]
    %v669 = vld [vmem:[#allocation2 + $0x8] sm:$0xff]
    %v670 = vld [vmem:[#allocation2 + $0x10] sm:$0xff]
    %v671 = vld [vmem:[#allocation2 + $0x18] sm:$0xff]
    %v672 = vld [vmem:[#allocation2 + $0x20] sm:$0xff]
    %v673 = vld [vmem:[#allocation2 + $0x28] sm:$0xff]
    %v674 = vld [vmem:[#allocation2 + $0x30] sm:$0xff]
    %v675 = vld [vmem:[#allocation2 + $0x38] sm:$0xff]
    %v676 = vld [vmem:[#allocation2 + $0x40] sm:$0xff]
    %v677 = vld [vmem:[#allocation2 + $0x48] sm:$0xff]
    %v678 = vld [vmem:[#allocation2 + $0x50] sm:$0xff]
    %v679 = vld [vmem:[#allocation2 + $0x58] sm:$0xff]
    %v680 = vld [vmem:[#allocation2 + $0x60] sm:$0xff]
    %v681 = vld [vmem:[#allocation2 + $0x68] sm:$0xff]
    %v682 = vld [vmem:[#allocation2 + $0x70] sm:$0xff]
    %v683 = vld [vmem:[#allocation2 + $0x78] sm:$0xff]
    %v684 = vld [vmem:[#allocation2 + $0x80] sm:$0xff]
    %v685 = vld [vmem:[#allocation2 + $0x88] sm:$0xff]
    %v686 = vld [vmem:[#allocation2 + $0x90] sm:$0xff]
    %v687 = vld [vmem:[#allocation2 + $0x98] sm:$0xff]
    %v688 = vld [vmem:[#allocation2 + $0xa0] sm:$0xff]
    %v689 = vld [vmem:[#allocation2 + $0xa8] sm:$0xff]
    %v690 = vld [vmem:[#allocation2 + $0xb0] sm:$0xff]
    %v691 = vld [vmem:[#allocation2 + $0xb8] sm:$0xff]
    %v692 = vld [vmem:[#allocation2 + $0xc0] sm:$0xff]
    %v693 = vld [vmem:[#allocation2 + $0xc8] sm:$0xff]
    %v694 = vld [vmem:[#allocation2 + $0xd0] sm:$0xff]
    %v695 = vld [vmem:[#allocation2 + $0xd8] sm:$0xff]
    %v696 = vld [vmem:[#allocation2 + $0xe0] sm:$0xff]
    %v697 = vld [vmem:[#allocation2 + $0xe8] sm:$0xff]
    %v698 = vld [vmem:[#allocation2 + $0xf0] sm:$0xff]
    %v699 = vld [vmem:[#allocation2 + $0xf8] sm:$0xff]
    %v700 = vld [vmem:[#allocation15] sm:$0xff]
    %v701 = vld [vmem:[#allocation15 + $0x8] sm:$0xff]
    %v704 = vlaneseq
    %v705 = vshrl.u32 %v704, 7
    %v706 = vsub.s32 0, %v705
    %v707 = vrot.slane %v700, %v706
    %v708 = vlaneseq
    %v709 = vshrl.u32 %v708, 7
    %v710 = vsub.s32 1, %v709
    %v711 = vrot.slane %v700, %v710
    %v712 = vlaneseq
    %v713 = vshrl.u32 %v712, 7
    %v714 = vsub.s32 2, %v713
    %v715 = vrot.slane %v700, %v714
    %v716 = vlaneseq
    %v717 = vshrl.u32 %v716, 7
    %v718 = vsub.s32 3, %v717
    %v719 = vrot.slane %v700, %v718
    %v720 = vlaneseq
    %v721 = vshrl.u32 %v720, 7
    %v722 = vsub.s32 4, %v721
    %v723 = vrot.slane %v700, %v722
    %v724 = vlaneseq
    %v725 = vshrl.u32 %v724, 7
    %v726 = vsub.s32 5, %v725
    %v727 = vrot.slane %v700, %v726
    %v728 = vlaneseq
    %v729 = vshrl.u32 %v728, 7
    %v730 = vsub.s32 6, %v729
    %v731 = vrot.slane %v700, %v730
    %v732 = vlaneseq
    %v733 = vshrl.u32 %v732, 7
    %v734 = vsub.s32 7, %v733
    %v735 = vrot.slane %v700, %v734
    %v736 = vlaneseq
    %v737 = vshrl.u32 %v736, 7
    %v738 = vsub.s32 0, %v737
    %v739 = vrot.slane %v701, %v738
    %v740 = vlaneseq
    %v741 = vshrl.u32 %v740, 7
    %v742 = vsub.s32 1, %v741
    %v743 = vrot.slane %v701, %v742
    %v744 = vlaneseq
    %v745 = vshrl.u32 %v744, 7
    %v746 = vsub.s32 2, %v745
    %v747 = vrot.slane %v701, %v746
    %v748 = vlaneseq
    %v749 = vshrl.u32 %v748, 7
    %v750 = vsub.s32 3, %v749
    %v751 = vrot.slane %v701, %v750
    %v752 = vlaneseq
    %v753 = vshrl.u32 %v752, 7
    %v754 = vsub.s32 4, %v753
    %v755 = vrot.slane %v701, %v754
    %v756 = vlaneseq
    %v757 = vshrl.u32 %v756, 7
    %v758 = vsub.s32 5, %v757
    %v759 = vrot.slane %v701, %v758
    %v760 = vlaneseq
    %v761 = vshrl.u32 %v760, 7
    %v762 = vsub.s32 6, %v761
    %v763 = vrot.slane %v701, %v762
    %v764 = vlaneseq
    %v765 = vshrl.u32 %v764, 7
    %v766 = vsub.s32 7, %v765
    %v767 = vrot.slane %v701, %v766
    %vm784 = vcmask 130048
    %v786 = vsel %vm784, %v661, 0
    %788 = vmatprep.subr.mxu0 %v669
    %789 = vmatpush1.msra.mxu0 %v668
    %790 = vmatprep.subr.mxu0 %v685
    %791 = vmatpush1.msra.mxu0 %v684
    %792 = vmatprep.subr.mxu0 0.0
    %793 = vmatpush1.msra.mxu0 0.0
    %794 = vmatprep.subr.mxu0 0.0
    %795 = vmatpush1.msra.mxu0 0.0
    %796 = vmatprep.subr.mxu0 0.0
    %797 = vmatpush1.msra.mxu0 0.0
    %798 = vmatprep.subr.mxu0 0.0
    %799 = vmatpush1.msra.mxu0 0.0
    %800 = vmatprep.subr.mxu0 0.0
    %801 = vmatpush1.msra.mxu0 0.0
    %802 = vmatprep.subr.mxu0 0.0
    %803 = vmatpush1.msra.mxu0 0.0
    %804 = vmatprep.subr.mxu0 0.0
    %805 = vmatpush1.msra.mxu0 0.0
    %806 = vmatprep.subr.mxu0 0.0
    %807 = vmatpush1.msra.mxu0 0.0
    %808 = vmatprep.subr.mxu0 0.0
    %809 = vmatpush1.msra.mxu0 0.0
    %810 = vmatprep.subr.mxu0 0.0
    %811 = vmatpush1.msra.mxu0 0.0
    %812 = vmatprep.subr.mxu0 0.0
    %813 = vmatpush1.msra.mxu0 0.0
    %814 = vmatprep.subr.mxu0 0.0
    %815 = vmatpush1.msra.mxu0 0.0
    %816 = vmatprep.subr.mxu0 0.0
    %817 = vmatpush1.msra.mxu0 0.0
    %818 = vmatprep.subr.mxu0 0.0
    %819 = vmatpush1.msra.mxu0 0.0
    %820 = vmatprep.subr.mxu0 0.0
    %821 = vmatpush1.msra.mxu0 0.0
    %822 = vmatprep.subr.mxu0 0.0
    %823 = vmatpush1.msra.mxu0 0.0
    %824 = vmatprep.subr.mxu0 0.0
    %825 = vmatpush1.msra.mxu0 0.0
    %826 = vmatprep.subr.mxu0 0.0
    %827 = vmatpush1.msra.mxu0 0.0
    %828 = vmatprep.subr.mxu0 0.0
    %829 = vmatpush1.msra.mxu0 0.0
    %830 = vmatprep.subr.mxu0 0.0
    %831 = vmatpush1.msra.mxu0 0.0
    %832 = vmatprep.subr.mxu0 0.0
    %833 = vmatpush1.msra.mxu0 0.0
    %834 = vmatprep.subr.mxu0 0.0
    %835 = vmatpush1.msra.mxu0 0.0
    %836 = vmatprep.subr.mxu0 0.0
    %837 = vmatpush1.msra.mxu0 0.0
    %838 = vmatprep.subr.mxu0 0.0
    %839 = vmatpush1.msra.mxu0 0.0
    %840 = vmatprep.subr.mxu0 0.0
    %841 = vmatpush1.msra.mxu0 0.0
    %842 = vmatprep.subr.mxu0 0.0
    %843 = vmatpush1.msra.mxu0 0.0
    %844 = vmatprep.subr.mxu0 0.0
    %845 = vmatpush1.msra.mxu0 0.0
    %846 = vmatprep.subr.mxu0 0.0
    %847 = vmatpush1.msra.mxu0 0.0
    %848 = vmatprep.subr.mxu0 0.0
    %849 = vmatpush1.msra.mxu0 0.0
    %850 = vmatprep.subr.mxu0 0.0
    %851 = vmatpush1.msra.mxu0 0.0
    %852 = vmatprep.mubr.f32.mxu0 0.0
    %853 = vmatmul.mubr.f32.gmra.mrb[0].mxu0 %v786
    %v854 = vpop.f32.mrb[0].mxu0
    %v855 = vadd.f32 %v707, %v854
    %v856 = vpop.f32.mrb[0].mxu0
    %v857 = vadd.f32 %v711, %v856
    %858 = vdwg.mxu0
    %859 = vmatprep.subr.mxu0 %v671
    %860 = vmatpush1.msra.mxu0 %v670
    %861 = vmatprep.subr.mxu0 %v687
    %862 = vmatpush1.msra.mxu0 %v686
    %863 = vmatprep.subr.mxu0 0.0
    %864 = vmatpush1.msra.mxu0 0.0
    %865 = vmatprep.subr.mxu0 0.0
    %866 = vmatpush1.msra.mxu0 0.0
    %867 = vmatprep.subr.mxu0 0.0
    %868 = vmatpush1.msra.mxu0 0.0
    %869 = vmatprep.subr.mxu0 0.0
    %870 = vmatpush1.msra.mxu0 0.0
    %871 = vmatprep.subr.mxu0 0.0
    %872 = vmatpush1.msra.mxu0 0.0
    %873 = vmatprep.subr.mxu0 0.0
    %874 = vmatpush1.msra.mxu0 0.0
    %875 = vmatprep.subr.mxu0 0.0
    %876 = vmatpush1.msra.mxu0 0.0
    %877 = vmatprep.subr.mxu0 0.0
    %878 = vmatpush1.msra.mxu0 0.0
    %879 = vmatprep.subr.mxu0 0.0
    %880 = vmatpush1.msra.mxu0 0.0
    %881 = vmatprep.subr.mxu0 0.0
    %882 = vmatpush1.msra.mxu0 0.0
    %883 = vmatprep.subr.mxu0 0.0
    %884 = vmatpush1.msra.mxu0 0.0
    %885 = vmatprep.subr.mxu0 0.0
    %886 = vmatpush1.msra.mxu0 0.0
    %887 = vmatprep.subr.mxu0 0.0
    %888 = vmatpush1.msra.mxu0 0.0
    %889 = vmatprep.subr.mxu0 0.0
    %890 = vmatpush1.msra.mxu0 0.0
    %891 = vmatprep.subr.mxu0 0.0
    %892 = vmatpush1.msra.mxu0 0.0
    %893 = vmatprep.subr.mxu0 0.0
    %894 = vmatpush1.msra.mxu0 0.0
    %895 = vmatprep.subr.mxu0 0.0
    %896 = vmatpush1.msra.mxu0 0.0
    %897 = vmatprep.subr.mxu0 0.0
    %898 = vmatpush1.msra.mxu0 0.0
    %899 = vmatprep.subr.mxu0 0.0
    %900 = vmatpush1.msra.mxu0 0.0
    %901 = vmatprep.subr.mxu0 0.0
    %902 = vmatpush1.msra.mxu0 0.0
    %903 = vmatprep.subr.mxu0 0.0
    %904 = vmatpush1.msra.mxu0 0.0
    %905 = vmatprep.subr.mxu0 0.0
    %906 = vmatpush1.msra.mxu0 0.0
    %907 = vmatprep.subr.mxu0 0.0
    %908 = vmatpush1.msra.mxu0 0.0
    %909 = vmatprep.subr.mxu0 0.0
    %910 = vmatpush1.msra.mxu0 0.0
    %911 = vmatprep.subr.mxu0 0.0
    %912 = vmatpush1.msra.mxu0 0.0
    %913 = vmatprep.subr.mxu0 0.0
    %914 = vmatpush1.msra.mxu0 0.0
    %915 = vmatprep.subr.mxu0 0.0
    %916 = vmatpush1.msra.mxu0 0.0
    %917 = vmatprep.subr.mxu0 0.0
    %918 = vmatpush1.msra.mxu0 0.0
    %919 = vmatprep.subr.mxu0 0.0
    %920 = vmatpush1.msra.mxu0 0.0
    %921 = vmatprep.subr.mxu0 0.0
    %922 = vmatpush1.msra.mxu0 0.0
    %923 = vmatprep.mubr.f32.mxu0 0.0
    %924 = vmatmul.mubr.f32.gmra.mrb[0].mxu0 %v786
    %v925 = vpop.f32.mrb[0].mxu0
    %v926 = vadd.f32 %v715, %v925
    %v927 = vpop.f32.mrb[0].mxu0
    %v928 = vadd.f32 %v719, %v927
    %929 = vdwg.mxu0
    %930 = vmatprep.subr.mxu0 %v673
    %931 = vmatpush1.msra.mxu0 %v672
    %932 = vmatprep.subr.mxu0 %v689
    %933 = vmatpush1.msra.mxu0 %v688
    %934 = vmatprep.subr.mxu0 0.0
    %935 = vmatpush1.msra.mxu0 0.0
    %936 = vmatprep.subr.mxu0 0.0
    %937 = vmatpush1.msra.mxu0 0.0
    %938 = vmatprep.subr.mxu0 0.0
    %939 = vmatpush1.msra.mxu0 0.0
    %940 = vmatprep.subr.mxu0 0.0
    %941 = vmatpush1.msra.mxu0 0.0
    %942 = vmatprep.subr.mxu0 0.0
    %943 = vmatpush1.msra.mxu0 0.0
    %944 = vmatprep.subr.mxu0 0.0
    %945 = vmatpush1.msra.mxu0 0.0
    %946 = vmatprep.subr.mxu0 0.0
    %947 = vmatpush1.msra.mxu0 0.0
    %948 = vmatprep.subr.mxu0 0.0
    %949 = vmatpush1.msra.mxu0 0.0
    %950 = vmatprep.subr.mxu0 0.0
    %951 = vmatpush1.msra.mxu0 0.0
    %952 = vmatprep.subr.mxu0 0.0
    %953 = vmatpush1.msra.mxu0 0.0
    %954 = vmatprep.subr.mxu0 0.0
    %955 = vmatpush1.msra.mxu0 0.0
    %956 = vmatprep.subr.mxu0 0.0
    %957 = vmatpush1.msra.mxu0 0.0
    %958 = vmatprep.subr.mxu0 0.0
    %959 = vmatpush1.msra.mxu0 0.0
    %960 = vmatprep.subr.mxu0 0.0
    %961 = vmatpush1.msra.mxu0 0.0
    %962 = vmatprep.subr.mxu0 0.0
    %963 = vmatpush1.msra.mxu0 0.0
    %964 = vmatprep.subr.mxu0 0.0
    %965 = vmatpush1.msra.mxu0 0.0
    %966 = vmatprep.subr.mxu0 0.0
    %967 = vmatpush1.msra.mxu0 0.0
    %968 = vmatprep.subr.mxu0 0.0
    %969 = vmatpush1.msra.mxu0 0.0
    %970 = vmatprep.subr.mxu0 0.0
    %971 = vmatpush1.msra.mxu0 0.0
    %972 = vmatprep.subr.mxu0 0.0
    %973 = vmatpush1.msra.mxu0 0.0
    %974 = vmatprep.subr.mxu0 0.0
    %975 = vmatpush1.msra.mxu0 0.0
    %976 = vmatprep.subr.mxu0 0.0
    %977 = vmatpush1.msra.mxu0 0.0
    %978 = vmatprep.subr.mxu0 0.0
    %979 = vmatpush1.msra.mxu0 0.0
    %980 = vmatprep.subr.mxu0 0.0
    %981 = vmatpush1.msra.mxu0 0.0
    %982 = vmatprep.subr.mxu0 0.0
    %983 = vmatpush1.msra.mxu0 0.0
    %984 = vmatprep.subr.mxu0 0.0
    %985 = vmatpush1.msra.mxu0 0.0
    %986 = vmatprep.subr.mxu0 0.0
    %987 = vmatpush1.msra.mxu0 0.0
    %988 = vmatprep.subr.mxu0 0.0
    %989 = vmatpush1.msra.mxu0 0.0
    %990 = vmatprep.subr.mxu0 0.0
    %991 = vmatpush1.msra.mxu0 0.0
    %992 = vmatprep.subr.mxu0 0.0
    %993 = vmatpush1.msra.mxu0 0.0
    %994 = vmatprep.mubr.f32.mxu0 0.0
    %995 = vmatmul.mubr.f32.gmra.mrb[0].mxu0 %v786
    %v996 = vpop.f32.mrb[0].mxu0
    %v997 = vadd.f32 %v723, %v996
    %v998 = vpop.f32.mrb[0].mxu0
    %v999 = vadd.f32 %v727, %v998
    %1000 = vdwg.mxu0
    %1001 = vmatprep.subr.mxu0 %v675
    %1002 = vmatpush1.msra.mxu0 %v674
    %1003 = vmatprep.subr.mxu0 %v691
    %1004 = vmatpush1.msra.mxu0 %v690
    %1005 = vmatprep.subr.mxu0 0.0
    %1006 = vmatpush1.msra.mxu0 0.0
    %1007 = vmatprep.subr.mxu0 0.0
    %1008 = vmatpush1.msra.mxu0 0.0
    %1009 = vmatprep.subr.mxu0 0.0
    %1010 = vmatpush1.msra.mxu0 0.0
    %1011 = vmatprep.subr.mxu0 0.0
    %1012 = vmatpush1.msra.mxu0 0.0
    %1013 = vmatprep.subr.mxu0 0.0
    %1014 = vmatpush1.msra.mxu0 0.0
    %1015 = vmatprep.subr.mxu0 0.0
    %1016 = vmatpush1.msra.mxu0 0.0
    %1017 = vmatprep.subr.mxu0 0.0
    %1018 = vmatpush1.msra.mxu0 0.0
    %1019 = vmatprep.subr.mxu0 0.0
    %1020 = vmatpush1.msra.mxu0 0.0
    %1021 = vmatprep.subr.mxu0 0.0
    %1022 = vmatpush1.msra.mxu0 0.0
    %1023 = vmatprep.subr.mxu0 0.0
    %1024 = vmatpush1.msra.mxu0 0.0
    %1025 = vmatprep.subr.mxu0 0.0
    %1026 = vmatpush1.msra.mxu0 0.0
    %1027 = vmatprep.subr.mxu0 0.0
    %1028 = vmatpush1.msra.mxu0 0.0
    %1029 = vmatprep.subr.mxu0 0.0
    %1030 = vmatpush1.msra.mxu0 0.0
    %1031 = vmatprep.subr.mxu0 0.0
    %1032 = vmatpush1.msra.mxu0 0.0
    %1033 = vmatprep.subr.mxu0 0.0
    %1034 = vmatpush1.msra.mxu0 0.0
    %1035 = vmatprep.subr.mxu0 0.0
    %1036 = vmatpush1.msra.mxu0 0.0
    %1037 = vmatprep.subr.mxu0 0.0
    %1038 = vmatpush1.msra.mxu0 0.0
    %1039 = vmatprep.subr.mxu0 0.0
    %1040 = vmatpush1.msra.mxu0 0.0
    %1041 = vmatprep.subr.mxu0 0.0
    %1042 = vmatpush1.msra.mxu0 0.0
    %1043 = vmatprep.subr.mxu0 0.0
    %1044 = vmatpush1.msra.mxu0 0.0
    %1045 = vmatprep.subr.mxu0 0.0
    %1046 = vmatpush1.msra.mxu0 0.0
    %1047 = vmatprep.subr.mxu0 0.0
    %1048 = vmatpush1.msra.mxu0 0.0
    %1049 = vmatprep.subr.mxu0 0.0
    %1050 = vmatpush1.msra.mxu0 0.0
    %1051 = vmatprep.subr.mxu0 0.0
    %1052 = vmatpush1.msra.mxu0 0.0
    %1053 = vmatprep.subr.mxu0 0.0
    %1054 = vmatpush1.msra.mxu0 0.0
    %1055 = vmatprep.subr.mxu0 0.0
    %1056 = vmatpush1.msra.mxu0 0.0
    %1057 = vmatprep.subr.mxu0 0.0
    %1058 = vmatpush1.msra.mxu0 0.0
    %1059 = vmatprep.subr.mxu0 0.0
    %1060 = vmatpush1.msra.mxu0 0.0
    %1061 = vmatprep.subr.mxu0 0.0
    %1062 = vmatpush1.msra.mxu0 0.0
    %1063 = vmatprep.subr.mxu0 0.0
    %1064 = vmatpush1.msra.mxu0 0.0
    %1065 = vmatprep.mubr.f32.mxu0 0.0
    %1066 = vmatmul.mubr.f32.gmra.mrb[0].mxu0 %v786
    %v1067 = vpop.f32.mrb[0].mxu0
    %v1068 = vadd.f32 %v731, %v1067
    %v1069 = vpop.f32.mrb[0].mxu0
    %v1070 = vadd.f32 %v735, %v1069
    %1071 = vdwg.mxu0
    %1072 = vmatprep.subr.mxu0 %v677
    %1073 = vmatpush1.msra.mxu0 %v676
    %1074 = vmatprep.subr.mxu0 %v693
    %1075 = vmatpush1.msra.mxu0 %v692
    %1076 = vmatprep.subr.mxu0 0.0
    %1077 = vmatpush1.msra.mxu0 0.0
    %1078 = vmatprep.subr.mxu0 0.0
    %1079 = vmatpush1.msra.mxu0 0.0
    %1080 = vmatprep.subr.mxu0 0.0
    %1081 = vmatpush1.msra.mxu0 0.0
    %1082 = vmatprep.subr.mxu0 0.0
    %1083 = vmatpush1.msra.mxu0 0.0
    %1084 = vmatprep.subr.mxu0 0.0
    %1085 = vmatpush1.msra.mxu0 0.0
    %1086 = vmatprep.subr.mxu0 0.0
    %1087 = vmatpush1.msra.mxu0 0.0
    %1088 = vmatprep.subr.mxu0 0.0
    %1089 = vmatpush1.msra.mxu0 0.0
    %1090 = vmatprep.subr.mxu0 0.0
    %1091 = vmatpush1.msra.mxu0 0.0
    %1092 = vmatprep.subr.mxu0 0.0
    %1093 = vmatpush1.msra.mxu0 0.0
    %1094 = vmatprep.subr.mxu0 0.0
    %1095 = vmatpush1.msra.mxu0 0.0
    %1096 = vmatprep.subr.mxu0 0.0
    %1097 = vmatpush1.msra.mxu0 0.0
    %1098 = vmatprep.subr.mxu0 0.0
    %1099 = vmatpush1.msra.mxu0 0.0
    %1100 = vmatprep.subr.mxu0 0.0
    %1101 = vmatpush1.msra.mxu0 0.0
    %1102 = vmatprep.subr.mxu0 0.0
    %1103 = vmatpush1.msra.mxu0 0.0
    %1104 = vmatprep.subr.mxu0 0.0
    %1105 = vmatpush1.msra.mxu0 0.0
    %1106 = vmatprep.subr.mxu0 0.0
    %1107 = vmatpush1.msra.mxu0 0.0
    %1108 = vmatprep.subr.mxu0 0.0
    %1109 = vmatpush1.msra.mxu0 0.0
    %1110 = vmatprep.subr.mxu0 0.0
    %1111 = vmatpush1.msra.mxu0 0.0
    %1112 = vmatprep.subr.mxu0 0.0
    %1113 = vmatpush1.msra.mxu0 0.0
    %1114 = vmatprep.subr.mxu0 0.0
    %1115 = vmatpush1.msra.mxu0 0.0
    %1116 = vmatprep.subr.mxu0 0.0
    %1117 = vmatpush1.msra.mxu0 0.0
    %1118 = vmatprep.subr.mxu0 0.0
    %1119 = vmatpush1.msra.mxu0 0.0
    %1120 = vmatprep.subr.mxu0 0.0
    %1121 = vmatpush1.msra.mxu0 0.0
    %1122 = vmatprep.subr.mxu0 0.0
    %1123 = vmatpush1.msra.mxu0 0.0
    %1124 = vmatprep.subr.mxu0 0.0
    %1125 = vmatpush1.msra.mxu0 0.0
    %1126 = vmatprep.subr.mxu0 0.0
    %1127 = vmatpush1.msra.mxu0 0.0
    %1128 = vmatprep.subr.mxu0 0.0
    %1129 = vmatpush1.msra.mxu0 0.0
    %1130 = vmatprep.subr.mxu0 0.0
    %1131 = vmatpush1.msra.mxu0 0.0
    %1132 = vmatprep.subr.mxu0 0.0
    %1133 = vmatpush1.msra.mxu0 0.0
    %1134 = vmatprep.subr.mxu0 0.0
    %1135 = vmatpush1.msra.mxu0 0.0
    %1136 = vmatprep.mubr.f32.mxu0 0.0
    %1137 = vmatmul.mubr.f32.gmra.mrb[0].mxu0 %v786
    %v1138 = vpop.f32.mrb[0].mxu0
    %v1139 = vadd.f32 %v739, %v1138
    %v1140 = vpop.f32.mrb[0].mxu0
    %v1141 = vadd.f32 %v743, %v1140
    %1142 = vdwg.mxu0
    %1143 = vmatprep.subr.mxu0 %v679
    %1144 = vmatpush1.msra.mxu0 %v678
    %1145 = vmatprep.subr.mxu0 %v695
    %1146 = vmatpush1.msra.mxu0 %v694
    %1147 = vmatprep.subr.mxu0 0.0
    %1148 = vmatpush1.msra.mxu0 0.0
    %1149 = vmatprep.subr.mxu0 0.0
    %1150 = vmatpush1.msra.mxu0 0.0
    %1151 = vmatprep.subr.mxu0 0.0
    %1152 = vmatpush1.msra.mxu0 0.0
    %1153 = vmatprep.subr.mxu0 0.0
    %1154 = vmatpush1.msra.mxu0 0.0
    %1155 = vmatprep.subr.mxu0 0.0
    %1156 = vmatpush1.msra.mxu0 0.0
    %1157 = vmatprep.subr.mxu0 0.0
    %1158 = vmatpush1.msra.mxu0 0.0
    %1159 = vmatprep.subr.mxu0 0.0
    %1160 = vmatpush1.msra.mxu0 0.0
    %1161 = vmatprep.subr.mxu0 0.0
    %1162 = vmatpush1.msra.mxu0 0.0
    %1163 = vmatprep.subr.mxu0 0.0
    %1164 = vmatpush1.msra.mxu0 0.0
    %1165 = vmatprep.subr.mxu0 0.0
    %1166 = vmatpush1.msra.mxu0 0.0
    %1167 = vmatprep.subr.mxu0 0.0
    %1168 = vmatpush1.msra.mxu0 0.0
    %1169 = vmatprep.subr.mxu0 0.0
    %1170 = vmatpush1.msra.mxu0 0.0
    %1171 = vmatprep.subr.mxu0 0.0
    %1172 = vmatpush1.msra.mxu0 0.0
    %1173 = vmatprep.subr.mxu0 0.0
    %1174 = vmatpush1.msra.mxu0 0.0
    %1175 = vmatprep.subr.mxu0 0.0
    %1176 = vmatpush1.msra.mxu0 0.0
    %1177 = vmatprep.subr.mxu0 0.0
    %1178 = vmatpush1.msra.mxu0 0.0
    %1179 = vmatprep.subr.mxu0 0.0
    %1180 = vmatpush1.msra.mxu0 0.0
    %1181 = vmatprep.subr.mxu0 0.0
    %1182 = vmatpush1.msra.mxu0 0.0
    %1183 = vmatprep.subr.mxu0 0.0
    %1184 = vmatpush1.msra.mxu0 0.0
    %1185 = vmatprep.subr.mxu0 0.0
    %1186 = vmatpush1.msra.mxu0 0.0
    %1187 = vmatprep.subr.mxu0 0.0
    %1188 = vmatpush1.msra.mxu0 0.0
    %1189 = vmatprep.subr.mxu0 0.0
    %1190 = vmatpush1.msra.mxu0 0.0
    %1191 = vmatprep.subr.mxu0 0.0
    %1192 = vmatpush1.msra.mxu0 0.0
    %1193 = vmatprep.subr.mxu0 0.0
    %1194 = vmatpush1.msra.mxu0 0.0
    %1195 = vmatprep.subr.mxu0 0.0
    %1196 = vmatpush1.msra.mxu0 0.0
    %1197 = vmatprep.subr.mxu0 0.0
    %1198 = vmatpush1.msra.mxu0 0.0
    %1199 = vmatprep.subr.mxu0 0.0
    %1200 = vmatpush1.msra.mxu0 0.0
    %1201 = vmatprep.subr.mxu0 0.0
    %1202 = vmatpush1.msra.mxu0 0.0
    %1203 = vmatprep.subr.mxu0 0.0
    %1204 = vmatpush1.msra.mxu0 0.0
    %1205 = vmatprep.subr.mxu0 0.0
    %1206 = vmatpush1.msra.mxu0 0.0
    %1207 = vmatprep.mubr.f32.mxu0 0.0
    %1208 = vmatmul.mubr.f32.gmra.mrb[0].mxu0 %v786
    %v1209 = vpop.f32.mrb[0].mxu0
    %v1210 = vadd.f32 %v747, %v1209
    %v1211 = vpop.f32.mrb[0].mxu0
    %v1212 = vadd.f32 %v751, %v1211
    %1213 = vdwg.mxu0
    %1214 = vmatprep.subr.mxu0 %v681
    %1215 = vmatpush1.msra.mxu0 %v680
    %1216 = vmatprep.subr.mxu0 %v697
    %1217 = vmatpush1.msra.mxu0 %v696
    %1218 = vmatprep.subr.mxu0 0.0
    %1219 = vmatpush1.msra.mxu0 0.0
    %1220 = vmatprep.subr.mxu0 0.0
    %1221 = vmatpush1.msra.mxu0 0.0
    %1222 = vmatprep.subr.mxu0 0.0
    %1223 = vmatpush1.msra.mxu0 0.0
    %1224 = vmatprep.subr.mxu0 0.0
    %1225 = vmatpush1.msra.mxu0 0.0
    %1226 = vmatprep.subr.mxu0 0.0
    %1227 = vmatpush1.msra.mxu0 0.0
    %1228 = vmatprep.subr.mxu0 0.0
    %1229 = vmatpush1.msra.mxu0 0.0
    %1230 = vmatprep.subr.mxu0 0.0
    %1231 = vmatpush1.msra.mxu0 0.0
    %1232 = vmatprep.subr.mxu0 0.0
    %1233 = vmatpush1.msra.mxu0 0.0
    %1234 = vmatprep.subr.mxu0 0.0
    %1235 = vmatpush1.msra.mxu0 0.0
    %1236 = vmatprep.subr.mxu0 0.0
    %1237 = vmatpush1.msra.mxu0 0.0
    %1238 = vmatprep.subr.mxu0 0.0
    %1239 = vmatpush1.msra.mxu0 0.0
    %1240 = vmatprep.subr.mxu0 0.0
    %1241 = vmatpush1.msra.mxu0 0.0
    %1242 = vmatprep.subr.mxu0 0.0
    %1243 = vmatpush1.msra.mxu0 0.0
    %1244 = vmatprep.subr.mxu0 0.0
    %1245 = vmatpush1.msra.mxu0 0.0
    %1246 = vmatprep.subr.mxu0 0.0
    %1247 = vmatpush1.msra.mxu0 0.0
    %1248 = vmatprep.subr.mxu0 0.0
    %1249 = vmatpush1.msra.mxu0 0.0
    %1250 = vmatprep.subr.mxu0 0.0
    %1251 = vmatpush1.msra.mxu0 0.0
    %1252 = vmatprep.subr.mxu0 0.0
    %1253 = vmatpush1.msra.mxu0 0.0
    %1254 = vmatprep.subr.mxu0 0.0
    %1255 = vmatpush1.msra.mxu0 0.0
    %1256 = vmatprep.subr.mxu0 0.0
    %1257 = vmatpush1.msra.mxu0 0.0
    %1258 = vmatprep.subr.mxu0 0.0
    %1259 = vmatpush1.msra.mxu0 0.0
    %1260 = vmatprep.subr.mxu0 0.0
    %1261 = vmatpush1.msra.mxu0 0.0
    %1262 = vmatprep.subr.mxu0 0.0
    %1263 = vmatpush1.msra.mxu0 0.0
    %1264 = vmatprep.subr.mxu0 0.0
    %1265 = vmatpush1.msra.mxu0 0.0
    %1266 = vmatprep.subr.mxu0 0.0
    %1267 = vmatpush1.msra.mxu0 0.0
    %1268 = vmatprep.subr.mxu0 0.0
    %1269 = vmatpush1.msra.mxu0 0.0
    %1270 = vmatprep.subr.mxu0 0.0
    %1271 = vmatpush1.msra.mxu0 0.0
    %1272 = vmatprep.subr.mxu0 0.0
    %1273 = vmatpush1.msra.mxu0 0.0
    %1274 = vmatprep.subr.mxu0 0.0
    %1275 = vmatpush1.msra.mxu0 0.0
    %1276 = vmatprep.subr.mxu0 0.0
    %1277 = vmatpush1.msra.mxu0 0.0
    %1278 = vmatprep.mubr.f32.mxu0 0.0
    %1279 = vmatmul.mubr.f32.gmra.mrb[0].mxu0 %v786
    %v1280 = vpop.f32.mrb[0].mxu0
    %v1281 = vadd.f32 %v755, %v1280
    %v1282 = vpop.f32.mrb[0].mxu0
    %v1283 = vadd.f32 %v759, %v1282
    %1284 = vdwg.mxu0
    %1285 = vmatprep.subr.mxu0 %v683
    %1286 = vmatpush1.msra.mxu0 %v682
    %1287 = vmatprep.subr.mxu0 %v699
    %1288 = vmatpush1.msra.mxu0 %v698
    %1289 = vmatprep.subr.mxu0 0.0
    %1290 = vmatpush1.msra.mxu0 0.0
    %1291 = vmatprep.subr.mxu0 0.0
    %1292 = vmatpush1.msra.mxu0 0.0
    %1293 = vmatprep.subr.mxu0 0.0
    %1294 = vmatpush1.msra.mxu0 0.0
    %1295 = vmatprep.subr.mxu0 0.0
    %1296 = vmatpush1.msra.mxu0 0.0
    %1297 = vmatprep.subr.mxu0 0.0
    %1298 = vmatpush1.msra.mxu0 0.0
    %1299 = vmatprep.subr.mxu0 0.0
    %1300 = vmatpush1.msra.mxu0 0.0
    %1301 = vmatprep.subr.mxu0 0.0
    %1302 = vmatpush1.msra.mxu0 0.0
    %1303 = vmatprep.subr.mxu0 0.0
    %1304 = vmatpush1.msra.mxu0 0.0
    %1305 = vmatprep.subr.mxu0 0.0
    %1306 = vmatpush1.msra.mxu0 0.0
    %1307 = vmatprep.subr.mxu0 0.0
    %1308 = vmatpush1.msra.mxu0 0.0
    %1309 = vmatprep.subr.mxu0 0.0
    %1310 = vmatpush1.msra.mxu0 0.0
    %1311 = vmatprep.subr.mxu0 0.0
    %1312 = vmatpush1.msra.mxu0 0.0
    %1313 = vmatprep.subr.mxu0 0.0
    %1314 = vmatpush1.msra.mxu0 0.0
    %1315 = vmatprep.subr.mxu0 0.0
    %1316 = vmatpush1.msra.mxu0 0.0
    %1317 = vmatprep.subr.mxu0 0.0
    %1318 = vmatpush1.msra.mxu0 0.0
    %1319 = vmatprep.subr.mxu0 0.0
    %1320 = vmatpush1.msra.mxu0 0.0
    %1321 = vmatprep.subr.mxu0 0.0
    %1322 = vmatpush1.msra.mxu0 0.0
    %1323 = vmatprep.subr.mxu0 0.0
    %1324 = vmatpush1.msra.mxu0 0.0
    %1325 = vmatprep.subr.mxu0 0.0
    %1326 = vmatpush1.msra.mxu0 0.0
    %1327 = vmatprep.subr.mxu0 0.0
    %1328 = vmatpush1.msra.mxu0 0.0
    %1329 = vmatprep.subr.mxu0 0.0
    %1330 = vmatpush1.msra.mxu0 0.0
    %1331 = vmatprep.subr.mxu0 0.0
    %1332 = vmatpush1.msra.mxu0 0.0
    %1333 = vmatprep.subr.mxu0 0.0
    %1334 = vmatpush1.msra.mxu0 0.0
    %1335 = vmatprep.subr.mxu0 0.0
    %1336 = vmatpush1.msra.mxu0 0.0
    %1337 = vmatprep.subr.mxu0 0.0
    %1338 = vmatpush1.msra.mxu0 0.0
    %1339 = vmatprep.subr.mxu0 0.0
    %1340 = vmatpush1.msra.mxu0 0.0
    %1341 = vmatprep.subr.mxu0 0.0
    %1342 = vmatpush1.msra.mxu0 0.0
    %1343 = vmatprep.subr.mxu0 0.0
    %1344 = vmatpush1.msra.mxu0 0.0
    %1345 = vmatprep.subr.mxu0 0.0
    %1346 = vmatpush1.msra.mxu0 0.0
    %1347 = vmatprep.subr.mxu0 0.0
    %1348 = vmatpush1.msra.mxu0 0.0
    %1349 = vmatprep.mubr.f32.mxu0 0.0
    %1350 = vmatmul.mubr.f32.gmra.mrb[0].mxu0 %v786
    %v1351 = vpop.f32.mrb[0].mxu0
    %v1352 = vadd.f32 %v763, %v1351
    %v1353 = vpop.f32.mrb[0].mxu0
    %v1354 = vadd.f32 %v767, %v1353
    %1355 = vdwg.mxu0
    %v1356 = vmax.f32 %v855, 0.0
    %v1357 = vmax.f32 %v857, 0.0
    %v1358 = vmax.f32 %v926, 0.0
    %v1359 = vmax.f32 %v928, 0.0
    %v1360 = vmax.f32 %v997, 0.0
    %v1361 = vmax.f32 %v999, 0.0
    %v1362 = vmax.f32 %v1068, 0.0
    %v1363 = vmax.f32 %v1070, 0.0
    %v1364 = vmax.f32 %v1139, 0.0
    %v1365 = vmax.f32 %v1141, 0.0
    %v1366 = vmax.f32 %v1210, 0.0
    %v1367 = vmax.f32 %v1212, 0.0
    %v1368 = vmax.f32 %v1281, 0.0
    %v1369 = vmax.f32 %v1283, 0.0
    %v1370 = vmax.f32 %v1352, 0.0
    %v1371 = vmax.f32 %v1354, 0.0
    %s1372 = smul.u32 8, 256
    %s1373 = smul.u32 %s1372, 8
    %s1374 = sshll.u32 %s1373, 4
    %1375 = dma.done %s153, %s1374
    %v1376 = vld [vmem:[#allocation3] sm:$0xff]
    %v1377 = vld [vmem:[#allocation3 + $0x8] sm:$0xff]
    %v1378 = vld [vmem:[#allocation3 + $0x10] sm:$0xff]
    %v1379 = vld [vmem:[#allocation3 + $0x18] sm:$0xff]
    %v1380 = vld [vmem:[#allocation3 + $0x20] sm:$0xff]
    %v1381 = vld [vmem:[#allocation3 + $0x28] sm:$0xff]
    %v1382 = vld [vmem:[#allocation3 + $0x30] sm:$0xff]
    %v1383 = vld [vmem:[#allocation3 + $0x38] sm:$0xff]
    %v1384 = vld [vmem:[#allocation3 + $0x40] sm:$0xff]
    %v1385 = vld [vmem:[#allocation3 + $0x48] sm:$0xff]
    %v1386 = vld [vmem:[#allocation3 + $0x50] sm:$0xff]
    %v1387 = vld [vmem:[#allocation3 + $0x58] sm:$0xff]
    %v1388 = vld [vmem:[#allocation3 + $0x60] sm:$0xff]
    %v1389 = vld [vmem:[#allocation3 + $0x68] sm:$0xff]
    %v1390 = vld [vmem:[#allocation3 + $0x70] sm:$0xff]
    %v1391 = vld [vmem:[#allocation3 + $0x78] sm:$0xff]
    %v1392 = vld [vmem:[#allocation3 + $0x80] sm:$0xff]
    %v1393 = vld [vmem:[#allocation3 + $0x88] sm:$0xff]
    %v1394 = vld [vmem:[#allocation3 + $0x90] sm:$0xff]
    %v1395 = vld [vmem:[#allocation3 + $0x98] sm:$0xff]
    %v1396 = vld [vmem:[#allocation3 + $0xa0] sm:$0xff]
    %v1397 = vld [vmem:[#allocation3 + $0xa8] sm:$0xff]
    %v1398 = vld [vmem:[#allocation3 + $0xb0] sm:$0xff]
    %v1399 = vld [vmem:[#allocation3 + $0xb8] sm:$0xff]
    %v1400 = vld [vmem:[#allocation3 + $0xc0] sm:$0xff]
    %v1401 = vld [vmem:[#allocation3 + $0xc8] sm:$0xff]
    %v1402 = vld [vmem:[#allocation3 + $0xd0] sm:$0xff]
    %v1403 = vld [vmem:[#allocation3 + $0xd8] sm:$0xff]
    %v1404 = vld [vmem:[#allocation3 + $0xe0] sm:$0xff]
    %v1405 = vld [vmem:[#allocation3 + $0xe8] sm:$0xff]
    %v1406 = vld [vmem:[#allocation3 + $0xf0] sm:$0xff]
    %v1407 = vld [vmem:[#allocation3 + $0xf8] sm:$0xff]
    %v1408 = vld [vmem:[#allocation3 + $0x100] sm:$0xff]
    %v1409 = vld [vmem:[#allocation3 + $0x108] sm:$0xff]
    %v1410 = vld [vmem:[#allocation3 + $0x110] sm:$0xff]
    %v1411 = vld [vmem:[#allocation3 + $0x118] sm:$0xff]
    %v1412 = vld [vmem:[#allocation3 + $0x120] sm:$0xff]
    %v1413 = vld [vmem:[#allocation3 + $0x128] sm:$0xff]
    %v1414 = vld [vmem:[#allocation3 + $0x130] sm:$0xff]
    %v1415 = vld [vmem:[#allocation3 + $0x138] sm:$0xff]
    %v1416 = vld [vmem:[#allocation3 + $0x140] sm:$0xff]
    %v1417 = vld [vmem:[#allocation3 + $0x148] sm:$0xff]
    %v1418 = vld [vmem:[#allocation3 + $0x150] sm:$0xff]
    %v1419 = vld [vmem:[#allocation3 + $0x158] sm:$0xff]
    %v1420 = vld [vmem:[#allocation3 + $0x160] sm:$0xff]
    %v1421 = vld [vmem:[#allocation3 + $0x168] sm:$0xff]
    %v1422 = vld [vmem:[#allocation3 + $0x170] sm:$0xff]
    %v1423 = vld [vmem:[#allocation3 + $0x178] sm:$0xff]
    %v1424 = vld [vmem:[#allocation3 + $0x180] sm:$0xff]
    %v1425 = vld [vmem:[#allocation3 + $0x188] sm:$0xff]
    %v1426 = vld [vmem:[#allocation3 + $0x190] sm:$0xff]
    %v1427 = vld [vmem:[#allocation3 + $0x198] sm:$0xff]
    %v1428 = vld [vmem:[#allocation3 + $0x1a0] sm:$0xff]
    %v1429 = vld [vmem:[#allocation3 + $0x1a8] sm:$0xff]
    %v1430 = vld [vmem:[#allocation3 + $0x1b0] sm:$0xff]
    %v1431 = vld [vmem:[#allocation3 + $0x1b8] sm:$0xff]
    %v1432 = vld [vmem:[#allocation3 + $0x1c0] sm:$0xff]
    %v1433 = vld [vmem:[#allocation3 + $0x1c8] sm:$0xff]
    %v1434 = vld [vmem:[#allocation3 + $0x1d0] sm:$0xff]
    %v1435 = vld [vmem:[#allocation3 + $0x1d8] sm:$0xff]
    %v1436 = vld [vmem:[#allocation3 + $0x1e0] sm:$0xff]
    %v1437 = vld [vmem:[#allocation3 + $0x1e8] sm:$0xff]
    %v1438 = vld [vmem:[#allocation3 + $0x1f0] sm:$0xff]
    %v1439 = vld [vmem:[#allocation3 + $0x1f8] sm:$0xff]
    %v1440 = vld [vmem:[#allocation3 + $0x200] sm:$0xff]
    %v1441 = vld [vmem:[#allocation3 + $0x208] sm:$0xff]
    %v1442 = vld [vmem:[#allocation3 + $0x210] sm:$0xff]
    %v1443 = vld [vmem:[#allocation3 + $0x218] sm:$0xff]
    %v1444 = vld [vmem:[#allocation3 + $0x220] sm:$0xff]
    %v1445 = vld [vmem:[#allocation3 + $0x228] sm:$0xff]
    %v1446 = vld [vmem:[#allocation3 + $0x230] sm:$0xff]
    %v1447 = vld [vmem:[#allocation3 + $0x238] sm:$0xff]
    %v1448 = vld [vmem:[#allocation3 + $0x240] sm:$0xff]
    %v1449 = vld [vmem:[#allocation3 + $0x248] sm:$0xff]
    %v1450 = vld [vmem:[#allocation3 + $0x250] sm:$0xff]
    %v1451 = vld [vmem:[#allocation3 + $0x258] sm:$0xff]
    %v1452 = vld [vmem:[#allocation3 + $0x260] sm:$0xff]
    %v1453 = vld [vmem:[#allocation3 + $0x268] sm:$0xff]
    %v1454 = vld [vmem:[#allocation3 + $0x270] sm:$0xff]
    %v1455 = vld [vmem:[#allocation3 + $0x278] sm:$0xff]
    %v1456 = vld [vmem:[#allocation3 + $0x280] sm:$0xff]
    %v1457 = vld [vmem:[#allocation3 + $0x288] sm:$0xff]
    %v1458 = vld [vmem:[#allocation3 + $0x290] sm:$0xff]
    %v1459 = vld [vmem:[#allocation3 + $0x298] sm:$0xff]
    %v1460 = vld [vmem:[#allocation3 + $0x2a0] sm:$0xff]
    %v1461 = vld [vmem:[#allocation3 + $0x2a8] sm:$0xff]
    %v1462 = vld [vmem:[#allocation3 + $0x2b0] sm:$0xff]
    %v1463 = vld [vmem:[#allocation3 + $0x2b8] sm:$0xff]
    %v1464 = vld [vmem:[#allocation3 + $0x2c0] sm:$0xff]
    %v1465 = vld [vmem:[#allocation3 + $0x2c8] sm:$0xff]
    %v1466 = vld [vmem:[#allocation3 + $0x2d0] sm:$0xff]
    %v1467 = vld [vmem:[#allocation3 + $0x2d8] sm:$0xff]
    %v1468 = vld [vmem:[#allocation3 + $0x2e0] sm:$0xff]
    %v1469 = vld [vmem:[#allocation3 + $0x2e8] sm:$0xff]
    %v1470 = vld [vmem:[#allocation3 + $0x2f0] sm:$0xff]
    %v1471 = vld [vmem:[#allocation3 + $0x2f8] sm:$0xff]
    %v1472 = vld [vmem:[#allocation3 + $0x300] sm:$0xff]
    %v1473 = vld [vmem:[#allocation3 + $0x308] sm:$0xff]
    %v1474 = vld [vmem:[#allocation3 + $0x310] sm:$0xff]
    %v1475 = vld [vmem:[#allocation3 + $0x318] sm:$0xff]
    %v1476 = vld [vmem:[#allocation3 + $0x320] sm:$0xff]
    %v1477 = vld [vmem:[#allocation3 + $0x328] sm:$0xff]
    %v1478 = vld [vmem:[#allocation3 + $0x330] sm:$0xff]
    %v1479 = vld [vmem:[#allocation3 + $0x338] sm:$0xff]
    %v1480 = vld [vmem:[#allocation3 + $0x340] sm:$0xff]
    %v1481 = vld [vmem:[#allocation3 + $0x348] sm:$0xff]
    %v1482 = vld [vmem:[#allocation3 + $0x350] sm:$0xff]
    %v1483 = vld [vmem:[#allocation3 + $0x358] sm:$0xff]
    %v1484 = vld [vmem:[#allocation3 + $0x360] sm:$0xff]
    %v1485 = vld [vmem:[#allocation3 + $0x368] sm:$0xff]
    %v1486 = vld [vmem:[#allocation3 + $0x370] sm:$0xff]
    %v1487 = vld [vmem:[#allocation3 + $0x378] sm:$0xff]
    %v1488 = vld [vmem:[#allocation3 + $0x380] sm:$0xff]
    %v1489 = vld [vmem:[#allocation3 + $0x388] sm:$0xff]
    %v1490 = vld [vmem:[#allocation3 + $0x390] sm:$0xff]
    %v1491 = vld [vmem:[#allocation3 + $0x398] sm:$0xff]
    %v1492 = vld [vmem:[#allocation3 + $0x3a0] sm:$0xff]
    %v1493 = vld [vmem:[#allocation3 + $0x3a8] sm:$0xff]
    %v1494 = vld [vmem:[#allocation3 + $0x3b0] sm:$0xff]
    %v1495 = vld [vmem:[#allocation3 + $0x3b8] sm:$0xff]
    %v1496 = vld [vmem:[#allocation3 + $0x3c0] sm:$0xff]
    %v1497 = vld [vmem:[#allocation3 + $0x3c8] sm:$0xff]
    %v1498 = vld [vmem:[#allocation3 + $0x3d0] sm:$0xff]
    %v1499 = vld [vmem:[#allocation3 + $0x3d8] sm:$0xff]
    %v1500 = vld [vmem:[#allocation3 + $0x3e0] sm:$0xff]
    %v1501 = vld [vmem:[#allocation3 + $0x3e8] sm:$0xff]
    %v1502 = vld [vmem:[#allocation3 + $0x3f0] sm:$0xff]
    %v1503 = vld [vmem:[#allocation3 + $0x3f8] sm:$0xff]
    %v1504 = vld [vmem:[#allocation3 + $0x400] sm:$0xff]
    %v1505 = vld [vmem:[#allocation3 + $0x408] sm:$0xff]
    %v1506 = vld [vmem:[#allocation3 + $0x410] sm:$0xff]
    %v1507 = vld [vmem:[#allocation3 + $0x418] sm:$0xff]
    %v1508 = vld [vmem:[#allocation3 + $0x420] sm:$0xff]
    %v1509 = vld [vmem:[#allocation3 + $0x428] sm:$0xff]
    %v1510 = vld [vmem:[#allocation3 + $0x430] sm:$0xff]
    %v1511 = vld [vmem:[#allocation3 + $0x438] sm:$0xff]
    %v1512 = vld [vmem:[#allocation3 + $0x440] sm:$0xff]
    %v1513 = vld [vmem:[#allocation3 + $0x448] sm:$0xff]
    %v1514 = vld [vmem:[#allocation3 + $0x450] sm:$0xff]
    %v1515 = vld [vmem:[#allocation3 + $0x458] sm:$0xff]
    %v1516 = vld [vmem:[#allocation3 + $0x460] sm:$0xff]
    %v1517 = vld [vmem:[#allocation3 + $0x468] sm:$0xff]
    %v1518 = vld [vmem:[#allocation3 + $0x470] sm:$0xff]
    %v1519 = vld [vmem:[#allocation3 + $0x478] sm:$0xff]
    %v1520 = vld [vmem:[#allocation3 + $0x480] sm:$0xff]
    %v1521 = vld [vmem:[#allocation3 + $0x488] sm:$0xff]
    %v1522 = vld [vmem:[#allocation3 + $0x490] sm:$0xff]
    %v1523 = vld [vmem:[#allocation3 + $0x498] sm:$0xff]
    %v1524 = vld [vmem:[#allocation3 + $0x4a0] sm:$0xff]
    %v1525 = vld [vmem:[#allocation3 + $0x4a8] sm:$0xff]
    %v1526 = vld [vmem:[#allocation3 + $0x4b0] sm:$0xff]
    %v1527 = vld [vmem:[#allocation3 + $0x4b8] sm:$0xff]
    %v1528 = vld [vmem:[#allocation3 + $0x4c0] sm:$0xff]
    %v1529 = vld [vmem:[#allocation3 + $0x4c8] sm:$0xff]
    %v1530 = vld [vmem:[#allocation3 + $0x4d0] sm:$0xff]
    %v1531 = vld [vmem:[#allocation3 + $0x4d8] sm:$0xff]
    %v1532 = vld [vmem:[#allocation3 + $0x4e0] sm:$0xff]
    %v1533 = vld [vmem:[#allocation3 + $0x4e8] sm:$0xff]
    %v1534 = vld [vmem:[#allocation3 + $0x4f0] sm:$0xff]
    %v1535 = vld [vmem:[#allocation3 + $0x4f8] sm:$0xff]
    %v1536 = vld [vmem:[#allocation3 + $0x500] sm:$0xff]
    %v1537 = vld [vmem:[#allocation3 + $0x508] sm:$0xff]
    %v1538 = vld [vmem:[#allocation3 + $0x510] sm:$0xff]
    %v1539 = vld [vmem:[#allocation3 + $0x518] sm:$0xff]
    %v1540 = vld [vmem:[#allocation3 + $0x520] sm:$0xff]
    %v1541 = vld [vmem:[#allocation3 + $0x528] sm:$0xff]
    %v1542 = vld [vmem:[#allocation3 + $0x530] sm:$0xff]
    %v1543 = vld [vmem:[#allocation3 + $0x538] sm:$0xff]
    %v1544 = vld [vmem:[#allocation3 + $0x540] sm:$0xff]
    %v1545 = vld [vmem:[#allocation3 + $0x548] sm:$0xff]
    %v1546 = vld [vmem:[#allocation3 + $0x550] sm:$0xff]
    %v1547 = vld [vmem:[#allocation3 + $0x558] sm:$0xff]
    %v1548 = vld [vmem:[#allocation3 + $0x560] sm:$0xff]
    %v1549 = vld [vmem:[#allocation3 + $0x568] sm:$0xff]
    %v1550 = vld [vmem:[#allocation3 + $0x570] sm:$0xff]
    %v1551 = vld [vmem:[#allocation3 + $0x578] sm:$0xff]
    %v1552 = vld [vmem:[#allocation3 + $0x580] sm:$0xff]
    %v1553 = vld [vmem:[#allocation3 + $0x588] sm:$0xff]
    %v1554 = vld [vmem:[#allocation3 + $0x590] sm:$0xff]
    %v1555 = vld [vmem:[#allocation3 + $0x598] sm:$0xff]
    %v1556 = vld [vmem:[#allocation3 + $0x5a0] sm:$0xff]
    %v1557 = vld [vmem:[#allocation3 + $0x5a8] sm:$0xff]
    %v1558 = vld [vmem:[#allocation3 + $0x5b0] sm:$0xff]
    %v1559 = vld [vmem:[#allocation3 + $0x5b8] sm:$0xff]
    %v1560 = vld [vmem:[#allocation3 + $0x5c0] sm:$0xff]
    %v1561 = vld [vmem:[#allocation3 + $0x5c8] sm:$0xff]
    %v1562 = vld [vmem:[#allocation3 + $0x5d0] sm:$0xff]
    %v1563 = vld [vmem:[#allocation3 + $0x5d8] sm:$0xff]
    %v1564 = vld [vmem:[#allocation3 + $0x5e0] sm:$0xff]
    %v1565 = vld [vmem:[#allocation3 + $0x5e8] sm:$0xff]
    %v1566 = vld [vmem:[#allocation3 + $0x5f0] sm:$0xff]
    %v1567 = vld [vmem:[#allocation3 + $0x5f8] sm:$0xff]
    %v1568 = vld [vmem:[#allocation3 + $0x600] sm:$0xff]
    %v1569 = vld [vmem:[#allocation3 + $0x608] sm:$0xff]
    %v1570 = vld [vmem:[#allocation3 + $0x610] sm:$0xff]
    %v1571 = vld [vmem:[#allocation3 + $0x618] sm:$0xff]
    %v1572 = vld [vmem:[#allocation3 + $0x620] sm:$0xff]
    %v1573 = vld [vmem:[#allocation3 + $0x628] sm:$0xff]
    %v1574 = vld [vmem:[#allocation3 + $0x630] sm:$0xff]
    %v1575 = vld [vmem:[#allocation3 + $0x638] sm:$0xff]
    %v1576 = vld [vmem:[#allocation3 + $0x640] sm:$0xff]
    %v1577 = vld [vmem:[#allocation3 + $0x648] sm:$0xff]
    %v1578 = vld [vmem:[#allocation3 + $0x650] sm:$0xff]
    %v1579 = vld [vmem:[#allocation3 + $0x658] sm:$0xff]
    %v1580 = vld [vmem:[#allocation3 + $0x660] sm:$0xff]
    %v1581 = vld [vmem:[#allocation3 + $0x668] sm:$0xff]
    %v1582 = vld [vmem:[#allocation3 + $0x670] sm:$0xff]
    %v1583 = vld [vmem:[#allocation3 + $0x678] sm:$0xff]
    %v1584 = vld [vmem:[#allocation3 + $0x680] sm:$0xff]
    %v1585 = vld [vmem:[#allocation3 + $0x688] sm:$0xff]
    %v1586 = vld [vmem:[#allocation3 + $0x690] sm:$0xff]
    %v1587 = vld [vmem:[#allocation3 + $0x698] sm:$0xff]
    %v1588 = vld [vmem:[#allocation3 + $0x6a0] sm:$0xff]
    %v1589 = vld [vmem:[#allocation3 + $0x6a8] sm:$0xff]
    %v1590 = vld [vmem:[#allocation3 + $0x6b0] sm:$0xff]
    %v1591 = vld [vmem:[#allocation3 + $0x6b8] sm:$0xff]
    %v1592 = vld [vmem:[#allocation3 + $0x6c0] sm:$0xff]
    %v1593 = vld [vmem:[#allocation3 + $0x6c8] sm:$0xff]
    %v1594 = vld [vmem:[#allocation3 + $0x6d0] sm:$0xff]
    %v1595 = vld [vmem:[#allocation3 + $0x6d8] sm:$0xff]
    %v1596 = vld [vmem:[#allocation3 + $0x6e0] sm:$0xff]
    %v1597 = vld [vmem:[#allocation3 + $0x6e8] sm:$0xff]
    %v1598 = vld [vmem:[#allocation3 + $0x6f0] sm:$0xff]
    %v1599 = vld [vmem:[#allocation3 + $0x6f8] sm:$0xff]
    %v1600 = vld [vmem:[#allocation3 + $0x700] sm:$0xff]
    %v1601 = vld [vmem:[#allocation3 + $0x708] sm:$0xff]
    %v1602 = vld [vmem:[#allocation3 + $0x710] sm:$0xff]
    %v1603 = vld [vmem:[#allocation3 + $0x718] sm:$0xff]
    %v1604 = vld [vmem:[#allocation3 + $0x720] sm:$0xff]
    %v1605 = vld [vmem:[#allocation3 + $0x728] sm:$0xff]
    %v1606 = vld [vmem:[#allocation3 + $0x730] sm:$0xff]
    %v1607 = vld [vmem:[#allocation3 + $0x738] sm:$0xff]
    %v1608 = vld [vmem:[#allocation3 + $0x740] sm:$0xff]
    %v1609 = vld [vmem:[#allocation3 + $0x748] sm:$0xff]
    %v1610 = vld [vmem:[#allocation3 + $0x750] sm:$0xff]
    %v1611 = vld [vmem:[#allocation3 + $0x758] sm:$0xff]
    %v1612 = vld [vmem:[#allocation3 + $0x760] sm:$0xff]
    %v1613 = vld [vmem:[#allocation3 + $0x768] sm:$0xff]
    %v1614 = vld [vmem:[#allocation3 + $0x770] sm:$0xff]
    %v1615 = vld [vmem:[#allocation3 + $0x778] sm:$0xff]
    %v1616 = vld [vmem:[#allocation3 + $0x780] sm:$0xff]
    %v1617 = vld [vmem:[#allocation3 + $0x788] sm:$0xff]
    %v1618 = vld [vmem:[#allocation3 + $0x790] sm:$0xff]
    %v1619 = vld [vmem:[#allocation3 + $0x798] sm:$0xff]
    %v1620 = vld [vmem:[#allocation3 + $0x7a0] sm:$0xff]
    %v1621 = vld [vmem:[#allocation3 + $0x7a8] sm:$0xff]
    %v1622 = vld [vmem:[#allocation3 + $0x7b0] sm:$0xff]
    %v1623 = vld [vmem:[#allocation3 + $0x7b8] sm:$0xff]
    %v1624 = vld [vmem:[#allocation3 + $0x7c0] sm:$0xff]
    %v1625 = vld [vmem:[#allocation3 + $0x7c8] sm:$0xff]
    %v1626 = vld [vmem:[#allocation3 + $0x7d0] sm:$0xff]
    %v1627 = vld [vmem:[#allocation3 + $0x7d8] sm:$0xff]
    %v1628 = vld [vmem:[#allocation3 + $0x7e0] sm:$0xff]
    %v1629 = vld [vmem:[#allocation3 + $0x7e8] sm:$0xff]
    %v1630 = vld [vmem:[#allocation3 + $0x7f0] sm:$0xff]
    %v1631 = vld [vmem:[#allocation3 + $0x7f8] sm:$0xff]
    %v1632 = vld [vmem:[#allocation3 + $0x800] sm:$0xff]
    %v1633 = vld [vmem:[#allocation3 + $0x808] sm:$0xff]
    %v1634 = vld [vmem:[#allocation3 + $0x810] sm:$0xff]
    %v1635 = vld [vmem:[#allocation3 + $0x818] sm:$0xff]
    %v1636 = vld [vmem:[#allocation3 + $0x820] sm:$0xff]
    %v1637 = vld [vmem:[#allocation3 + $0x828] sm:$0xff]
    %v1638 = vld [vmem:[#allocation3 + $0x830] sm:$0xff]
    %v1639 = vld [vmem:[#allocation3 + $0x838] sm:$0xff]
    %v1640 = vld [vmem:[#allocation3 + $0x840] sm:$0xff]
    %v1641 = vld [vmem:[#allocation3 + $0x848] sm:$0xff]
    %v1642 = vld [vmem:[#allocation3 + $0x850] sm:$0xff]
    %v1643 = vld [vmem:[#allocation3 + $0x858] sm:$0xff]
    %v1644 = vld [vmem:[#allocation3 + $0x860] sm:$0xff]
    %v1645 = vld [vmem:[#allocation3 + $0x868] sm:$0xff]
    %v1646 = vld [vmem:[#allocation3 + $0x870] sm:$0xff]
    %v1647 = vld [vmem:[#allocation3 + $0x878] sm:$0xff]
    %v1648 = vld [vmem:[#allocation3 + $0x880] sm:$0xff]
    %v1649 = vld [vmem:[#allocation3 + $0x888] sm:$0xff]
    %v1650 = vld [vmem:[#allocation3 + $0x890] sm:$0xff]
    %v1651 = vld [vmem:[#allocation3 + $0x898] sm:$0xff]
    %v1652 = vld [vmem:[#allocation3 + $0x8a0] sm:$0xff]
    %v1653 = vld [vmem:[#allocation3 + $0x8a8] sm:$0xff]
    %v1654 = vld [vmem:[#allocation3 + $0x8b0] sm:$0xff]
    %v1655 = vld [vmem:[#allocation3 + $0x8b8] sm:$0xff]
    %v1656 = vld [vmem:[#allocation3 + $0x8c0] sm:$0xff]
    %v1657 = vld [vmem:[#allocation3 + $0x8c8] sm:$0xff]
    %v1658 = vld [vmem:[#allocation3 + $0x8d0] sm:$0xff]
    %v1659 = vld [vmem:[#allocation3 + $0x8d8] sm:$0xff]
    %v1660 = vld [vmem:[#allocation3 + $0x8e0] sm:$0xff]
    %v1661 = vld [vmem:[#allocation3 + $0x8e8] sm:$0xff]
    %v1662 = vld [vmem:[#allocation3 + $0x8f0] sm:$0xff]
    %v1663 = vld [vmem:[#allocation3 + $0x8f8] sm:$0xff]
    %v1664 = vld [vmem:[#allocation3 + $0x900] sm:$0xff]
    %v1665 = vld [vmem:[#allocation3 + $0x908] sm:$0xff]
    %v1666 = vld [vmem:[#allocation3 + $0x910] sm:$0xff]
    %v1667 = vld [vmem:[#allocation3 + $0x918] sm:$0xff]
    %v1668 = vld [vmem:[#allocation3 + $0x920] sm:$0xff]
    %v1669 = vld [vmem:[#allocation3 + $0x928] sm:$0xff]
    %v1670 = vld [vmem:[#allocation3 + $0x930] sm:$0xff]
    %v1671 = vld [vmem:[#allocation3 + $0x938] sm:$0xff]
    %v1672 = vld [vmem:[#allocation3 + $0x940] sm:$0xff]
    %v1673 = vld [vmem:[#allocation3 + $0x948] sm:$0xff]
    %v1674 = vld [vmem:[#allocation3 + $0x950] sm:$0xff]
    %v1675 = vld [vmem:[#allocation3 + $0x958] sm:$0xff]
    %v1676 = vld [vmem:[#allocation3 + $0x960] sm:$0xff]
    %v1677 = vld [vmem:[#allocation3 + $0x968] sm:$0xff]
    %v1678 = vld [vmem:[#allocation3 + $0x970] sm:$0xff]
    %v1679 = vld [vmem:[#allocation3 + $0x978] sm:$0xff]
    %v1680 = vld [vmem:[#allocation3 + $0x980] sm:$0xff]
    %v1681 = vld [vmem:[#allocation3 + $0x988] sm:$0xff]
    %v1682 = vld [vmem:[#allocation3 + $0x990] sm:$0xff]
    %v1683 = vld [vmem:[#allocation3 + $0x998] sm:$0xff]
    %v1684 = vld [vmem:[#allocation3 + $0x9a0] sm:$0xff]
    %v1685 = vld [vmem:[#allocation3 + $0x9a8] sm:$0xff]
    %v1686 = vld [vmem:[#allocation3 + $0x9b0] sm:$0xff]
    %v1687 = vld [vmem:[#allocation3 + $0x9b8] sm:$0xff]
    %v1688 = vld [vmem:[#allocation3 + $0x9c0] sm:$0xff]
    %v1689 = vld [vmem:[#allocation3 + $0x9c8] sm:$0xff]
    %v1690 = vld [vmem:[#allocation3 + $0x9d0] sm:$0xff]
    %v1691 = vld [vmem:[#allocation3 + $0x9d8] sm:$0xff]
    %v1692 = vld [vmem:[#allocation3 + $0x9e0] sm:$0xff]
    %v1693 = vld [vmem:[#allocation3 + $0x9e8] sm:$0xff]
    %v1694 = vld [vmem:[#allocation3 + $0x9f0] sm:$0xff]
    %v1695 = vld [vmem:[#allocation3 + $0x9f8] sm:$0xff]
    %v1696 = vld [vmem:[#allocation3 + $0xa00] sm:$0xff]
    %v1697 = vld [vmem:[#allocation3 + $0xa08] sm:$0xff]
    %v1698 = vld [vmem:[#allocation3 + $0xa10] sm:$0xff]
    %v1699 = vld [vmem:[#allocation3 + $0xa18] sm:$0xff]
    %v1700 = vld [vmem:[#allocation3 + $0xa20] sm:$0xff]
    %v1701 = vld [vmem:[#allocation3 + $0xa28] sm:$0xff]
    %v1702 = vld [vmem:[#allocation3 + $0xa30] sm:$0xff]
    %v1703 = vld [vmem:[#allocation3 + $0xa38] sm:$0xff]
    %v1704 = vld [vmem:[#allocation3 + $0xa40] sm:$0xff]
    %v1705 = vld [vmem:[#allocation3 + $0xa48] sm:$0xff]
    %v1706 = vld [vmem:[#allocation3 + $0xa50] sm:$0xff]
    %v1707 = vld [vmem:[#allocation3 + $0xa58] sm:$0xff]
    %v1708 = vld [vmem:[#allocation3 + $0xa60] sm:$0xff]
    %v1709 = vld [vmem:[#allocation3 + $0xa68] sm:$0xff]
    %v1710 = vld [vmem:[#allocation3 + $0xa70] sm:$0xff]
    %v1711 = vld [vmem:[#allocation3 + $0xa78] sm:$0xff]
    %v1712 = vld [vmem:[#allocation3 + $0xa80] sm:$0xff]
    %v1713 = vld [vmem:[#allocation3 + $0xa88] sm:$0xff]
    %v1714 = vld [vmem:[#allocation3 + $0xa90] sm:$0xff]
    %v1715 = vld [vmem:[#allocation3 + $0xa98] sm:$0xff]
    %v1716 = vld [vmem:[#allocation3 + $0xaa0] sm:$0xff]
    %v1717 = vld [vmem:[#allocation3 + $0xaa8] sm:$0xff]
    %v1718 = vld [vmem:[#allocation3 + $0xab0] sm:$0xff]
    %v1719 = vld [vmem:[#allocation3 + $0xab8] sm:$0xff]
    %v1720 = vld [vmem:[#allocation3 + $0xac0] sm:$0xff]
    %v1721 = vld [vmem:[#allocation3 + $0xac8] sm:$0xff]
    %v1722 = vld [vmem:[#allocation3 + $0xad0] sm:$0xff]
    %v1723 = vld [vmem:[#allocation3 + $0xad8] sm:$0xff]
    %v1724 = vld [vmem:[#allocation3 + $0xae0] sm:$0xff]
    %v1725 = vld [vmem:[#allocation3 + $0xae8] sm:$0xff]
    %v1726 = vld [vmem:[#allocation3 + $0xaf0] sm:$0xff]
    %v1727 = vld [vmem:[#allocation3 + $0xaf8] sm:$0xff]
    %v1728 = vld [vmem:[#allocation3 + $0xb00] sm:$0xff]
    %v1729 = vld [vmem:[#allocation3 + $0xb08] sm:$0xff]
    %v1730 = vld [vmem:[#allocation3 + $0xb10] sm:$0xff]
    %v1731 = vld [vmem:[#allocation3 + $0xb18] sm:$0xff]
    %v1732 = vld [vmem:[#allocation3 + $0xb20] sm:$0xff]
    %v1733 = vld [vmem:[#allocation3 + $0xb28] sm:$0xff]
    %v1734 = vld [vmem:[#allocation3 + $0xb30] sm:$0xff]
    %v1735 = vld [vmem:[#allocation3 + $0xb38] sm:$0xff]
    %v1736 = vld [vmem:[#allocation3 + $0xb40] sm:$0xff]
    %v1737 = vld [vmem:[#allocation3 + $0xb48] sm:$0xff]
    %v1738 = vld [vmem:[#allocation3 + $0xb50] sm:$0xff]
    %v1739 = vld [vmem:[#allocation3 + $0xb58] sm:$0xff]
    %v1740 = vld [vmem:[#allocation3 + $0xb60] sm:$0xff]
    %v1741 = vld [vmem:[#allocation3 + $0xb68] sm:$0xff]
    %v1742 = vld [vmem:[#allocation3 + $0xb70] sm:$0xff]
    %v1743 = vld [vmem:[#allocation3 + $0xb78] sm:$0xff]
    %v1744 = vld [vmem:[#allocation3 + $0xb80] sm:$0xff]
    %v1745 = vld [vmem:[#allocation3 + $0xb88] sm:$0xff]
    %v1746 = vld [vmem:[#allocation3 + $0xb90] sm:$0xff]
    %v1747 = vld [vmem:[#allocation3 + $0xb98] sm:$0xff]
    %v1748 = vld [vmem:[#allocation3 + $0xba0] sm:$0xff]
    %v1749 = vld [vmem:[#allocation3 + $0xba8] sm:$0xff]
    %v1750 = vld [vmem:[#allocation3 + $0xbb0] sm:$0xff]
    %v1751 = vld [vmem:[#allocation3 + $0xbb8] sm:$0xff]
    %v1752 = vld [vmem:[#allocation3 + $0xbc0] sm:$0xff]
    %v1753 = vld [vmem:[#allocation3 + $0xbc8] sm:$0xff]
    %v1754 = vld [vmem:[#allocation3 + $0xbd0] sm:$0xff]
    %v1755 = vld [vmem:[#allocation3 + $0xbd8] sm:$0xff]
    %v1756 = vld [vmem:[#allocation3 + $0xbe0] sm:$0xff]
    %v1757 = vld [vmem:[#allocation3 + $0xbe8] sm:$0xff]
    %v1758 = vld [vmem:[#allocation3 + $0xbf0] sm:$0xff]
    %v1759 = vld [vmem:[#allocation3 + $0xbf8] sm:$0xff]
    %v1760 = vld [vmem:[#allocation3 + $0xc00] sm:$0xff]
    %v1761 = vld [vmem:[#allocation3 + $0xc08] sm:$0xff]
    %v1762 = vld [vmem:[#allocation3 + $0xc10] sm:$0xff]
    %v1763 = vld [vmem:[#allocation3 + $0xc18] sm:$0xff]
    %v1764 = vld [vmem:[#allocation3 + $0xc20] sm:$0xff]
    %v1765 = vld [vmem:[#allocation3 + $0xc28] sm:$0xff]
    %v1766 = vld [vmem:[#allocation3 + $0xc30] sm:$0xff]
    %v1767 = vld [vmem:[#allocation3 + $0xc38] sm:$0xff]
    %v1768 = vld [vmem:[#allocation3 + $0xc40] sm:$0xff]
    %v1769 = vld [vmem:[#allocation3 + $0xc48] sm:$0xff]
    %v1770 = vld [vmem:[#allocation3 + $0xc50] sm:$0xff]
    %v1771 = vld [vmem:[#allocation3 + $0xc58] sm:$0xff]
    %v1772 = vld [vmem:[#allocation3 + $0xc60] sm:$0xff]
    %v1773 = vld [vmem:[#allocation3 + $0xc68] sm:$0xff]
    %v1774 = vld [vmem:[#allocation3 + $0xc70] sm:$0xff]
    %v1775 = vld [vmem:[#allocation3 + $0xc78] sm:$0xff]
    %v1776 = vld [vmem:[#allocation3 + $0xc80] sm:$0xff]
    %v1777 = vld [vmem:[#allocation3 + $0xc88] sm:$0xff]
    %v1778 = vld [vmem:[#allocation3 + $0xc90] sm:$0xff]
    %v1779 = vld [vmem:[#allocation3 + $0xc98] sm:$0xff]
    %v1780 = vld [vmem:[#allocation3 + $0xca0] sm:$0xff]
    %v1781 = vld [vmem:[#allocation3 + $0xca8] sm:$0xff]
    %v1782 = vld [vmem:[#allocation3 + $0xcb0] sm:$0xff]
    %v1783 = vld [vmem:[#allocation3 + $0xcb8] sm:$0xff]
    %v1784 = vld [vmem:[#allocation3 + $0xcc0] sm:$0xff]
    %v1785 = vld [vmem:[#allocation3 + $0xcc8] sm:$0xff]
    %v1786 = vld [vmem:[#allocation3 + $0xcd0] sm:$0xff]
    %v1787 = vld [vmem:[#allocation3 + $0xcd8] sm:$0xff]
    %v1788 = vld [vmem:[#allocation3 + $0xce0] sm:$0xff]
    %v1789 = vld [vmem:[#allocation3 + $0xce8] sm:$0xff]
    %v1790 = vld [vmem:[#allocation3 + $0xcf0] sm:$0xff]
    %v1791 = vld [vmem:[#allocation3 + $0xcf8] sm:$0xff]
    %v1792 = vld [vmem:[#allocation3 + $0xd00] sm:$0xff]
    %v1793 = vld [vmem:[#allocation3 + $0xd08] sm:$0xff]
    %v1794 = vld [vmem:[#allocation3 + $0xd10] sm:$0xff]
    %v1795 = vld [vmem:[#allocation3 + $0xd18] sm:$0xff]
    %v1796 = vld [vmem:[#allocation3 + $0xd20] sm:$0xff]
    %v1797 = vld [vmem:[#allocation3 + $0xd28] sm:$0xff]
    %v1798 = vld [vmem:[#allocation3 + $0xd30] sm:$0xff]
    %v1799 = vld [vmem:[#allocation3 + $0xd38] sm:$0xff]
    %v1800 = vld [vmem:[#allocation3 + $0xd40] sm:$0xff]
    %v1801 = vld [vmem:[#allocation3 + $0xd48] sm:$0xff]
    %v1802 = vld [vmem:[#allocation3 + $0xd50] sm:$0xff]
    %v1803 = vld [vmem:[#allocation3 + $0xd58] sm:$0xff]
    %v1804 = vld [vmem:[#allocation3 + $0xd60] sm:$0xff]
    %v1805 = vld [vmem:[#allocation3 + $0xd68] sm:$0xff]
    %v1806 = vld [vmem:[#allocation3 + $0xd70] sm:$0xff]
    %v1807 = vld [vmem:[#allocation3 + $0xd78] sm:$0xff]
    %v1808 = vld [vmem:[#allocation3 + $0xd80] sm:$0xff]
    %v1809 = vld [vmem:[#allocation3 + $0xd88] sm:$0xff]
    %v1810 = vld [vmem:[#allocation3 + $0xd90] sm:$0xff]
    %v1811 = vld [vmem:[#allocation3 + $0xd98] sm:$0xff]
    %v1812 = vld [vmem:[#allocation3 + $0xda0] sm:$0xff]
    %v1813 = vld [vmem:[#allocation3 + $0xda8] sm:$0xff]
    %v1814 = vld [vmem:[#allocation3 + $0xdb0] sm:$0xff]
    %v1815 = vld [vmem:[#allocation3 + $0xdb8] sm:$0xff]
    %v1816 = vld [vmem:[#allocation3 + $0xdc0] sm:$0xff]
    %v1817 = vld [vmem:[#allocation3 + $0xdc8] sm:$0xff]
    %v1818 = vld [vmem:[#allocation3 + $0xdd0] sm:$0xff]
    %v1819 = vld [vmem:[#allocation3 + $0xdd8] sm:$0xff]
    %v1820 = vld [vmem:[#allocation3 + $0xde0] sm:$0xff]
    %v1821 = vld [vmem:[#allocation3 + $0xde8] sm:$0xff]
    %v1822 = vld [vmem:[#allocation3 + $0xdf0] sm:$0xff]
    %v1823 = vld [vmem:[#allocation3 + $0xdf8] sm:$0xff]
    %v1824 = vld [vmem:[#allocation3 + $0xe00] sm:$0xff]
    %v1825 = vld [vmem:[#allocation3 + $0xe08] sm:$0xff]
    %v1826 = vld [vmem:[#allocation3 + $0xe10] sm:$0xff]
    %v1827 = vld [vmem:[#allocation3 + $0xe18] sm:$0xff]
    %v1828 = vld [vmem:[#allocation3 + $0xe20] sm:$0xff]
    %v1829 = vld [vmem:[#allocation3 + $0xe28] sm:$0xff]
    %v1830 = vld [vmem:[#allocation3 + $0xe30] sm:$0xff]
    %v1831 = vld [vmem:[#allocation3 + $0xe38] sm:$0xff]
    %v1832 = vld [vmem:[#allocation3 + $0xe40] sm:$0xff]
    %v1833 = vld [vmem:[#allocation3 + $0xe48] sm:$0xff]
    %v1834 = vld [vmem:[#allocation3 + $0xe50] sm:$0xff]
    %v1835 = vld [vmem:[#allocation3 + $0xe58] sm:$0xff]
    %v1836 = vld [vmem:[#allocation3 + $0xe60] sm:$0xff]
    %v1837 = vld [vmem:[#allocation3 + $0xe68] sm:$0xff]
    %v1838 = vld [vmem:[#allocation3 + $0xe70] sm:$0xff]
    %v1839 = vld [vmem:[#allocation3 + $0xe78] sm:$0xff]
    %v1840 = vld [vmem:[#allocation3 + $0xe80] sm:$0xff]
    %v1841 = vld [vmem:[#allocation3 + $0xe88] sm:$0xff]
    %v1842 = vld [vmem:[#allocation3 + $0xe90] sm:$0xff]
    %v1843 = vld [vmem:[#allocation3 + $0xe98] sm:$0xff]
    %v1844 = vld [vmem:[#allocation3 + $0xea0] sm:$0xff]
    %v1845 = vld [vmem:[#allocation3 + $0xea8] sm:$0xff]
    %v1846 = vld [vmem:[#allocation3 + $0xeb0] sm:$0xff]
    %v1847 = vld [vmem:[#allocation3 + $0xeb8] sm:$0xff]
    %v1848 = vld [vmem:[#allocation3 + $0xec0] sm:$0xff]
    %v1849 = vld [vmem:[#allocation3 + $0xec8] sm:$0xff]
    %v1850 = vld [vmem:[#allocation3 + $0xed0] sm:$0xff]
    %v1851 = vld [vmem:[#allocation3 + $0xed8] sm:$0xff]
    %v1852 = vld [vmem:[#allocation3 + $0xee0] sm:$0xff]
    %v1853 = vld [vmem:[#allocation3 + $0xee8] sm:$0xff]
    %v1854 = vld [vmem:[#allocation3 + $0xef0] sm:$0xff]
    %v1855 = vld [vmem:[#allocation3 + $0xef8] sm:$0xff]
    %v1856 = vld [vmem:[#allocation3 + $0xf00] sm:$0xff]
    %v1857 = vld [vmem:[#allocation3 + $0xf08] sm:$0xff]
    %v1858 = vld [vmem:[#allocation3 + $0xf10] sm:$0xff]
    %v1859 = vld [vmem:[#allocation3 + $0xf18] sm:$0xff]
    %v1860 = vld [vmem:[#allocation3 + $0xf20] sm:$0xff]
    %v1861 = vld [vmem:[#allocation3 + $0xf28] sm:$0xff]
    %v1862 = vld [vmem:[#allocation3 + $0xf30] sm:$0xff]
    %v1863 = vld [vmem:[#allocation3 + $0xf38] sm:$0xff]
    %v1864 = vld [vmem:[#allocation3 + $0xf40] sm:$0xff]
    %v1865 = vld [vmem:[#allocation3 + $0xf48] sm:$0xff]
    %v1866 = vld [vmem:[#allocation3 + $0xf50] sm:$0xff]
    %v1867 = vld [vmem:[#allocation3 + $0xf58] sm:$0xff]
    %v1868 = vld [vmem:[#allocation3 + $0xf60] sm:$0xff]
    %v1869 = vld [vmem:[#allocation3 + $0xf68] sm:$0xff]
    %v1870 = vld [vmem:[#allocation3 + $0xf70] sm:$0xff]
    %v1871 = vld [vmem:[#allocation3 + $0xf78] sm:$0xff]
    %v1872 = vld [vmem:[#allocation3 + $0xf80] sm:$0xff]
    %v1873 = vld [vmem:[#allocation3 + $0xf88] sm:$0xff]
    %v1874 = vld [vmem:[#allocation3 + $0xf90] sm:$0xff]
    %v1875 = vld [vmem:[#allocation3 + $0xf98] sm:$0xff]
    %v1876 = vld [vmem:[#allocation3 + $0xfa0] sm:$0xff]
    %v1877 = vld [vmem:[#allocation3 + $0xfa8] sm:$0xff]
    %v1878 = vld [vmem:[#allocation3 + $0xfb0] sm:$0xff]
    %v1879 = vld [vmem:[#allocation3 + $0xfb8] sm:$0xff]
    %v1880 = vld [vmem:[#allocation3 + $0xfc0] sm:$0xff]
    %v1881 = vld [vmem:[#allocation3 + $0xfc8] sm:$0xff]
    %v1882 = vld [vmem:[#allocation3 + $0xfd0] sm:$0xff]
    %v1883 = vld [vmem:[#allocation3 + $0xfd8] sm:$0xff]
    %v1884 = vld [vmem:[#allocation3 + $0xfe0] sm:$0xff]
    %v1885 = vld [vmem:[#allocation3 + $0xfe8] sm:$0xff]
    %v1886 = vld [vmem:[#allocation3 + $0xff0] sm:$0xff]
    %v1887 = vld [vmem:[#allocation3 + $0xff8] sm:$0xff]
    %v1888 = vld [vmem:[#allocation3 + $0x1000] sm:$0xff]
    %v1889 = vld [vmem:[#allocation3 + $0x1008] sm:$0xff]
    %v1890 = vld [vmem:[#allocation3 + $0x1010] sm:$0xff]
    %v1891 = vld [vmem:[#allocation3 + $0x1018] sm:$0xff]
    %v1892 = vld [vmem:[#allocation3 + $0x1020] sm:$0xff]
    %v1893 = vld [vmem:[#allocation3 + $0x1028] sm:$0xff]
    %v1894 = vld [vmem:[#allocation3 + $0x1030] sm:$0xff]
    %v1895 = vld [vmem:[#allocation3 + $0x1038] sm:$0xff]
    %v1896 = vld [vmem:[#allocation3 + $0x1040] sm:$0xff]
    %v1897 = vld [vmem:[#allocation3 + $0x1048] sm:$0xff]
    %v1898 = vld [vmem:[#allocation3 + $0x1050] sm:$0xff]
    %v1899 = vld [vmem:[#allocation3 + $0x1058] sm:$0xff]
    %v1900 = vld [vmem:[#allocation3 + $0x1060] sm:$0xff]
    %v1901 = vld [vmem:[#allocation3 + $0x1068] sm:$0xff]
    %v1902 = vld [vmem:[#allocation3 + $0x1070] sm:$0xff]
    %v1903 = vld [vmem:[#allocation3 + $0x1078] sm:$0xff]
    %v1904 = vld [vmem:[#allocation3 + $0x1080] sm:$0xff]
    %v1905 = vld [vmem:[#allocation3 + $0x1088] sm:$0xff]
    %v1906 = vld [vmem:[#allocation3 + $0x1090] sm:$0xff]
    %v1907 = vld [vmem:[#allocation3 + $0x1098] sm:$0xff]
    %v1908 = vld [vmem:[#allocation3 + $0x10a0] sm:$0xff]
    %v1909 = vld [vmem:[#allocation3 + $0x10a8] sm:$0xff]
    %v1910 = vld [vmem:[#allocation3 + $0x10b0] sm:$0xff]
    %v1911 = vld [vmem:[#allocation3 + $0x10b8] sm:$0xff]
    %v1912 = vld [vmem:[#allocation3 + $0x10c0] sm:$0xff]
    %v1913 = vld [vmem:[#allocation3 + $0x10c8] sm:$0xff]
    %v1914 = vld [vmem:[#allocation3 + $0x10d0] sm:$0xff]
    %v1915 = vld [vmem:[#allocation3 + $0x10d8] sm:$0xff]
    %v1916 = vld [vmem:[#allocation3 + $0x10e0] sm:$0xff]
    %v1917 = vld [vmem:[#allocation3 + $0x10e8] sm:$0xff]
    %v1918 = vld [vmem:[#allocation3 + $0x10f0] sm:$0xff]
    %v1919 = vld [vmem:[#allocation3 + $0x10f8] sm:$0xff]
    %v1920 = vld [vmem:[#allocation3 + $0x1100] sm:$0xff]
    %v1921 = vld [vmem:[#allocation3 + $0x1108] sm:$0xff]
    %v1922 = vld [vmem:[#allocation3 + $0x1110] sm:$0xff]
    %v1923 = vld [vmem:[#allocation3 + $0x1118] sm:$0xff]
    %v1924 = vld [vmem:[#allocation3 + $0x1120] sm:$0xff]
    %v1925 = vld [vmem:[#allocation3 + $0x1128] sm:$0xff]
    %v1926 = vld [vmem:[#allocation3 + $0x1130] sm:$0xff]
    %v1927 = vld [vmem:[#allocation3 + $0x1138] sm:$0xff]
    %v1928 = vld [vmem:[#allocation3 + $0x1140] sm:$0xff]
    %v1929 = vld [vmem:[#allocation3 + $0x1148] sm:$0xff]
    %v1930 = vld [vmem:[#allocation3 + $0x1150] sm:$0xff]
    %v1931 = vld [vmem:[#allocation3 + $0x1158] sm:$0xff]
    %v1932 = vld [vmem:[#allocation3 + $0x1160] sm:$0xff]
    %v1933 = vld [vmem:[#allocation3 + $0x1168] sm:$0xff]
    %v1934 = vld [vmem:[#allocation3 + $0x1170] sm:$0xff]
    %v1935 = vld [vmem:[#allocation3 + $0x1178] sm:$0xff]
    %v1936 = vld [vmem:[#allocation3 + $0x1180] sm:$0xff]
    %v1937 = vld [vmem:[#allocation3 + $0x1188] sm:$0xff]
    %v1938 = vld [vmem:[#allocation3 + $0x1190] sm:$0xff]
    %v1939 = vld [vmem:[#allocation3 + $0x1198] sm:$0xff]
    %v1940 = vld [vmem:[#allocation3 + $0x11a0] sm:$0xff]
    %v1941 = vld [vmem:[#allocation3 + $0x11a8] sm:$0xff]
    %v1942 = vld [vmem:[#allocation3 + $0x11b0] sm:$0xff]
    %v1943 = vld [vmem:[#allocation3 + $0x11b8] sm:$0xff]
    %v1944 = vld [vmem:[#allocation3 + $0x11c0] sm:$0xff]
    %v1945 = vld [vmem:[#allocation3 + $0x11c8] sm:$0xff]
    %v1946 = vld [vmem:[#allocation3 + $0x11d0] sm:$0xff]
    %v1947 = vld [vmem:[#allocation3 + $0x11d8] sm:$0xff]
    %v1948 = vld [vmem:[#allocation3 + $0x11e0] sm:$0xff]
    %v1949 = vld [vmem:[#allocation3 + $0x11e8] sm:$0xff]
    %v1950 = vld [vmem:[#allocation3 + $0x11f0] sm:$0xff]
    %v1951 = vld [vmem:[#allocation3 + $0x11f8] sm:$0xff]
    %v1952 = vld [vmem:[#allocation3 + $0x1200] sm:$0xff]
    %v1953 = vld [vmem:[#allocation3 + $0x1208] sm:$0xff]
    %v1954 = vld [vmem:[#allocation3 + $0x1210] sm:$0xff]
    %v1955 = vld [vmem:[#allocation3 + $0x1218] sm:$0xff]
    %v1956 = vld [vmem:[#allocation3 + $0x1220] sm:$0xff]
    %v1957 = vld [vmem:[#allocation3 + $0x1228] sm:$0xff]
    %v1958 = vld [vmem:[#allocation3 + $0x1230] sm:$0xff]
    %v1959 = vld [vmem:[#allocation3 + $0x1238] sm:$0xff]
    %v1960 = vld [vmem:[#allocation3 + $0x1240] sm:$0xff]
    %v1961 = vld [vmem:[#allocation3 + $0x1248] sm:$0xff]
    %v1962 = vld [vmem:[#allocation3 + $0x1250] sm:$0xff]
    %v1963 = vld [vmem:[#allocation3 + $0x1258] sm:$0xff]
    %v1964 = vld [vmem:[#allocation3 + $0x1260] sm:$0xff]
    %v1965 = vld [vmem:[#allocation3 + $0x1268] sm:$0xff]
    %v1966 = vld [vmem:[#allocation3 + $0x1270] sm:$0xff]
    %v1967 = vld [vmem:[#allocation3 + $0x1278] sm:$0xff]
    %v1968 = vld [vmem:[#allocation3 + $0x1280] sm:$0xff]
    %v1969 = vld [vmem:[#allocation3 + $0x1288] sm:$0xff]
    %v1970 = vld [vmem:[#allocation3 + $0x1290] sm:$0xff]
    %v1971 = vld [vmem:[#allocation3 + $0x1298] sm:$0xff]
    %v1972 = vld [vmem:[#allocation3 + $0x12a0] sm:$0xff]
    %v1973 = vld [vmem:[#allocation3 + $0x12a8] sm:$0xff]
    %v1974 = vld [vmem:[#allocation3 + $0x12b0] sm:$0xff]
    %v1975 = vld [vmem:[#allocation3 + $0x12b8] sm:$0xff]
    %v1976 = vld [vmem:[#allocation3 + $0x12c0] sm:$0xff]
    %v1977 = vld [vmem:[#allocation3 + $0x12c8] sm:$0xff]
    %v1978 = vld [vmem:[#allocation3 + $0x12d0] sm:$0xff]
    %v1979 = vld [vmem:[#allocation3 + $0x12d8] sm:$0xff]
    %v1980 = vld [vmem:[#allocation3 + $0x12e0] sm:$0xff]
    %v1981 = vld [vmem:[#allocation3 + $0x12e8] sm:$0xff]
    %v1982 = vld [vmem:[#allocation3 + $0x12f0] sm:$0xff]
    %v1983 = vld [vmem:[#allocation3 + $0x12f8] sm:$0xff]
    %v1984 = vld [vmem:[#allocation3 + $0x1300] sm:$0xff]
    %v1985 = vld [vmem:[#allocation3 + $0x1308] sm:$0xff]
    %v1986 = vld [vmem:[#allocation3 + $0x1310] sm:$0xff]
    %v1987 = vld [vmem:[#allocation3 + $0x1318] sm:$0xff]
    %v1988 = vld [vmem:[#allocation3 + $0x1320] sm:$0xff]
    %v1989 = vld [vmem:[#allocation3 + $0x1328] sm:$0xff]
    %v1990 = vld [vmem:[#allocation3 + $0x1330] sm:$0xff]
    %v1991 = vld [vmem:[#allocation3 + $0x1338] sm:$0xff]
    %v1992 = vld [vmem:[#allocation3 + $0x1340] sm:$0xff]
    %v1993 = vld [vmem:[#allocation3 + $0x1348] sm:$0xff]
    %v1994 = vld [vmem:[#allocation3 + $0x1350] sm:$0xff]
    %v1995 = vld [vmem:[#allocation3 + $0x1358] sm:$0xff]
    %v1996 = vld [vmem:[#allocation3 + $0x1360] sm:$0xff]
    %v1997 = vld [vmem:[#allocation3 + $0x1368] sm:$0xff]
    %v1998 = vld [vmem:[#allocation3 + $0x1370] sm:$0xff]
    %v1999 = vld [vmem:[#allocation3 + $0x1378] sm:$0xff]
    %v2000 = vld [vmem:[#allocation3 + $0x1380] sm:$0xff]
    %v2001 = vld [vmem:[#allocation3 + $0x1388] sm:$0xff]
    %v2002 = vld [vmem:[#allocation3 + $0x1390] sm:$0xff]
    %v2003 = vld [vmem:[#allocation3 + $0x1398] sm:$0xff]
    %v2004 = vld [vmem:[#allocation3 + $0x13a0] sm:$0xff]
    %v2005 = vld [vmem:[#allocation3 + $0x13a8] sm:$0xff]
    %v2006 = vld [vmem:[#allocation3 + $0x13b0] sm:$0xff]
    %v2007 = vld [vmem:[#allocation3 + $0x13b8] sm:$0xff]
    %v2008 = vld [vmem:[#allocation3 + $0x13c0] sm:$0xff]
    %v2009 = vld [vmem:[#allocation3 + $0x13c8] sm:$0xff]
    %v2010 = vld [vmem:[#allocation3 + $0x13d0] sm:$0xff]
    %v2011 = vld [vmem:[#allocation3 + $0x13d8] sm:$0xff]
    %v2012 = vld [vmem:[#allocation3 + $0x13e0] sm:$0xff]
    %v2013 = vld [vmem:[#allocation3 + $0x13e8] sm:$0xff]
    %v2014 = vld [vmem:[#allocation3 + $0x13f0] sm:$0xff]
    %v2015 = vld [vmem:[#allocation3 + $0x13f8] sm:$0xff]
    %v2016 = vld [vmem:[#allocation3 + $0x1400] sm:$0xff]
    %v2017 = vld [vmem:[#allocation3 + $0x1408] sm:$0xff]
    %v2018 = vld [vmem:[#allocation3 + $0x1410] sm:$0xff]
    %v2019 = vld [vmem:[#allocation3 + $0x1418] sm:$0xff]
    %v2020 = vld [vmem:[#allocation3 + $0x1420] sm:$0xff]
    %v2021 = vld [vmem:[#allocation3 + $0x1428] sm:$0xff]
    %v2022 = vld [vmem:[#allocation3 + $0x1430] sm:$0xff]
    %v2023 = vld [vmem:[#allocation3 + $0x1438] sm:$0xff]
    %v2024 = vld [vmem:[#allocation3 + $0x1440] sm:$0xff]
    %v2025 = vld [vmem:[#allocation3 + $0x1448] sm:$0xff]
    %v2026 = vld [vmem:[#allocation3 + $0x1450] sm:$0xff]
    %v2027 = vld [vmem:[#allocation3 + $0x1458] sm:$0xff]
    %v2028 = vld [vmem:[#allocation3 + $0x1460] sm:$0xff]
    %v2029 = vld [vmem:[#allocation3 + $0x1468] sm:$0xff]
    %v2030 = vld [vmem:[#allocation3 + $0x1470] sm:$0xff]
    %v2031 = vld [vmem:[#allocation3 + $0x1478] sm:$0xff]
    %v2032 = vld [vmem:[#allocation3 + $0x1480] sm:$0xff]
    %v2033 = vld [vmem:[#allocation3 + $0x1488] sm:$0xff]
    %v2034 = vld [vmem:[#allocation3 + $0x1490] sm:$0xff]
    %v2035 = vld [vmem:[#allocation3 + $0x1498] sm:$0xff]
    %v2036 = vld [vmem:[#allocation3 + $0x14a0] sm:$0xff]
    %v2037 = vld [vmem:[#allocation3 + $0x14a8] sm:$0xff]
    %v2038 = vld [vmem:[#allocation3 + $0x14b0] sm:$0xff]
    %v2039 = vld [vmem:[#allocation3 + $0x14b8] sm:$0xff]
    %v2040 = vld [vmem:[#allocation3 + $0x14c0] sm:$0xff]
    %v2041 = vld [vmem:[#allocation3 + $0x14c8] sm:$0xff]
    %v2042 = vld [vmem:[#allocation3 + $0x14d0] sm:$0xff]
    %v2043 = vld [vmem:[#allocation3 + $0x14d8] sm:$0xff]
    %v2044 = vld [vmem:[#allocation3 + $0x14e0] sm:$0xff]
    %v2045 = vld [vmem:[#allocation3 + $0x14e8] sm:$0xff]
    %v2046 = vld [vmem:[#allocation3 + $0x14f0] sm:$0xff]
    %v2047 = vld [vmem:[#allocation3 + $0x14f8] sm:$0xff]
    %v2048 = vld [vmem:[#allocation3 + $0x1500] sm:$0xff]
    %v2049 = vld [vmem:[#allocation3 + $0x1508] sm:$0xff]
    %v2050 = vld [vmem:[#allocation3 + $0x1510] sm:$0xff]
    %v2051 = vld [vmem:[#allocation3 + $0x1518] sm:$0xff]
    %v2052 = vld [vmem:[#allocation3 + $0x1520] sm:$0xff]
    %v2053 = vld [vmem:[#allocation3 + $0x1528] sm:$0xff]
    %v2054 = vld [vmem:[#allocation3 + $0x1530] sm:$0xff]
    %v2055 = vld [vmem:[#allocation3 + $0x1538] sm:$0xff]
    %v2056 = vld [vmem:[#allocation3 + $0x1540] sm:$0xff]
    %v2057 = vld [vmem:[#allocation3 + $0x1548] sm:$0xff]
    %v2058 = vld [vmem:[#allocation3 + $0x1550] sm:$0xff]
    %v2059 = vld [vmem:[#allocation3 + $0x1558] sm:$0xff]
    %v2060 = vld [vmem:[#allocation3 + $0x1560] sm:$0xff]
    %v2061 = vld [vmem:[#allocation3 + $0x1568] sm:$0xff]
    %v2062 = vld [vmem:[#allocation3 + $0x1570] sm:$0xff]
    %v2063 = vld [vmem:[#allocation3 + $0x1578] sm:$0xff]
    %v2064 = vld [vmem:[#allocation3 + $0x1580] sm:$0xff]
    %v2065 = vld [vmem:[#allocation3 + $0x1588] sm:$0xff]
    %v2066 = vld [vmem:[#allocation3 + $0x1590] sm:$0xff]
    %v2067 = vld [vmem:[#allocation3 + $0x1598] sm:$0xff]
    %v2068 = vld [vmem:[#allocation3 + $0x15a0] sm:$0xff]
    %v2069 = vld [vmem:[#allocation3 + $0x15a8] sm:$0xff]
    %v2070 = vld [vmem:[#allocation3 + $0x15b0] sm:$0xff]
    %v2071 = vld [vmem:[#allocation3 + $0x15b8] sm:$0xff]
    %v2072 = vld [vmem:[#allocation3 + $0x15c0] sm:$0xff]
    %v2073 = vld [vmem:[#allocation3 + $0x15c8] sm:$0xff]
    %v2074 = vld [vmem:[#allocation3 + $0x15d0] sm:$0xff]
    %v2075 = vld [vmem:[#allocation3 + $0x15d8] sm:$0xff]
    %v2076 = vld [vmem:[#allocation3 + $0x15e0] sm:$0xff]
    %v2077 = vld [vmem:[#allocation3 + $0x15e8] sm:$0xff]
    %v2078 = vld [vmem:[#allocation3 + $0x15f0] sm:$0xff]
    %v2079 = vld [vmem:[#allocation3 + $0x15f8] sm:$0xff]
    %v2080 = vld [vmem:[#allocation3 + $0x1600] sm:$0xff]
    %v2081 = vld [vmem:[#allocation3 + $0x1608] sm:$0xff]
    %v2082 = vld [vmem:[#allocation3 + $0x1610] sm:$0xff]
    %v2083 = vld [vmem:[#allocation3 + $0x1618] sm:$0xff]
    %v2084 = vld [vmem:[#allocation3 + $0x1620] sm:$0xff]
    %v2085 = vld [vmem:[#allocation3 + $0x1628] sm:$0xff]
    %v2086 = vld [vmem:[#allocation3 + $0x1630] sm:$0xff]
    %v2087 = vld [vmem:[#allocation3 + $0x1638] sm:$0xff]
    %v2088 = vld [vmem:[#allocation3 + $0x1640] sm:$0xff]
    %v2089 = vld [vmem:[#allocation3 + $0x1648] sm:$0xff]
    %v2090 = vld [vmem:[#allocation3 + $0x1650] sm:$0xff]
    %v2091 = vld [vmem:[#allocation3 + $0x1658] sm:$0xff]
    %v2092 = vld [vmem:[#allocation3 + $0x1660] sm:$0xff]
    %v2093 = vld [vmem:[#allocation3 + $0x1668] sm:$0xff]
    %v2094 = vld [vmem:[#allocation3 + $0x1670] sm:$0xff]
    %v2095 = vld [vmem:[#allocation3 + $0x1678] sm:$0xff]
    %v2096 = vld [vmem:[#allocation3 + $0x1680] sm:$0xff]
    %v2097 = vld [vmem:[#allocation3 + $0x1688] sm:$0xff]
    %v2098 = vld [vmem:[#allocation3 + $0x1690] sm:$0xff]
    %v2099 = vld [vmem:[#allocation3 + $0x1698] sm:$0xff]
    %v2100 = vld [vmem:[#allocation3 + $0x16a0] sm:$0xff]
    %v2101 = vld [vmem:[#allocation3 + $0x16a8] sm:$0xff]
    %v2102 = vld [vmem:[#allocation3 + $0x16b0] sm:$0xff]
    %v2103 = vld [vmem:[#allocation3 + $0x16b8] sm:$0xff]
    %v2104 = vld [vmem:[#allocation3 + $0x16c0] sm:$0xff]
    %v2105 = vld [vmem:[#allocation3 + $0x16c8] sm:$0xff]
    %v2106 = vld [vmem:[#allocation3 + $0x16d0] sm:$0xff]
    %v2107 = vld [vmem:[#allocation3 + $0x16d8] sm:$0xff]
    %v2108 = vld [vmem:[#allocation3 + $0x16e0] sm:$0xff]
    %v2109 = vld [vmem:[#allocation3 + $0x16e8] sm:$0xff]
    %v2110 = vld [vmem:[#allocation3 + $0x16f0] sm:$0xff]
    %v2111 = vld [vmem:[#allocation3 + $0x16f8] sm:$0xff]
    %v2112 = vld [vmem:[#allocation3 + $0x1700] sm:$0xff]
    %v2113 = vld [vmem:[#allocation3 + $0x1708] sm:$0xff]
    %v2114 = vld [vmem:[#allocation3 + $0x1710] sm:$0xff]
    %v2115 = vld [vmem:[#allocation3 + $0x1718] sm:$0xff]
    %v2116 = vld [vmem:[#allocation3 + $0x1720] sm:$0xff]
    %v2117 = vld [vmem:[#allocation3 + $0x1728] sm:$0xff]
    %v2118 = vld [vmem:[#allocation3 + $0x1730] sm:$0xff]
    %v2119 = vld [vmem:[#allocation3 + $0x1738] sm:$0xff]
    %v2120 = vld [vmem:[#allocation3 + $0x1740] sm:$0xff]
    %v2121 = vld [vmem:[#allocation3 + $0x1748] sm:$0xff]
    %v2122 = vld [vmem:[#allocation3 + $0x1750] sm:$0xff]
    %v2123 = vld [vmem:[#allocation3 + $0x1758] sm:$0xff]
    %v2124 = vld [vmem:[#allocation3 + $0x1760] sm:$0xff]
    %v2125 = vld [vmem:[#allocation3 + $0x1768] sm:$0xff]
    %v2126 = vld [vmem:[#allocation3 + $0x1770] sm:$0xff]
    %v2127 = vld [vmem:[#allocation3 + $0x1778] sm:$0xff]
    %v2128 = vld [vmem:[#allocation3 + $0x1780] sm:$0xff]
    %v2129 = vld [vmem:[#allocation3 + $0x1788] sm:$0xff]
    %v2130 = vld [vmem:[#allocation3 + $0x1790] sm:$0xff]
    %v2131 = vld [vmem:[#allocation3 + $0x1798] sm:$0xff]
    %v2132 = vld [vmem:[#allocation3 + $0x17a0] sm:$0xff]
    %v2133 = vld [vmem:[#allocation3 + $0x17a8] sm:$0xff]
    %v2134 = vld [vmem:[#allocation3 + $0x17b0] sm:$0xff]
    %v2135 = vld [vmem:[#allocation3 + $0x17b8] sm:$0xff]
    %v2136 = vld [vmem:[#allocation3 + $0x17c0] sm:$0xff]
    %v2137 = vld [vmem:[#allocation3 + $0x17c8] sm:$0xff]
    %v2138 = vld [vmem:[#allocation3 + $0x17d0] sm:$0xff]
    %v2139 = vld [vmem:[#allocation3 + $0x17d8] sm:$0xff]
    %v2140 = vld [vmem:[#allocation3 + $0x17e0] sm:$0xff]
    %v2141 = vld [vmem:[#allocation3 + $0x17e8] sm:$0xff]
    %v2142 = vld [vmem:[#allocation3 + $0x17f0] sm:$0xff]
    %v2143 = vld [vmem:[#allocation3 + $0x17f8] sm:$0xff]
    %v2144 = vld [vmem:[#allocation3 + $0x1800] sm:$0xff]
    %v2145 = vld [vmem:[#allocation3 + $0x1808] sm:$0xff]
    %v2146 = vld [vmem:[#allocation3 + $0x1810] sm:$0xff]
    %v2147 = vld [vmem:[#allocation3 + $0x1818] sm:$0xff]
    %v2148 = vld [vmem:[#allocation3 + $0x1820] sm:$0xff]
    %v2149 = vld [vmem:[#allocation3 + $0x1828] sm:$0xff]
    %v2150 = vld [vmem:[#allocation3 + $0x1830] sm:$0xff]
    %v2151 = vld [vmem:[#allocation3 + $0x1838] sm:$0xff]
    %v2152 = vld [vmem:[#allocation3 + $0x1840] sm:$0xff]
    %v2153 = vld [vmem:[#allocation3 + $0x1848] sm:$0xff]
    %v2154 = vld [vmem:[#allocation3 + $0x1850] sm:$0xff]
    %v2155 = vld [vmem:[#allocation3 + $0x1858] sm:$0xff]
    %v2156 = vld [vmem:[#allocation3 + $0x1860] sm:$0xff]
    %v2157 = vld [vmem:[#allocation3 + $0x1868] sm:$0xff]
    %v2158 = vld [vmem:[#allocation3 + $0x1870] sm:$0xff]
    %v2159 = vld [vmem:[#allocation3 + $0x1878] sm:$0xff]
    %v2160 = vld [vmem:[#allocation3 + $0x1880] sm:$0xff]
    %v2161 = vld [vmem:[#allocation3 + $0x1888] sm:$0xff]
    %v2162 = vld [vmem:[#allocation3 + $0x1890] sm:$0xff]
    %v2163 = vld [vmem:[#allocation3 + $0x1898] sm:$0xff]
    %v2164 = vld [vmem:[#allocation3 + $0x18a0] sm:$0xff]
    %v2165 = vld [vmem:[#allocation3 + $0x18a8] sm:$0xff]
    %v2166 = vld [vmem:[#allocation3 + $0x18b0] sm:$0xff]
    %v2167 = vld [vmem:[#allocation3 + $0x18b8] sm:$0xff]
    %v2168 = vld [vmem:[#allocation3 + $0x18c0] sm:$0xff]
    %v2169 = vld [vmem:[#allocation3 + $0x18c8] sm:$0xff]
    %v2170 = vld [vmem:[#allocation3 + $0x18d0] sm:$0xff]
    %v2171 = vld [vmem:[#allocation3 + $0x18d8] sm:$0xff]
    %v2172 = vld [vmem:[#allocation3 + $0x18e0] sm:$0xff]
    %v2173 = vld [vmem:[#allocation3 + $0x18e8] sm:$0xff]
    %v2174 = vld [vmem:[#allocation3 + $0x18f0] sm:$0xff]
    %v2175 = vld [vmem:[#allocation3 + $0x18f8] sm:$0xff]
    %v2176 = vld [vmem:[#allocation3 + $0x1900] sm:$0xff]
    %v2177 = vld [vmem:[#allocation3 + $0x1908] sm:$0xff]
    %v2178 = vld [vmem:[#allocation3 + $0x1910] sm:$0xff]
    %v2179 = vld [vmem:[#allocation3 + $0x1918] sm:$0xff]
    %v2180 = vld [vmem:[#allocation3 + $0x1920] sm:$0xff]
    %v2181 = vld [vmem:[#allocation3 + $0x1928] sm:$0xff]
    %v2182 = vld [vmem:[#allocation3 + $0x1930] sm:$0xff]
    %v2183 = vld [vmem:[#allocation3 + $0x1938] sm:$0xff]
    %v2184 = vld [vmem:[#allocation3 + $0x1940] sm:$0xff]
    %v2185 = vld [vmem:[#allocation3 + $0x1948] sm:$0xff]
    %v2186 = vld [vmem:[#allocation3 + $0x1950] sm:$0xff]
    %v2187 = vld [vmem:[#allocation3 + $0x1958] sm:$0xff]
    %v2188 = vld [vmem:[#allocation3 + $0x1960] sm:$0xff]
    %v2189 = vld [vmem:[#allocation3 + $0x1968] sm:$0xff]
    %v2190 = vld [vmem:[#allocation3 + $0x1970] sm:$0xff]
    %v2191 = vld [vmem:[#allocation3 + $0x1978] sm:$0xff]
    %v2192 = vld [vmem:[#allocation3 + $0x1980] sm:$0xff]
    %v2193 = vld [vmem:[#allocation3 + $0x1988] sm:$0xff]
    %v2194 = vld [vmem:[#allocation3 + $0x1990] sm:$0xff]
    %v2195 = vld [vmem:[#allocation3 + $0x1998] sm:$0xff]
    %v2196 = vld [vmem:[#allocation3 + $0x19a0] sm:$0xff]
    %v2197 = vld [vmem:[#allocation3 + $0x19a8] sm:$0xff]
    %v2198 = vld [vmem:[#allocation3 + $0x19b0] sm:$0xff]
    %v2199 = vld [vmem:[#allocation3 + $0x19b8] sm:$0xff]
    %v2200 = vld [vmem:[#allocation3 + $0x19c0] sm:$0xff]
    %v2201 = vld [vmem:[#allocation3 + $0x19c8] sm:$0xff]
    %v2202 = vld [vmem:[#allocation3 + $0x19d0] sm:$0xff]
    %v2203 = vld [vmem:[#allocation3 + $0x19d8] sm:$0xff]
    %v2204 = vld [vmem:[#allocation3 + $0x19e0] sm:$0xff]
    %v2205 = vld [vmem:[#allocation3 + $0x19e8] sm:$0xff]
    %v2206 = vld [vmem:[#allocation3 + $0x19f0] sm:$0xff]
    %v2207 = vld [vmem:[#allocation3 + $0x19f8] sm:$0xff]
    %v2208 = vld [vmem:[#allocation3 + $0x1a00] sm:$0xff]
    %v2209 = vld [vmem:[#allocation3 + $0x1a08] sm:$0xff]
    %v2210 = vld [vmem:[#allocation3 + $0x1a10] sm:$0xff]
    %v2211 = vld [vmem:[#allocation3 + $0x1a18] sm:$0xff]
    %v2212 = vld [vmem:[#allocation3 + $0x1a20] sm:$0xff]
    %v2213 = vld [vmem:[#allocation3 + $0x1a28] sm:$0xff]
    %v2214 = vld [vmem:[#allocation3 + $0x1a30] sm:$0xff]
    %v2215 = vld [vmem:[#allocation3 + $0x1a38] sm:$0xff]
    %v2216 = vld [vmem:[#allocation3 + $0x1a40] sm:$0xff]
    %v2217 = vld [vmem:[#allocation3 + $0x1a48] sm:$0xff]
    %v2218 = vld [vmem:[#allocation3 + $0x1a50] sm:$0xff]
    %v2219 = vld [vmem:[#allocation3 + $0x1a58] sm:$0xff]
    %v2220 = vld [vmem:[#allocation3 + $0x1a60] sm:$0xff]
    %v2221 = vld [vmem:[#allocation3 + $0x1a68] sm:$0xff]
    %v2222 = vld [vmem:[#allocation3 + $0x1a70] sm:$0xff]
    %v2223 = vld [vmem:[#allocation3 + $0x1a78] sm:$0xff]
    %v2224 = vld [vmem:[#allocation3 + $0x1a80] sm:$0xff]
    %v2225 = vld [vmem:[#allocation3 + $0x1a88] sm:$0xff]
    %v2226 = vld [vmem:[#allocation3 + $0x1a90] sm:$0xff]
    %v2227 = vld [vmem:[#allocation3 + $0x1a98] sm:$0xff]
    %v2228 = vld [vmem:[#allocation3 + $0x1aa0] sm:$0xff]
    %v2229 = vld [vmem:[#allocation3 + $0x1aa8] sm:$0xff]
    %v2230 = vld [vmem:[#allocation3 + $0x1ab0] sm:$0xff]
    %v2231 = vld [vmem:[#allocation3 + $0x1ab8] sm:$0xff]
    %v2232 = vld [vmem:[#allocation3 + $0x1ac0] sm:$0xff]
    %v2233 = vld [vmem:[#allocation3 + $0x1ac8] sm:$0xff]
    %v2234 = vld [vmem:[#allocation3 + $0x1ad0] sm:$0xff]
    %v2235 = vld [vmem:[#allocation3 + $0x1ad8] sm:$0xff]
    %v2236 = vld [vmem:[#allocation3 + $0x1ae0] sm:$0xff]
    %v2237 = vld [vmem:[#allocation3 + $0x1ae8] sm:$0xff]
    %v2238 = vld [vmem:[#allocation3 + $0x1af0] sm:$0xff]
    %v2239 = vld [vmem:[#allocation3 + $0x1af8] sm:$0xff]
    %v2240 = vld [vmem:[#allocation3 + $0x1b00] sm:$0xff]
    %v2241 = vld [vmem:[#allocation3 + $0x1b08] sm:$0xff]
    %v2242 = vld [vmem:[#allocation3 + $0x1b10] sm:$0xff]
    %v2243 = vld [vmem:[#allocation3 + $0x1b18] sm:$0xff]
    %v2244 = vld [vmem:[#allocation3 + $0x1b20] sm:$0xff]
    %v2245 = vld [vmem:[#allocation3 + $0x1b28] sm:$0xff]
    %v2246 = vld [vmem:[#allocation3 + $0x1b30] sm:$0xff]
    %v2247 = vld [vmem:[#allocation3 + $0x1b38] sm:$0xff]
    %v2248 = vld [vmem:[#allocation3 + $0x1b40] sm:$0xff]
    %v2249 = vld [vmem:[#allocation3 + $0x1b48] sm:$0xff]
    %v2250 = vld [vmem:[#allocation3 + $0x1b50] sm:$0xff]
    %v2251 = vld [vmem:[#allocation3 + $0x1b58] sm:$0xff]
    %v2252 = vld [vmem:[#allocation3 + $0x1b60] sm:$0xff]
    %v2253 = vld [vmem:[#allocation3 + $0x1b68] sm:$0xff]
    %v2254 = vld [vmem:[#allocation3 + $0x1b70] sm:$0xff]
    %v2255 = vld [vmem:[#allocation3 + $0x1b78] sm:$0xff]
    %v2256 = vld [vmem:[#allocation3 + $0x1b80] sm:$0xff]
    %v2257 = vld [vmem:[#allocation3 + $0x1b88] sm:$0xff]
    %v2258 = vld [vmem:[#allocation3 + $0x1b90] sm:$0xff]
    %v2259 = vld [vmem:[#allocation3 + $0x1b98] sm:$0xff]
    %v2260 = vld [vmem:[#allocation3 + $0x1ba0] sm:$0xff]
    %v2261 = vld [vmem:[#allocation3 + $0x1ba8] sm:$0xff]
    %v2262 = vld [vmem:[#allocation3 + $0x1bb0] sm:$0xff]
    %v2263 = vld [vmem:[#allocation3 + $0x1bb8] sm:$0xff]
    %v2264 = vld [vmem:[#allocation3 + $0x1bc0] sm:$0xff]
    %v2265 = vld [vmem:[#allocation3 + $0x1bc8] sm:$0xff]
    %v2266 = vld [vmem:[#allocation3 + $0x1bd0] sm:$0xff]
    %v2267 = vld [vmem:[#allocation3 + $0x1bd8] sm:$0xff]
    %v2268 = vld [vmem:[#allocation3 + $0x1be0] sm:$0xff]
    %v2269 = vld [vmem:[#allocation3 + $0x1be8] sm:$0xff]
    %v2270 = vld [vmem:[#allocation3 + $0x1bf0] sm:$0xff]
    %v2271 = vld [vmem:[#allocation3 + $0x1bf8] sm:$0xff]
    %v2272 = vld [vmem:[#allocation3 + $0x1c00] sm:$0xff]
    %v2273 = vld [vmem:[#allocation3 + $0x1c08] sm:$0xff]
    %v2274 = vld [vmem:[#allocation3 + $0x1c10] sm:$0xff]
    %v2275 = vld [vmem:[#allocation3 + $0x1c18] sm:$0xff]
    %v2276 = vld [vmem:[#allocation3 + $0x1c20] sm:$0xff]
    %v2277 = vld [vmem:[#allocation3 + $0x1c28] sm:$0xff]
    %v2278 = vld [vmem:[#allocation3 + $0x1c30] sm:$0xff]
    %v2279 = vld [vmem:[#allocation3 + $0x1c38] sm:$0xff]
    %v2280 = vld [vmem:[#allocation3 + $0x1c40] sm:$0xff]
    %v2281 = vld [vmem:[#allocation3 + $0x1c48] sm:$0xff]
    %v2282 = vld [vmem:[#allocation3 + $0x1c50] sm:$0xff]
    %v2283 = vld [vmem:[#allocation3 + $0x1c58] sm:$0xff]
    %v2284 = vld [vmem:[#allocation3 + $0x1c60] sm:$0xff]
    %v2285 = vld [vmem:[#allocation3 + $0x1c68] sm:$0xff]
    %v2286 = vld [vmem:[#allocation3 + $0x1c70] sm:$0xff]
    %v2287 = vld [vmem:[#allocation3 + $0x1c78] sm:$0xff]
    %v2288 = vld [vmem:[#allocation3 + $0x1c80] sm:$0xff]
    %v2289 = vld [vmem:[#allocation3 + $0x1c88] sm:$0xff]
    %v2290 = vld [vmem:[#allocation3 + $0x1c90] sm:$0xff]
    %v2291 = vld [vmem:[#allocation3 + $0x1c98] sm:$0xff]
    %v2292 = vld [vmem:[#allocation3 + $0x1ca0] sm:$0xff]
    %v2293 = vld [vmem:[#allocation3 + $0x1ca8] sm:$0xff]
    %v2294 = vld [vmem:[#allocation3 + $0x1cb0] sm:$0xff]
    %v2295 = vld [vmem:[#allocation3 + $0x1cb8] sm:$0xff]
    %v2296 = vld [vmem:[#allocation3 + $0x1cc0] sm:$0xff]
    %v2297 = vld [vmem:[#allocation3 + $0x1cc8] sm:$0xff]
    %v2298 = vld [vmem:[#allocation3 + $0x1cd0] sm:$0xff]
    %v2299 = vld [vmem:[#allocation3 + $0x1cd8] sm:$0xff]
    %v2300 = vld [vmem:[#allocation3 + $0x1ce0] sm:$0xff]
    %v2301 = vld [vmem:[#allocation3 + $0x1ce8] sm:$0xff]
    %v2302 = vld [vmem:[#allocation3 + $0x1cf0] sm:$0xff]
    %v2303 = vld [vmem:[#allocation3 + $0x1cf8] sm:$0xff]
    %v2304 = vld [vmem:[#allocation3 + $0x1d00] sm:$0xff]
    %v2305 = vld [vmem:[#allocation3 + $0x1d08] sm:$0xff]
    %v2306 = vld [vmem:[#allocation3 + $0x1d10] sm:$0xff]
    %v2307 = vld [vmem:[#allocation3 + $0x1d18] sm:$0xff]
    %v2308 = vld [vmem:[#allocation3 + $0x1d20] sm:$0xff]
    %v2309 = vld [vmem:[#allocation3 + $0x1d28] sm:$0xff]
    %v2310 = vld [vmem:[#allocation3 + $0x1d30] sm:$0xff]
    %v2311 = vld [vmem:[#allocation3 + $0x1d38] sm:$0xff]
    %v2312 = vld [vmem:[#allocation3 + $0x1d40] sm:$0xff]
    %v2313 = vld [vmem:[#allocation3 + $0x1d48] sm:$0xff]
    %v2314 = vld [vmem:[#allocation3 + $0x1d50] sm:$0xff]
    %v2315 = vld [vmem:[#allocation3 + $0x1d58] sm:$0xff]
    %v2316 = vld [vmem:[#allocation3 + $0x1d60] sm:$0xff]
    %v2317 = vld [vmem:[#allocation3 + $0x1d68] sm:$0xff]
    %v2318 = vld [vmem:[#allocation3 + $0x1d70] sm:$0xff]
    %v2319 = vld [vmem:[#allocation3 + $0x1d78] sm:$0xff]
    %v2320 = vld [vmem:[#allocation3 + $0x1d80] sm:$0xff]
    %v2321 = vld [vmem:[#allocation3 + $0x1d88] sm:$0xff]
    %v2322 = vld [vmem:[#allocation3 + $0x1d90] sm:$0xff]
    %v2323 = vld [vmem:[#allocation3 + $0x1d98] sm:$0xff]
    %v2324 = vld [vmem:[#allocation3 + $0x1da0] sm:$0xff]
    %v2325 = vld [vmem:[#allocation3 + $0x1da8] sm:$0xff]
    %v2326 = vld [vmem:[#allocation3 + $0x1db0] sm:$0xff]
    %v2327 = vld [vmem:[#allocation3 + $0x1db8] sm:$0xff]
    %v2328 = vld [vmem:[#allocation3 + $0x1dc0] sm:$0xff]
    %v2329 = vld [vmem:[#allocation3 + $0x1dc8] sm:$0xff]
    %v2330 = vld [vmem:[#allocation3 + $0x1dd0] sm:$0xff]
    %v2331 = vld [vmem:[#allocation3 + $0x1dd8] sm:$0xff]
    %v2332 = vld [vmem:[#allocation3 + $0x1de0] sm:$0xff]
    %v2333 = vld [vmem:[#allocation3 + $0x1de8] sm:$0xff]
    %v2334 = vld [vmem:[#allocation3 + $0x1df0] sm:$0xff]
    %v2335 = vld [vmem:[#allocation3 + $0x1df8] sm:$0xff]
    %v2336 = vld [vmem:[#allocation3 + $0x1e00] sm:$0xff]
    %v2337 = vld [vmem:[#allocation3 + $0x1e08] sm:$0xff]
    %v2338 = vld [vmem:[#allocation3 + $0x1e10] sm:$0xff]
    %v2339 = vld [vmem:[#allocation3 + $0x1e18] sm:$0xff]
    %v2340 = vld [vmem:[#allocation3 + $0x1e20] sm:$0xff]
    %v2341 = vld [vmem:[#allocation3 + $0x1e28] sm:$0xff]
    %v2342 = vld [vmem:[#allocation3 + $0x1e30] sm:$0xff]
    %v2343 = vld [vmem:[#allocation3 + $0x1e38] sm:$0xff]
    %v2344 = vld [vmem:[#allocation3 + $0x1e40] sm:$0xff]
    %v2345 = vld [vmem:[#allocation3 + $0x1e48] sm:$0xff]
    %v2346 = vld [vmem:[#allocation3 + $0x1e50] sm:$0xff]
    %v2347 = vld [vmem:[#allocation3 + $0x1e58] sm:$0xff]
    %v2348 = vld [vmem:[#allocation3 + $0x1e60] sm:$0xff]
    %v2349 = vld [vmem:[#allocation3 + $0x1e68] sm:$0xff]
    %v2350 = vld [vmem:[#allocation3 + $0x1e70] sm:$0xff]
    %v2351 = vld [vmem:[#allocation3 + $0x1e78] sm:$0xff]
    %v2352 = vld [vmem:[#allocation3 + $0x1e80] sm:$0xff]
    %v2353 = vld [vmem:[#allocation3 + $0x1e88] sm:$0xff]
    %v2354 = vld [vmem:[#allocation3 + $0x1e90] sm:$0xff]
    %v2355 = vld [vmem:[#allocation3 + $0x1e98] sm:$0xff]
    %v2356 = vld [vmem:[#allocation3 + $0x1ea0] sm:$0xff]
    %v2357 = vld [vmem:[#allocation3 + $0x1ea8] sm:$0xff]
    %v2358 = vld [vmem:[#allocation3 + $0x1eb0] sm:$0xff]
    %v2359 = vld [vmem:[#allocation3 + $0x1eb8] sm:$0xff]
    %v2360 = vld [vmem:[#allocation3 + $0x1ec0] sm:$0xff]
    %v2361 = vld [vmem:[#allocation3 + $0x1ec8] sm:$0xff]
    %v2362 = vld [vmem:[#allocation3 + $0x1ed0] sm:$0xff]
    %v2363 = vld [vmem:[#allocation3 + $0x1ed8] sm:$0xff]
    %v2364 = vld [vmem:[#allocation3 + $0x1ee0] sm:$0xff]
    %v2365 = vld [vmem:[#allocation3 + $0x1ee8] sm:$0xff]
    %v2366 = vld [vmem:[#allocation3 + $0x1ef0] sm:$0xff]
    %v2367 = vld [vmem:[#allocation3 + $0x1ef8] sm:$0xff]
    %v2368 = vld [vmem:[#allocation3 + $0x1f00] sm:$0xff]
    %v2369 = vld [vmem:[#allocation3 + $0x1f08] sm:$0xff]
    %v2370 = vld [vmem:[#allocation3 + $0x1f10] sm:$0xff]
    %v2371 = vld [vmem:[#allocation3 + $0x1f18] sm:$0xff]
    %v2372 = vld [vmem:[#allocation3 + $0x1f20] sm:$0xff]
    %v2373 = vld [vmem:[#allocation3 + $0x1f28] sm:$0xff]
    %v2374 = vld [vmem:[#allocation3 + $0x1f30] sm:$0xff]
    %v2375 = vld [vmem:[#allocation3 + $0x1f38] sm:$0xff]
    %v2376 = vld [vmem:[#allocation3 + $0x1f40] sm:$0xff]
    %v2377 = vld [vmem:[#allocation3 + $0x1f48] sm:$0xff]
    %v2378 = vld [vmem:[#allocation3 + $0x1f50] sm:$0xff]
    %v2379 = vld [vmem:[#allocation3 + $0x1f58] sm:$0xff]
    %v2380 = vld [vmem:[#allocation3 + $0x1f60] sm:$0xff]
    %v2381 = vld [vmem:[#allocation3 + $0x1f68] sm:$0xff]
    %v2382 = vld [vmem:[#allocation3 + $0x1f70] sm:$0xff]
    %v2383 = vld [vmem:[#allocation3 + $0x1f78] sm:$0xff]
    %v2384 = vld [vmem:[#allocation3 + $0x1f80] sm:$0xff]
    %v2385 = vld [vmem:[#allocation3 + $0x1f88] sm:$0xff]
    %v2386 = vld [vmem:[#allocation3 + $0x1f90] sm:$0xff]
    %v2387 = vld [vmem:[#allocation3 + $0x1f98] sm:$0xff]
    %v2388 = vld [vmem:[#allocation3 + $0x1fa0] sm:$0xff]
    %v2389 = vld [vmem:[#allocation3 + $0x1fa8] sm:$0xff]
    %v2390 = vld [vmem:[#allocation3 + $0x1fb0] sm:$0xff]
    %v2391 = vld [vmem:[#allocation3 + $0x1fb8] sm:$0xff]
    %v2392 = vld [vmem:[#allocation3 + $0x1fc0] sm:$0xff]
    %v2393 = vld [vmem:[#allocation3 + $0x1fc8] sm:$0xff]
    %v2394 = vld [vmem:[#allocation3 + $0x1fd0] sm:$0xff]
    %v2395 = vld [vmem:[#allocation3 + $0x1fd8] sm:$0xff]
    %v2396 = vld [vmem:[#allocation3 + $0x1fe0] sm:$0xff]
    %v2397 = vld [vmem:[#allocation3 + $0x1fe8] sm:$0xff]
    %v2398 = vld [vmem:[#allocation3 + $0x1ff0] sm:$0xff]
    %v2399 = vld [vmem:[#allocation3 + $0x1ff8] sm:$0xff]
    %v2400 = vld [vmem:[#allocation3 + $0x2000] sm:$0xff]
    %v2401 = vld [vmem:[#allocation3 + $0x2008] sm:$0xff]
    %v2402 = vld [vmem:[#allocation3 + $0x2010] sm:$0xff]
    %v2403 = vld [vmem:[#allocation3 + $0x2018] sm:$0xff]
    %v2404 = vld [vmem:[#allocation3 + $0x2020] sm:$0xff]
    %v2405 = vld [vmem:[#allocation3 + $0x2028] sm:$0xff]
    %v2406 = vld [vmem:[#allocation3 + $0x2030] sm:$0xff]
    %v2407 = vld [vmem:[#allocation3 + $0x2038] sm:$0xff]
    %v2408 = vld [vmem:[#allocation3 + $0x2040] sm:$0xff]
    %v2409 = vld [vmem:[#allocation3 + $0x2048] sm:$0xff]
    %v2410 = vld [vmem:[#allocation3 + $0x2050] sm:$0xff]
    %v2411 = vld [vmem:[#allocation3 + $0x2058] sm:$0xff]
    %v2412 = vld [vmem:[#allocation3 + $0x2060] sm:$0xff]
    %v2413 = vld [vmem:[#allocation3 + $0x2068] sm:$0xff]
    %v2414 = vld [vmem:[#allocation3 + $0x2070] sm:$0xff]
    %v2415 = vld [vmem:[#allocation3 + $0x2078] sm:$0xff]
    %v2416 = vld [vmem:[#allocation3 + $0x2080] sm:$0xff]
    %v2417 = vld [vmem:[#allocation3 + $0x2088] sm:$0xff]
    %v2418 = vld [vmem:[#allocation3 + $0x2090] sm:$0xff]
    %v2419 = vld [vmem:[#allocation3 + $0x2098] sm:$0xff]
    %v2420 = vld [vmem:[#allocation3 + $0x20a0] sm:$0xff]
    %v2421 = vld [vmem:[#allocation3 + $0x20a8] sm:$0xff]
    %v2422 = vld [vmem:[#allocation3 + $0x20b0] sm:$0xff]
    %v2423 = vld [vmem:[#allocation3 + $0x20b8] sm:$0xff]
    %v2424 = vld [vmem:[#allocation3 + $0x20c0] sm:$0xff]
    %v2425 = vld [vmem:[#allocation3 + $0x20c8] sm:$0xff]
    %v2426 = vld [vmem:[#allocation3 + $0x20d0] sm:$0xff]
    %v2427 = vld [vmem:[#allocation3 + $0x20d8] sm:$0xff]
    %v2428 = vld [vmem:[#allocation3 + $0x20e0] sm:$0xff]
    %v2429 = vld [vmem:[#allocation3 + $0x20e8] sm:$0xff]
    %v2430 = vld [vmem:[#allocation3 + $0x20f0] sm:$0xff]
    %v2431 = vld [vmem:[#allocation3 + $0x20f8] sm:$0xff]
    %v2432 = vld [vmem:[#allocation3 + $0x2100] sm:$0xff]
    %v2433 = vld [vmem:[#allocation3 + $0x2108] sm:$0xff]
    %v2434 = vld [vmem:[#allocation3 + $0x2110] sm:$0xff]
    %v2435 = vld [vmem:[#allocation3 + $0x2118] sm:$0xff]
    %v2436 = vld [vmem:[#allocation3 + $0x2120] sm:$0xff]
    %v2437 = vld [vmem:[#allocation3 + $0x2128] sm:$0xff]
    %v2438 = vld [vmem:[#allocation3 + $0x2130] sm:$0xff]
    %v2439 = vld [vmem:[#allocation3 + $0x2138] sm:$0xff]
    %v2440 = vld [vmem:[#allocation3 + $0x2140] sm:$0xff]
    %v2441 = vld [vmem:[#allocation3 + $0x2148] sm:$0xff]
    %v2442 = vld [vmem:[#allocation3 + $0x2150] sm:$0xff]
    %v2443 = vld [vmem:[#allocation3 + $0x2158] sm:$0xff]
    %v2444 = vld [vmem:[#allocation3 + $0x2160] sm:$0xff]
    %v2445 = vld [vmem:[#allocation3 + $0x2168] sm:$0xff]
    %v2446 = vld [vmem:[#allocation3 + $0x2170] sm:$0xff]
    %v2447 = vld [vmem:[#allocation3 + $0x2178] sm:$0xff]
    %v2448 = vld [vmem:[#allocation3 + $0x2180] sm:$0xff]
    %v2449 = vld [vmem:[#allocation3 + $0x2188] sm:$0xff]
    %v2450 = vld [vmem:[#allocation3 + $0x2190] sm:$0xff]
    %v2451 = vld [vmem:[#allocation3 + $0x2198] sm:$0xff]
    %v2452 = vld [vmem:[#allocation3 + $0x21a0] sm:$0xff]
    %v2453 = vld [vmem:[#allocation3 + $0x21a8] sm:$0xff]
    %v2454 = vld [vmem:[#allocation3 + $0x21b0] sm:$0xff]
    %v2455 = vld [vmem:[#allocation3 + $0x21b8] sm:$0xff]
    %v2456 = vld [vmem:[#allocation3 + $0x21c0] sm:$0xff]
    %v2457 = vld [vmem:[#allocation3 + $0x21c8] sm:$0xff]
    %v2458 = vld [vmem:[#allocation3 + $0x21d0] sm:$0xff]
    %v2459 = vld [vmem:[#allocation3 + $0x21d8] sm:$0xff]
    %v2460 = vld [vmem:[#allocation3 + $0x21e0] sm:$0xff]
    %v2461 = vld [vmem:[#allocation3 + $0x21e8] sm:$0xff]
    %v2462 = vld [vmem:[#allocation3 + $0x21f0] sm:$0xff]
    %v2463 = vld [vmem:[#allocation3 + $0x21f8] sm:$0xff]
    %v2464 = vld [vmem:[#allocation3 + $0x2200] sm:$0xff]
    %v2465 = vld [vmem:[#allocation3 + $0x2208] sm:$0xff]
    %v2466 = vld [vmem:[#allocation3 + $0x2210] sm:$0xff]
    %v2467 = vld [vmem:[#allocation3 + $0x2218] sm:$0xff]
    %v2468 = vld [vmem:[#allocation3 + $0x2220] sm:$0xff]
    %v2469 = vld [vmem:[#allocation3 + $0x2228] sm:$0xff]
    %v2470 = vld [vmem:[#allocation3 + $0x2230] sm:$0xff]
    %v2471 = vld [vmem:[#allocation3 + $0x2238] sm:$0xff]
    %v2472 = vld [vmem:[#allocation3 + $0x2240] sm:$0xff]
    %v2473 = vld [vmem:[#allocation3 + $0x2248] sm:$0xff]
    %v2474 = vld [vmem:[#allocation3 + $0x2250] sm:$0xff]
    %v2475 = vld [vmem:[#allocation3 + $0x2258] sm:$0xff]
    %v2476 = vld [vmem:[#allocation3 + $0x2260] sm:$0xff]
    %v2477 = vld [vmem:[#allocation3 + $0x2268] sm:$0xff]
    %v2478 = vld [vmem:[#allocation3 + $0x2270] sm:$0xff]
    %v2479 = vld [vmem:[#allocation3 + $0x2278] sm:$0xff]
    %v2480 = vld [vmem:[#allocation3 + $0x2280] sm:$0xff]
    %v2481 = vld [vmem:[#allocation3 + $0x2288] sm:$0xff]
    %v2482 = vld [vmem:[#allocation3 + $0x2290] sm:$0xff]
    %v2483 = vld [vmem:[#allocation3 + $0x2298] sm:$0xff]
    %v2484 = vld [vmem:[#allocation3 + $0x22a0] sm:$0xff]
    %v2485 = vld [vmem:[#allocation3 + $0x22a8] sm:$0xff]
    %v2486 = vld [vmem:[#allocation3 + $0x22b0] sm:$0xff]
    %v2487 = vld [vmem:[#allocation3 + $0x22b8] sm:$0xff]
    %v2488 = vld [vmem:[#allocation3 + $0x22c0] sm:$0xff]
    %v2489 = vld [vmem:[#allocation3 + $0x22c8] sm:$0xff]
    %v2490 = vld [vmem:[#allocation3 + $0x22d0] sm:$0xff]
    %v2491 = vld [vmem:[#allocation3 + $0x22d8] sm:$0xff]
    %v2492 = vld [vmem:[#allocation3 + $0x22e0] sm:$0xff]
    %v2493 = vld [vmem:[#allocation3 + $0x22e8] sm:$0xff]
    %v2494 = vld [vmem:[#allocation3 + $0x22f0] sm:$0xff]
    %v2495 = vld [vmem:[#allocation3 + $0x22f8] sm:$0xff]
    %v2496 = vld [vmem:[#allocation3 + $0x2300] sm:$0xff]
    %v2497 = vld [vmem:[#allocation3 + $0x2308] sm:$0xff]
    %v2498 = vld [vmem:[#allocation3 + $0x2310] sm:$0xff]
    %v2499 = vld [vmem:[#allocation3 + $0x2318] sm:$0xff]
    %v2500 = vld [vmem:[#allocation3 + $0x2320] sm:$0xff]
    %v2501 = vld [vmem:[#allocation3 + $0x2328] sm:$0xff]
    %v2502 = vld [vmem:[#allocation3 + $0x2330] sm:$0xff]
    %v2503 = vld [vmem:[#allocation3 + $0x2338] sm:$0xff]
    %v2504 = vld [vmem:[#allocation3 + $0x2340] sm:$0xff]
    %v2505 = vld [vmem:[#allocation3 + $0x2348] sm:$0xff]
    %v2506 = vld [vmem:[#allocation3 + $0x2350] sm:$0xff]
    %v2507 = vld [vmem:[#allocation3 + $0x2358] sm:$0xff]
    %v2508 = vld [vmem:[#allocation3 + $0x2360] sm:$0xff]
    %v2509 = vld [vmem:[#allocation3 + $0x2368] sm:$0xff]
    %v2510 = vld [vmem:[#allocation3 + $0x2370] sm:$0xff]
    %v2511 = vld [vmem:[#allocation3 + $0x2378] sm:$0xff]
    %v2512 = vld [vmem:[#allocation3 + $0x2380] sm:$0xff]
    %v2513 = vld [vmem:[#allocation3 + $0x2388] sm:$0xff]
    %v2514 = vld [vmem:[#allocation3 + $0x2390] sm:$0xff]
    %v2515 = vld [vmem:[#allocation3 + $0x2398] sm:$0xff]
    %v2516 = vld [vmem:[#allocation3 + $0x23a0] sm:$0xff]
    %v2517 = vld [vmem:[#allocation3 + $0x23a8] sm:$0xff]
    %v2518 = vld [vmem:[#allocation3 + $0x23b0] sm:$0xff]
    %v2519 = vld [vmem:[#allocation3 + $0x23b8] sm:$0xff]
    %v2520 = vld [vmem:[#allocation3 + $0x23c0] sm:$0xff]
    %v2521 = vld [vmem:[#allocation3 + $0x23c8] sm:$0xff]
    %v2522 = vld [vmem:[#allocation3 + $0x23d0] sm:$0xff]
    %v2523 = vld [vmem:[#allocation3 + $0x23d8] sm:$0xff]
    %v2524 = vld [vmem:[#allocation3 + $0x23e0] sm:$0xff]
    %v2525 = vld [vmem:[#allocation3 + $0x23e8] sm:$0xff]
    %v2526 = vld [vmem:[#allocation3 + $0x23f0] sm:$0xff]
    %v2527 = vld [vmem:[#allocation3 + $0x23f8] sm:$0xff]
    %v2528 = vld [vmem:[#allocation3 + $0x2400] sm:$0xff]
    %v2529 = vld [vmem:[#allocation3 + $0x2408] sm:$0xff]
    %v2530 = vld [vmem:[#allocation3 + $0x2410] sm:$0xff]
    %v2531 = vld [vmem:[#allocation3 + $0x2418] sm:$0xff]
    %v2532 = vld [vmem:[#allocation3 + $0x2420] sm:$0xff]
    %v2533 = vld [vmem:[#allocation3 + $0x2428] sm:$0xff]
    %v2534 = vld [vmem:[#allocation3 + $0x2430] sm:$0xff]
    %v2535 = vld [vmem:[#allocation3 + $0x2438] sm:$0xff]
    %v2536 = vld [vmem:[#allocation3 + $0x2440] sm:$0xff]
    %v2537 = vld [vmem:[#allocation3 + $0x2448] sm:$0xff]
    %v2538 = vld [vmem:[#allocation3 + $0x2450] sm:$0xff]
    %v2539 = vld [vmem:[#allocation3 + $0x2458] sm:$0xff]
    %v2540 = vld [vmem:[#allocation3 + $0x2460] sm:$0xff]
    %v2541 = vld [vmem:[#allocation3 + $0x2468] sm:$0xff]
    %v2542 = vld [vmem:[#allocation3 + $0x2470] sm:$0xff]
    %v2543 = vld [vmem:[#allocation3 + $0x2478] sm:$0xff]
    %v2544 = vld [vmem:[#allocation3 + $0x2480] sm:$0xff]
    %v2545 = vld [vmem:[#allocation3 + $0x2488] sm:$0xff]
    %v2546 = vld [vmem:[#allocation3 + $0x2490] sm:$0xff]
    %v2547 = vld [vmem:[#allocation3 + $0x2498] sm:$0xff]
    %v2548 = vld [vmem:[#allocation3 + $0x24a0] sm:$0xff]
    %v2549 = vld [vmem:[#allocation3 + $0x24a8] sm:$0xff]
    %v2550 = vld [vmem:[#allocation3 + $0x24b0] sm:$0xff]
    %v2551 = vld [vmem:[#allocation3 + $0x24b8] sm:$0xff]
    %v2552 = vld [vmem:[#allocation3 + $0x24c0] sm:$0xff]
    %v2553 = vld [vmem:[#allocation3 + $0x24c8] sm:$0xff]
    %v2554 = vld [vmem:[#allocation3 + $0x24d0] sm:$0xff]
    %v2555 = vld [vmem:[#allocation3 + $0x24d8] sm:$0xff]
    %v2556 = vld [vmem:[#allocation3 + $0x24e0] sm:$0xff]
    %v2557 = vld [vmem:[#allocation3 + $0x24e8] sm:$0xff]
    %v2558 = vld [vmem:[#allocation3 + $0x24f0] sm:$0xff]
    %v2559 = vld [vmem:[#allocation3 + $0x24f8] sm:$0xff]
    %v2560 = vld [vmem:[#allocation3 + $0x2500] sm:$0xff]
    %v2561 = vld [vmem:[#allocation3 + $0x2508] sm:$0xff]
    %v2562 = vld [vmem:[#allocation3 + $0x2510] sm:$0xff]
    %v2563 = vld [vmem:[#allocation3 + $0x2518] sm:$0xff]
    %v2564 = vld [vmem:[#allocation3 + $0x2520] sm:$0xff]
    %v2565 = vld [vmem:[#allocation3 + $0x2528] sm:$0xff]
    %v2566 = vld [vmem:[#allocation3 + $0x2530] sm:$0xff]
    %v2567 = vld [vmem:[#allocation3 + $0x2538] sm:$0xff]
    %v2568 = vld [vmem:[#allocation3 + $0x2540] sm:$0xff]
    %v2569 = vld [vmem:[#allocation3 + $0x2548] sm:$0xff]
    %v2570 = vld [vmem:[#allocation3 + $0x2550] sm:$0xff]
    %v2571 = vld [vmem:[#allocation3 + $0x2558] sm:$0xff]
    %v2572 = vld [vmem:[#allocation3 + $0x2560] sm:$0xff]
    %v2573 = vld [vmem:[#allocation3 + $0x2568] sm:$0xff]
    %v2574 = vld [vmem:[#allocation3 + $0x2570] sm:$0xff]
    %v2575 = vld [vmem:[#allocation3 + $0x2578] sm:$0xff]
    %v2576 = vld [vmem:[#allocation3 + $0x2580] sm:$0xff]
    %v2577 = vld [vmem:[#allocation3 + $0x2588] sm:$0xff]
    %v2578 = vld [vmem:[#allocation3 + $0x2590] sm:$0xff]
    %v2579 = vld [vmem:[#allocation3 + $0x2598] sm:$0xff]
    %v2580 = vld [vmem:[#allocation3 + $0x25a0] sm:$0xff]
    %v2581 = vld [vmem:[#allocation3 + $0x25a8] sm:$0xff]
    %v2582 = vld [vmem:[#allocation3 + $0x25b0] sm:$0xff]
    %v2583 = vld [vmem:[#allocation3 + $0x25b8] sm:$0xff]
    %v2584 = vld [vmem:[#allocation3 + $0x25c0] sm:$0xff]
    %v2585 = vld [vmem:[#allocation3 + $0x25c8] sm:$0xff]
    %v2586 = vld [vmem:[#allocation3 + $0x25d0] sm:$0xff]
    %v2587 = vld [vmem:[#allocation3 + $0x25d8] sm:$0xff]
    %v2588 = vld [vmem:[#allocation3 + $0x25e0] sm:$0xff]
    %v2589 = vld [vmem:[#allocation3 + $0x25e8] sm:$0xff]
    %v2590 = vld [vmem:[#allocation3 + $0x25f0] sm:$0xff]
    %v2591 = vld [vmem:[#allocation3 + $0x25f8] sm:$0xff]
    %v2592 = vld [vmem:[#allocation3 + $0x2600] sm:$0xff]
    %v2593 = vld [vmem:[#allocation3 + $0x2608] sm:$0xff]
    %v2594 = vld [vmem:[#allocation3 + $0x2610] sm:$0xff]
    %v2595 = vld [vmem:[#allocation3 + $0x2618] sm:$0xff]
    %v2596 = vld [vmem:[#allocation3 + $0x2620] sm:$0xff]
    %v2597 = vld [vmem:[#allocation3 + $0x2628] sm:$0xff]
    %v2598 = vld [vmem:[#allocation3 + $0x2630] sm:$0xff]
    %v2599 = vld [vmem:[#allocation3 + $0x2638] sm:$0xff]
    %v2600 = vld [vmem:[#allocation3 + $0x2640] sm:$0xff]
    %v2601 = vld [vmem:[#allocation3 + $0x2648] sm:$0xff]
    %v2602 = vld [vmem:[#allocation3 + $0x2650] sm:$0xff]
    %v2603 = vld [vmem:[#allocation3 + $0x2658] sm:$0xff]
    %v2604 = vld [vmem:[#allocation3 + $0x2660] sm:$0xff]
    %v2605 = vld [vmem:[#allocation3 + $0x2668] sm:$0xff]
    %v2606 = vld [vmem:[#allocation3 + $0x2670] sm:$0xff]
    %v2607 = vld [vmem:[#allocation3 + $0x2678] sm:$0xff]
    %v2608 = vld [vmem:[#allocation3 + $0x2680] sm:$0xff]
    %v2609 = vld [vmem:[#allocation3 + $0x2688] sm:$0xff]
    %v2610 = vld [vmem:[#allocation3 + $0x2690] sm:$0xff]
    %v2611 = vld [vmem:[#allocation3 + $0x2698] sm:$0xff]
    %v2612 = vld [vmem:[#allocation3 + $0x26a0] sm:$0xff]
    %v2613 = vld [vmem:[#allocation3 + $0x26a8] sm:$0xff]
    %v2614 = vld [vmem:[#allocation3 + $0x26b0] sm:$0xff]
    %v2615 = vld [vmem:[#allocation3 + $0x26b8] sm:$0xff]
    %v2616 = vld [vmem:[#allocation3 + $0x26c0] sm:$0xff]
    %v2617 = vld [vmem:[#allocation3 + $0x26c8] sm:$0xff]
    %v2618 = vld [vmem:[#allocation3 + $0x26d0] sm:$0xff]
    %v2619 = vld [vmem:[#allocation3 + $0x26d8] sm:$0xff]
    %v2620 = vld [vmem:[#allocation3 + $0x26e0] sm:$0xff]
    %v2621 = vld [vmem:[#allocation3 + $0x26e8] sm:$0xff]
    %v2622 = vld [vmem:[#allocation3 + $0x26f0] sm:$0xff]
    %v2623 = vld [vmem:[#allocation3 + $0x26f8] sm:$0xff]
    %v2624 = vld [vmem:[#allocation3 + $0x2700] sm:$0xff]
    %v2625 = vld [vmem:[#allocation3 + $0x2708] sm:$0xff]
    %v2626 = vld [vmem:[#allocation3 + $0x2710] sm:$0xff]
    %v2627 = vld [vmem:[#allocation3 + $0x2718] sm:$0xff]
    %v2628 = vld [vmem:[#allocation3 + $0x2720] sm:$0xff]
    %v2629 = vld [vmem:[#allocation3 + $0x2728] sm:$0xff]
    %v2630 = vld [vmem:[#allocation3 + $0x2730] sm:$0xff]
    %v2631 = vld [vmem:[#allocation3 + $0x2738] sm:$0xff]
    %v2632 = vld [vmem:[#allocation3 + $0x2740] sm:$0xff]
    %v2633 = vld [vmem:[#allocation3 + $0x2748] sm:$0xff]
    %v2634 = vld [vmem:[#allocation3 + $0x2750] sm:$0xff]
    %v2635 = vld [vmem:[#allocation3 + $0x2758] sm:$0xff]
    %v2636 = vld [vmem:[#allocation3 + $0x2760] sm:$0xff]
    %v2637 = vld [vmem:[#allocation3 + $0x2768] sm:$0xff]
    %v2638 = vld [vmem:[#allocation3 + $0x2770] sm:$0xff]
    %v2639 = vld [vmem:[#allocation3 + $0x2778] sm:$0xff]
    %v2640 = vld [vmem:[#allocation3 + $0x2780] sm:$0xff]
    %v2641 = vld [vmem:[#allocation3 + $0x2788] sm:$0xff]
    %v2642 = vld [vmem:[#allocation3 + $0x2790] sm:$0xff]
    %v2643 = vld [vmem:[#allocation3 + $0x2798] sm:$0xff]
    %v2644 = vld [vmem:[#allocation3 + $0x27a0] sm:$0xff]
    %v2645 = vld [vmem:[#allocation3 + $0x27a8] sm:$0xff]
    %v2646 = vld [vmem:[#allocation3 + $0x27b0] sm:$0xff]
    %v2647 = vld [vmem:[#allocation3 + $0x27b8] sm:$0xff]
    %v2648 = vld [vmem:[#allocation3 + $0x27c0] sm:$0xff]
    %v2649 = vld [vmem:[#allocation3 + $0x27c8] sm:$0xff]
    %v2650 = vld [vmem:[#allocation3 + $0x27d0] sm:$0xff]
    %v2651 = vld [vmem:[#allocation3 + $0x27d8] sm:$0xff]
    %v2652 = vld [vmem:[#allocation3 + $0x27e0] sm:$0xff]
    %v2653 = vld [vmem:[#allocation3 + $0x27e8] sm:$0xff]
    %v2654 = vld [vmem:[#allocation3 + $0x27f0] sm:$0xff]
    %v2655 = vld [vmem:[#allocation3 + $0x27f8] sm:$0xff]
    %v2656 = vld [vmem:[#allocation3 + $0x2800] sm:$0xff]
    %v2657 = vld [vmem:[#allocation3 + $0x2808] sm:$0xff]
    %v2658 = vld [vmem:[#allocation3 + $0x2810] sm:$0xff]
    %v2659 = vld [vmem:[#allocation3 + $0x2818] sm:$0xff]
    %v2660 = vld [vmem:[#allocation3 + $0x2820] sm:$0xff]
    %v2661 = vld [vmem:[#allocation3 + $0x2828] sm:$0xff]
    %v2662 = vld [vmem:[#allocation3 + $0x2830] sm:$0xff]
    %v2663 = vld [vmem:[#allocation3 + $0x2838] sm:$0xff]
    %v2664 = vld [vmem:[#allocation3 + $0x2840] sm:$0xff]
    %v2665 = vld [vmem:[#allocation3 + $0x2848] sm:$0xff]
    %v2666 = vld [vmem:[#allocation3 + $0x2850] sm:$0xff]
    %v2667 = vld [vmem:[#allocation3 + $0x2858] sm:$0xff]
    %v2668 = vld [vmem:[#allocation3 + $0x2860] sm:$0xff]
    %v2669 = vld [vmem:[#allocation3 + $0x2868] sm:$0xff]
    %v2670 = vld [vmem:[#allocation3 + $0x2870] sm:$0xff]
    %v2671 = vld [vmem:[#allocation3 + $0x2878] sm:$0xff]
    %v2672 = vld [vmem:[#allocation3 + $0x2880] sm:$0xff]
    %v2673 = vld [vmem:[#allocation3 + $0x2888] sm:$0xff]
    %v2674 = vld [vmem:[#allocation3 + $0x2890] sm:$0xff]
    %v2675 = vld [vmem:[#allocation3 + $0x2898] sm:$0xff]
    %v2676 = vld [vmem:[#allocation3 + $0x28a0] sm:$0xff]
    %v2677 = vld [vmem:[#allocation3 + $0x28a8] sm:$0xff]
    %v2678 = vld [vmem:[#allocation3 + $0x28b0] sm:$0xff]
    %v2679 = vld [vmem:[#allocation3 + $0x28b8] sm:$0xff]
    %v2680 = vld [vmem:[#allocation3 + $0x28c0] sm:$0xff]
    %v2681 = vld [vmem:[#allocation3 + $0x28c8] sm:$0xff]
    %v2682 = vld [vmem:[#allocation3 + $0x28d0] sm:$0xff]
    %v2683 = vld [vmem:[#allocation3 + $0x28d8] sm:$0xff]
    %v2684 = vld [vmem:[#allocation3 + $0x28e0] sm:$0xff]
    %v2685 = vld [vmem:[#allocation3 + $0x28e8] sm:$0xff]
    %v2686 = vld [vmem:[#allocation3 + $0x28f0] sm:$0xff]
    %v2687 = vld [vmem:[#allocation3 + $0x28f8] sm:$0xff]
    %v2688 = vld [vmem:[#allocation3 + $0x2900] sm:$0xff]
    %v2689 = vld [vmem:[#allocation3 + $0x2908] sm:$0xff]
    %v2690 = vld [vmem:[#allocation3 + $0x2910] sm:$0xff]
    %v2691 = vld [vmem:[#allocation3 + $0x2918] sm:$0xff]
    %v2692 = vld [vmem:[#allocation3 + $0x2920] sm:$0xff]
    %v2693 = vld [vmem:[#allocation3 + $0x2928] sm:$0xff]
    %v2694 = vld [vmem:[#allocation3 + $0x2930] sm:$0xff]
    %v2695 = vld [vmem:[#allocation3 + $0x2938] sm:$0xff]
    %v2696 = vld [vmem:[#allocation3 + $0x2940] sm:$0xff]
    %v2697 = vld [vmem:[#allocation3 + $0x2948] sm:$0xff]
    %v2698 = vld [vmem:[#allocation3 + $0x2950] sm:$0xff]
    %v2699 = vld [vmem:[#allocation3 + $0x2958] sm:$0xff]
    %v2700 = vld [vmem:[#allocation3 + $0x2960] sm:$0xff]
    %v2701 = vld [vmem:[#allocation3 + $0x2968] sm:$0xff]
    %v2702 = vld [vmem:[#allocation3 + $0x2970] sm:$0xff]
    %v2703 = vld [vmem:[#allocation3 + $0x2978] sm:$0xff]
    %v2704 = vld [vmem:[#allocation3 + $0x2980] sm:$0xff]
    %v2705 = vld [vmem:[#allocation3 + $0x2988] sm:$0xff]
    %v2706 = vld [vmem:[#allocation3 + $0x2990] sm:$0xff]
    %v2707 = vld [vmem:[#allocation3 + $0x2998] sm:$0xff]
    %v2708 = vld [vmem:[#allocation3 + $0x29a0] sm:$0xff]
    %v2709 = vld [vmem:[#allocation3 + $0x29a8] sm:$0xff]
    %v2710 = vld [vmem:[#allocation3 + $0x29b0] sm:$0xff]
    %v2711 = vld [vmem:[#allocation3 + $0x29b8] sm:$0xff]
    %v2712 = vld [vmem:[#allocation3 + $0x29c0] sm:$0xff]
    %v2713 = vld [vmem:[#allocation3 + $0x29c8] sm:$0xff]
    %v2714 = vld [vmem:[#allocation3 + $0x29d0] sm:$0xff]
    %v2715 = vld [vmem:[#allocation3 + $0x29d8] sm:$0xff]
    %v2716 = vld [vmem:[#allocation3 + $0x29e0] sm:$0xff]
    %v2717 = vld [vmem:[#allocation3 + $0x29e8] sm:$0xff]
    %v2718 = vld [vmem:[#allocation3 + $0x29f0] sm:$0xff]
    %v2719 = vld [vmem:[#allocation3 + $0x29f8] sm:$0xff]
    %v2720 = vld [vmem:[#allocation3 + $0x2a00] sm:$0xff]
    %v2721 = vld [vmem:[#allocation3 + $0x2a08] sm:$0xff]
    %v2722 = vld [vmem:[#allocation3 + $0x2a10] sm:$0xff]
    %v2723 = vld [vmem:[#allocation3 + $0x2a18] sm:$0xff]
    %v2724 = vld [vmem:[#allocation3 + $0x2a20] sm:$0xff]
    %v2725 = vld [vmem:[#allocation3 + $0x2a28] sm:$0xff]
    %v2726 = vld [vmem:[#allocation3 + $0x2a30] sm:$0xff]
    %v2727 = vld [vmem:[#allocation3 + $0x2a38] sm:$0xff]
    %v2728 = vld [vmem:[#allocation3 + $0x2a40] sm:$0xff]
    %v2729 = vld [vmem:[#allocation3 + $0x2a48] sm:$0xff]
    %v2730 = vld [vmem:[#allocation3 + $0x2a50] sm:$0xff]
    %v2731 = vld [vmem:[#allocation3 + $0x2a58] sm:$0xff]
    %v2732 = vld [vmem:[#allocation3 + $0x2a60] sm:$0xff]
    %v2733 = vld [vmem:[#allocation3 + $0x2a68] sm:$0xff]
    %v2734 = vld [vmem:[#allocation3 + $0x2a70] sm:$0xff]
    %v2735 = vld [vmem:[#allocation3 + $0x2a78] sm:$0xff]
    %v2736 = vld [vmem:[#allocation3 + $0x2a80] sm:$0xff]
    %v2737 = vld [vmem:[#allocation3 + $0x2a88] sm:$0xff]
    %v2738 = vld [vmem:[#allocation3 + $0x2a90] sm:$0xff]
    %v2739 = vld [vmem:[#allocation3 + $0x2a98] sm:$0xff]
    %v2740 = vld [vmem:[#allocation3 + $0x2aa0] sm:$0xff]
    %v2741 = vld [vmem:[#allocation3 + $0x2aa8] sm:$0xff]
    %v2742 = vld [vmem:[#allocation3 + $0x2ab0] sm:$0xff]
    %v2743 = vld [vmem:[#allocation3 + $0x2ab8] sm:$0xff]
    %v2744 = vld [vmem:[#allocation3 + $0x2ac0] sm:$0xff]
    %v2745 = vld [vmem:[#allocation3 + $0x2ac8] sm:$0xff]
    %v2746 = vld [vmem:[#allocation3 + $0x2ad0] sm:$0xff]
    %v2747 = vld [vmem:[#allocation3 + $0x2ad8] sm:$0xff]
    %v2748 = vld [vmem:[#allocation3 + $0x2ae0] sm:$0xff]
    %v2749 = vld [vmem:[#allocation3 + $0x2ae8] sm:$0xff]
    %v2750 = vld [vmem:[#allocation3 + $0x2af0] sm:$0xff]
    %v2751 = vld [vmem:[#allocation3 + $0x2af8] sm:$0xff]
    %v2752 = vld [vmem:[#allocation3 + $0x2b00] sm:$0xff]
    %v2753 = vld [vmem:[#allocation3 + $0x2b08] sm:$0xff]
    %v2754 = vld [vmem:[#allocation3 + $0x2b10] sm:$0xff]
    %v2755 = vld [vmem:[#allocation3 + $0x2b18] sm:$0xff]
    %v2756 = vld [vmem:[#allocation3 + $0x2b20] sm:$0xff]
    %v2757 = vld [vmem:[#allocation3 + $0x2b28] sm:$0xff]
    %v2758 = vld [vmem:[#allocation3 + $0x2b30] sm:$0xff]
    %v2759 = vld [vmem:[#allocation3 + $0x2b38] sm:$0xff]
    %v2760 = vld [vmem:[#allocation3 + $0x2b40] sm:$0xff]
    %v2761 = vld [vmem:[#allocation3 + $0x2b48] sm:$0xff]
    %v2762 = vld [vmem:[#allocation3 + $0x2b50] sm:$0xff]
    %v2763 = vld [vmem:[#allocation3 + $0x2b58] sm:$0xff]
    %v2764 = vld [vmem:[#allocation3 + $0x2b60] sm:$0xff]
    %v2765 = vld [vmem:[#allocation3 + $0x2b68] sm:$0xff]
    %v2766 = vld [vmem:[#allocation3 + $0x2b70] sm:$0xff]
    %v2767 = vld [vmem:[#allocation3 + $0x2b78] sm:$0xff]
    %v2768 = vld [vmem:[#allocation3 + $0x2b80] sm:$0xff]
    %v2769 = vld [vmem:[#allocation3 + $0x2b88] sm:$0xff]
    %v2770 = vld [vmem:[#allocation3 + $0x2b90] sm:$0xff]
    %v2771 = vld [vmem:[#allocation3 + $0x2b98] sm:$0xff]
    %v2772 = vld [vmem:[#allocation3 + $0x2ba0] sm:$0xff]
    %v2773 = vld [vmem:[#allocation3 + $0x2ba8] sm:$0xff]
    %v2774 = vld [vmem:[#allocation3 + $0x2bb0] sm:$0xff]
    %v2775 = vld [vmem:[#allocation3 + $0x2bb8] sm:$0xff]
    %v2776 = vld [vmem:[#allocation3 + $0x2bc0] sm:$0xff]
    %v2777 = vld [vmem:[#allocation3 + $0x2bc8] sm:$0xff]
    %v2778 = vld [vmem:[#allocation3 + $0x2bd0] sm:$0xff]
    %v2779 = vld [vmem:[#allocation3 + $0x2bd8] sm:$0xff]
    %v2780 = vld [vmem:[#allocation3 + $0x2be0] sm:$0xff]
    %v2781 = vld [vmem:[#allocation3 + $0x2be8] sm:$0xff]
    %v2782 = vld [vmem:[#allocation3 + $0x2bf0] sm:$0xff]
    %v2783 = vld [vmem:[#allocation3 + $0x2bf8] sm:$0xff]
    %v2784 = vld [vmem:[#allocation3 + $0x2c00] sm:$0xff]
    %v2785 = vld [vmem:[#allocation3 + $0x2c08] sm:$0xff]
    %v2786 = vld [vmem:[#allocation3 + $0x2c10] sm:$0xff]
    %v2787 = vld [vmem:[#allocation3 + $0x2c18] sm:$0xff]
    %v2788 = vld [vmem:[#allocation3 + $0x2c20] sm:$0xff]
    %v2789 = vld [vmem:[#allocation3 + $0x2c28] sm:$0xff]
    %v2790 = vld [vmem:[#allocation3 + $0x2c30] sm:$0xff]
    %v2791 = vld [vmem:[#allocation3 + $0x2c38] sm:$0xff]
    %v2792 = vld [vmem:[#allocation3 + $0x2c40] sm:$0xff]
    %v2793 = vld [vmem:[#allocation3 + $0x2c48] sm:$0xff]
    %v2794 = vld [vmem:[#allocation3 + $0x2c50] sm:$0xff]
    %v2795 = vld [vmem:[#allocation3 + $0x2c58] sm:$0xff]
    %v2796 = vld [vmem:[#allocation3 + $0x2c60] sm:$0xff]
    %v2797 = vld [vmem:[#allocation3 + $0x2c68] sm:$0xff]
    %v2798 = vld [vmem:[#allocation3 + $0x2c70] sm:$0xff]
    %v2799 = vld [vmem:[#allocation3 + $0x2c78] sm:$0xff]
    %v2800 = vld [vmem:[#allocation3 + $0x2c80] sm:$0xff]
    %v2801 = vld [vmem:[#allocation3 + $0x2c88] sm:$0xff]
    %v2802 = vld [vmem:[#allocation3 + $0x2c90] sm:$0xff]
    %v2803 = vld [vmem:[#allocation3 + $0x2c98] sm:$0xff]
    %v2804 = vld [vmem:[#allocation3 + $0x2ca0] sm:$0xff]
    %v2805 = vld [vmem:[#allocation3 + $0x2ca8] sm:$0xff]
    %v2806 = vld [vmem:[#allocation3 + $0x2cb0] sm:$0xff]
    %v2807 = vld [vmem:[#allocation3 + $0x2cb8] sm:$0xff]
    %v2808 = vld [vmem:[#allocation3 + $0x2cc0] sm:$0xff]
    %v2809 = vld [vmem:[#allocation3 + $0x2cc8] sm:$0xff]
    %v2810 = vld [vmem:[#allocation3 + $0x2cd0] sm:$0xff]
    %v2811 = vld [vmem:[#allocation3 + $0x2cd8] sm:$0xff]
    %v2812 = vld [vmem:[#allocation3 + $0x2ce0] sm:$0xff]
    %v2813 = vld [vmem:[#allocation3 + $0x2ce8] sm:$0xff]
    %v2814 = vld [vmem:[#allocation3 + $0x2cf0] sm:$0xff]
    %v2815 = vld [vmem:[#allocation3 + $0x2cf8] sm:$0xff]
    %v2816 = vld [vmem:[#allocation3 + $0x2d00] sm:$0xff]
    %v2817 = vld [vmem:[#allocation3 + $0x2d08] sm:$0xff]
    %v2818 = vld [vmem:[#allocation3 + $0x2d10] sm:$0xff]
    %v2819 = vld [vmem:[#allocation3 + $0x2d18] sm:$0xff]
    %v2820 = vld [vmem:[#allocation3 + $0x2d20] sm:$0xff]
    %v2821 = vld [vmem:[#allocation3 + $0x2d28] sm:$0xff]
    %v2822 = vld [vmem:[#allocation3 + $0x2d30] sm:$0xff]
    %v2823 = vld [vmem:[#allocation3 + $0x2d38] sm:$0xff]
    %v2824 = vld [vmem:[#allocation3 + $0x2d40] sm:$0xff]
    %v2825 = vld [vmem:[#allocation3 + $0x2d48] sm:$0xff]
    %v2826 = vld [vmem:[#allocation3 + $0x2d50] sm:$0xff]
    %v2827 = vld [vmem:[#allocation3 + $0x2d58] sm:$0xff]
    %v2828 = vld [vmem:[#allocation3 + $0x2d60] sm:$0xff]
    %v2829 = vld [vmem:[#allocation3 + $0x2d68] sm:$0xff]
    %v2830 = vld [vmem:[#allocation3 + $0x2d70] sm:$0xff]
    %v2831 = vld [vmem:[#allocation3 + $0x2d78] sm:$0xff]
    %v2832 = vld [vmem:[#allocation3 + $0x2d80] sm:$0xff]
    %v2833 = vld [vmem:[#allocation3 + $0x2d88] sm:$0xff]
    %v2834 = vld [vmem:[#allocation3 + $0x2d90] sm:$0xff]
    %v2835 = vld [vmem:[#allocation3 + $0x2d98] sm:$0xff]
    %v2836 = vld [vmem:[#allocation3 + $0x2da0] sm:$0xff]
    %v2837 = vld [vmem:[#allocation3 + $0x2da8] sm:$0xff]
    %v2838 = vld [vmem:[#allocation3 + $0x2db0] sm:$0xff]
    %v2839 = vld [vmem:[#allocation3 + $0x2db8] sm:$0xff]
    %v2840 = vld [vmem:[#allocation3 + $0x2dc0] sm:$0xff]
    %v2841 = vld [vmem:[#allocation3 + $0x2dc8] sm:$0xff]
    %v2842 = vld [vmem:[#allocation3 + $0x2dd0] sm:$0xff]
    %v2843 = vld [vmem:[#allocation3 + $0x2dd8] sm:$0xff]
    %v2844 = vld [vmem:[#allocation3 + $0x2de0] sm:$0xff]
    %v2845 = vld [vmem:[#allocation3 + $0x2de8] sm:$0xff]
    %v2846 = vld [vmem:[#allocation3 + $0x2df0] sm:$0xff]
    %v2847 = vld [vmem:[#allocation3 + $0x2df8] sm:$0xff]
    %v2848 = vld [vmem:[#allocation3 + $0x2e00] sm:$0xff]
    %v2849 = vld [vmem:[#allocation3 + $0x2e08] sm:$0xff]
    %v2850 = vld [vmem:[#allocation3 + $0x2e10] sm:$0xff]
    %v2851 = vld [vmem:[#allocation3 + $0x2e18] sm:$0xff]
    %v2852 = vld [vmem:[#allocation3 + $0x2e20] sm:$0xff]
    %v2853 = vld [vmem:[#allocation3 + $0x2e28] sm:$0xff]
    %v2854 = vld [vmem:[#allocation3 + $0x2e30] sm:$0xff]
    %v2855 = vld [vmem:[#allocation3 + $0x2e38] sm:$0xff]
    %v2856 = vld [vmem:[#allocation3 + $0x2e40] sm:$0xff]
    %v2857 = vld [vmem:[#allocation3 + $0x2e48] sm:$0xff]
    %v2858 = vld [vmem:[#allocation3 + $0x2e50] sm:$0xff]
    %v2859 = vld [vmem:[#allocation3 + $0x2e58] sm:$0xff]
    %v2860 = vld [vmem:[#allocation3 + $0x2e60] sm:$0xff]
    %v2861 = vld [vmem:[#allocation3 + $0x2e68] sm:$0xff]
    %v2862 = vld [vmem:[#allocation3 + $0x2e70] sm:$0xff]
    %v2863 = vld [vmem:[#allocation3 + $0x2e78] sm:$0xff]
    %v2864 = vld [vmem:[#allocation3 + $0x2e80] sm:$0xff]
    %v2865 = vld [vmem:[#allocation3 + $0x2e88] sm:$0xff]
    %v2866 = vld [vmem:[#allocation3 + $0x2e90] sm:$0xff]
    %v2867 = vld [vmem:[#allocation3 + $0x2e98] sm:$0xff]
    %v2868 = vld [vmem:[#allocation3 + $0x2ea0] sm:$0xff]
    %v2869 = vld [vmem:[#allocation3 + $0x2ea8] sm:$0xff]
    %v2870 = vld [vmem:[#allocation3 + $0x2eb0] sm:$0xff]
    %v2871 = vld [vmem:[#allocation3 + $0x2eb8] sm:$0xff]
    %v2872 = vld [vmem:[#allocation3 + $0x2ec0] sm:$0xff]
    %v2873 = vld [vmem:[#allocation3 + $0x2ec8] sm:$0xff]
    %v2874 = vld [vmem:[#allocation3 + $0x2ed0] sm:$0xff]
    %v2875 = vld [vmem:[#allocation3 + $0x2ed8] sm:$0xff]
    %v2876 = vld [vmem:[#allocation3 + $0x2ee0] sm:$0xff]
    %v2877 = vld [vmem:[#allocation3 + $0x2ee8] sm:$0xff]
    %v2878 = vld [vmem:[#allocation3 + $0x2ef0] sm:$0xff]
    %v2879 = vld [vmem:[#allocation3 + $0x2ef8] sm:$0xff]
    %v2880 = vld [vmem:[#allocation3 + $0x2f00] sm:$0xff]
    %v2881 = vld [vmem:[#allocation3 + $0x2f08] sm:$0xff]
    %v2882 = vld [vmem:[#allocation3 + $0x2f10] sm:$0xff]
    %v2883 = vld [vmem:[#allocation3 + $0x2f18] sm:$0xff]
    %v2884 = vld [vmem:[#allocation3 + $0x2f20] sm:$0xff]
    %v2885 = vld [vmem:[#allocation3 + $0x2f28] sm:$0xff]
    %v2886 = vld [vmem:[#allocation3 + $0x2f30] sm:$0xff]
    %v2887 = vld [vmem:[#allocation3 + $0x2f38] sm:$0xff]
    %v2888 = vld [vmem:[#allocation3 + $0x2f40] sm:$0xff]
    %v2889 = vld [vmem:[#allocation3 + $0x2f48] sm:$0xff]
    %v2890 = vld [vmem:[#allocation3 + $0x2f50] sm:$0xff]
    %v2891 = vld [vmem:[#allocation3 + $0x2f58] sm:$0xff]
    %v2892 = vld [vmem:[#allocation3 + $0x2f60] sm:$0xff]
    %v2893 = vld [vmem:[#allocation3 + $0x2f68] sm:$0xff]
    %v2894 = vld [vmem:[#allocation3 + $0x2f70] sm:$0xff]
    %v2895 = vld [vmem:[#allocation3 + $0x2f78] sm:$0xff]
    %v2896 = vld [vmem:[#allocation3 + $0x2f80] sm:$0xff]
    %v2897 = vld [vmem:[#allocation3 + $0x2f88] sm:$0xff]
    %v2898 = vld [vmem:[#allocation3 + $0x2f90] sm:$0xff]
    %v2899 = vld [vmem:[#allocation3 + $0x2f98] sm:$0xff]
    %v2900 = vld [vmem:[#allocation3 + $0x2fa0] sm:$0xff]
    %v2901 = vld [vmem:[#allocation3 + $0x2fa8] sm:$0xff]
    %v2902 = vld [vmem:[#allocation3 + $0x2fb0] sm:$0xff]
    %v2903 = vld [vmem:[#allocation3 + $0x2fb8] sm:$0xff]
    %v2904 = vld [vmem:[#allocation3 + $0x2fc0] sm:$0xff]
    %v2905 = vld [vmem:[#allocation3 + $0x2fc8] sm:$0xff]
    %v2906 = vld [vmem:[#allocation3 + $0x2fd0] sm:$0xff]
    %v2907 = vld [vmem:[#allocation3 + $0x2fd8] sm:$0xff]
    %v2908 = vld [vmem:[#allocation3 + $0x2fe0] sm:$0xff]
    %v2909 = vld [vmem:[#allocation3 + $0x2fe8] sm:$0xff]
    %v2910 = vld [vmem:[#allocation3 + $0x2ff0] sm:$0xff]
    %v2911 = vld [vmem:[#allocation3 + $0x2ff8] sm:$0xff]
    %v2912 = vld [vmem:[#allocation3 + $0x3000] sm:$0xff]
    %v2913 = vld [vmem:[#allocation3 + $0x3008] sm:$0xff]
    %v2914 = vld [vmem:[#allocation3 + $0x3010] sm:$0xff]
    %v2915 = vld [vmem:[#allocation3 + $0x3018] sm:$0xff]
    %v2916 = vld [vmem:[#allocation3 + $0x3020] sm:$0xff]
    %v2917 = vld [vmem:[#allocation3 + $0x3028] sm:$0xff]
    %v2918 = vld [vmem:[#allocation3 + $0x3030] sm:$0xff]
    %v2919 = vld [vmem:[#allocation3 + $0x3038] sm:$0xff]
    %v2920 = vld [vmem:[#allocation3 + $0x3040] sm:$0xff]
    %v2921 = vld [vmem:[#allocation3 + $0x3048] sm:$0xff]
    %v2922 = vld [vmem:[#allocation3 + $0x3050] sm:$0xff]
    %v2923 = vld [vmem:[#allocation3 + $0x3058] sm:$0xff]
    %v2924 = vld [vmem:[#allocation3 + $0x3060] sm:$0xff]
    %v2925 = vld [vmem:[#allocation3 + $0x3068] sm:$0xff]
    %v2926 = vld [vmem:[#allocation3 + $0x3070] sm:$0xff]
    %v2927 = vld [vmem:[#allocation3 + $0x3078] sm:$0xff]
    %v2928 = vld [vmem:[#allocation3 + $0x3080] sm:$0xff]
    %v2929 = vld [vmem:[#allocation3 + $0x3088] sm:$0xff]
    %v2930 = vld [vmem:[#allocation3 + $0x3090] sm:$0xff]
    %v2931 = vld [vmem:[#allocation3 + $0x3098] sm:$0xff]
    %v2932 = vld [vmem:[#allocation3 + $0x30a0] sm:$0xff]
    %v2933 = vld [vmem:[#allocation3 + $0x30a8] sm:$0xff]
    %v2934 = vld [vmem:[#allocation3 + $0x30b0] sm:$0xff]
    %v2935 = vld [vmem:[#allocation3 + $0x30b8] sm:$0xff]
    %v2936 = vld [vmem:[#allocation3 + $0x30c0] sm:$0xff]
    %v2937 = vld [vmem:[#allocation3 + $0x30c8] sm:$0xff]
    %v2938 = vld [vmem:[#allocation3 + $0x30d0] sm:$0xff]
    %v2939 = vld [vmem:[#allocation3 + $0x30d8] sm:$0xff]
    %v2940 = vld [vmem:[#allocation3 + $0x30e0] sm:$0xff]
    %v2941 = vld [vmem:[#allocation3 + $0x30e8] sm:$0xff]
    %v2942 = vld [vmem:[#allocation3 + $0x30f0] sm:$0xff]
    %v2943 = vld [vmem:[#allocation3 + $0x30f8] sm:$0xff]
    %v2944 = vld [vmem:[#allocation3 + $0x3100] sm:$0xff]
    %v2945 = vld [vmem:[#allocation3 + $0x3108] sm:$0xff]
    %v2946 = vld [vmem:[#allocation3 + $0x3110] sm:$0xff]
    %v2947 = vld [vmem:[#allocation3 + $0x3118] sm:$0xff]
    %v2948 = vld [vmem:[#allocation3 + $0x3120] sm:$0xff]
    %v2949 = vld [vmem:[#allocation3 + $0x3128] sm:$0xff]
    %v2950 = vld [vmem:[#allocation3 + $0x3130] sm:$0xff]
    %v2951 = vld [vmem:[#allocation3 + $0x3138] sm:$0xff]
    %v2952 = vld [vmem:[#allocation3 + $0x3140] sm:$0xff]
    %v2953 = vld [vmem:[#allocation3 + $0x3148] sm:$0xff]
    %v2954 = vld [vmem:[#allocation3 + $0x3150] sm:$0xff]
    %v2955 = vld [vmem:[#allocation3 + $0x3158] sm:$0xff]
    %v2956 = vld [vmem:[#allocation3 + $0x3160] sm:$0xff]
    %v2957 = vld [vmem:[#allocation3 + $0x3168] sm:$0xff]
    %v2958 = vld [vmem:[#allocation3 + $0x3170] sm:$0xff]
    %v2959 = vld [vmem:[#allocation3 + $0x3178] sm:$0xff]
    %v2960 = vld [vmem:[#allocation3 + $0x3180] sm:$0xff]
    %v2961 = vld [vmem:[#allocation3 + $0x3188] sm:$0xff]
    %v2962 = vld [vmem:[#allocation3 + $0x3190] sm:$0xff]
    %v2963 = vld [vmem:[#allocation3 + $0x3198] sm:$0xff]
    %v2964 = vld [vmem:[#allocation3 + $0x31a0] sm:$0xff]
    %v2965 = vld [vmem:[#allocation3 + $0x31a8] sm:$0xff]
    %v2966 = vld [vmem:[#allocation3 + $0x31b0] sm:$0xff]
    %v2967 = vld [vmem:[#allocation3 + $0x31b8] sm:$0xff]
    %v2968 = vld [vmem:[#allocation3 + $0x31c0] sm:$0xff]
    %v2969 = vld [vmem:[#allocation3 + $0x31c8] sm:$0xff]
    %v2970 = vld [vmem:[#allocation3 + $0x31d0] sm:$0xff]
    %v2971 = vld [vmem:[#allocation3 + $0x31d8] sm:$0xff]
    %v2972 = vld [vmem:[#allocation3 + $0x31e0] sm:$0xff]
    %v2973 = vld [vmem:[#allocation3 + $0x31e8] sm:$0xff]
    %v2974 = vld [vmem:[#allocation3 + $0x31f0] sm:$0xff]
    %v2975 = vld [vmem:[#allocation3 + $0x31f8] sm:$0xff]
    %v2976 = vld [vmem:[#allocation3 + $0x3200] sm:$0xff]
    %v2977 = vld [vmem:[#allocation3 + $0x3208] sm:$0xff]
    %v2978 = vld [vmem:[#allocation3 + $0x3210] sm:$0xff]
    %v2979 = vld [vmem:[#allocation3 + $0x3218] sm:$0xff]
    %v2980 = vld [vmem:[#allocation3 + $0x3220] sm:$0xff]
    %v2981 = vld [vmem:[#allocation3 + $0x3228] sm:$0xff]
    %v2982 = vld [vmem:[#allocation3 + $0x3230] sm:$0xff]
    %v2983 = vld [vmem:[#allocation3 + $0x3238] sm:$0xff]
    %v2984 = vld [vmem:[#allocation3 + $0x3240] sm:$0xff]
    %v2985 = vld [vmem:[#allocation3 + $0x3248] sm:$0xff]
    %v2986 = vld [vmem:[#allocation3 + $0x3250] sm:$0xff]
    %v2987 = vld [vmem:[#allocation3 + $0x3258] sm:$0xff]
    %v2988 = vld [vmem:[#allocation3 + $0x3260] sm:$0xff]
    %v2989 = vld [vmem:[#allocation3 + $0x3268] sm:$0xff]
    %v2990 = vld [vmem:[#allocation3 + $0x3270] sm:$0xff]
    %v2991 = vld [vmem:[#allocation3 + $0x3278] sm:$0xff]
    %v2992 = vld [vmem:[#allocation3 + $0x3280] sm:$0xff]
    %v2993 = vld [vmem:[#allocation3 + $0x3288] sm:$0xff]
    %v2994 = vld [vmem:[#allocation3 + $0x3290] sm:$0xff]
    %v2995 = vld [vmem:[#allocation3 + $0x3298] sm:$0xff]
    %v2996 = vld [vmem:[#allocation3 + $0x32a0] sm:$0xff]
    %v2997 = vld [vmem:[#allocation3 + $0x32a8] sm:$0xff]
    %v2998 = vld [vmem:[#allocation3 + $0x32b0] sm:$0xff]
    %v2999 = vld [vmem:[#allocation3 + $0x32b8] sm:$0xff]
    %v3000 = vld [vmem:[#allocation3 + $0x32c0] sm:$0xff]
    %v3001 = vld [vmem:[#allocation3 + $0x32c8] sm:$0xff]
    %v3002 = vld [vmem:[#allocation3 + $0x32d0] sm:$0xff]
    %v3003 = vld [vmem:[#allocation3 + $0x32d8] sm:$0xff]
    %v3004 = vld [vmem:[#allocation3 + $0x32e0] sm:$0xff]
    %v3005 = vld [vmem:[#allocation3 + $0x32e8] sm:$0xff]
    %v3006 = vld [vmem:[#allocation3 + $0x32f0] sm:$0xff]
    %v3007 = vld [vmem:[#allocation3 + $0x32f8] sm:$0xff]
    %v3008 = vld [vmem:[#allocation3 + $0x3300] sm:$0xff]
    %v3009 = vld [vmem:[#allocation3 + $0x3308] sm:$0xff]
    %v3010 = vld [vmem:[#allocation3 + $0x3310] sm:$0xff]
    %v3011 = vld [vmem:[#allocation3 + $0x3318] sm:$0xff]
    %v3012 = vld [vmem:[#allocation3 + $0x3320] sm:$0xff]
    %v3013 = vld [vmem:[#allocation3 + $0x3328] sm:$0xff]
    %v3014 = vld [vmem:[#allocation3 + $0x3330] sm:$0xff]
    %v3015 = vld [vmem:[#allocation3 + $0x3338] sm:$0xff]
    %v3016 = vld [vmem:[#allocation3 + $0x3340] sm:$0xff]
    %v3017 = vld [vmem:[#allocation3 + $0x3348] sm:$0xff]
    %v3018 = vld [vmem:[#allocation3 + $0x3350] sm:$0xff]
    %v3019 = vld [vmem:[#allocation3 + $0x3358] sm:$0xff]
    %v3020 = vld [vmem:[#allocation3 + $0x3360] sm:$0xff]
    %v3021 = vld [vmem:[#allocation3 + $0x3368] sm:$0xff]
    %v3022 = vld [vmem:[#allocation3 + $0x3370] sm:$0xff]
    %v3023 = vld [vmem:[#allocation3 + $0x3378] sm:$0xff]
    %v3024 = vld [vmem:[#allocation3 + $0x3380] sm:$0xff]
    %v3025 = vld [vmem:[#allocation3 + $0x3388] sm:$0xff]
    %v3026 = vld [vmem:[#allocation3 + $0x3390] sm:$0xff]
    %v3027 = vld [vmem:[#allocation3 + $0x3398] sm:$0xff]
    %v3028 = vld [vmem:[#allocation3 + $0x33a0] sm:$0xff]
    %v3029 = vld [vmem:[#allocation3 + $0x33a8] sm:$0xff]
    %v3030 = vld [vmem:[#allocation3 + $0x33b0] sm:$0xff]
    %v3031 = vld [vmem:[#allocation3 + $0x33b8] sm:$0xff]
    %v3032 = vld [vmem:[#allocation3 + $0x33c0] sm:$0xff]
    %v3033 = vld [vmem:[#allocation3 + $0x33c8] sm:$0xff]
    %v3034 = vld [vmem:[#allocation3 + $0x33d0] sm:$0xff]
    %v3035 = vld [vmem:[#allocation3 + $0x33d8] sm:$0xff]
    %v3036 = vld [vmem:[#allocation3 + $0x33e0] sm:$0xff]
    %v3037 = vld [vmem:[#allocation3 + $0x33e8] sm:$0xff]
    %v3038 = vld [vmem:[#allocation3 + $0x33f0] sm:$0xff]
    %v3039 = vld [vmem:[#allocation3 + $0x33f8] sm:$0xff]
    %v3040 = vld [vmem:[#allocation3 + $0x3400] sm:$0xff]
    %v3041 = vld [vmem:[#allocation3 + $0x3408] sm:$0xff]
    %v3042 = vld [vmem:[#allocation3 + $0x3410] sm:$0xff]
    %v3043 = vld [vmem:[#allocation3 + $0x3418] sm:$0xff]
    %v3044 = vld [vmem:[#allocation3 + $0x3420] sm:$0xff]
    %v3045 = vld [vmem:[#allocation3 + $0x3428] sm:$0xff]
    %v3046 = vld [vmem:[#allocation3 + $0x3430] sm:$0xff]
    %v3047 = vld [vmem:[#allocation3 + $0x3438] sm:$0xff]
    %v3048 = vld [vmem:[#allocation3 + $0x3440] sm:$0xff]
    %v3049 = vld [vmem:[#allocation3 + $0x3448] sm:$0xff]
    %v3050 = vld [vmem:[#allocation3 + $0x3450] sm:$0xff]
    %v3051 = vld [vmem:[#allocation3 + $0x3458] sm:$0xff]
    %v3052 = vld [vmem:[#allocation3 + $0x3460] sm:$0xff]
    %v3053 = vld [vmem:[#allocation3 + $0x3468] sm:$0xff]
    %v3054 = vld [vmem:[#allocation3 + $0x3470] sm:$0xff]
    %v3055 = vld [vmem:[#allocation3 + $0x3478] sm:$0xff]
    %v3056 = vld [vmem:[#allocation3 + $0x3480] sm:$0xff]
    %v3057 = vld [vmem:[#allocation3 + $0x3488] sm:$0xff]
    %v3058 = vld [vmem:[#allocation3 + $0x3490] sm:$0xff]
    %v3059 = vld [vmem:[#allocation3 + $0x3498] sm:$0xff]
    %v3060 = vld [vmem:[#allocation3 + $0x34a0] sm:$0xff]
    %v3061 = vld [vmem:[#allocation3 + $0x34a8] sm:$0xff]
    %v3062 = vld [vmem:[#allocation3 + $0x34b0] sm:$0xff]
    %v3063 = vld [vmem:[#allocation3 + $0x34b8] sm:$0xff]
    %v3064 = vld [vmem:[#allocation3 + $0x34c0] sm:$0xff]
    %v3065 = vld [vmem:[#allocation3 + $0x34c8] sm:$0xff]
    %v3066 = vld [vmem:[#allocation3 + $0x34d0] sm:$0xff]
    %v3067 = vld [vmem:[#allocation3 + $0x34d8] sm:$0xff]
    %v3068 = vld [vmem:[#allocation3 + $0x34e0] sm:$0xff]
    %v3069 = vld [vmem:[#allocation3 + $0x34e8] sm:$0xff]
    %v3070 = vld [vmem:[#allocation3 + $0x34f0] sm:$0xff]
    %v3071 = vld [vmem:[#allocation3 + $0x34f8] sm:$0xff]
    %v3072 = vld [vmem:[#allocation3 + $0x3500] sm:$0xff]
    %v3073 = vld [vmem:[#allocation3 + $0x3508] sm:$0xff]
    %v3074 = vld [vmem:[#allocation3 + $0x3510] sm:$0xff]
    %v3075 = vld [vmem:[#allocation3 + $0x3518] sm:$0xff]
    %v3076 = vld [vmem:[#allocation3 + $0x3520] sm:$0xff]
    %v3077 = vld [vmem:[#allocation3 + $0x3528] sm:$0xff]
    %v3078 = vld [vmem:[#allocation3 + $0x3530] sm:$0xff]
    %v3079 = vld [vmem:[#allocation3 + $0x3538] sm:$0xff]
    %v3080 = vld [vmem:[#allocation3 + $0x3540] sm:$0xff]
    %v3081 = vld [vmem:[#allocation3 + $0x3548] sm:$0xff]
    %v3082 = vld [vmem:[#allocation3 + $0x3550] sm:$0xff]
    %v3083 = vld [vmem:[#allocation3 + $0x3558] sm:$0xff]
    %v3084 = vld [vmem:[#allocation3 + $0x3560] sm:$0xff]
    %v3085 = vld [vmem:[#allocation3 + $0x3568] sm:$0xff]
    %v3086 = vld [vmem:[#allocation3 + $0x3570] sm:$0xff]
    %v3087 = vld [vmem:[#allocation3 + $0x3578] sm:$0xff]
    %v3088 = vld [vmem:[#allocation3 + $0x3580] sm:$0xff]
    %v3089 = vld [vmem:[#allocation3 + $0x3588] sm:$0xff]
    %v3090 = vld [vmem:[#allocation3 + $0x3590] sm:$0xff]
    %v3091 = vld [vmem:[#allocation3 + $0x3598] sm:$0xff]
    %v3092 = vld [vmem:[#allocation3 + $0x35a0] sm:$0xff]
    %v3093 = vld [vmem:[#allocation3 + $0x35a8] sm:$0xff]
    %v3094 = vld [vmem:[#allocation3 + $0x35b0] sm:$0xff]
    %v3095 = vld [vmem:[#allocation3 + $0x35b8] sm:$0xff]
    %v3096 = vld [vmem:[#allocation3 + $0x35c0] sm:$0xff]
    %v3097 = vld [vmem:[#allocation3 + $0x35c8] sm:$0xff]
    %v3098 = vld [vmem:[#allocation3 + $0x35d0] sm:$0xff]
    %v3099 = vld [vmem:[#allocation3 + $0x35d8] sm:$0xff]
    %v3100 = vld [vmem:[#allocation3 + $0x35e0] sm:$0xff]
    %v3101 = vld [vmem:[#allocation3 + $0x35e8] sm:$0xff]
    %v3102 = vld [vmem:[#allocation3 + $0x35f0] sm:$0xff]
    %v3103 = vld [vmem:[#allocation3 + $0x35f8] sm:$0xff]
    %v3104 = vld [vmem:[#allocation3 + $0x3600] sm:$0xff]
    %v3105 = vld [vmem:[#allocation3 + $0x3608] sm:$0xff]
    %v3106 = vld [vmem:[#allocation3 + $0x3610] sm:$0xff]
    %v3107 = vld [vmem:[#allocation3 + $0x3618] sm:$0xff]
    %v3108 = vld [vmem:[#allocation3 + $0x3620] sm:$0xff]
    %v3109 = vld [vmem:[#allocation3 + $0x3628] sm:$0xff]
    %v3110 = vld [vmem:[#allocation3 + $0x3630] sm:$0xff]
    %v3111 = vld [vmem:[#allocation3 + $0x3638] sm:$0xff]
    %v3112 = vld [vmem:[#allocation3 + $0x3640] sm:$0xff]
    %v3113 = vld [vmem:[#allocation3 + $0x3648] sm:$0xff]
    %v3114 = vld [vmem:[#allocation3 + $0x3650] sm:$0xff]
    %v3115 = vld [vmem:[#allocation3 + $0x3658] sm:$0xff]
    %v3116 = vld [vmem:[#allocation3 + $0x3660] sm:$0xff]
    %v3117 = vld [vmem:[#allocation3 + $0x3668] sm:$0xff]
    %v3118 = vld [vmem:[#allocation3 + $0x3670] sm:$0xff]
    %v3119 = vld [vmem:[#allocation3 + $0x3678] sm:$0xff]
    %v3120 = vld [vmem:[#allocation3 + $0x3680] sm:$0xff]
    %v3121 = vld [vmem:[#allocation3 + $0x3688] sm:$0xff]
    %v3122 = vld [vmem:[#allocation3 + $0x3690] sm:$0xff]
    %v3123 = vld [vmem:[#allocation3 + $0x3698] sm:$0xff]
    %v3124 = vld [vmem:[#allocation3 + $0x36a0] sm:$0xff]
    %v3125 = vld [vmem:[#allocation3 + $0x36a8] sm:$0xff]
    %v3126 = vld [vmem:[#allocation3 + $0x36b0] sm:$0xff]
    %v3127 = vld [vmem:[#allocation3 + $0x36b8] sm:$0xff]
    %v3128 = vld [vmem:[#allocation3 + $0x36c0] sm:$0xff]
    %v3129 = vld [vmem:[#allocation3 + $0x36c8] sm:$0xff]
    %v3130 = vld [vmem:[#allocation3 + $0x36d0] sm:$0xff]
    %v3131 = vld [vmem:[#allocation3 + $0x36d8] sm:$0xff]
    %v3132 = vld [vmem:[#allocation3 + $0x36e0] sm:$0xff]
    %v3133 = vld [vmem:[#allocation3 + $0x36e8] sm:$0xff]
    %v3134 = vld [vmem:[#allocation3 + $0x36f0] sm:$0xff]
    %v3135 = vld [vmem:[#allocation3 + $0x36f8] sm:$0xff]
    %v3136 = vld [vmem:[#allocation3 + $0x3700] sm:$0xff]
    %v3137 = vld [vmem:[#allocation3 + $0x3708] sm:$0xff]
    %v3138 = vld [vmem:[#allocation3 + $0x3710] sm:$0xff]
    %v3139 = vld [vmem:[#allocation3 + $0x3718] sm:$0xff]
    %v3140 = vld [vmem:[#allocation3 + $0x3720] sm:$0xff]
    %v3141 = vld [vmem:[#allocation3 + $0x3728] sm:$0xff]
    %v3142 = vld [vmem:[#allocation3 + $0x3730] sm:$0xff]
    %v3143 = vld [vmem:[#allocation3 + $0x3738] sm:$0xff]
    %v3144 = vld [vmem:[#allocation3 + $0x3740] sm:$0xff]
    %v3145 = vld [vmem:[#allocation3 + $0x3748] sm:$0xff]
    %v3146 = vld [vmem:[#allocation3 + $0x3750] sm:$0xff]
    %v3147 = vld [vmem:[#allocation3 + $0x3758] sm:$0xff]
    %v3148 = vld [vmem:[#allocation3 + $0x3760] sm:$0xff]
    %v3149 = vld [vmem:[#allocation3 + $0x3768] sm:$0xff]
    %v3150 = vld [vmem:[#allocation3 + $0x3770] sm:$0xff]
    %v3151 = vld [vmem:[#allocation3 + $0x3778] sm:$0xff]
    %v3152 = vld [vmem:[#allocation3 + $0x3780] sm:$0xff]
    %v3153 = vld [vmem:[#allocation3 + $0x3788] sm:$0xff]
    %v3154 = vld [vmem:[#allocation3 + $0x3790] sm:$0xff]
    %v3155 = vld [vmem:[#allocation3 + $0x3798] sm:$0xff]
    %v3156 = vld [vmem:[#allocation3 + $0x37a0] sm:$0xff]
    %v3157 = vld [vmem:[#allocation3 + $0x37a8] sm:$0xff]
    %v3158 = vld [vmem:[#allocation3 + $0x37b0] sm:$0xff]
    %v3159 = vld [vmem:[#allocation3 + $0x37b8] sm:$0xff]
    %v3160 = vld [vmem:[#allocation3 + $0x37c0] sm:$0xff]
    %v3161 = vld [vmem:[#allocation3 + $0x37c8] sm:$0xff]
    %v3162 = vld [vmem:[#allocation3 + $0x37d0] sm:$0xff]
    %v3163 = vld [vmem:[#allocation3 + $0x37d8] sm:$0xff]
    %v3164 = vld [vmem:[#allocation3 + $0x37e0] sm:$0xff]
    %v3165 = vld [vmem:[#allocation3 + $0x37e8] sm:$0xff]
    %v3166 = vld [vmem:[#allocation3 + $0x37f0] sm:$0xff]
    %v3167 = vld [vmem:[#allocation3 + $0x37f8] sm:$0xff]
    %v3168 = vld [vmem:[#allocation3 + $0x3800] sm:$0xff]
    %v3169 = vld [vmem:[#allocation3 + $0x3808] sm:$0xff]
    %v3170 = vld [vmem:[#allocation3 + $0x3810] sm:$0xff]
    %v3171 = vld [vmem:[#allocation3 + $0x3818] sm:$0xff]
    %v3172 = vld [vmem:[#allocation3 + $0x3820] sm:$0xff]
    %v3173 = vld [vmem:[#allocation3 + $0x3828] sm:$0xff]
    %v3174 = vld [vmem:[#allocation3 + $0x3830] sm:$0xff]
    %v3175 = vld [vmem:[#allocation3 + $0x3838] sm:$0xff]
    %v3176 = vld [vmem:[#allocation3 + $0x3840] sm:$0xff]
    %v3177 = vld [vmem:[#allocation3 + $0x3848] sm:$0xff]
    %v3178 = vld [vmem:[#allocation3 + $0x3850] sm:$0xff]
    %v3179 = vld [vmem:[#allocation3 + $0x3858] sm:$0xff]
    %v3180 = vld [vmem:[#allocation3 + $0x3860] sm:$0xff]
    %v3181 = vld [vmem:[#allocation3 + $0x3868] sm:$0xff]
    %v3182 = vld [vmem:[#allocation3 + $0x3870] sm:$0xff]
    %v3183 = vld [vmem:[#allocation3 + $0x3878] sm:$0xff]
    %v3184 = vld [vmem:[#allocation3 + $0x3880] sm:$0xff]
    %v3185 = vld [vmem:[#allocation3 + $0x3888] sm:$0xff]
    %v3186 = vld [vmem:[#allocation3 + $0x3890] sm:$0xff]
    %v3187 = vld [vmem:[#allocation3 + $0x3898] sm:$0xff]
    %v3188 = vld [vmem:[#allocation3 + $0x38a0] sm:$0xff]
    %v3189 = vld [vmem:[#allocation3 + $0x38a8] sm:$0xff]
    %v3190 = vld [vmem:[#allocation3 + $0x38b0] sm:$0xff]
    %v3191 = vld [vmem:[#allocation3 + $0x38b8] sm:$0xff]
    %v3192 = vld [vmem:[#allocation3 + $0x38c0] sm:$0xff]
    %v3193 = vld [vmem:[#allocation3 + $0x38c8] sm:$0xff]
    %v3194 = vld [vmem:[#allocation3 + $0x38d0] sm:$0xff]
    %v3195 = vld [vmem:[#allocation3 + $0x38d8] sm:$0xff]
    %v3196 = vld [vmem:[#allocation3 + $0x38e0] sm:$0xff]
    %v3197 = vld [vmem:[#allocation3 + $0x38e8] sm:$0xff]
    %v3198 = vld [vmem:[#allocation3 + $0x38f0] sm:$0xff]
    %v3199 = vld [vmem:[#allocation3 + $0x38f8] sm:$0xff]
    %v3200 = vld [vmem:[#allocation3 + $0x3900] sm:$0xff]
    %v3201 = vld [vmem:[#allocation3 + $0x3908] sm:$0xff]
    %v3202 = vld [vmem:[#allocation3 + $0x3910] sm:$0xff]
    %v3203 = vld [vmem:[#allocation3 + $0x3918] sm:$0xff]
    %v3204 = vld [vmem:[#allocation3 + $0x3920] sm:$0xff]
    %v3205 = vld [vmem:[#allocation3 + $0x3928] sm:$0xff]
    %v3206 = vld [vmem:[#allocation3 + $0x3930] sm:$0xff]
    %v3207 = vld [vmem:[#allocation3 + $0x3938] sm:$0xff]
    %v3208 = vld [vmem:[#allocation3 + $0x3940] sm:$0xff]
    %v3209 = vld [vmem:[#allocation3 + $0x3948] sm:$0xff]
    %v3210 = vld [vmem:[#allocation3 + $0x3950] sm:$0xff]
    %v3211 = vld [vmem:[#allocation3 + $0x3958] sm:$0xff]
    %v3212 = vld [vmem:[#allocation3 + $0x3960] sm:$0xff]
    %v3213 = vld [vmem:[#allocation3 + $0x3968] sm:$0xff]
    %v3214 = vld [vmem:[#allocation3 + $0x3970] sm:$0xff]
    %v3215 = vld [vmem:[#allocation3 + $0x3978] sm:$0xff]
    %v3216 = vld [vmem:[#allocation3 + $0x3980] sm:$0xff]
    %v3217 = vld [vmem:[#allocation3 + $0x3988] sm:$0xff]
    %v3218 = vld [vmem:[#allocation3 + $0x3990] sm:$0xff]
    %v3219 = vld [vmem:[#allocation3 + $0x3998] sm:$0xff]
    %v3220 = vld [vmem:[#allocation3 + $0x39a0] sm:$0xff]
    %v3221 = vld [vmem:[#allocation3 + $0x39a8] sm:$0xff]
    %v3222 = vld [vmem:[#allocation3 + $0x39b0] sm:$0xff]
    %v3223 = vld [vmem:[#allocation3 + $0x39b8] sm:$0xff]
    %v3224 = vld [vmem:[#allocation3 + $0x39c0] sm:$0xff]
    %v3225 = vld [vmem:[#allocation3 + $0x39c8] sm:$0xff]
    %v3226 = vld [vmem:[#allocation3 + $0x39d0] sm:$0xff]
    %v3227 = vld [vmem:[#allocation3 + $0x39d8] sm:$0xff]
    %v3228 = vld [vmem:[#allocation3 + $0x39e0] sm:$0xff]
    %v3229 = vld [vmem:[#allocation3 + $0x39e8] sm:$0xff]
    %v3230 = vld [vmem:[#allocation3 + $0x39f0] sm:$0xff]
    %v3231 = vld [vmem:[#allocation3 + $0x39f8] sm:$0xff]
    %v3232 = vld [vmem:[#allocation3 + $0x3a00] sm:$0xff]
    %v3233 = vld [vmem:[#allocation3 + $0x3a08] sm:$0xff]
    %v3234 = vld [vmem:[#allocation3 + $0x3a10] sm:$0xff]
    %v3235 = vld [vmem:[#allocation3 + $0x3a18] sm:$0xff]
    %v3236 = vld [vmem:[#allocation3 + $0x3a20] sm:$0xff]
    %v3237 = vld [vmem:[#allocation3 + $0x3a28] sm:$0xff]
    %v3238 = vld [vmem:[#allocation3 + $0x3a30] sm:$0xff]
    %v3239 = vld [vmem:[#allocation3 + $0x3a38] sm:$0xff]
    %v3240 = vld [vmem:[#allocation3 + $0x3a40] sm:$0xff]
    %v3241 = vld [vmem:[#allocation3 + $0x3a48] sm:$0xff]
    %v3242 = vld [vmem:[#allocation3 + $0x3a50] sm:$0xff]
    %v3243 = vld [vmem:[#allocation3 + $0x3a58] sm:$0xff]
    %v3244 = vld [vmem:[#allocation3 + $0x3a60] sm:$0xff]
    %v3245 = vld [vmem:[#allocation3 + $0x3a68] sm:$0xff]
    %v3246 = vld [vmem:[#allocation3 + $0x3a70] sm:$0xff]
    %v3247 = vld [vmem:[#allocation3 + $0x3a78] sm:$0xff]
    %v3248 = vld [vmem:[#allocation3 + $0x3a80] sm:$0xff]
    %v3249 = vld [vmem:[#allocation3 + $0x3a88] sm:$0xff]
    %v3250 = vld [vmem:[#allocation3 + $0x3a90] sm:$0xff]
    %v3251 = vld [vmem:[#allocation3 + $0x3a98] sm:$0xff]
    %v3252 = vld [vmem:[#allocation3 + $0x3aa0] sm:$0xff]
    %v3253 = vld [vmem:[#allocation3 + $0x3aa8] sm:$0xff]
    %v3254 = vld [vmem:[#allocation3 + $0x3ab0] sm:$0xff]
    %v3255 = vld [vmem:[#allocation3 + $0x3ab8] sm:$0xff]
    %v3256 = vld [vmem:[#allocation3 + $0x3ac0] sm:$0xff]
    %v3257 = vld [vmem:[#allocation3 + $0x3ac8] sm:$0xff]
    %v3258 = vld [vmem:[#allocation3 + $0x3ad0] sm:$0xff]
    %v3259 = vld [vmem:[#allocation3 + $0x3ad8] sm:$0xff]
    %v3260 = vld [vmem:[#allocation3 + $0x3ae0] sm:$0xff]
    %v3261 = vld [vmem:[#allocation3 + $0x3ae8] sm:$0xff]
    %v3262 = vld [vmem:[#allocation3 + $0x3af0] sm:$0xff]
    %v3263 = vld [vmem:[#allocation3 + $0x3af8] sm:$0xff]
    %v3264 = vld [vmem:[#allocation3 + $0x3b00] sm:$0xff]
    %v3265 = vld [vmem:[#allocation3 + $0x3b08] sm:$0xff]
    %v3266 = vld [vmem:[#allocation3 + $0x3b10] sm:$0xff]
    %v3267 = vld [vmem:[#allocation3 + $0x3b18] sm:$0xff]
    %v3268 = vld [vmem:[#allocation3 + $0x3b20] sm:$0xff]
    %v3269 = vld [vmem:[#allocation3 + $0x3b28] sm:$0xff]
    %v3270 = vld [vmem:[#allocation3 + $0x3b30] sm:$0xff]
    %v3271 = vld [vmem:[#allocation3 + $0x3b38] sm:$0xff]
    %v3272 = vld [vmem:[#allocation3 + $0x3b40] sm:$0xff]
    %v3273 = vld [vmem:[#allocation3 + $0x3b48] sm:$0xff]
    %v3274 = vld [vmem:[#allocation3 + $0x3b50] sm:$0xff]
    %v3275 = vld [vmem:[#allocation3 + $0x3b58] sm:$0xff]
    %v3276 = vld [vmem:[#allocation3 + $0x3b60] sm:$0xff]
    %v3277 = vld [vmem:[#allocation3 + $0x3b68] sm:$0xff]
    %v3278 = vld [vmem:[#allocation3 + $0x3b70] sm:$0xff]
    %v3279 = vld [vmem:[#allocation3 + $0x3b78] sm:$0xff]
    %v3280 = vld [vmem:[#allocation3 + $0x3b80] sm:$0xff]
    %v3281 = vld [vmem:[#allocation3 + $0x3b88] sm:$0xff]
    %v3282 = vld [vmem:[#allocation3 + $0x3b90] sm:$0xff]
    %v3283 = vld [vmem:[#allocation3 + $0x3b98] sm:$0xff]
    %v3284 = vld [vmem:[#allocation3 + $0x3ba0] sm:$0xff]
    %v3285 = vld [vmem:[#allocation3 + $0x3ba8] sm:$0xff]
    %v3286 = vld [vmem:[#allocation3 + $0x3bb0] sm:$0xff]
    %v3287 = vld [vmem:[#allocation3 + $0x3bb8] sm:$0xff]
    %v3288 = vld [vmem:[#allocation3 + $0x3bc0] sm:$0xff]
    %v3289 = vld [vmem:[#allocation3 + $0x3bc8] sm:$0xff]
    %v3290 = vld [vmem:[#allocation3 + $0x3bd0] sm:$0xff]
    %v3291 = vld [vmem:[#allocation3 + $0x3bd8] sm:$0xff]
    %v3292 = vld [vmem:[#allocation3 + $0x3be0] sm:$0xff]
    %v3293 = vld [vmem:[#allocation3 + $0x3be8] sm:$0xff]
    %v3294 = vld [vmem:[#allocation3 + $0x3bf0] sm:$0xff]
    %v3295 = vld [vmem:[#allocation3 + $0x3bf8] sm:$0xff]
    %v3296 = vld [vmem:[#allocation3 + $0x3c00] sm:$0xff]
    %v3297 = vld [vmem:[#allocation3 + $0x3c08] sm:$0xff]
    %v3298 = vld [vmem:[#allocation3 + $0x3c10] sm:$0xff]
    %v3299 = vld [vmem:[#allocation3 + $0x3c18] sm:$0xff]
    %v3300 = vld [vmem:[#allocation3 + $0x3c20] sm:$0xff]
    %v3301 = vld [vmem:[#allocation3 + $0x3c28] sm:$0xff]
    %v3302 = vld [vmem:[#allocation3 + $0x3c30] sm:$0xff]
    %v3303 = vld [vmem:[#allocation3 + $0x3c38] sm:$0xff]
    %v3304 = vld [vmem:[#allocation3 + $0x3c40] sm:$0xff]
    %v3305 = vld [vmem:[#allocation3 + $0x3c48] sm:$0xff]
    %v3306 = vld [vmem:[#allocation3 + $0x3c50] sm:$0xff]
    %v3307 = vld [vmem:[#allocation3 + $0x3c58] sm:$0xff]
    %v3308 = vld [vmem:[#allocation3 + $0x3c60] sm:$0xff]
    %v3309 = vld [vmem:[#allocation3 + $0x3c68] sm:$0xff]
    %v3310 = vld [vmem:[#allocation3 + $0x3c70] sm:$0xff]
    %v3311 = vld [vmem:[#allocation3 + $0x3c78] sm:$0xff]
    %v3312 = vld [vmem:[#allocation3 + $0x3c80] sm:$0xff]
    %v3313 = vld [vmem:[#allocation3 + $0x3c88] sm:$0xff]
    %v3314 = vld [vmem:[#allocation3 + $0x3c90] sm:$0xff]
    %v3315 = vld [vmem:[#allocation3 + $0x3c98] sm:$0xff]
    %v3316 = vld [vmem:[#allocation3 + $0x3ca0] sm:$0xff]
    %v3317 = vld [vmem:[#allocation3 + $0x3ca8] sm:$0xff]
    %v3318 = vld [vmem:[#allocation3 + $0x3cb0] sm:$0xff]
    %v3319 = vld [vmem:[#allocation3 + $0x3cb8] sm:$0xff]
    %v3320 = vld [vmem:[#allocation3 + $0x3cc0] sm:$0xff]
    %v3321 = vld [vmem:[#allocation3 + $0x3cc8] sm:$0xff]
    %v3322 = vld [vmem:[#allocation3 + $0x3cd0] sm:$0xff]
    %v3323 = vld [vmem:[#allocation3 + $0x3cd8] sm:$0xff]
    %v3324 = vld [vmem:[#allocation3 + $0x3ce0] sm:$0xff]
    %v3325 = vld [vmem:[#allocation3 + $0x3ce8] sm:$0xff]
    %v3326 = vld [vmem:[#allocation3 + $0x3cf0] sm:$0xff]
    %v3327 = vld [vmem:[#allocation3 + $0x3cf8] sm:$0xff]
    %v3328 = vld [vmem:[#allocation3 + $0x3d00] sm:$0xff]
    %v3329 = vld [vmem:[#allocation3 + $0x3d08] sm:$0xff]
    %v3330 = vld [vmem:[#allocation3 + $0x3d10] sm:$0xff]
    %v3331 = vld [vmem:[#allocation3 + $0x3d18] sm:$0xff]
    %v3332 = vld [vmem:[#allocation3 + $0x3d20] sm:$0xff]
    %v3333 = vld [vmem:[#allocation3 + $0x3d28] sm:$0xff]
    %v3334 = vld [vmem:[#allocation3 + $0x3d30] sm:$0xff]
    %v3335 = vld [vmem:[#allocation3 + $0x3d38] sm:$0xff]
    %v3336 = vld [vmem:[#allocation3 + $0x3d40] sm:$0xff]
    %v3337 = vld [vmem:[#allocation3 + $0x3d48] sm:$0xff]
    %v3338 = vld [vmem:[#allocation3 + $0x3d50] sm:$0xff]
    %v3339 = vld [vmem:[#allocation3 + $0x3d58] sm:$0xff]
    %v3340 = vld [vmem:[#allocation3 + $0x3d60] sm:$0xff]
    %v3341 = vld [vmem:[#allocation3 + $0x3d68] sm:$0xff]
    %v3342 = vld [vmem:[#allocation3 + $0x3d70] sm:$0xff]
    %v3343 = vld [vmem:[#allocation3 + $0x3d78] sm:$0xff]
    %v3344 = vld [vmem:[#allocation3 + $0x3d80] sm:$0xff]
    %v3345 = vld [vmem:[#allocation3 + $0x3d88] sm:$0xff]
    %v3346 = vld [vmem:[#allocation3 + $0x3d90] sm:$0xff]
    %v3347 = vld [vmem:[#allocation3 + $0x3d98] sm:$0xff]
    %v3348 = vld [vmem:[#allocation3 + $0x3da0] sm:$0xff]
    %v3349 = vld [vmem:[#allocation3 + $0x3da8] sm:$0xff]
    %v3350 = vld [vmem:[#allocation3 + $0x3db0] sm:$0xff]
    %v3351 = vld [vmem:[#allocation3 + $0x3db8] sm:$0xff]
    %v3352 = vld [vmem:[#allocation3 + $0x3dc0] sm:$0xff]
    %v3353 = vld [vmem:[#allocation3 + $0x3dc8] sm:$0xff]
    %v3354 = vld [vmem:[#allocation3 + $0x3dd0] sm:$0xff]
    %v3355 = vld [vmem:[#allocation3 + $0x3dd8] sm:$0xff]
    %v3356 = vld [vmem:[#allocation3 + $0x3de0] sm:$0xff]
    %v3357 = vld [vmem:[#allocation3 + $0x3de8] sm:$0xff]
    %v3358 = vld [vmem:[#allocation3 + $0x3df0] sm:$0xff]
    %v3359 = vld [vmem:[#allocation3 + $0x3df8] sm:$0xff]
    %v3360 = vld [vmem:[#allocation3 + $0x3e00] sm:$0xff]
    %v3361 = vld [vmem:[#allocation3 + $0x3e08] sm:$0xff]
    %v3362 = vld [vmem:[#allocation3 + $0x3e10] sm:$0xff]
    %v3363 = vld [vmem:[#allocation3 + $0x3e18] sm:$0xff]
    %v3364 = vld [vmem:[#allocation3 + $0x3e20] sm:$0xff]
    %v3365 = vld [vmem:[#allocation3 + $0x3e28] sm:$0xff]
    %v3366 = vld [vmem:[#allocation3 + $0x3e30] sm:$0xff]
    %v3367 = vld [vmem:[#allocation3 + $0x3e38] sm:$0xff]
    %v3368 = vld [vmem:[#allocation3 + $0x3e40] sm:$0xff]
    %v3369 = vld [vmem:[#allocation3 + $0x3e48] sm:$0xff]
    %v3370 = vld [vmem:[#allocation3 + $0x3e50] sm:$0xff]
    %v3371 = vld [vmem:[#allocation3 + $0x3e58] sm:$0xff]
    %v3372 = vld [vmem:[#allocation3 + $0x3e60] sm:$0xff]
    %v3373 = vld [vmem:[#allocation3 + $0x3e68] sm:$0xff]
    %v3374 = vld [vmem:[#allocation3 + $0x3e70] sm:$0xff]
    %v3375 = vld [vmem:[#allocation3 + $0x3e78] sm:$0xff]
    %v3376 = vld [vmem:[#allocation3 + $0x3e80] sm:$0xff]
    %v3377 = vld [vmem:[#allocation3 + $0x3e88] sm:$0xff]
    %v3378 = vld [vmem:[#allocation3 + $0x3e90] sm:$0xff]
    %v3379 = vld [vmem:[#allocation3 + $0x3e98] sm:$0xff]
    %v3380 = vld [vmem:[#allocation3 + $0x3ea0] sm:$0xff]
    %v3381 = vld [vmem:[#allocation3 + $0x3ea8] sm:$0xff]
    %v3382 = vld [vmem:[#allocation3 + $0x3eb0] sm:$0xff]
    %v3383 = vld [vmem:[#allocation3 + $0x3eb8] sm:$0xff]
    %v3384 = vld [vmem:[#allocation3 + $0x3ec0] sm:$0xff]
    %v3385 = vld [vmem:[#allocation3 + $0x3ec8] sm:$0xff]
    %v3386 = vld [vmem:[#allocation3 + $0x3ed0] sm:$0xff]
    %v3387 = vld [vmem:[#allocation3 + $0x3ed8] sm:$0xff]
    %v3388 = vld [vmem:[#allocation3 + $0x3ee0] sm:$0xff]
    %v3389 = vld [vmem:[#allocation3 + $0x3ee8] sm:$0xff]
    %v3390 = vld [vmem:[#allocation3 + $0x3ef0] sm:$0xff]
    %v3391 = vld [vmem:[#allocation3 + $0x3ef8] sm:$0xff]
    %v3392 = vld [vmem:[#allocation3 + $0x3f00] sm:$0xff]
    %v3393 = vld [vmem:[#allocation3 + $0x3f08] sm:$0xff]
    %v3394 = vld [vmem:[#allocation3 + $0x3f10] sm:$0xff]
    %v3395 = vld [vmem:[#allocation3 + $0x3f18] sm:$0xff]
    %v3396 = vld [vmem:[#allocation3 + $0x3f20] sm:$0xff]
    %v3397 = vld [vmem:[#allocation3 + $0x3f28] sm:$0xff]
    %v3398 = vld [vmem:[#allocation3 + $0x3f30] sm:$0xff]
    %v3399 = vld [vmem:[#allocation3 + $0x3f38] sm:$0xff]
    %v3400 = vld [vmem:[#allocation3 + $0x3f40] sm:$0xff]
    %v3401 = vld [vmem:[#allocation3 + $0x3f48] sm:$0xff]
    %v3402 = vld [vmem:[#allocation3 + $0x3f50] sm:$0xff]
    %v3403 = vld [vmem:[#allocation3 + $0x3f58] sm:$0xff]
    %v3404 = vld [vmem:[#allocation3 + $0x3f60] sm:$0xff]
    %v3405 = vld [vmem:[#allocation3 + $0x3f68] sm:$0xff]
    %v3406 = vld [vmem:[#allocation3 + $0x3f70] sm:$0xff]
    %v3407 = vld [vmem:[#allocation3 + $0x3f78] sm:$0xff]
    %v3408 = vld [vmem:[#allocation3 + $0x3f80] sm:$0xff]
    %v3409 = vld [vmem:[#allocation3 + $0x3f88] sm:$0xff]
    %v3410 = vld [vmem:[#allocation3 + $0x3f90] sm:$0xff]
    %v3411 = vld [vmem:[#allocation3 + $0x3f98] sm:$0xff]
    %v3412 = vld [vmem:[#allocation3 + $0x3fa0] sm:$0xff]
    %v3413 = vld [vmem:[#allocation3 + $0x3fa8] sm:$0xff]
    %v3414 = vld [vmem:[#allocation3 + $0x3fb0] sm:$0xff]
    %v3415 = vld [vmem:[#allocation3 + $0x3fb8] sm:$0xff]
    %v3416 = vld [vmem:[#allocation3 + $0x3fc0] sm:$0xff]
    %v3417 = vld [vmem:[#allocation3 + $0x3fc8] sm:$0xff]
    %v3418 = vld [vmem:[#allocation3 + $0x3fd0] sm:$0xff]
    %v3419 = vld [vmem:[#allocation3 + $0x3fd8] sm:$0xff]
    %v3420 = vld [vmem:[#allocation3 + $0x3fe0] sm:$0xff]
    %v3421 = vld [vmem:[#allocation3 + $0x3fe8] sm:$0xff]
    %v3422 = vld [vmem:[#allocation3 + $0x3ff0] sm:$0xff]
    %v3423 = vld [vmem:[#allocation3 + $0x3ff8] sm:$0xff]
    %v3424 = vld [vmem:[#allocation17] sm:$0xff]
    %3425 = vmatprep.subr.mxu0 %v1377
    %3426 = vmatpush1.msra.mxu0 %v1376
    %3427 = vmatprep.subr.mxu0 %v1385
    %3428 = vmatpush1.msra.mxu0 %v1384
    %3429 = vmatprep.subr.mxu0 %v1393
    %3430 = vmatpush1.msra.mxu0 %v1392
    %3431 = vmatprep.subr.mxu0 %v1401
    %3432 = vmatpush1.msra.mxu0 %v1400
    %3433 = vmatprep.subr.mxu0 %v1409
    %3434 = vmatpush1.msra.mxu0 %v1408
    %3435 = vmatprep.subr.mxu0 %v1417
    %3436 = vmatpush1.msra.mxu0 %v1416
    %3437 = vmatprep.subr.mxu0 %v1425
    %3438 = vmatpush1.msra.mxu0 %v1424
    %3439 = vmatprep.subr.mxu0 %v1433
    %3440 = vmatpush1.msra.mxu0 %v1432
    %3441 = vmatprep.subr.mxu0 %v1441
    %3442 = vmatpush1.msra.mxu0 %v1440
    %3443 = vmatprep.subr.mxu0 %v1449
    %3444 = vmatpush1.msra.mxu0 %v1448
    %3445 = vmatprep.subr.mxu0 %v1457
    %3446 = vmatpush1.msra.mxu0 %v1456
    %3447 = vmatprep.subr.mxu0 %v1465
    %3448 = vmatpush1.msra.mxu0 %v1464
    %3449 = vmatprep.subr.mxu0 %v1473
    %3450 = vmatpush1.msra.mxu0 %v1472
    %3451 = vmatprep.subr.mxu0 %v1481
    %3452 = vmatpush1.msra.mxu0 %v1480
    %3453 = vmatprep.subr.mxu0 %v1489
    %3454 = vmatpush1.msra.mxu0 %v1488
    %3455 = vmatprep.subr.mxu0 %v1497
    %3456 = vmatpush1.msra.mxu0 %v1496
    %3457 = vmatprep.subr.mxu0 %v1505
    %3458 = vmatpush1.msra.mxu0 %v1504
    %3459 = vmatprep.subr.mxu0 %v1513
    %3460 = vmatpush1.msra.mxu0 %v1512
    %3461 = vmatprep.subr.mxu0 %v1521
    %3462 = vmatpush1.msra.mxu0 %v1520
    %3463 = vmatprep.subr.mxu0 %v1529
    %3464 = vmatpush1.msra.mxu0 %v1528
    %3465 = vmatprep.subr.mxu0 %v1537
    %3466 = vmatpush1.msra.mxu0 %v1536
    %3467 = vmatprep.subr.mxu0 %v1545
    %3468 = vmatpush1.msra.mxu0 %v1544
    %3469 = vmatprep.subr.mxu0 %v1553
    %3470 = vmatpush1.msra.mxu0 %v1552
    %3471 = vmatprep.subr.mxu0 %v1561
    %3472 = vmatpush1.msra.mxu0 %v1560
    %3473 = vmatprep.subr.mxu0 %v1569
    %3474 = vmatpush1.msra.mxu0 %v1568
    %3475 = vmatprep.subr.mxu0 %v1577
    %3476 = vmatpush1.msra.mxu0 %v1576
    %3477 = vmatprep.subr.mxu0 %v1585
    %3478 = vmatpush1.msra.mxu0 %v1584
    %3479 = vmatprep.subr.mxu0 %v1593
    %3480 = vmatpush1.msra.mxu0 %v1592
    %3481 = vmatprep.subr.mxu0 %v1601
    %3482 = vmatpush1.msra.mxu0 %v1600
    %3483 = vmatprep.subr.mxu0 %v1609
    %3484 = vmatpush1.msra.mxu0 %v1608
    %3485 = vmatprep.subr.mxu0 %v1617
    %3486 = vmatpush1.msra.mxu0 %v1616
    %3487 = vmatprep.subr.mxu0 %v1625
    %3488 = vmatpush1.msra.mxu0 %v1624
    %3489 = vmatprep.mubr.f32.mxu0 %v1357
    %3490 = vmatmul.mubr.f32.gmra.mrb[0].mxu0 %v1356
    %v3491 = vpop.f32.mrb[0].mxu0
    %v3492 = vadd.f32 0.0, %v3491
    %v3493 = vpop.f32.mrb[0].mxu0
    %v3494 = vadd.f32 0.0, %v3493
    %3495 = vdwg.mxu0
    %3496 = vmatprep.subr.mxu0 %v1633
    %3497 = vmatpush1.msra.mxu0 %v1632
    %3498 = vmatprep.subr.mxu0 %v1641
    %3499 = vmatpush1.msra.mxu0 %v1640
    %3500 = vmatprep.subr.mxu0 %v1649
    %3501 = vmatpush1.msra.mxu0 %v1648
    %3502 = vmatprep.subr.mxu0 %v1657
    %3503 = vmatpush1.msra.mxu0 %v1656
    %3504 = vmatprep.subr.mxu0 %v1665
    %3505 = vmatpush1.msra.mxu0 %v1664
    %3506 = vmatprep.subr.mxu0 %v1673
    %3507 = vmatpush1.msra.mxu0 %v1672
    %3508 = vmatprep.subr.mxu0 %v1681
    %3509 = vmatpush1.msra.mxu0 %v1680
    %3510 = vmatprep.subr.mxu0 %v1689
    %3511 = vmatpush1.msra.mxu0 %v1688
    %3512 = vmatprep.subr.mxu0 %v1697
    %3513 = vmatpush1.msra.mxu0 %v1696
    %3514 = vmatprep.subr.mxu0 %v1705
    %3515 = vmatpush1.msra.mxu0 %v1704
    %3516 = vmatprep.subr.mxu0 %v1713
    %3517 = vmatpush1.msra.mxu0 %v1712
    %3518 = vmatprep.subr.mxu0 %v1721
    %3519 = vmatpush1.msra.mxu0 %v1720
    %3520 = vmatprep.subr.mxu0 %v1729
    %3521 = vmatpush1.msra.mxu0 %v1728
    %3522 = vmatprep.subr.mxu0 %v1737
    %3523 = vmatpush1.msra.mxu0 %v1736
    %3524 = vmatprep.subr.mxu0 %v1745
    %3525 = vmatpush1.msra.mxu0 %v1744
    %3526 = vmatprep.subr.mxu0 %v1753
    %3527 = vmatpush1.msra.mxu0 %v1752
    %3528 = vmatprep.subr.mxu0 %v1761
    %3529 = vmatpush1.msra.mxu0 %v1760
    %3530 = vmatprep.subr.mxu0 %v1769
    %3531 = vmatpush1.msra.mxu0 %v1768
    %3532 = vmatprep.subr.mxu0 %v1777
    %3533 = vmatpush1.msra.mxu0 %v1776
    %3534 = vmatprep.subr.mxu0 %v1785
    %3535 = vmatpush1.msra.mxu0 %v1784
    %3536 = vmatprep.subr.mxu0 %v1793
    %3537 = vmatpush1.msra.mxu0 %v1792
    %3538 = vmatprep.subr.mxu0 %v1801
    %3539 = vmatpush1.msra.mxu0 %v1800
    %3540 = vmatprep.subr.mxu0 %v1809
    %3541 = vmatpush1.msra.mxu0 %v1808
    %3542 = vmatprep.subr.mxu0 %v1817
    %3543 = vmatpush1.msra.mxu0 %v1816
    %3544 = vmatprep.subr.mxu0 %v1825
    %3545 = vmatpush1.msra.mxu0 %v1824
    %3546 = vmatprep.subr.mxu0 %v1833
    %3547 = vmatpush1.msra.mxu0 %v1832
    %3548 = vmatprep.subr.mxu0 %v1841
    %3549 = vmatpush1.msra.mxu0 %v1840
    %3550 = vmatprep.subr.mxu0 %v1849
    %3551 = vmatpush1.msra.mxu0 %v1848
    %3552 = vmatprep.subr.mxu0 %v1857
    %3553 = vmatpush1.msra.mxu0 %v1856
    %3554 = vmatprep.subr.mxu0 %v1865
    %3555 = vmatpush1.msra.mxu0 %v1864
    %3556 = vmatprep.subr.mxu0 %v1873
    %3557 = vmatpush1.msra.mxu0 %v1872
    %3558 = vmatprep.subr.mxu0 %v1881
    %3559 = vmatpush1.msra.mxu0 %v1880
    %3560 = vmatprep.mubr.f32.mxu0 %v1359
    %3561 = vmatmul.mubr.f32.gmra.mrb[0].mxu0 %v1358
    %v3562 = vpop.f32.mrb[0].mxu0
    %v3563 = vadd.f32 %v3492, %v3562
    %v3564 = vpop.f32.mrb[0].mxu0
    %v3565 = vadd.f32 %v3494, %v3564
    %3566 = vdwg.mxu0
    %3567 = vmatprep.subr.mxu0 %v1889
    %3568 = vmatpush1.msra.mxu0 %v1888
    %3569 = vmatprep.subr.mxu0 %v1897
    %3570 = vmatpush1.msra.mxu0 %v1896
    %3571 = vmatprep.subr.mxu0 %v1905
    %3572 = vmatpush1.msra.mxu0 %v1904
    %3573 = vmatprep.subr.mxu0 %v1913
    %3574 = vmatpush1.msra.mxu0 %v1912
    %3575 = vmatprep.subr.mxu0 %v1921
    %3576 = vmatpush1.msra.mxu0 %v1920
    %3577 = vmatprep.subr.mxu0 %v1929
    %3578 = vmatpush1.msra.mxu0 %v1928
    %3579 = vmatprep.subr.mxu0 %v1937
    %3580 = vmatpush1.msra.mxu0 %v1936
    %3581 = vmatprep.subr.mxu0 %v1945
    %3582 = vmatpush1.msra.mxu0 %v1944
    %3583 = vmatprep.subr.mxu0 %v1953
    %3584 = vmatpush1.msra.mxu0 %v1952
    %3585 = vmatprep.subr.mxu0 %v1961
    %3586 = vmatpush1.msra.mxu0 %v1960
    %3587 = vmatprep.subr.mxu0 %v1969
    %3588 = vmatpush1.msra.mxu0 %v1968
    %3589 = vmatprep.subr.mxu0 %v1977
    %3590 = vmatpush1.msra.mxu0 %v1976
    %3591 = vmatprep.subr.mxu0 %v1985
    %3592 = vmatpush1.msra.mxu0 %v1984
    %3593 = vmatprep.subr.mxu0 %v1993
    %3594 = vmatpush1.msra.mxu0 %v1992
    %3595 = vmatprep.subr.mxu0 %v2001
    %3596 = vmatpush1.msra.mxu0 %v2000
    %3597 = vmatprep.subr.mxu0 %v2009
    %3598 = vmatpush1.msra.mxu0 %v2008
    %3599 = vmatprep.subr.mxu0 %v2017
    %3600 = vmatpush1.msra.mxu0 %v2016
    %3601 = vmatprep.subr.mxu0 %v2025
    %3602 = vmatpush1.msra.mxu0 %v2024
    %3603 = vmatprep.subr.mxu0 %v2033
    %3604 = vmatpush1.msra.mxu0 %v2032
    %3605 = vmatprep.subr.mxu0 %v2041
    %3606 = vmatpush1.msra.mxu0 %v2040
    %3607 = vmatprep.subr.mxu0 %v2049
    %3608 = vmatpush1.msra.mxu0 %v2048
    %3609 = vmatprep.subr.mxu0 %v2057
    %3610 = vmatpush1.msra.mxu0 %v2056
    %3611 = vmatprep.subr.mxu0 %v2065
    %3612 = vmatpush1.msra.mxu0 %v2064
    %3613 = vmatprep.subr.mxu0 %v2073
    %3614 = vmatpush1.msra.mxu0 %v2072
    %3615 = vmatprep.subr.mxu0 %v2081
    %3616 = vmatpush1.msra.mxu0 %v2080
    %3617 = vmatprep.subr.mxu0 %v2089
    %3618 = vmatpush1.msra.mxu0 %v2088
    %3619 = vmatprep.subr.mxu0 %v2097
    %3620 = vmatpush1.msra.mxu0 %v2096
    %3621 = vmatprep.subr.mxu0 %v2105
    %3622 = vmatpush1.msra.mxu0 %v2104
    %3623 = vmatprep.subr.mxu0 %v2113
    %3624 = vmatpush1.msra.mxu0 %v2112
    %3625 = vmatprep.subr.mxu0 %v2121
    %3626 = vmatpush1.msra.mxu0 %v2120
    %3627 = vmatprep.subr.mxu0 %v2129
    %3628 = vmatpush1.msra.mxu0 %v2128
    %3629 = vmatprep.subr.mxu0 %v2137
    %3630 = vmatpush1.msra.mxu0 %v2136
    %3631 = vmatprep.mubr.f32.mxu0 %v1361
    %3632 = vmatmul.mubr.f32.gmra.mrb[0].mxu0 %v1360
    %v3633 = vpop.f32.mrb[0].mxu0
    %v3634 = vadd.f32 %v3563, %v3633
    %v3635 = vpop.f32.mrb[0].mxu0
    %v3636 = vadd.f32 %v3565, %v3635
    %3637 = vdwg.mxu0
    %3638 = vmatprep.subr.mxu0 %v2145
    %3639 = vmatpush1.msra.mxu0 %v2144
    %3640 = vmatprep.subr.mxu0 %v2153
    %3641 = vmatpush1.msra.mxu0 %v2152
    %3642 = vmatprep.subr.mxu0 %v2161
    %3643 = vmatpush1.msra.mxu0 %v2160
    %3644 = vmatprep.subr.mxu0 %v2169
    %3645 = vmatpush1.msra.mxu0 %v2168
    %3646 = vmatprep.subr.mxu0 %v2177
    %3647 = vmatpush1.msra.mxu0 %v2176
    %3648 = vmatprep.subr.mxu0 %v2185
    %3649 = vmatpush1.msra.mxu0 %v2184
    %3650 = vmatprep.subr.mxu0 %v2193
    %3651 = vmatpush1.msra.mxu0 %v2192
    %3652 = vmatprep.subr.mxu0 %v2201
    %3653 = vmatpush1.msra.mxu0 %v2200
    %3654 = vmatprep.subr.mxu0 %v2209
    %3655 = vmatpush1.msra.mxu0 %v2208
    %3656 = vmatprep.subr.mxu0 %v2217
    %3657 = vmatpush1.msra.mxu0 %v2216
    %3658 = vmatprep.subr.mxu0 %v2225
    %3659 = vmatpush1.msra.mxu0 %v2224
    %3660 = vmatprep.subr.mxu0 %v2233
    %3661 = vmatpush1.msra.mxu0 %v2232
    %3662 = vmatprep.subr.mxu0 %v2241
    %3663 = vmatpush1.msra.mxu0 %v2240
    %3664 = vmatprep.subr.mxu0 %v2249
    %3665 = vmatpush1.msra.mxu0 %v2248
    %3666 = vmatprep.subr.mxu0 %v2257
    %3667 = vmatpush1.msra.mxu0 %v2256
    %3668 = vmatprep.subr.mxu0 %v2265
    %3669 = vmatpush1.msra.mxu0 %v2264
    %3670 = vmatprep.subr.mxu0 %v2273
    %3671 = vmatpush1.msra.mxu0 %v2272
    %3672 = vmatprep.subr.mxu0 %v2281
    %3673 = vmatpush1.msra.mxu0 %v2280
    %3674 = vmatprep.subr.mxu0 %v2289
    %3675 = vmatpush1.msra.mxu0 %v2288
    %3676 = vmatprep.subr.mxu0 %v2297
    %3677 = vmatpush1.msra.mxu0 %v2296
    %3678 = vmatprep.subr.mxu0 %v2305
    %3679 = vmatpush1.msra.mxu0 %v2304
    %3680 = vmatprep.subr.mxu0 %v2313
    %3681 = vmatpush1.msra.mxu0 %v2312
    %3682 = vmatprep.subr.mxu0 %v2321
    %3683 = vmatpush1.msra.mxu0 %v2320
    %3684 = vmatprep.subr.mxu0 %v2329
    %3685 = vmatpush1.msra.mxu0 %v2328
    %3686 = vmatprep.subr.mxu0 %v2337
    %3687 = vmatpush1.msra.mxu0 %v2336
    %3688 = vmatprep.subr.mxu0 %v2345
    %3689 = vmatpush1.msra.mxu0 %v2344
    %3690 = vmatprep.subr.mxu0 %v2353
    %3691 = vmatpush1.msra.mxu0 %v2352
    %3692 = vmatprep.subr.mxu0 %v2361
    %3693 = vmatpush1.msra.mxu0 %v2360
    %3694 = vmatprep.subr.mxu0 %v2369
    %3695 = vmatpush1.msra.mxu0 %v2368
    %3696 = vmatprep.subr.mxu0 %v2377
    %3697 = vmatpush1.msra.mxu0 %v2376
    %3698 = vmatprep.subr.mxu0 %v2385
    %3699 = vmatpush1.msra.mxu0 %v2384
    %3700 = vmatprep.subr.mxu0 %v2393
    %3701 = vmatpush1.msra.mxu0 %v2392
    %3702 = vmatprep.mubr.f32.mxu0 %v1363
    %3703 = vmatmul.mubr.f32.gmra.mrb[0].mxu0 %v1362
    %v3704 = vpop.f32.mrb[0].mxu0
    %v3705 = vadd.f32 %v3634, %v3704
    %v3706 = vpop.f32.mrb[0].mxu0
    %v3707 = vadd.f32 %v3636, %v3706
    %3708 = vdwg.mxu0
    %3709 = vmatprep.subr.mxu0 %v2401
    %3710 = vmatpush1.msra.mxu0 %v2400
    %3711 = vmatprep.subr.mxu0 %v2409
    %3712 = vmatpush1.msra.mxu0 %v2408
    %3713 = vmatprep.subr.mxu0 %v2417
    %3714 = vmatpush1.msra.mxu0 %v2416
    %3715 = vmatprep.subr.mxu0 %v2425
    %3716 = vmatpush1.msra.mxu0 %v2424
    %3717 = vmatprep.subr.mxu0 %v2433
    %3718 = vmatpush1.msra.mxu0 %v2432
    %3719 = vmatprep.subr.mxu0 %v2441
    %3720 = vmatpush1.msra.mxu0 %v2440
    %3721 = vmatprep.subr.mxu0 %v2449
    %3722 = vmatpush1.msra.mxu0 %v2448
    %3723 = vmatprep.subr.mxu0 %v2457
    %3724 = vmatpush1.msra.mxu0 %v2456
    %3725 = vmatprep.subr.mxu0 %v2465
    %3726 = vmatpush1.msra.mxu0 %v2464
    %3727 = vmatprep.subr.mxu0 %v2473
    %3728 = vmatpush1.msra.mxu0 %v2472
    %3729 = vmatprep.subr.mxu0 %v2481
    %3730 = vmatpush1.msra.mxu0 %v2480
    %3731 = vmatprep.subr.mxu0 %v2489
    %3732 = vmatpush1.msra.mxu0 %v2488
    %3733 = vmatprep.subr.mxu0 %v2497
    %3734 = vmatpush1.msra.mxu0 %v2496
    %3735 = vmatprep.subr.mxu0 %v2505
    %3736 = vmatpush1.msra.mxu0 %v2504
    %3737 = vmatprep.subr.mxu0 %v2513
    %3738 = vmatpush1.msra.mxu0 %v2512
    %3739 = vmatprep.subr.mxu0 %v2521
    %3740 = vmatpush1.msra.mxu0 %v2520
    %3741 = vmatprep.subr.mxu0 %v2529
    %3742 = vmatpush1.msra.mxu0 %v2528
    %3743 = vmatprep.subr.mxu0 %v2537
    %3744 = vmatpush1.msra.mxu0 %v2536
    %3745 = vmatprep.subr.mxu0 %v2545
    %3746 = vmatpush1.msra.mxu0 %v2544
    %3747 = vmatprep.subr.mxu0 %v2553
    %3748 = vmatpush1.msra.mxu0 %v2552
    %3749 = vmatprep.subr.mxu0 %v2561
    %3750 = vmatpush1.msra.mxu0 %v2560
    %3751 = vmatprep.subr.mxu0 %v2569
    %3752 = vmatpush1.msra.mxu0 %v2568
    %3753 = vmatprep.subr.mxu0 %v2577
    %3754 = vmatpush1.msra.mxu0 %v2576
    %3755 = vmatprep.subr.mxu0 %v2585
    %3756 = vmatpush1.msra.mxu0 %v2584
    %3757 = vmatprep.subr.mxu0 %v2593
    %3758 = vmatpush1.msra.mxu0 %v2592
    %3759 = vmatprep.subr.mxu0 %v2601
    %3760 = vmatpush1.msra.mxu0 %v2600
    %3761 = vmatprep.subr.mxu0 %v2609
    %3762 = vmatpush1.msra.mxu0 %v2608
    %3763 = vmatprep.subr.mxu0 %v2617
    %3764 = vmatpush1.msra.mxu0 %v2616
    %3765 = vmatprep.subr.mxu0 %v2625
    %3766 = vmatpush1.msra.mxu0 %v2624
    %3767 = vmatprep.subr.mxu0 %v2633
    %3768 = vmatpush1.msra.mxu0 %v2632
    %3769 = vmatprep.subr.mxu0 %v2641
    %3770 = vmatpush1.msra.mxu0 %v2640
    %3771 = vmatprep.subr.mxu0 %v2649
    %3772 = vmatpush1.msra.mxu0 %v2648
    %3773 = vmatprep.mubr.f32.mxu0 %v1365
    %3774 = vmatmul.mubr.f32.gmra.mrb[0].mxu0 %v1364
    %v3775 = vpop.f32.mrb[0].mxu0
    %v3776 = vadd.f32 %v3705, %v3775
    %v3777 = vpop.f32.mrb[0].mxu0
    %v3778 = vadd.f32 %v3707, %v3777
    %3779 = vdwg.mxu0
    %3780 = vmatprep.subr.mxu0 %v2657
    %3781 = vmatpush1.msra.mxu0 %v2656
    %3782 = vmatprep.subr.mxu0 %v2665
    %3783 = vmatpush1.msra.mxu0 %v2664
    %3784 = vmatprep.subr.mxu0 %v2673
    %3785 = vmatpush1.msra.mxu0 %v2672
    %3786 = vmatprep.subr.mxu0 %v2681
    %3787 = vmatpush1.msra.mxu0 %v2680
    %3788 = vmatprep.subr.mxu0 %v2689
    %3789 = vmatpush1.msra.mxu0 %v2688
    %3790 = vmatprep.subr.mxu0 %v2697
    %3791 = vmatpush1.msra.mxu0 %v2696
    %3792 = vmatprep.subr.mxu0 %v2705
    %3793 = vmatpush1.msra.mxu0 %v2704
    %3794 = vmatprep.subr.mxu0 %v2713
    %3795 = vmatpush1.msra.mxu0 %v2712
    %3796 = vmatprep.subr.mxu0 %v2721
    %3797 = vmatpush1.msra.mxu0 %v2720
    %3798 = vmatprep.subr.mxu0 %v2729
    %3799 = vmatpush1.msra.mxu0 %v2728
    %3800 = vmatprep.subr.mxu0 %v2737
    %3801 = vmatpush1.msra.mxu0 %v2736
    %3802 = vmatprep.subr.mxu0 %v2745
    %3803 = vmatpush1.msra.mxu0 %v2744
    %3804 = vmatprep.subr.mxu0 %v2753
    %3805 = vmatpush1.msra.mxu0 %v2752
    %3806 = vmatprep.subr.mxu0 %v2761
    %3807 = vmatpush1.msra.mxu0 %v2760
    %3808 = vmatprep.subr.mxu0 %v2769
    %3809 = vmatpush1.msra.mxu0 %v2768
    %3810 = vmatprep.subr.mxu0 %v2777
    %3811 = vmatpush1.msra.mxu0 %v2776
    %3812 = vmatprep.subr.mxu0 %v2785
    %3813 = vmatpush1.msra.mxu0 %v2784
    %3814 = vmatprep.subr.mxu0 %v2793
    %3815 = vmatpush1.msra.mxu0 %v2792
    %3816 = vmatprep.subr.mxu0 %v2801
    %3817 = vmatpush1.msra.mxu0 %v2800
    %3818 = vmatprep.subr.mxu0 %v2809
    %3819 = vmatpush1.msra.mxu0 %v2808
    %3820 = vmatprep.subr.mxu0 %v2817
    %3821 = vmatpush1.msra.mxu0 %v2816
    %3822 = vmatprep.subr.mxu0 %v2825
    %3823 = vmatpush1.msra.mxu0 %v2824
    %3824 = vmatprep.subr.mxu0 %v2833
    %3825 = vmatpush1.msra.mxu0 %v2832
    %3826 = vmatprep.subr.mxu0 %v2841
    %3827 = vmatpush1.msra.mxu0 %v2840
    %3828 = vmatprep.subr.mxu0 %v2849
    %3829 = vmatpush1.msra.mxu0 %v2848
    %3830 = vmatprep.subr.mxu0 %v2857
    %3831 = vmatpush1.msra.mxu0 %v2856
    %3832 = vmatprep.subr.mxu0 %v2865
    %3833 = vmatpush1.msra.mxu0 %v2864
    %3834 = vmatprep.subr.mxu0 %v2873
    %3835 = vmatpush1.msra.mxu0 %v2872
    %3836 = vmatprep.subr.mxu0 %v2881
    %3837 = vmatpush1.msra.mxu0 %v2880
    %3838 = vmatprep.subr.mxu0 %v2889
    %3839 = vmatpush1.msra.mxu0 %v2888
    %3840 = vmatprep.subr.mxu0 %v2897
    %3841 = vmatpush1.msra.mxu0 %v2896
    %3842 = vmatprep.subr.mxu0 %v2905
    %3843 = vmatpush1.msra.mxu0 %v2904
    %3844 = vmatprep.mubr.f32.mxu0 %v1367
    %3845 = vmatmul.mubr.f32.gmra.mrb[0].mxu0 %v1366
    %v3846 = vpop.f32.mrb[0].mxu0
    %v3847 = vadd.f32 %v3776, %v3846
    %v3848 = vpop.f32.mrb[0].mxu0
    %v3849 = vadd.f32 %v3778, %v3848
    %3850 = vdwg.mxu0
    %3851 = vmatprep.subr.mxu0 %v2913
    %3852 = vmatpush1.msra.mxu0 %v2912
    %3853 = vmatprep.subr.mxu0 %v2921
    %3854 = vmatpush1.msra.mxu0 %v2920
    %3855 = vmatprep.subr.mxu0 %v2929
    %3856 = vmatpush1.msra.mxu0 %v2928
    %3857 = vmatprep.subr.mxu0 %v2937
    %3858 = vmatpush1.msra.mxu0 %v2936
    %3859 = vmatprep.subr.mxu0 %v2945
    %3860 = vmatpush1.msra.mxu0 %v2944
    %3861 = vmatprep.subr.mxu0 %v2953
    %3862 = vmatpush1.msra.mxu0 %v2952
    %3863 = vmatprep.subr.mxu0 %v2961
    %3864 = vmatpush1.msra.mxu0 %v2960
    %3865 = vmatprep.subr.mxu0 %v2969
    %3866 = vmatpush1.msra.mxu0 %v2968
    %3867 = vmatprep.subr.mxu0 %v2977
    %3868 = vmatpush1.msra.mxu0 %v2976
    %3869 = vmatprep.subr.mxu0 %v2985
    %3870 = vmatpush1.msra.mxu0 %v2984
    %3871 = vmatprep.subr.mxu0 %v2993
    %3872 = vmatpush1.msra.mxu0 %v2992
    %3873 = vmatprep.subr.mxu0 %v3001
    %3874 = vmatpush1.msra.mxu0 %v3000
    %3875 = vmatprep.subr.mxu0 %v3009
    %3876 = vmatpush1.msra.mxu0 %v3008
    %3877 = vmatprep.subr.mxu0 %v3017
    %3878 = vmatpush1.msra.mxu0 %v3016
    %3879 = vmatprep.subr.mxu0 %v3025
    %3880 = vmatpush1.msra.mxu0 %v3024
    %3881 = vmatprep.subr.mxu0 %v3033
    %3882 = vmatpush1.msra.mxu0 %v3032
    %3883 = vmatprep.subr.mxu0 %v3041
    %3884 = vmatpush1.msra.mxu0 %v3040
    %3885 = vmatprep.subr.mxu0 %v3049
    %3886 = vmatpush1.msra.mxu0 %v3048
    %3887 = vmatprep.subr.mxu0 %v3057
    %3888 = vmatpush1.msra.mxu0 %v3056
    %3889 = vmatprep.subr.mxu0 %v3065
    %3890 = vmatpush1.msra.mxu0 %v3064
    %3891 = vmatprep.subr.mxu0 %v3073
    %3892 = vmatpush1.msra.mxu0 %v3072
    %3893 = vmatprep.subr.mxu0 %v3081
    %3894 = vmatpush1.msra.mxu0 %v3080
    %3895 = vmatprep.subr.mxu0 %v3089
    %3896 = vmatpush1.msra.mxu0 %v3088
    %3897 = vmatprep.subr.mxu0 %v3097
    %3898 = vmatpush1.msra.mxu0 %v3096
    %3899 = vmatprep.subr.mxu0 %v3105
    %3900 = vmatpush1.msra.mxu0 %v3104
    %3901 = vmatprep.subr.mxu0 %v3113
    %3902 = vmatpush1.msra.mxu0 %v3112
    %3903 = vmatprep.subr.mxu0 %v3121
    %3904 = vmatpush1.msra.mxu0 %v3120
    %3905 = vmatprep.subr.mxu0 %v3129
    %3906 = vmatpush1.msra.mxu0 %v3128
    %3907 = vmatprep.subr.mxu0 %v3137
    %3908 = vmatpush1.msra.mxu0 %v3136
    %3909 = vmatprep.subr.mxu0 %v3145
    %3910 = vmatpush1.msra.mxu0 %v3144
    %3911 = vmatprep.subr.mxu0 %v3153
    %3912 = vmatpush1.msra.mxu0 %v3152
    %3913 = vmatprep.subr.mxu0 %v3161
    %3914 = vmatpush1.msra.mxu0 %v3160
    %3915 = vmatprep.mubr.f32.mxu0 %v1369
    %3916 = vmatmul.mubr.f32.gmra.mrb[0].mxu0 %v1368
    %v3917 = vpop.f32.mrb[0].mxu0
    %v3918 = vadd.f32 %v3847, %v3917
    %v3919 = vpop.f32.mrb[0].mxu0
    %v3920 = vadd.f32 %v3849, %v3919
    %3921 = vdwg.mxu0
    %3922 = vmatprep.subr.mxu0 %v3169
    %3923 = vmatpush1.msra.mxu0 %v3168
    %3924 = vmatprep.subr.mxu0 %v3177
    %3925 = vmatpush1.msra.mxu0 %v3176
    %3926 = vmatprep.subr.mxu0 %v3185
    %3927 = vmatpush1.msra.mxu0 %v3184
    %3928 = vmatprep.subr.mxu0 %v3193
    %3929 = vmatpush1.msra.mxu0 %v3192
    %3930 = vmatprep.subr.mxu0 %v3201
    %3931 = vmatpush1.msra.mxu0 %v3200
    %3932 = vmatprep.subr.mxu0 %v3209
    %3933 = vmatpush1.msra.mxu0 %v3208
    %3934 = vmatprep.subr.mxu0 %v3217
    %3935 = vmatpush1.msra.mxu0 %v3216
    %3936 = vmatprep.subr.mxu0 %v3225
    %3937 = vmatpush1.msra.mxu0 %v3224
    %3938 = vmatprep.subr.mxu0 %v3233
    %3939 = vmatpush1.msra.mxu0 %v3232
    %3940 = vmatprep.subr.mxu0 %v3241
    %3941 = vmatpush1.msra.mxu0 %v3240
    %3942 = vmatprep.subr.mxu0 %v3249
    %3943 = vmatpush1.msra.mxu0 %v3248
    %3944 = vmatprep.subr.mxu0 %v3257
    %3945 = vmatpush1.msra.mxu0 %v3256
    %3946 = vmatprep.subr.mxu0 %v3265
    %3947 = vmatpush1.msra.mxu0 %v3264
    %3948 = vmatprep.subr.mxu0 %v3273
    %3949 = vmatpush1.msra.mxu0 %v3272
    %3950 = vmatprep.subr.mxu0 %v3281
    %3951 = vmatpush1.msra.mxu0 %v3280
    %3952 = vmatprep.subr.mxu0 %v3289
    %3953 = vmatpush1.msra.mxu0 %v3288
    %3954 = vmatprep.subr.mxu0 %v3297
    %3955 = vmatpush1.msra.mxu0 %v3296
    %3956 = vmatprep.subr.mxu0 %v3305
    %3957 = vmatpush1.msra.mxu0 %v3304
    %3958 = vmatprep.subr.mxu0 %v3313
    %3959 = vmatpush1.msra.mxu0 %v3312
    %3960 = vmatprep.subr.mxu0 %v3321
    %3961 = vmatpush1.msra.mxu0 %v3320
    %3962 = vmatprep.subr.mxu0 %v3329
    %3963 = vmatpush1.msra.mxu0 %v3328
    %3964 = vmatprep.subr.mxu0 %v3337
    %3965 = vmatpush1.msra.mxu0 %v3336
    %3966 = vmatprep.subr.mxu0 %v3345
    %3967 = vmatpush1.msra.mxu0 %v3344
    %3968 = vmatprep.subr.mxu0 %v3353
    %3969 = vmatpush1.msra.mxu0 %v3352
    %3970 = vmatprep.subr.mxu0 %v3361
    %3971 = vmatpush1.msra.mxu0 %v3360
    %3972 = vmatprep.subr.mxu0 %v3369
    %3973 = vmatpush1.msra.mxu0 %v3368
    %3974 = vmatprep.subr.mxu0 %v3377
    %3975 = vmatpush1.msra.mxu0 %v3376
    %3976 = vmatprep.subr.mxu0 %v3385
    %3977 = vmatpush1.msra.mxu0 %v3384
    %3978 = vmatprep.subr.mxu0 %v3393
    %3979 = vmatpush1.msra.mxu0 %v3392
    %3980 = vmatprep.subr.mxu0 %v3401
    %3981 = vmatpush1.msra.mxu0 %v3400
    %3982 = vmatprep.subr.mxu0 %v3409
    %3983 = vmatpush1.msra.mxu0 %v3408
    %3984 = vmatprep.subr.mxu0 %v3417
    %3985 = vmatpush1.msra.mxu0 %v3416
    %3986 = vmatprep.mubr.f32.mxu0 %v1371
    %3987 = vmatmul.mubr.f32.gmra.mrb[0].mxu0 %v1370
    %v3988 = vpop.f32.mrb[0].mxu0
    %v3989 = vadd.f32 %v3918, %v3988
    %v3990 = vpop.f32.mrb[0].mxu0
    %v3991 = vadd.f32 %v3920, %v3990
    %3992 = vdwg.mxu0
    %3993 = vmatprep.subr.mxu0 %v1379
    %3994 = vmatpush1.msra.mxu0 %v1378
    %3995 = vmatprep.subr.mxu0 %v1387
    %3996 = vmatpush1.msra.mxu0 %v1386
    %3997 = vmatprep.subr.mxu0 %v1395
    %3998 = vmatpush1.msra.mxu0 %v1394
    %3999 = vmatprep.subr.mxu0 %v1403
    %4000 = vmatpush1.msra.mxu0 %v1402
    %4001 = vmatprep.subr.mxu0 %v1411
    %4002 = vmatpush1.msra.mxu0 %v1410
    %4003 = vmatprep.subr.mxu0 %v1419
    %4004 = vmatpush1.msra.mxu0 %v1418
    %4005 = vmatprep.subr.mxu0 %v1427
    %4006 = vmatpush1.msra.mxu0 %v1426
    %4007 = vmatprep.subr.mxu0 %v1435
    %4008 = vmatpush1.msra.mxu0 %v1434
    %4009 = vmatprep.subr.mxu0 %v1443
    %4010 = vmatpush1.msra.mxu0 %v1442
    %4011 = vmatprep.subr.mxu0 %v1451
    %4012 = vmatpush1.msra.mxu0 %v1450
    %4013 = vmatprep.subr.mxu0 %v1459
    %4014 = vmatpush1.msra.mxu0 %v1458
    %4015 = vmatprep.subr.mxu0 %v1467
    %4016 = vmatpush1.msra.mxu0 %v1466
    %4017 = vmatprep.subr.mxu0 %v1475
    %4018 = vmatpush1.msra.mxu0 %v1474
    %4019 = vmatprep.subr.mxu0 %v1483
    %4020 = vmatpush1.msra.mxu0 %v1482
    %4021 = vmatprep.subr.mxu0 %v1491
    %4022 = vmatpush1.msra.mxu0 %v1490
    %4023 = vmatprep.subr.mxu0 %v1499
    %4024 = vmatpush1.msra.mxu0 %v1498
    %4025 = vmatprep.subr.mxu0 %v1507
    %4026 = vmatpush1.msra.mxu0 %v1506
    %4027 = vmatprep.subr.mxu0 %v1515
    %4028 = vmatpush1.msra.mxu0 %v1514
    %4029 = vmatprep.subr.mxu0 %v1523
    %4030 = vmatpush1.msra.mxu0 %v1522
    %4031 = vmatprep.subr.mxu0 %v1531
    %4032 = vmatpush1.msra.mxu0 %v1530
    %4033 = vmatprep.subr.mxu0 %v1539
    %4034 = vmatpush1.msra.mxu0 %v1538
    %4035 = vmatprep.subr.mxu0 %v1547
    %4036 = vmatpush1.msra.mxu0 %v1546
    %4037 = vmatprep.subr.mxu0 %v1555
    %4038 = vmatpush1.msra.mxu0 %v1554
    %4039 = vmatprep.subr.mxu0 %v1563
    %4040 = vmatpush1.msra.mxu0 %v1562
    %4041 = vmatprep.subr.mxu0 %v1571
    %4042 = vmatpush1.msra.mxu0 %v1570
    %4043 = vmatprep.subr.mxu0 %v1579
    %4044 = vmatpush1.msra.mxu0 %v1578
    %4045 = vmatprep.subr.mxu0 %v1587
    %4046 = vmatpush1.msra.mxu0 %v1586
    %4047 = vmatprep.subr.mxu0 %v1595
    %4048 = vmatpush1.msra.mxu0 %v1594
    %4049 = vmatprep.subr.mxu0 %v1603
    %4050 = vmatpush1.msra.mxu0 %v1602
    %4051 = vmatprep.subr.mxu0 %v1611
    %4052 = vmatpush1.msra.mxu0 %v1610
    %4053 = vmatprep.subr.mxu0 %v1619
    %4054 = vmatpush1.msra.mxu0 %v1618
    %4055 = vmatprep.subr.mxu0 %v1627
    %4056 = vmatpush1.msra.mxu0 %v1626
    %4057 = vmatprep.mubr.f32.mxu0 %v1357
    %4058 = vmatmul.mubr.f32.gmra.mrb[0].mxu0 %v1356
    %v4059 = vpop.f32.mrb[0].mxu0
    %v4060 = vadd.f32 0.0, %v4059
    %v4061 = vpop.f32.mrb[0].mxu0
    %v4062 = vadd.f32 0.0, %v4061
    %4063 = vdwg.mxu0
    %4064 = vmatprep.subr.mxu0 %v1635
    %4065 = vmatpush1.msra.mxu0 %v1634
    %4066 = vmatprep.subr.mxu0 %v1643
    %4067 = vmatpush1.msra.mxu0 %v1642
    %4068 = vmatprep.subr.mxu0 %v1651
    %4069 = vmatpush1.msra.mxu0 %v1650
    %4070 = vmatprep.subr.mxu0 %v1659
    %4071 = vmatpush1.msra.mxu0 %v1658
    %4072 = vmatprep.subr.mxu0 %v1667
    %4073 = vmatpush1.msra.mxu0 %v1666
    %4074 = vmatprep.subr.mxu0 %v1675
    %4075 = vmatpush1.msra.mxu0 %v1674
    %4076 = vmatprep.subr.mxu0 %v1683
    %4077 = vmatpush1.msra.mxu0 %v1682
    %4078 = vmatprep.subr.mxu0 %v1691
    %4079 = vmatpush1.msra.mxu0 %v1690
    %4080 = vmatprep.subr.mxu0 %v1699
    %4081 = vmatpush1.msra.mxu0 %v1698
    %4082 = vmatprep.subr.mxu0 %v1707
    %4083 = vmatpush1.msra.mxu0 %v1706
    %4084 = vmatprep.subr.mxu0 %v1715
    %4085 = vmatpush1.msra.mxu0 %v1714
    %4086 = vmatprep.subr.mxu0 %v1723
    %4087 = vmatpush1.msra.mxu0 %v1722
    %4088 = vmatprep.subr.mxu0 %v1731
    %4089 = vmatpush1.msra.mxu0 %v1730
    %4090 = vmatprep.subr.mxu0 %v1739
    %4091 = vmatpush1.msra.mxu0 %v1738
    %4092 = vmatprep.subr.mxu0 %v1747
    %4093 = vmatpush1.msra.mxu0 %v1746
    %4094 = vmatprep.subr.mxu0 %v1755
    %4095 = vmatpush1.msra.mxu0 %v1754
    %4096 = vmatprep.subr.mxu0 %v1763
    %4097 = vmatpush1.msra.mxu0 %v1762
    %4098 = vmatprep.subr.mxu0 %v1771
    %4099 = vmatpush1.msra.mxu0 %v1770
    %4100 = vmatprep.subr.mxu0 %v1779
    %4101 = vmatpush1.msra.mxu0 %v1778
    %4102 = vmatprep.subr.mxu0 %v1787
    %4103 = vmatpush1.msra.mxu0 %v1786
    %4104 = vmatprep.subr.mxu0 %v1795
    %4105 = vmatpush1.msra.mxu0 %v1794
    %4106 = vmatprep.subr.mxu0 %v1803
    %4107 = vmatpush1.msra.mxu0 %v1802
    %4108 = vmatprep.subr.mxu0 %v1811
    %4109 = vmatpush1.msra.mxu0 %v1810
    %4110 = vmatprep.subr.mxu0 %v1819
    %4111 = vmatpush1.msra.mxu0 %v1818
    %4112 = vmatprep.subr.mxu0 %v1827
    %4113 = vmatpush1.msra.mxu0 %v1826
    %4114 = vmatprep.subr.mxu0 %v1835
    %4115 = vmatpush1.msra.mxu0 %v1834
    %4116 = vmatprep.subr.mxu0 %v1843
    %4117 = vmatpush1.msra.mxu0 %v1842
    %4118 = vmatprep.subr.mxu0 %v1851
    %4119 = vmatpush1.msra.mxu0 %v1850
    %4120 = vmatprep.subr.mxu0 %v1859
    %4121 = vmatpush1.msra.mxu0 %v1858
    %4122 = vmatprep.subr.mxu0 %v1867
    %4123 = vmatpush1.msra.mxu0 %v1866
    %4124 = vmatprep.subr.mxu0 %v1875
    %4125 = vmatpush1.msra.mxu0 %v1874
    %4126 = vmatprep.subr.mxu0 %v1883
    %4127 = vmatpush1.msra.mxu0 %v1882
    %4128 = vmatprep.mubr.f32.mxu0 %v1359
    %4129 = vmatmul.mubr.f32.gmra.mrb[0].mxu0 %v1358
    %v4130 = vpop.f32.mrb[0].mxu0
    %v4131 = vadd.f32 %v4060, %v4130
    %v4132 = vpop.f32.mrb[0].mxu0
    %v4133 = vadd.f32 %v4062, %v4132
    %4134 = vdwg.mxu0
    %4135 = vmatprep.subr.mxu0 %v1891
    %4136 = vmatpush1.msra.mxu0 %v1890
    %4137 = vmatprep.subr.mxu0 %v1899
    %4138 = vmatpush1.msra.mxu0 %v1898
    %4139 = vmatprep.subr.mxu0 %v1907
    %4140 = vmatpush1.msra.mxu0 %v1906
    %4141 = vmatprep.subr.mxu0 %v1915
    %4142 = vmatpush1.msra.mxu0 %v1914
    %4143 = vmatprep.subr.mxu0 %v1923
    %4144 = vmatpush1.msra.mxu0 %v1922
    %4145 = vmatprep.subr.mxu0 %v1931
    %4146 = vmatpush1.msra.mxu0 %v1930
    %4147 = vmatprep.subr.mxu0 %v1939
    %4148 = vmatpush1.msra.mxu0 %v1938
    %4149 = vmatprep.subr.mxu0 %v1947
    %4150 = vmatpush1.msra.mxu0 %v1946
    %4151 = vmatprep.subr.mxu0 %v1955
    %4152 = vmatpush1.msra.mxu0 %v1954
    %4153 = vmatprep.subr.mxu0 %v1963
    %4154 = vmatpush1.msra.mxu0 %v1962
    %4155 = vmatprep.subr.mxu0 %v1971
    %4156 = vmatpush1.msra.mxu0 %v1970
    %4157 = vmatprep.subr.mxu0 %v1979
    %4158 = vmatpush1.msra.mxu0 %v1978
    %4159 = vmatprep.subr.mxu0 %v1987
    %4160 = vmatpush1.msra.mxu0 %v1986
    %4161 = vmatprep.subr.mxu0 %v1995
    %4162 = vmatpush1.msra.mxu0 %v1994
    %4163 = vmatprep.subr.mxu0 %v2003
    %4164 = vmatpush1.msra.mxu0 %v2002
    %4165 = vmatprep.subr.mxu0 %v2011
    %4166 = vmatpush1.msra.mxu0 %v2010
    %4167 = vmatprep.subr.mxu0 %v2019
    %4168 = vmatpush1.msra.mxu0 %v2018
    %4169 = vmatprep.subr.mxu0 %v2027
    %4170 = vmatpush1.msra.mxu0 %v2026
    %4171 = vmatprep.subr.mxu0 %v2035
    %4172 = vmatpush1.msra.mxu0 %v2034
    %4173 = vmatprep.subr.mxu0 %v2043
    %4174 = vmatpush1.msra.mxu0 %v2042
    %4175 = vmatprep.subr.mxu0 %v2051
    %4176 = vmatpush1.msra.mxu0 %v2050
    %4177 = vmatprep.subr.mxu0 %v2059
    %4178 = vmatpush1.msra.mxu0 %v2058
    %4179 = vmatprep.subr.mxu0 %v2067
    %4180 = vmatpush1.msra.mxu0 %v2066
    %4181 = vmatprep.subr.mxu0 %v2075
    %4182 = vmatpush1.msra.mxu0 %v2074
    %4183 = vmatprep.subr.mxu0 %v2083
    %4184 = vmatpush1.msra.mxu0 %v2082
    %4185 = vmatprep.subr.mxu0 %v2091
    %4186 = vmatpush1.msra.mxu0 %v2090
    %4187 = vmatprep.subr.mxu0 %v2099
    %4188 = vmatpush1.msra.mxu0 %v2098
    %4189 = vmatprep.subr.mxu0 %v2107
    %4190 = vmatpush1.msra.mxu0 %v2106
    %4191 = vmatprep.subr.mxu0 %v2115
    %4192 = vmatpush1.msra.mxu0 %v2114
    %4193 = vmatprep.subr.mxu0 %v2123
    %4194 = vmatpush1.msra.mxu0 %v2122
    %4195 = vmatprep.subr.mxu0 %v2131
    %4196 = vmatpush1.msra.mxu0 %v2130
    %4197 = vmatprep.subr.mxu0 %v2139
    %4198 = vmatpush1.msra.mxu0 %v2138
    %4199 = vmatprep.mubr.f32.mxu0 %v1361
    %4200 = vmatmul.mubr.f32.gmra.mrb[0].mxu0 %v1360
    %v4201 = vpop.f32.mrb[0].mxu0
    %v4202 = vadd.f32 %v4131, %v4201
    %v4203 = vpop.f32.mrb[0].mxu0
    %v4204 = vadd.f32 %v4133, %v4203
    %4205 = vdwg.mxu0
    %4206 = vmatprep.subr.mxu0 %v2147
    %4207 = vmatpush1.msra.mxu0 %v2146
    %4208 = vmatprep.subr.mxu0 %v2155
    %4209 = vmatpush1.msra.mxu0 %v2154
    %4210 = vmatprep.subr.mxu0 %v2163
    %4211 = vmatpush1.msra.mxu0 %v2162
    %4212 = vmatprep.subr.mxu0 %v2171
    %4213 = vmatpush1.msra.mxu0 %v2170
    %4214 = vmatprep.subr.mxu0 %v2179
    %4215 = vmatpush1.msra.mxu0 %v2178
    %4216 = vmatprep.subr.mxu0 %v2187
    %4217 = vmatpush1.msra.mxu0 %v2186
    %4218 = vmatprep.subr.mxu0 %v2195
    %4219 = vmatpush1.msra.mxu0 %v2194
    %4220 = vmatprep.subr.mxu0 %v2203
    %4221 = vmatpush1.msra.mxu0 %v2202
    %4222 = vmatprep.subr.mxu0 %v2211
    %4223 = vmatpush1.msra.mxu0 %v2210
    %4224 = vmatprep.subr.mxu0 %v2219
    %4225 = vmatpush1.msra.mxu0 %v2218
    %4226 = vmatprep.subr.mxu0 %v2227
    %4227 = vmatpush1.msra.mxu0 %v2226
    %4228 = vmatprep.subr.mxu0 %v2235
    %4229 = vmatpush1.msra.mxu0 %v2234
    %4230 = vmatprep.subr.mxu0 %v2243
    %4231 = vmatpush1.msra.mxu0 %v2242
    %4232 = vmatprep.subr.mxu0 %v2251
    %4233 = vmatpush1.msra.mxu0 %v2250
    %4234 = vmatprep.subr.mxu0 %v2259
    %4235 = vmatpush1.msra.mxu0 %v2258
    %4236 = vmatprep.subr.mxu0 %v2267
    %4237 = vmatpush1.msra.mxu0 %v2266
    %4238 = vmatprep.subr.mxu0 %v2275
    %4239 = vmatpush1.msra.mxu0 %v2274
    %4240 = vmatprep.subr.mxu0 %v2283
    %4241 = vmatpush1.msra.mxu0 %v2282
    %4242 = vmatprep.subr.mxu0 %v2291
    %4243 = vmatpush1.msra.mxu0 %v2290
    %4244 = vmatprep.subr.mxu0 %v2299
    %4245 = vmatpush1.msra.mxu0 %v2298
    %4246 = vmatprep.subr.mxu0 %v2307
    %4247 = vmatpush1.msra.mxu0 %v2306
    %4248 = vmatprep.subr.mxu0 %v2315
    %4249 = vmatpush1.msra.mxu0 %v2314
    %4250 = vmatprep.subr.mxu0 %v2323
    %4251 = vmatpush1.msra.mxu0 %v2322
    %4252 = vmatprep.subr.mxu0 %v2331
    %4253 = vmatpush1.msra.mxu0 %v2330
    %4254 = vmatprep.subr.mxu0 %v2339
    %4255 = vmatpush1.msra.mxu0 %v2338
    %4256 = vmatprep.subr.mxu0 %v2347
    %4257 = vmatpush1.msra.mxu0 %v2346
    %4258 = vmatprep.subr.mxu0 %v2355
    %4259 = vmatpush1.msra.mxu0 %v2354
    %4260 = vmatprep.subr.mxu0 %v2363
    %4261 = vmatpush1.msra.mxu0 %v2362
    %4262 = vmatprep.subr.mxu0 %v2371
    %4263 = vmatpush1.msra.mxu0 %v2370
    %4264 = vmatprep.subr.mxu0 %v2379
    %4265 = vmatpush1.msra.mxu0 %v2378
    %4266 = vmatprep.subr.mxu0 %v2387
    %4267 = vmatpush1.msra.mxu0 %v2386
    %4268 = vmatprep.subr.mxu0 %v2395
    %4269 = vmatpush1.msra.mxu0 %v2394
    %4270 = vmatprep.mubr.f32.mxu0 %v1363
    %4271 = vmatmul.mubr.f32.gmra.mrb[0].mxu0 %v1362
    %v4272 = vpop.f32.mrb[0].mxu0
    %v4273 = vadd.f32 %v4202, %v4272
    %v4274 = vpop.f32.mrb[0].mxu0
    %v4275 = vadd.f32 %v4204, %v4274
    %4276 = vdwg.mxu0
    %4277 = vmatprep.subr.mxu0 %v2403
    %4278 = vmatpush1.msra.mxu0 %v2402
    %4279 = vmatprep.subr.mxu0 %v2411
    %4280 = vmatpush1.msra.mxu0 %v2410
    %4281 = vmatprep.subr.mxu0 %v2419
    %4282 = vmatpush1.msra.mxu0 %v2418
    %4283 = vmatprep.subr.mxu0 %v2427
    %4284 = vmatpush1.msra.mxu0 %v2426
    %4285 = vmatprep.subr.mxu0 %v2435
    %4286 = vmatpush1.msra.mxu0 %v2434
    %4287 = vmatprep.subr.mxu0 %v2443
    %4288 = vmatpush1.msra.mxu0 %v2442
    %4289 = vmatprep.subr.mxu0 %v2451
    %4290 = vmatpush1.msra.mxu0 %v2450
    %4291 = vmatprep.subr.mxu0 %v2459
    %4292 = vmatpush1.msra.mxu0 %v2458
    %4293 = vmatprep.subr.mxu0 %v2467
    %4294 = vmatpush1.msra.mxu0 %v2466
    %4295 = vmatprep.subr.mxu0 %v2475
    %4296 = vmatpush1.msra.mxu0 %v2474
    %4297 = vmatprep.subr.mxu0 %v2483
    %4298 = vmatpush1.msra.mxu0 %v2482
    %4299 = vmatprep.subr.mxu0 %v2491
    %4300 = vmatpush1.msra.mxu0 %v2490
    %4301 = vmatprep.subr.mxu0 %v2499
    %4302 = vmatpush1.msra.mxu0 %v2498
    %4303 = vmatprep.subr.mxu0 %v2507
    %4304 = vmatpush1.msra.mxu0 %v2506
    %4305 = vmatprep.subr.mxu0 %v2515
    %4306 = vmatpush1.msra.mxu0 %v2514
    %4307 = vmatprep.subr.mxu0 %v2523
    %4308 = vmatpush1.msra.mxu0 %v2522
    %4309 = vmatprep.subr.mxu0 %v2531
    %4310 = vmatpush1.msra.mxu0 %v2530
    %4311 = vmatprep.subr.mxu0 %v2539
    %4312 = vmatpush1.msra.mxu0 %v2538
    %4313 = vmatprep.subr.mxu0 %v2547
    %4314 = vmatpush1.msra.mxu0 %v2546
    %4315 = vmatprep.subr.mxu0 %v2555
    %4316 = vmatpush1.msra.mxu0 %v2554
    %4317 = vmatprep.subr.mxu0 %v2563
    %4318 = vmatpush1.msra.mxu0 %v2562
    %4319 = vmatprep.subr.mxu0 %v2571
    %4320 = vmatpush1.msra.mxu0 %v2570
    %4321 = vmatprep.subr.mxu0 %v2579
    %4322 = vmatpush1.msra.mxu0 %v2578
    %4323 = vmatprep.subr.mxu0 %v2587
    %4324 = vmatpush1.msra.mxu0 %v2586
    %4325 = vmatprep.subr.mxu0 %v2595
    %4326 = vmatpush1.msra.mxu0 %v2594
    %4327 = vmatprep.subr.mxu0 %v2603
    %4328 = vmatpush1.msra.mxu0 %v2602
    %4329 = vmatprep.subr.mxu0 %v2611
    %4330 = vmatpush1.msra.mxu0 %v2610
    %4331 = vmatprep.subr.mxu0 %v2619
    %4332 = vmatpush1.msra.mxu0 %v2618
    %4333 = vmatprep.subr.mxu0 %v2627
    %4334 = vmatpush1.msra.mxu0 %v2626
    %4335 = vmatprep.subr.mxu0 %v2635
    %4336 = vmatpush1.msra.mxu0 %v2634
    %4337 = vmatprep.subr.mxu0 %v2643
    %4338 = vmatpush1.msra.mxu0 %v2642
    %4339 = vmatprep.subr.mxu0 %v2651
    %4340 = vmatpush1.msra.mxu0 %v2650
    %4341 = vmatprep.mubr.f32.mxu0 %v1365
    %4342 = vmatmul.mubr.f32.gmra.mrb[0].mxu0 %v1364
    %v4343 = vpop.f32.mrb[0].mxu0
    %v4344 = vadd.f32 %v4273, %v4343
    %v4345 = vpop.f32.mrb[0].mxu0
    %v4346 = vadd.f32 %v4275, %v4345
    %4347 = vdwg.mxu0
    %4348 = vmatprep.subr.mxu0 %v2659
    %4349 = vmatpush1.msra.mxu0 %v2658
    %4350 = vmatprep.subr.mxu0 %v2667
    %4351 = vmatpush1.msra.mxu0 %v2666
    %4352 = vmatprep.subr.mxu0 %v2675
    %4353 = vmatpush1.msra.mxu0 %v2674
    %4354 = vmatprep.subr.mxu0 %v2683
    %4355 = vmatpush1.msra.mxu0 %v2682
    %4356 = vmatprep.subr.mxu0 %v2691
    %4357 = vmatpush1.msra.mxu0 %v2690
    %4358 = vmatprep.subr.mxu0 %v2699
    %4359 = vmatpush1.msra.mxu0 %v2698
    %4360 = vmatprep.subr.mxu0 %v2707
    %4361 = vmatpush1.msra.mxu0 %v2706
    %4362 = vmatprep.subr.mxu0 %v2715
    %4363 = vmatpush1.msra.mxu0 %v2714
    %4364 = vmatprep.subr.mxu0 %v2723
    %4365 = vmatpush1.msra.mxu0 %v2722
    %4366 = vmatprep.subr.mxu0 %v2731
    %4367 = vmatpush1.msra.mxu0 %v2730
    %4368 = vmatprep.subr.mxu0 %v2739
    %4369 = vmatpush1.msra.mxu0 %v2738
    %4370 = vmatprep.subr.mxu0 %v2747
    %4371 = vmatpush1.msra.mxu0 %v2746
    %4372 = vmatprep.subr.mxu0 %v2755
    %4373 = vmatpush1.msra.mxu0 %v2754
    %4374 = vmatprep.subr.mxu0 %v2763
    %4375 = vmatpush1.msra.mxu0 %v2762
    %4376 = vmatprep.subr.mxu0 %v2771
    %4377 = vmatpush1.msra.mxu0 %v2770
    %4378 = vmatprep.subr.mxu0 %v2779
    %4379 = vmatpush1.msra.mxu0 %v2778
    %4380 = vmatprep.subr.mxu0 %v2787
    %4381 = vmatpush1.msra.mxu0 %v2786
    %4382 = vmatprep.subr.mxu0 %v2795
    %4383 = vmatpush1.msra.mxu0 %v2794
    %4384 = vmatprep.subr.mxu0 %v2803
    %4385 = vmatpush1.msra.mxu0 %v2802
    %4386 = vmatprep.subr.mxu0 %v2811
    %4387 = vmatpush1.msra.mxu0 %v2810
    %4388 = vmatprep.subr.mxu0 %v2819
    %4389 = vmatpush1.msra.mxu0 %v2818
    %4390 = vmatprep.subr.mxu0 %v2827
    %4391 = vmatpush1.msra.mxu0 %v2826
    %4392 = vmatprep.subr.mxu0 %v2835
    %4393 = vmatpush1.msra.mxu0 %v2834
    %4394 = vmatprep.subr.mxu0 %v2843
    %4395 = vmatpush1.msra.mxu0 %v2842
    %4396 = vmatprep.subr.mxu0 %v2851
    %4397 = vmatpush1.msra.mxu0 %v2850
    %4398 = vmatprep.subr.mxu0 %v2859
    %4399 = vmatpush1.msra.mxu0 %v2858
    %4400 = vmatprep.subr.mxu0 %v2867
    %4401 = vmatpush1.msra.mxu0 %v2866
    %4402 = vmatprep.subr.mxu0 %v2875
    %4403 = vmatpush1.msra.mxu0 %v2874
    %4404 = vmatprep.subr.mxu0 %v2883
    %4405 = vmatpush1.msra.mxu0 %v2882
    %4406 = vmatprep.subr.mxu0 %v2891
    %4407 = vmatpush1.msra.mxu0 %v2890
    %4408 = vmatprep.subr.mxu0 %v2899
    %4409 = vmatpush1.msra.mxu0 %v2898
    %4410 = vmatprep.subr.mxu0 %v2907
    %4411 = vmatpush1.msra.mxu0 %v2906
    %4412 = vmatprep.mubr.f32.mxu0 %v1367
    %4413 = vmatmul.mubr.f32.gmra.mrb[0].mxu0 %v1366
    %v4414 = vpop.f32.mrb[0].mxu0
    %v4415 = vadd.f32 %v4344, %v4414
    %v4416 = vpop.f32.mrb[0].mxu0
    %v4417 = vadd.f32 %v4346, %v4416
    %4418 = vdwg.mxu0
    %4419 = vmatprep.subr.mxu0 %v2915
    %4420 = vmatpush1.msra.mxu0 %v2914
    %4421 = vmatprep.subr.mxu0 %v2923
    %4422 = vmatpush1.msra.mxu0 %v2922
    %4423 = vmatprep.subr.mxu0 %v2931
    %4424 = vmatpush1.msra.mxu0 %v2930
    %4425 = vmatprep.subr.mxu0 %v2939
    %4426 = vmatpush1.msra.mxu0 %v2938
    %4427 = vmatprep.subr.mxu0 %v2947
    %4428 = vmatpush1.msra.mxu0 %v2946
    %4429 = vmatprep.subr.mxu0 %v2955
    %4430 = vmatpush1.msra.mxu0 %v2954
    %4431 = vmatprep.subr.mxu0 %v2963
    %4432 = vmatpush1.msra.mxu0 %v2962
    %4433 = vmatprep.subr.mxu0 %v2971
    %4434 = vmatpush1.msra.mxu0 %v2970
    %4435 = vmatprep.subr.mxu0 %v2979
    %4436 = vmatpush1.msra.mxu0 %v2978
    %4437 = vmatprep.subr.mxu0 %v2987
    %4438 = vmatpush1.msra.mxu0 %v2986
    %4439 = vmatprep.subr.mxu0 %v2995
    %4440 = vmatpush1.msra.mxu0 %v2994
    %4441 = vmatprep.subr.mxu0 %v3003
    %4442 = vmatpush1.msra.mxu0 %v3002
    %4443 = vmatprep.subr.mxu0 %v3011
    %4444 = vmatpush1.msra.mxu0 %v3010
    %4445 = vmatprep.subr.mxu0 %v3019
    %4446 = vmatpush1.msra.mxu0 %v3018
    %4447 = vmatprep.subr.mxu0 %v3027
    %4448 = vmatpush1.msra.mxu0 %v3026
    %4449 = vmatprep.subr.mxu0 %v3035
    %4450 = vmatpush1.msra.mxu0 %v3034
    %4451 = vmatprep.subr.mxu0 %v3043
    %4452 = vmatpush1.msra.mxu0 %v3042
    %4453 = vmatprep.subr.mxu0 %v3051
    %4454 = vmatpush1.msra.mxu0 %v3050
    %4455 = vmatprep.subr.mxu0 %v3059
    %4456 = vmatpush1.msra.mxu0 %v3058
    %4457 = vmatprep.subr.mxu0 %v3067
    %4458 = vmatpush1.msra.mxu0 %v3066
    %4459 = vmatprep.subr.mxu0 %v3075
    %4460 = vmatpush1.msra.mxu0 %v3074
    %4461 = vmatprep.subr.mxu0 %v3083
    %4462 = vmatpush1.msra.mxu0 %v3082
    %4463 = vmatprep.subr.mxu0 %v3091
    %4464 = vmatpush1.msra.mxu0 %v3090
    %4465 = vmatprep.subr.mxu0 %v3099
    %4466 = vmatpush1.msra.mxu0 %v3098
    %4467 = vmatprep.subr.mxu0 %v3107
    %4468 = vmatpush1.msra.mxu0 %v3106
    %4469 = vmatprep.subr.mxu0 %v3115
    %4470 = vmatpush1.msra.mxu0 %v3114
    %4471 = vmatprep.subr.mxu0 %v3123
    %4472 = vmatpush1.msra.mxu0 %v3122
    %4473 = vmatprep.subr.mxu0 %v3131
    %4474 = vmatpush1.msra.mxu0 %v3130
    %4475 = vmatprep.subr.mxu0 %v3139
    %4476 = vmatpush1.msra.mxu0 %v3138
    %4477 = vmatprep.subr.mxu0 %v3147
    %4478 = vmatpush1.msra.mxu0 %v3146
    %4479 = vmatprep.subr.mxu0 %v3155
    %4480 = vmatpush1.msra.mxu0 %v3154
    %4481 = vmatprep.subr.mxu0 %v3163
    %4482 = vmatpush1.msra.mxu0 %v3162
    %4483 = vmatprep.mubr.f32.mxu0 %v1369
    %4484 = vmatmul.mubr.f32.gmra.mrb[0].mxu0 %v1368
    %v4485 = vpop.f32.mrb[0].mxu0
    %v4486 = vadd.f32 %v4415, %v4485
    %v4487 = vpop.f32.mrb[0].mxu0
    %v4488 = vadd.f32 %v4417, %v4487
    %4489 = vdwg.mxu0
    %4490 = vmatprep.subr.mxu0 %v3171
    %4491 = vmatpush1.msra.mxu0 %v3170
    %4492 = vmatprep.subr.mxu0 %v3179
    %4493 = vmatpush1.msra.mxu0 %v3178
    %4494 = vmatprep.subr.mxu0 %v3187
    %4495 = vmatpush1.msra.mxu0 %v3186
    %4496 = vmatprep.subr.mxu0 %v3195
    %4497 = vmatpush1.msra.mxu0 %v3194
    %4498 = vmatprep.subr.mxu0 %v3203
    %4499 = vmatpush1.msra.mxu0 %v3202
    %4500 = vmatprep.subr.mxu0 %v3211
    %4501 = vmatpush1.msra.mxu0 %v3210
    %4502 = vmatprep.subr.mxu0 %v3219
    %4503 = vmatpush1.msra.mxu0 %v3218
    %4504 = vmatprep.subr.mxu0 %v3227
    %4505 = vmatpush1.msra.mxu0 %v3226
    %4506 = vmatprep.subr.mxu0 %v3235
    %4507 = vmatpush1.msra.mxu0 %v3234
    %4508 = vmatprep.subr.mxu0 %v3243
    %4509 = vmatpush1.msra.mxu0 %v3242
    %4510 = vmatprep.subr.mxu0 %v3251
    %4511 = vmatpush1.msra.mxu0 %v3250
    %4512 = vmatprep.subr.mxu0 %v3259
    %4513 = vmatpush1.msra.mxu0 %v3258
    %4514 = vmatprep.subr.mxu0 %v3267
    %4515 = vmatpush1.msra.mxu0 %v3266
    %4516 = vmatprep.subr.mxu0 %v3275
    %4517 = vmatpush1.msra.mxu0 %v3274
    %4518 = vmatprep.subr.mxu0 %v3283
    %4519 = vmatpush1.msra.mxu0 %v3282
    %4520 = vmatprep.subr.mxu0 %v3291
    %4521 = vmatpush1.msra.mxu0 %v3290
    %4522 = vmatprep.subr.mxu0 %v3299
    %4523 = vmatpush1.msra.mxu0 %v3298
    %4524 = vmatprep.subr.mxu0 %v3307
    %4525 = vmatpush1.msra.mxu0 %v3306
    %4526 = vmatprep.subr.mxu0 %v3315
    %4527 = vmatpush1.msra.mxu0 %v3314
    %4528 = vmatprep.subr.mxu0 %v3323
    %4529 = vmatpush1.msra.mxu0 %v3322
    %4530 = vmatprep.subr.mxu0 %v3331
    %4531 = vmatpush1.msra.mxu0 %v3330
    %4532 = vmatprep.subr.mxu0 %v3339
    %4533 = vmatpush1.msra.mxu0 %v3338
    %4534 = vmatprep.subr.mxu0 %v3347
    %4535 = vmatpush1.msra.mxu0 %v3346
    %4536 = vmatprep.subr.mxu0 %v3355
    %4537 = vmatpush1.msra.mxu0 %v3354
    %4538 = vmatprep.subr.mxu0 %v3363
    %4539 = vmatpush1.msra.mxu0 %v3362
    %4540 = vmatprep.subr.mxu0 %v3371
    %4541 = vmatpush1.msra.mxu0 %v3370
    %4542 = vmatprep.subr.mxu0 %v3379
    %4543 = vmatpush1.msra.mxu0 %v3378
    %4544 = vmatprep.subr.mxu0 %v3387
    %4545 = vmatpush1.msra.mxu0 %v3386
    %4546 = vmatprep.subr.mxu0 %v3395
    %4547 = vmatpush1.msra.mxu0 %v3394
    %4548 = vmatprep.subr.mxu0 %v3403
    %4549 = vmatpush1.msra.mxu0 %v3402
    %4550 = vmatprep.subr.mxu0 %v3411
    %4551 = vmatpush1.msra.mxu0 %v3410
    %4552 = vmatprep.subr.mxu0 %v3419
    %4553 = vmatpush1.msra.mxu0 %v3418
    %4554 = vmatprep.mubr.f32.mxu0 %v1371
    %4555 = vmatmul.mubr.f32.gmra.mrb[0].mxu0 %v1370
    %v4556 = vpop.f32.mrb[0].mxu0
    %v4557 = vadd.f32 %v4486, %v4556
    %v4558 = vpop.f32.mrb[0].mxu0
    %v4559 = vadd.f32 %v4488, %v4558
    %4560 = vdwg.mxu0
    %4561 = vmatprep.subr.mxu0 %v1381
    %4562 = vmatpush1.msra.mxu0 %v1380
    %4563 = vmatprep.subr.mxu0 %v1389
    %4564 = vmatpush1.msra.mxu0 %v1388
    %4565 = vmatprep.subr.mxu0 %v1397
    %4566 = vmatpush1.msra.mxu0 %v1396
    %4567 = vmatprep.subr.mxu0 %v1405
    %4568 = vmatpush1.msra.mxu0 %v1404
    %4569 = vmatprep.subr.mxu0 %v1413
    %4570 = vmatpush1.msra.mxu0 %v1412
    %4571 = vmatprep.subr.mxu0 %v1421
    %4572 = vmatpush1.msra.mxu0 %v1420
    %4573 = vmatprep.subr.mxu0 %v1429
    %4574 = vmatpush1.msra.mxu0 %v1428
    %4575 = vmatprep.subr.mxu0 %v1437
    %4576 = vmatpush1.msra.mxu0 %v1436
    %4577 = vmatprep.subr.mxu0 %v1445
    %4578 = vmatpush1.msra.mxu0 %v1444
    %4579 = vmatprep.subr.mxu0 %v1453
    %4580 = vmatpush1.msra.mxu0 %v1452
    %4581 = vmatprep.subr.mxu0 %v1461
    %4582 = vmatpush1.msra.mxu0 %v1460
    %4583 = vmatprep.subr.mxu0 %v1469
    %4584 = vmatpush1.msra.mxu0 %v1468
    %4585 = vmatprep.subr.mxu0 %v1477
    %4586 = vmatpush1.msra.mxu0 %v1476
    %4587 = vmatprep.subr.mxu0 %v1485
    %4588 = vmatpush1.msra.mxu0 %v1484
    %4589 = vmatprep.subr.mxu0 %v1493
    %4590 = vmatpush1.msra.mxu0 %v1492
    %4591 = vmatprep.subr.mxu0 %v1501
    %4592 = vmatpush1.msra.mxu0 %v1500
    %4593 = vmatprep.subr.mxu0 %v1509
    %4594 = vmatpush1.msra.mxu0 %v1508
    %4595 = vmatprep.subr.mxu0 %v1517
    %4596 = vmatpush1.msra.mxu0 %v1516
    %4597 = vmatprep.subr.mxu0 %v1525
    %4598 = vmatpush1.msra.mxu0 %v1524
    %4599 = vmatprep.subr.mxu0 %v1533
    %4600 = vmatpush1.msra.mxu0 %v1532
    %4601 = vmatprep.subr.mxu0 %v1541
    %4602 = vmatpush1.msra.mxu0 %v1540
    %4603 = vmatprep.subr.mxu0 %v1549
    %4604 = vmatpush1.msra.mxu0 %v1548
    %4605 = vmatprep.subr.mxu0 %v1557
    %4606 = vmatpush1.msra.mxu0 %v1556
    %4607 = vmatprep.subr.mxu0 %v1565
    %4608 = vmatpush1.msra.mxu0 %v1564
    %4609 = vmatprep.subr.mxu0 %v1573
    %4610 = vmatpush1.msra.mxu0 %v1572
    %4611 = vmatprep.subr.mxu0 %v1581
    %4612 = vmatpush1.msra.mxu0 %v1580
    %4613 = vmatprep.subr.mxu0 %v1589
    %4614 = vmatpush1.msra.mxu0 %v1588
    %4615 = vmatprep.subr.mxu0 %v1597
    %4616 = vmatpush1.msra.mxu0 %v1596
    %4617 = vmatprep.subr.mxu0 %v1605
    %4618 = vmatpush1.msra.mxu0 %v1604
    %4619 = vmatprep.subr.mxu0 %v1613
    %4620 = vmatpush1.msra.mxu0 %v1612
    %4621 = vmatprep.subr.mxu0 %v1621
    %4622 = vmatpush1.msra.mxu0 %v1620
    %4623 = vmatprep.subr.mxu0 %v1629
    %4624 = vmatpush1.msra.mxu0 %v1628
    %4625 = vmatprep.mubr.f32.mxu0 %v1357
    %4626 = vmatmul.mubr.f32.gmra.mrb[0].mxu0 %v1356
    %v4627 = vpop.f32.mrb[0].mxu0
    %v4628 = vadd.f32 0.0, %v4627
    %v4629 = vpop.f32.mrb[0].mxu0
    %v4630 = vadd.f32 0.0, %v4629
    %4631 = vdwg.mxu0
    %4632 = vmatprep.subr.mxu0 %v1637
    %4633 = vmatpush1.msra.mxu0 %v1636
    %4634 = vmatprep.subr.mxu0 %v1645
    %4635 = vmatpush1.msra.mxu0 %v1644
    %4636 = vmatprep.subr.mxu0 %v1653
    %4637 = vmatpush1.msra.mxu0 %v1652
    %4638 = vmatprep.subr.mxu0 %v1661
    %4639 = vmatpush1.msra.mxu0 %v1660
    %4640 = vmatprep.subr.mxu0 %v1669
    %4641 = vmatpush1.msra.mxu0 %v1668
    %4642 = vmatprep.subr.mxu0 %v1677
    %4643 = vmatpush1.msra.mxu0 %v1676
    %4644 = vmatprep.subr.mxu0 %v1685
    %4645 = vmatpush1.msra.mxu0 %v1684
    %4646 = vmatprep.subr.mxu0 %v1693
    %4647 = vmatpush1.msra.mxu0 %v1692
    %4648 = vmatprep.subr.mxu0 %v1701
    %4649 = vmatpush1.msra.mxu0 %v1700
    %4650 = vmatprep.subr.mxu0 %v1709
    %4651 = vmatpush1.msra.mxu0 %v1708
    %4652 = vmatprep.subr.mxu0 %v1717
    %4653 = vmatpush1.msra.mxu0 %v1716
    %4654 = vmatprep.subr.mxu0 %v1725
    %4655 = vmatpush1.msra.mxu0 %v1724
    %4656 = vmatprep.subr.mxu0 %v1733
    %4657 = vmatpush1.msra.mxu0 %v1732
    %4658 = vmatprep.subr.mxu0 %v1741
    %4659 = vmatpush1.msra.mxu0 %v1740
    %4660 = vmatprep.subr.mxu0 %v1749
    %4661 = vmatpush1.msra.mxu0 %v1748
    %4662 = vmatprep.subr.mxu0 %v1757
    %4663 = vmatpush1.msra.mxu0 %v1756
    %4664 = vmatprep.subr.mxu0 %v1765
    %4665 = vmatpush1.msra.mxu0 %v1764
    %4666 = vmatprep.subr.mxu0 %v1773
    %4667 = vmatpush1.msra.mxu0 %v1772
    %4668 = vmatprep.subr.mxu0 %v1781
    %4669 = vmatpush1.msra.mxu0 %v1780
    %4670 = vmatprep.subr.mxu0 %v1789
    %4671 = vmatpush1.msra.mxu0 %v1788
    %4672 = vmatprep.subr.mxu0 %v1797
    %4673 = vmatpush1.msra.mxu0 %v1796
    %4674 = vmatprep.subr.mxu0 %v1805
    %4675 = vmatpush1.msra.mxu0 %v1804
    %4676 = vmatprep.subr.mxu0 %v1813
    %4677 = vmatpush1.msra.mxu0 %v1812
    %4678 = vmatprep.subr.mxu0 %v1821
    %4679 = vmatpush1.msra.mxu0 %v1820
    %4680 = vmatprep.subr.mxu0 %v1829
    %4681 = vmatpush1.msra.mxu0 %v1828
    %4682 = vmatprep.subr.mxu0 %v1837
    %4683 = vmatpush1.msra.mxu0 %v1836
    %4684 = vmatprep.subr.mxu0 %v1845
    %4685 = vmatpush1.msra.mxu0 %v1844
    %4686 = vmatprep.subr.mxu0 %v1853
    %4687 = vmatpush1.msra.mxu0 %v1852
    %4688 = vmatprep.subr.mxu0 %v1861
    %4689 = vmatpush1.msra.mxu0 %v1860
    %4690 = vmatprep.subr.mxu0 %v1869
    %4691 = vmatpush1.msra.mxu0 %v1868
    %4692 = vmatprep.subr.mxu0 %v1877
    %4693 = vmatpush1.msra.mxu0 %v1876
    %4694 = vmatprep.subr.mxu0 %v1885
    %4695 = vmatpush1.msra.mxu0 %v1884
    %4696 = vmatprep.mubr.f32.mxu0 %v1359
    %4697 = vmatmul.mubr.f32.gmra.mrb[0].mxu0 %v1358
    %v4698 = vpop.f32.mrb[0].mxu0
    %v4699 = vadd.f32 %v4628, %v4698
    %v4700 = vpop.f32.mrb[0].mxu0
    %v4701 = vadd.f32 %v4630, %v4700
    %4702 = vdwg.mxu0
    %4703 = vmatprep.subr.mxu0 %v1893
    %4704 = vmatpush1.msra.mxu0 %v1892
    %4705 = vmatprep.subr.mxu0 %v1901
    %4706 = vmatpush1.msra.mxu0 %v1900
    %4707 = vmatprep.subr.mxu0 %v1909
    %4708 = vmatpush1.msra.mxu0 %v1908
    %4709 = vmatprep.subr.mxu0 %v1917
    %4710 = vmatpush1.msra.mxu0 %v1916
    %4711 = vmatprep.subr.mxu0 %v1925
    %4712 = vmatpush1.msra.mxu0 %v1924
    %4713 = vmatprep.subr.mxu0 %v1933
    %4714 = vmatpush1.msra.mxu0 %v1932
    %4715 = vmatprep.subr.mxu0 %v1941
    %4716 = vmatpush1.msra.mxu0 %v1940
    %4717 = vmatprep.subr.mxu0 %v1949
    %4718 = vmatpush1.msra.mxu0 %v1948
    %4719 = vmatprep.subr.mxu0 %v1957
    %4720 = vmatpush1.msra.mxu0 %v1956
    %4721 = vmatprep.subr.mxu0 %v1965
    %4722 = vmatpush1.msra.mxu0 %v1964
    %4723 = vmatprep.subr.mxu0 %v1973
    %4724 = vmatpush1.msra.mxu0 %v1972
    %4725 = vmatprep.subr.mxu0 %v1981
    %4726 = vmatpush1.msra.mxu0 %v1980
    %4727 = vmatprep.subr.mxu0 %v1989
    %4728 = vmatpush1.msra.mxu0 %v1988
    %4729 = vmatprep.subr.mxu0 %v1997
    %4730 = vmatpush1.msra.mxu0 %v1996
    %4731 = vmatprep.subr.mxu0 %v2005
    %4732 = vmatpush1.msra.mxu0 %v2004
    %4733 = vmatprep.subr.mxu0 %v2013
    %4734 = vmatpush1.msra.mxu0 %v2012
    %4735 = vmatprep.subr.mxu0 %v2021
    %4736 = vmatpush1.msra.mxu0 %v2020
    %4737 = vmatprep.subr.mxu0 %v2029
    %4738 = vmatpush1.msra.mxu0 %v2028
    %4739 = vmatprep.subr.mxu0 %v2037
    %4740 = vmatpush1.msra.mxu0 %v2036
    %4741 = vmatprep.subr.mxu0 %v2045
    %4742 = vmatpush1.msra.mxu0 %v2044
    %4743 = vmatprep.subr.mxu0 %v2053
    %4744 = vmatpush1.msra.mxu0 %v2052
    %4745 = vmatprep.subr.mxu0 %v2061
    %4746 = vmatpush1.msra.mxu0 %v2060
    %4747 = vmatprep.subr.mxu0 %v2069
    %4748 = vmatpush1.msra.mxu0 %v2068
    %4749 = vmatprep.subr.mxu0 %v2077
    %4750 = vmatpush1.msra.mxu0 %v2076
    %4751 = vmatprep.subr.mxu0 %v2085
    %4752 = vmatpush1.msra.mxu0 %v2084
    %4753 = vmatprep.subr.mxu0 %v2093
    %4754 = vmatpush1.msra.mxu0 %v2092
    %4755 = vmatprep.subr.mxu0 %v2101
    %4756 = vmatpush1.msra.mxu0 %v2100
    %4757 = vmatprep.subr.mxu0 %v2109
    %4758 = vmatpush1.msra.mxu0 %v2108
    %4759 = vmatprep.subr.mxu0 %v2117
    %4760 = vmatpush1.msra.mxu0 %v2116
    %4761 = vmatprep.subr.mxu0 %v2125
    %4762 = vmatpush1.msra.mxu0 %v2124
    %4763 = vmatprep.subr.mxu0 %v2133
    %4764 = vmatpush1.msra.mxu0 %v2132
    %4765 = vmatprep.subr.mxu0 %v2141
    %4766 = vmatpush1.msra.mxu0 %v2140
    %4767 = vmatprep.mubr.f32.mxu0 %v1361
    %4768 = vmatmul.mubr.f32.gmra.mrb[0].mxu0 %v1360
    %v4769 = vpop.f32.mrb[0].mxu0
    %v4770 = vadd.f32 %v4699, %v4769
    %v4771 = vpop.f32.mrb[0].mxu0
    %v4772 = vadd.f32 %v4701, %v4771
    %4773 = vdwg.mxu0
    %4774 = vmatprep.subr.mxu0 %v2149
    %4775 = vmatpush1.msra.mxu0 %v2148
    %4776 = vmatprep.subr.mxu0 %v2157
    %4777 = vmatpush1.msra.mxu0 %v2156
    %4778 = vmatprep.subr.mxu0 %v2165
    %4779 = vmatpush1.msra.mxu0 %v2164
    %4780 = vmatprep.subr.mxu0 %v2173
    %4781 = vmatpush1.msra.mxu0 %v2172
    %4782 = vmatprep.subr.mxu0 %v2181
    %4783 = vmatpush1.msra.mxu0 %v2180
    %4784 = vmatprep.subr.mxu0 %v2189
    %4785 = vmatpush1.msra.mxu0 %v2188
    %4786 = vmatprep.subr.mxu0 %v2197
    %4787 = vmatpush1.msra.mxu0 %v2196
    %4788 = vmatprep.subr.mxu0 %v2205
    %4789 = vmatpush1.msra.mxu0 %v2204
    %4790 = vmatprep.subr.mxu0 %v2213
    %4791 = vmatpush1.msra.mxu0 %v2212
    %4792 = vmatprep.subr.mxu0 %v2221
    %4793 = vmatpush1.msra.mxu0 %v2220
    %4794 = vmatprep.subr.mxu0 %v2229
    %4795 = vmatpush1.msra.mxu0 %v2228
    %4796 = vmatprep.subr.mxu0 %v2237
    %4797 = vmatpush1.msra.mxu0 %v2236
    %4798 = vmatprep.subr.mxu0 %v2245
    %4799 = vmatpush1.msra.mxu0 %v2244
    %4800 = vmatprep.subr.mxu0 %v2253
    %4801 = vmatpush1.msra.mxu0 %v2252
    %4802 = vmatprep.subr.mxu0 %v2261
    %4803 = vmatpush1.msra.mxu0 %v2260
    %4804 = vmatprep.subr.mxu0 %v2269
    %4805 = vmatpush1.msra.mxu0 %v2268
    %4806 = vmatprep.subr.mxu0 %v2277
    %4807 = vmatpush1.msra.mxu0 %v2276
    %4808 = vmatprep.subr.mxu0 %v2285
    %4809 = vmatpush1.msra.mxu0 %v2284
    %4810 = vmatprep.subr.mxu0 %v2293
    %4811 = vmatpush1.msra.mxu0 %v2292
    %4812 = vmatprep.subr.mxu0 %v2301
    %4813 = vmatpush1.msra.mxu0 %v2300
    %4814 = vmatprep.subr.mxu0 %v2309
    %4815 = vmatpush1.msra.mxu0 %v2308
    %4816 = vmatprep.subr.mxu0 %v2317
    %4817 = vmatpush1.msra.mxu0 %v2316
    %4818 = vmatprep.subr.mxu0 %v2325
    %4819 = vmatpush1.msra.mxu0 %v2324
    %4820 = vmatprep.subr.mxu0 %v2333
    %4821 = vmatpush1.msra.mxu0 %v2332
    %4822 = vmatprep.subr.mxu0 %v2341
    %4823 = vmatpush1.msra.mxu0 %v2340
    %4824 = vmatprep.subr.mxu0 %v2349
    %4825 = vmatpush1.msra.mxu0 %v2348
    %4826 = vmatprep.subr.mxu0 %v2357
    %4827 = vmatpush1.msra.mxu0 %v2356
    %4828 = vmatprep.subr.mxu0 %v2365
    %4829 = vmatpush1.msra.mxu0 %v2364
    %4830 = vmatprep.subr.mxu0 %v2373
    %4831 = vmatpush1.msra.mxu0 %v2372
    %4832 = vmatprep.subr.mxu0 %v2381
    %4833 = vmatpush1.msra.mxu0 %v2380
    %4834 = vmatprep.subr.mxu0 %v2389
    %4835 = vmatpush1.msra.mxu0 %v2388
    %4836 = vmatprep.subr.mxu0 %v2397
    %4837 = vmatpush1.msra.mxu0 %v2396
    %4838 = vmatprep.mubr.f32.mxu0 %v1363
    %4839 = vmatmul.mubr.f32.gmra.mrb[0].mxu0 %v1362
    %v4840 = vpop.f32.mrb[0].mxu0
    %v4841 = vadd.f32 %v4770, %v4840
    %v4842 = vpop.f32.mrb[0].mxu0
    %v4843 = vadd.f32 %v4772, %v4842
    %4844 = vdwg.mxu0
    %4845 = vmatprep.subr.mxu0 %v2405
    %4846 = vmatpush1.msra.mxu0 %v2404
    %4847 = vmatprep.subr.mxu0 %v2413
    %4848 = vmatpush1.msra.mxu0 %v2412
    %4849 = vmatprep.subr.mxu0 %v2421
    %4850 = vmatpush1.msra.mxu0 %v2420
    %4851 = vmatprep.subr.mxu0 %v2429
    %4852 = vmatpush1.msra.mxu0 %v2428
    %4853 = vmatprep.subr.mxu0 %v2437
    %4854 = vmatpush1.msra.mxu0 %v2436
    %4855 = vmatprep.subr.mxu0 %v2445
    %4856 = vmatpush1.msra.mxu0 %v2444
    %4857 = vmatprep.subr.mxu0 %v2453
    %4858 = vmatpush1.msra.mxu0 %v2452
    %4859 = vmatprep.subr.mxu0 %v2461
    %4860 = vmatpush1.msra.mxu0 %v2460
    %4861 = vmatprep.subr.mxu0 %v2469
    %4862 = vmatpush1.msra.mxu0 %v2468
    %4863 = vmatprep.subr.mxu0 %v2477
    %4864 = vmatpush1.msra.mxu0 %v2476
    %4865 = vmatprep.subr.mxu0 %v2485
    %4866 = vmatpush1.msra.mxu0 %v2484
    %4867 = vmatprep.subr.mxu0 %v2493
    %4868 = vmatpush1.msra.mxu0 %v2492
    %4869 = vmatprep.subr.mxu0 %v2501
    %4870 = vmatpush1.msra.mxu0 %v2500
    %4871 = vmatprep.subr.mxu0 %v2509
    %4872 = vmatpush1.msra.mxu0 %v2508
    %4873 = vmatprep.subr.mxu0 %v2517
    %4874 = vmatpush1.msra.mxu0 %v2516
    %4875 = vmatprep.subr.mxu0 %v2525
    %4876 = vmatpush1.msra.mxu0 %v2524
    %4877 = vmatprep.subr.mxu0 %v2533
    %4878 = vmatpush1.msra.mxu0 %v2532
    %4879 = vmatprep.subr.mxu0 %v2541
    %4880 = vmatpush1.msra.mxu0 %v2540
    %4881 = vmatprep.subr.mxu0 %v2549
    %4882 = vmatpush1.msra.mxu0 %v2548
    %4883 = vmatprep.subr.mxu0 %v2557
    %4884 = vmatpush1.msra.mxu0 %v2556
    %4885 = vmatprep.subr.mxu0 %v2565
    %4886 = vmatpush1.msra.mxu0 %v2564
    %4887 = vmatprep.subr.mxu0 %v2573
    %4888 = vmatpush1.msra.mxu0 %v2572
    %4889 = vmatprep.subr.mxu0 %v2581
    %4890 = vmatpush1.msra.mxu0 %v2580
    %4891 = vmatprep.subr.mxu0 %v2589
    %4892 = vmatpush1.msra.mxu0 %v2588
    %4893 = vmatprep.subr.mxu0 %v2597
    %4894 = vmatpush1.msra.mxu0 %v2596
    %4895 = vmatprep.subr.mxu0 %v2605
    %4896 = vmatpush1.msra.mxu0 %v2604
    %4897 = vmatprep.subr.mxu0 %v2613
    %4898 = vmatpush1.msra.mxu0 %v2612
    %4899 = vmatprep.subr.mxu0 %v2621
    %4900 = vmatpush1.msra.mxu0 %v2620
    %4901 = vmatprep.subr.mxu0 %v2629
    %4902 = vmatpush1.msra.mxu0 %v2628
    %4903 = vmatprep.subr.mxu0 %v2637
    %4904 = vmatpush1.msra.mxu0 %v2636
    %4905 = vmatprep.subr.mxu0 %v2645
    %4906 = vmatpush1.msra.mxu0 %v2644
    %4907 = vmatprep.subr.mxu0 %v2653
    %4908 = vmatpush1.msra.mxu0 %v2652
    %4909 = vmatprep.mubr.f32.mxu0 %v1365
    %4910 = vmatmul.mubr.f32.gmra.mrb[0].mxu0 %v1364
    %v4911 = vpop.f32.mrb[0].mxu0
    %v4912 = vadd.f32 %v4841, %v4911
    %v4913 = vpop.f32.mrb[0].mxu0
    %v4914 = vadd.f32 %v4843, %v4913
    %4915 = vdwg.mxu0
    %4916 = vmatprep.subr.mxu0 %v2661
    %4917 = vmatpush1.msra.mxu0 %v2660
    %4918 = vmatprep.subr.mxu0 %v2669
    %4919 = vmatpush1.msra.mxu0 %v2668
    %4920 = vmatprep.subr.mxu0 %v2677
    %4921 = vmatpush1.msra.mxu0 %v2676
    %4922 = vmatprep.subr.mxu0 %v2685
    %4923 = vmatpush1.msra.mxu0 %v2684
    %4924 = vmatprep.subr.mxu0 %v2693
    %4925 = vmatpush1.msra.mxu0 %v2692
    %4926 = vmatprep.subr.mxu0 %v2701
    %4927 = vmatpush1.msra.mxu0 %v2700
    %4928 = vmatprep.subr.mxu0 %v2709
    %4929 = vmatpush1.msra.mxu0 %v2708
    %4930 = vmatprep.subr.mxu0 %v2717
    %4931 = vmatpush1.msra.mxu0 %v2716
    %4932 = vmatprep.subr.mxu0 %v2725
    %4933 = vmatpush1.msra.mxu0 %v2724
    %4934 = vmatprep.subr.mxu0 %v2733
    %4935 = vmatpush1.msra.mxu0 %v2732
    %4936 = vmatprep.subr.mxu0 %v2741
    %4937 = vmatpush1.msra.mxu0 %v2740
    %4938 = vmatprep.subr.mxu0 %v2749
    %4939 = vmatpush1.msra.mxu0 %v2748
    %4940 = vmatprep.subr.mxu0 %v2757
    %4941 = vmatpush1.msra.mxu0 %v2756
    %4942 = vmatprep.subr.mxu0 %v2765
    %4943 = vmatpush1.msra.mxu0 %v2764
    %4944 = vmatprep.subr.mxu0 %v2773
    %4945 = vmatpush1.msra.mxu0 %v2772
    %4946 = vmatprep.subr.mxu0 %v2781
    %4947 = vmatpush1.msra.mxu0 %v2780
    %4948 = vmatprep.subr.mxu0 %v2789
    %4949 = vmatpush1.msra.mxu0 %v2788
    %4950 = vmatprep.subr.mxu0 %v2797
    %4951 = vmatpush1.msra.mxu0 %v2796
    %4952 = vmatprep.subr.mxu0 %v2805
    %4953 = vmatpush1.msra.mxu0 %v2804
    %4954 = vmatprep.subr.mxu0 %v2813
    %4955 = vmatpush1.msra.mxu0 %v2812
    %4956 = vmatprep.subr.mxu0 %v2821
    %4957 = vmatpush1.msra.mxu0 %v2820
    %4958 = vmatprep.subr.mxu0 %v2829
    %4959 = vmatpush1.msra.mxu0 %v2828
    %4960 = vmatprep.subr.mxu0 %v2837
    %4961 = vmatpush1.msra.mxu0 %v2836
    %4962 = vmatprep.subr.mxu0 %v2845
    %4963 = vmatpush1.msra.mxu0 %v2844
    %4964 = vmatprep.subr.mxu0 %v2853
    %4965 = vmatpush1.msra.mxu0 %v2852
    %4966 = vmatprep.subr.mxu0 %v2861
    %4967 = vmatpush1.msra.mxu0 %v2860
    %4968 = vmatprep.subr.mxu0 %v2869
    %4969 = vmatpush1.msra.mxu0 %v2868
    %4970 = vmatprep.subr.mxu0 %v2877
    %4971 = vmatpush1.msra.mxu0 %v2876
    %4972 = vmatprep.subr.mxu0 %v2885
    %4973 = vmatpush1.msra.mxu0 %v2884
    %4974 = vmatprep.subr.mxu0 %v2893
    %4975 = vmatpush1.msra.mxu0 %v2892
    %4976 = vmatprep.subr.mxu0 %v2901
    %4977 = vmatpush1.msra.mxu0 %v2900
    %4978 = vmatprep.subr.mxu0 %v2909
    %4979 = vmatpush1.msra.mxu0 %v2908
    %4980 = vmatprep.mubr.f32.mxu0 %v1367
    %4981 = vmatmul.mubr.f32.gmra.mrb[0].mxu0 %v1366
    %v4982 = vpop.f32.mrb[0].mxu0
    %v4983 = vadd.f32 %v4912, %v4982
    %v4984 = vpop.f32.mrb[0].mxu0
    %v4985 = vadd.f32 %v4914, %v4984
    %4986 = vdwg.mxu0
    %4987 = vmatprep.subr.mxu0 %v2917
    %4988 = vmatpush1.msra.mxu0 %v2916
    %4989 = vmatprep.subr.mxu0 %v2925
    %4990 = vmatpush1.msra.mxu0 %v2924
    %4991 = vmatprep.subr.mxu0 %v2933
    %4992 = vmatpush1.msra.mxu0 %v2932
    %4993 = vmatprep.subr.mxu0 %v2941
    %4994 = vmatpush1.msra.mxu0 %v2940
    %4995 = vmatprep.subr.mxu0 %v2949
    %4996 = vmatpush1.msra.mxu0 %v2948
    %4997 = vmatprep.subr.mxu0 %v2957
    %4998 = vmatpush1.msra.mxu0 %v2956
    %4999 = vmatprep.subr.mxu0 %v2965
    %5000 = vmatpush1.msra.mxu0 %v2964
    %5001 = vmatprep.subr.mxu0 %v2973
    %5002 = vmatpush1.msra.mxu0 %v2972
    %5003 = vmatprep.subr.mxu0 %v2981
    %5004 = vmatpush1.msra.mxu0 %v2980
    %5005 = vmatprep.subr.mxu0 %v2989
    %5006 = vmatpush1.msra.mxu0 %v2988
    %5007 = vmatprep.subr.mxu0 %v2997
    %5008 = vmatpush1.msra.mxu0 %v2996
    %5009 = vmatprep.subr.mxu0 %v3005
    %5010 = vmatpush1.msra.mxu0 %v3004
    %5011 = vmatprep.subr.mxu0 %v3013
    %5012 = vmatpush1.msra.mxu0 %v3012
    %5013 = vmatprep.subr.mxu0 %v3021
    %5014 = vmatpush1.msra.mxu0 %v3020
    %5015 = vmatprep.subr.mxu0 %v3029
    %5016 = vmatpush1.msra.mxu0 %v3028
    %5017 = vmatprep.subr.mxu0 %v3037
    %5018 = vmatpush1.msra.mxu0 %v3036
    %5019 = vmatprep.subr.mxu0 %v3045
    %5020 = vmatpush1.msra.mxu0 %v3044
    %5021 = vmatprep.subr.mxu0 %v3053
    %5022 = vmatpush1.msra.mxu0 %v3052
    %5023 = vmatprep.subr.mxu0 %v3061
    %5024 = vmatpush1.msra.mxu0 %v3060
    %5025 = vmatprep.subr.mxu0 %v3069
    %5026 = vmatpush1.msra.mxu0 %v3068
    %5027 = vmatprep.subr.mxu0 %v3077
    %5028 = vmatpush1.msra.mxu0 %v3076
    %5029 = vmatprep.subr.mxu0 %v3085
    %5030 = vmatpush1.msra.mxu0 %v3084
    %5031 = vmatprep.subr.mxu0 %v3093
    %5032 = vmatpush1.msra.mxu0 %v3092
    %5033 = vmatprep.subr.mxu0 %v3101
    %5034 = vmatpush1.msra.mxu0 %v3100
    %5035 = vmatprep.subr.mxu0 %v3109
    %5036 = vmatpush1.msra.mxu0 %v3108
    %5037 = vmatprep.subr.mxu0 %v3117
    %5038 = vmatpush1.msra.mxu0 %v3116
    %5039 = vmatprep.subr.mxu0 %v3125
    %5040 = vmatpush1.msra.mxu0 %v3124
    %5041 = vmatprep.subr.mxu0 %v3133
    %5042 = vmatpush1.msra.mxu0 %v3132
    %5043 = vmatprep.subr.mxu0 %v3141
    %5044 = vmatpush1.msra.mxu0 %v3140
    %5045 = vmatprep.subr.mxu0 %v3149
    %5046 = vmatpush1.msra.mxu0 %v3148
    %5047 = vmatprep.subr.mxu0 %v3157
    %5048 = vmatpush1.msra.mxu0 %v3156
    %5049 = vmatprep.subr.mxu0 %v3165
    %5050 = vmatpush1.msra.mxu0 %v3164
    %5051 = vmatprep.mubr.f32.mxu0 %v1369
    %5052 = vmatmul.mubr.f32.gmra.mrb[0].mxu0 %v1368
    %v5053 = vpop.f32.mrb[0].mxu0
    %v5054 = vadd.f32 %v4983, %v5053
    %v5055 = vpop.f32.mrb[0].mxu0
    %v5056 = vadd.f32 %v4985, %v5055
    %5057 = vdwg.mxu0
    %5058 = vmatprep.subr.mxu0 %v3173
    %5059 = vmatpush1.msra.mxu0 %v3172
    %5060 = vmatprep.subr.mxu0 %v3181
    %5061 = vmatpush1.msra.mxu0 %v3180
    %5062 = vmatprep.subr.mxu0 %v3189
    %5063 = vmatpush1.msra.mxu0 %v3188
    %5064 = vmatprep.subr.mxu0 %v3197
    %5065 = vmatpush1.msra.mxu0 %v3196
    %5066 = vmatprep.subr.mxu0 %v3205
    %5067 = vmatpush1.msra.mxu0 %v3204
    %5068 = vmatprep.subr.mxu0 %v3213
    %5069 = vmatpush1.msra.mxu0 %v3212
    %5070 = vmatprep.subr.mxu0 %v3221
    %5071 = vmatpush1.msra.mxu0 %v3220
    %5072 = vmatprep.subr.mxu0 %v3229
    %5073 = vmatpush1.msra.mxu0 %v3228
    %5074 = vmatprep.subr.mxu0 %v3237
    %5075 = vmatpush1.msra.mxu0 %v3236
    %5076 = vmatprep.subr.mxu0 %v3245
    %5077 = vmatpush1.msra.mxu0 %v3244
    %5078 = vmatprep.subr.mxu0 %v3253
    %5079 = vmatpush1.msra.mxu0 %v3252
    %5080 = vmatprep.subr.mxu0 %v3261
    %5081 = vmatpush1.msra.mxu0 %v3260
    %5082 = vmatprep.subr.mxu0 %v3269
    %5083 = vmatpush1.msra.mxu0 %v3268
    %5084 = vmatprep.subr.mxu0 %v3277
    %5085 = vmatpush1.msra.mxu0 %v3276
    %5086 = vmatprep.subr.mxu0 %v3285
    %5087 = vmatpush1.msra.mxu0 %v3284
    %5088 = vmatprep.subr.mxu0 %v3293
    %5089 = vmatpush1.msra.mxu0 %v3292
    %5090 = vmatprep.subr.mxu0 %v3301
    %5091 = vmatpush1.msra.mxu0 %v3300
    %5092 = vmatprep.subr.mxu0 %v3309
    %5093 = vmatpush1.msra.mxu0 %v3308
    %5094 = vmatprep.subr.mxu0 %v3317
    %5095 = vmatpush1.msra.mxu0 %v3316
    %5096 = vmatprep.subr.mxu0 %v3325
    %5097 = vmatpush1.msra.mxu0 %v3324
    %5098 = vmatprep.subr.mxu0 %v3333
    %5099 = vmatpush1.msra.mxu0 %v3332
    %5100 = vmatprep.subr.mxu0 %v3341
    %5101 = vmatpush1.msra.mxu0 %v3340
    %5102 = vmatprep.subr.mxu0 %v3349
    %5103 = vmatpush1.msra.mxu0 %v3348
    %5104 = vmatprep.subr.mxu0 %v3357
    %5105 = vmatpush1.msra.mxu0 %v3356
    %5106 = vmatprep.subr.mxu0 %v3365
    %5107 = vmatpush1.msra.mxu0 %v3364
    %5108 = vmatprep.subr.mxu0 %v3373
    %5109 = vmatpush1.msra.mxu0 %v3372
    %5110 = vmatprep.subr.mxu0 %v3381
    %5111 = vmatpush1.msra.mxu0 %v3380
    %5112 = vmatprep.subr.mxu0 %v3389
    %5113 = vmatpush1.msra.mxu0 %v3388
    %5114 = vmatprep.subr.mxu0 %v3397
    %5115 = vmatpush1.msra.mxu0 %v3396
    %5116 = vmatprep.subr.mxu0 %v3405
    %5117 = vmatpush1.msra.mxu0 %v3404
    %5118 = vmatprep.subr.mxu0 %v3413
    %5119 = vmatpush1.msra.mxu0 %v3412
    %5120 = vmatprep.subr.mxu0 %v3421
    %5121 = vmatpush1.msra.mxu0 %v3420
    %5122 = vmatprep.mubr.f32.mxu0 %v1371
    %5123 = vmatmul.mubr.f32.gmra.mrb[0].mxu0 %v1370
    %v5124 = vpop.f32.mrb[0].mxu0
    %v5125 = vadd.f32 %v5054, %v5124
    %v5126 = vpop.f32.mrb[0].mxu0
    %v5127 = vadd.f32 %v5056, %v5126
    %5128 = vdwg.mxu0
    %5129 = vmatprep.subr.mxu0 %v1383
    %5130 = vmatpush1.msra.mxu0 %v1382
    %5131 = vmatprep.subr.mxu0 %v1391
    %5132 = vmatpush1.msra.mxu0 %v1390
    %5133 = vmatprep.subr.mxu0 %v1399
    %5134 = vmatpush1.msra.mxu0 %v1398
    %5135 = vmatprep.subr.mxu0 %v1407
    %5136 = vmatpush1.msra.mxu0 %v1406
    %5137 = vmatprep.subr.mxu0 %v1415
    %5138 = vmatpush1.msra.mxu0 %v1414
    %5139 = vmatprep.subr.mxu0 %v1423
    %5140 = vmatpush1.msra.mxu0 %v1422
    %5141 = vmatprep.subr.mxu0 %v1431
    %5142 = vmatpush1.msra.mxu0 %v1430
    %5143 = vmatprep.subr.mxu0 %v1439
    %5144 = vmatpush1.msra.mxu0 %v1438
    %5145 = vmatprep.subr.mxu0 %v1447
    %5146 = vmatpush1.msra.mxu0 %v1446
    %5147 = vmatprep.subr.mxu0 %v1455
    %5148 = vmatpush1.msra.mxu0 %v1454
    %5149 = vmatprep.subr.mxu0 %v1463
    %5150 = vmatpush1.msra.mxu0 %v1462
    %5151 = vmatprep.subr.mxu0 %v1471
    %5152 = vmatpush1.msra.mxu0 %v1470
    %5153 = vmatprep.subr.mxu0 %v1479
    %5154 = vmatpush1.msra.mxu0 %v1478
    %5155 = vmatprep.subr.mxu0 %v1487
    %5156 = vmatpush1.msra.mxu0 %v1486
    %5157 = vmatprep.subr.mxu0 %v1495
    %5158 = vmatpush1.msra.mxu0 %v1494
    %5159 = vmatprep.subr.mxu0 %v1503
    %5160 = vmatpush1.msra.mxu0 %v1502
    %5161 = vmatprep.subr.mxu0 %v1511
    %5162 = vmatpush1.msra.mxu0 %v1510
    %5163 = vmatprep.subr.mxu0 %v1519
    %5164 = vmatpush1.msra.mxu0 %v1518
    %5165 = vmatprep.subr.mxu0 %v1527
    %5166 = vmatpush1.msra.mxu0 %v1526
    %5167 = vmatprep.subr.mxu0 %v1535
    %5168 = vmatpush1.msra.mxu0 %v1534
    %5169 = vmatprep.subr.mxu0 %v1543
    %5170 = vmatpush1.msra.mxu0 %v1542
    %5171 = vmatprep.subr.mxu0 %v1551
    %5172 = vmatpush1.msra.mxu0 %v1550
    %5173 = vmatprep.subr.mxu0 %v1559
    %5174 = vmatpush1.msra.mxu0 %v1558
    %5175 = vmatprep.subr.mxu0 %v1567
    %5176 = vmatpush1.msra.mxu0 %v1566
    %5177 = vmatprep.subr.mxu0 %v1575
    %5178 = vmatpush1.msra.mxu0 %v1574
    %5179 = vmatprep.subr.mxu0 %v1583
    %5180 = vmatpush1.msra.mxu0 %v1582
    %5181 = vmatprep.subr.mxu0 %v1591
    %5182 = vmatpush1.msra.mxu0 %v1590
    %5183 = vmatprep.subr.mxu0 %v1599
    %5184 = vmatpush1.msra.mxu0 %v1598
    %5185 = vmatprep.subr.mxu0 %v1607
    %5186 = vmatpush1.msra.mxu0 %v1606
    %5187 = vmatprep.subr.mxu0 %v1615
    %5188 = vmatpush1.msra.mxu0 %v1614
    %5189 = vmatprep.subr.mxu0 %v1623
    %5190 = vmatpush1.msra.mxu0 %v1622
    %5191 = vmatprep.subr.mxu0 %v1631
    %5192 = vmatpush1.msra.mxu0 %v1630
    %5193 = vmatprep.mubr.f32.mxu0 %v1357
    %5194 = vmatmul.mubr.f32.gmra.mrb[0].mxu0 %v1356
    %v5195 = vpop.f32.mrb[0].mxu0
    %v5196 = vadd.f32 0.0, %v5195
    %v5197 = vpop.f32.mrb[0].mxu0
    %v5198 = vadd.f32 0.0, %v5197
    %5199 = vdwg.mxu0
    %5200 = vmatprep.subr.mxu0 %v1639
    %5201 = vmatpush1.msra.mxu0 %v1638
    %5202 = vmatprep.subr.mxu0 %v1647
    %5203 = vmatpush1.msra.mxu0 %v1646
    %5204 = vmatprep.subr.mxu0 %v1655
    %5205 = vmatpush1.msra.mxu0 %v1654
    %5206 = vmatprep.subr.mxu0 %v1663
    %5207 = vmatpush1.msra.mxu0 %v1662
    %5208 = vmatprep.subr.mxu0 %v1671
    %5209 = vmatpush1.msra.mxu0 %v1670
    %5210 = vmatprep.subr.mxu0 %v1679
    %5211 = vmatpush1.msra.mxu0 %v1678
    %5212 = vmatprep.subr.mxu0 %v1687
    %5213 = vmatpush1.msra.mxu0 %v1686
    %5214 = vmatprep.subr.mxu0 %v1695
    %5215 = vmatpush1.msra.mxu0 %v1694
    %5216 = vmatprep.subr.mxu0 %v1703
    %5217 = vmatpush1.msra.mxu0 %v1702
    %5218 = vmatprep.subr.mxu0 %v1711
    %5219 = vmatpush1.msra.mxu0 %v1710
    %5220 = vmatprep.subr.mxu0 %v1719
    %5221 = vmatpush1.msra.mxu0 %v1718
    %5222 = vmatprep.subr.mxu0 %v1727
    %5223 = vmatpush1.msra.mxu0 %v1726
    %5224 = vmatprep.subr.mxu0 %v1735
    %5225 = vmatpush1.msra.mxu0 %v1734
    %5226 = vmatprep.subr.mxu0 %v1743
    %5227 = vmatpush1.msra.mxu0 %v1742
    %5228 = vmatprep.subr.mxu0 %v1751
    %5229 = vmatpush1.msra.mxu0 %v1750
    %5230 = vmatprep.subr.mxu0 %v1759
    %5231 = vmatpush1.msra.mxu0 %v1758
    %5232 = vmatprep.subr.mxu0 %v1767
    %5233 = vmatpush1.msra.mxu0 %v1766
    %5234 = vmatprep.subr.mxu0 %v1775
    %5235 = vmatpush1.msra.mxu0 %v1774
    %5236 = vmatprep.subr.mxu0 %v1783
    %5237 = vmatpush1.msra.mxu0 %v1782
    %5238 = vmatprep.subr.mxu0 %v1791
    %5239 = vmatpush1.msra.mxu0 %v1790
    %5240 = vmatprep.subr.mxu0 %v1799
    %5241 = vmatpush1.msra.mxu0 %v1798
    %5242 = vmatprep.subr.mxu0 %v1807
    %5243 = vmatpush1.msra.mxu0 %v1806
    %5244 = vmatprep.subr.mxu0 %v1815
    %5245 = vmatpush1.msra.mxu0 %v1814
    %5246 = vmatprep.subr.mxu0 %v1823
    %5247 = vmatpush1.msra.mxu0 %v1822
    %5248 = vmatprep.subr.mxu0 %v1831
    %5249 = vmatpush1.msra.mxu0 %v1830
    %5250 = vmatprep.subr.mxu0 %v1839
    %5251 = vmatpush1.msra.mxu0 %v1838
    %5252 = vmatprep.subr.mxu0 %v1847
    %5253 = vmatpush1.msra.mxu0 %v1846
    %5254 = vmatprep.subr.mxu0 %v1855
    %5255 = vmatpush1.msra.mxu0 %v1854
    %5256 = vmatprep.subr.mxu0 %v1863
    %5257 = vmatpush1.msra.mxu0 %v1862
    %5258 = vmatprep.subr.mxu0 %v1871
    %5259 = vmatpush1.msra.mxu0 %v1870
    %5260 = vmatprep.subr.mxu0 %v1879
    %5261 = vmatpush1.msra.mxu0 %v1878
    %5262 = vmatprep.subr.mxu0 %v1887
    %5263 = vmatpush1.msra.mxu0 %v1886
    %5264 = vmatprep.mubr.f32.mxu0 %v1359
    %5265 = vmatmul.mubr.f32.gmra.mrb[0].mxu0 %v1358
    %v5266 = vpop.f32.mrb[0].mxu0
    %v5267 = vadd.f32 %v5196, %v5266
    %v5268 = vpop.f32.mrb[0].mxu0
    %v5269 = vadd.f32 %v5198, %v5268
    %5270 = vdwg.mxu0
    %5271 = vmatprep.subr.mxu0 %v1895
    %5272 = vmatpush1.msra.mxu0 %v1894
    %5273 = vmatprep.subr.mxu0 %v1903
    %5274 = vmatpush1.msra.mxu0 %v1902
    %5275 = vmatprep.subr.mxu0 %v1911
    %5276 = vmatpush1.msra.mxu0 %v1910
    %5277 = vmatprep.subr.mxu0 %v1919
    %5278 = vmatpush1.msra.mxu0 %v1918
    %5279 = vmatprep.subr.mxu0 %v1927
    %5280 = vmatpush1.msra.mxu0 %v1926
    %5281 = vmatprep.subr.mxu0 %v1935
    %5282 = vmatpush1.msra.mxu0 %v1934
    %5283 = vmatprep.subr.mxu0 %v1943
    %5284 = vmatpush1.msra.mxu0 %v1942
    %5285 = vmatprep.subr.mxu0 %v1951
    %5286 = vmatpush1.msra.mxu0 %v1950
    %5287 = vmatprep.subr.mxu0 %v1959
    %5288 = vmatpush1.msra.mxu0 %v1958
    %5289 = vmatprep.subr.mxu0 %v1967
    %5290 = vmatpush1.msra.mxu0 %v1966
    %5291 = vmatprep.subr.mxu0 %v1975
    %5292 = vmatpush1.msra.mxu0 %v1974
    %5293 = vmatprep.subr.mxu0 %v1983
    %5294 = vmatpush1.msra.mxu0 %v1982
    %5295 = vmatprep.subr.mxu0 %v1991
    %5296 = vmatpush1.msra.mxu0 %v1990
    %5297 = vmatprep.subr.mxu0 %v1999
    %5298 = vmatpush1.msra.mxu0 %v1998
    %5299 = vmatprep.subr.mxu0 %v2007
    %5300 = vmatpush1.msra.mxu0 %v2006
    %5301 = vmatprep.subr.mxu0 %v2015
    %5302 = vmatpush1.msra.mxu0 %v2014
    %5303 = vmatprep.subr.mxu0 %v2023
    %5304 = vmatpush1.msra.mxu0 %v2022
    %5305 = vmatprep.subr.mxu0 %v2031
    %5306 = vmatpush1.msra.mxu0 %v2030
    %5307 = vmatprep.subr.mxu0 %v2039
    %5308 = vmatpush1.msra.mxu0 %v2038
    %5309 = vmatprep.subr.mxu0 %v2047
    %5310 = vmatpush1.msra.mxu0 %v2046
    %5311 = vmatprep.subr.mxu0 %v2055
    %5312 = vmatpush1.msra.mxu0 %v2054
    %5313 = vmatprep.subr.mxu0 %v2063
    %5314 = vmatpush1.msra.mxu0 %v2062
    %5315 = vmatprep.subr.mxu0 %v2071
    %5316 = vmatpush1.msra.mxu0 %v2070
    %5317 = vmatprep.subr.mxu0 %v2079
    %5318 = vmatpush1.msra.mxu0 %v2078
    %5319 = vmatprep.subr.mxu0 %v2087
    %5320 = vmatpush1.msra.mxu0 %v2086
    %5321 = vmatprep.subr.mxu0 %v2095
    %5322 = vmatpush1.msra.mxu0 %v2094
    %5323 = vmatprep.subr.mxu0 %v2103
    %5324 = vmatpush1.msra.mxu0 %v2102
    %5325 = vmatprep.subr.mxu0 %v2111
    %5326 = vmatpush1.msra.mxu0 %v2110
    %5327 = vmatprep.subr.mxu0 %v2119
    %5328 = vmatpush1.msra.mxu0 %v2118
    %5329 = vmatprep.subr.mxu0 %v2127
    %5330 = vmatpush1.msra.mxu0 %v2126
    %5331 = vmatprep.subr.mxu0 %v2135
    %5332 = vmatpush1.msra.mxu0 %v2134
    %5333 = vmatprep.subr.mxu0 %v2143
    %5334 = vmatpush1.msra.mxu0 %v2142
    %5335 = vmatprep.mubr.f32.mxu0 %v1361
    %5336 = vmatmul.mubr.f32.gmra.mrb[0].mxu0 %v1360
    %v5337 = vpop.f32.mrb[0].mxu0
    %v5338 = vadd.f32 %v5267, %v5337
    %v5339 = vpop.f32.mrb[0].mxu0
    %v5340 = vadd.f32 %v5269, %v5339
    %5341 = vdwg.mxu0
    %5342 = vmatprep.subr.mxu0 %v2151
    %5343 = vmatpush1.msra.mxu0 %v2150
    %5344 = vmatprep.subr.mxu0 %v2159
    %5345 = vmatpush1.msra.mxu0 %v2158
    %5346 = vmatprep.subr.mxu0 %v2167
    %5347 = vmatpush1.msra.mxu0 %v2166
    %5348 = vmatprep.subr.mxu0 %v2175
    %5349 = vmatpush1.msra.mxu0 %v2174
    %5350 = vmatprep.subr.mxu0 %v2183
    %5351 = vmatpush1.msra.mxu0 %v2182
    %5352 = vmatprep.subr.mxu0 %v2191
    %5353 = vmatpush1.msra.mxu0 %v2190
    %5354 = vmatprep.subr.mxu0 %v2199
    %5355 = vmatpush1.msra.mxu0 %v2198
    %5356 = vmatprep.subr.mxu0 %v2207
    %5357 = vmatpush1.msra.mxu0 %v2206
    %5358 = vmatprep.subr.mxu0 %v2215
    %5359 = vmatpush1.msra.mxu0 %v2214
    %5360 = vmatprep.subr.mxu0 %v2223
    %5361 = vmatpush1.msra.mxu0 %v2222
    %5362 = vmatprep.subr.mxu0 %v2231
    %5363 = vmatpush1.msra.mxu0 %v2230
    %5364 = vmatprep.subr.mxu0 %v2239
    %5365 = vmatpush1.msra.mxu0 %v2238
    %5366 = vmatprep.subr.mxu0 %v2247
    %5367 = vmatpush1.msra.mxu0 %v2246
    %5368 = vmatprep.subr.mxu0 %v2255
    %5369 = vmatpush1.msra.mxu0 %v2254
    %5370 = vmatprep.subr.mxu0 %v2263
    %5371 = vmatpush1.msra.mxu0 %v2262
    %5372 = vmatprep.subr.mxu0 %v2271
    %5373 = vmatpush1.msra.mxu0 %v2270
    %5374 = vmatprep.subr.mxu0 %v2279
    %5375 = vmatpush1.msra.mxu0 %v2278
    %5376 = vmatprep.subr.mxu0 %v2287
    %5377 = vmatpush1.msra.mxu0 %v2286
    %5378 = vmatprep.subr.mxu0 %v2295
    %5379 = vmatpush1.msra.mxu0 %v2294
    %5380 = vmatprep.subr.mxu0 %v2303
    %5381 = vmatpush1.msra.mxu0 %v2302
    %5382 = vmatprep.subr.mxu0 %v2311
    %5383 = vmatpush1.msra.mxu0 %v2310
    %5384 = vmatprep.subr.mxu0 %v2319
    %5385 = vmatpush1.msra.mxu0 %v2318
    %5386 = vmatprep.subr.mxu0 %v2327
    %5387 = vmatpush1.msra.mxu0 %v2326
    %5388 = vmatprep.subr.mxu0 %v2335
    %5389 = vmatpush1.msra.mxu0 %v2334
    %5390 = vmatprep.subr.mxu0 %v2343
    %5391 = vmatpush1.msra.mxu0 %v2342
    %5392 = vmatprep.subr.mxu0 %v2351
    %5393 = vmatpush1.msra.mxu0 %v2350
    %5394 = vmatprep.subr.mxu0 %v2359
    %5395 = vmatpush1.msra.mxu0 %v2358
    %5396 = vmatprep.subr.mxu0 %v2367
    %5397 = vmatpush1.msra.mxu0 %v2366
    %5398 = vmatprep.subr.mxu0 %v2375
    %5399 = vmatpush1.msra.mxu0 %v2374
    %5400 = vmatprep.subr.mxu0 %v2383
    %5401 = vmatpush1.msra.mxu0 %v2382
    %5402 = vmatprep.subr.mxu0 %v2391
    %5403 = vmatpush1.msra.mxu0 %v2390
    %5404 = vmatprep.subr.mxu0 %v2399
    %5405 = vmatpush1.msra.mxu0 %v2398
    %5406 = vmatprep.mubr.f32.mxu0 %v1363
    %5407 = vmatmul.mubr.f32.gmra.mrb[0].mxu0 %v1362
    %v5408 = vpop.f32.mrb[0].mxu0
    %v5409 = vadd.f32 %v5338, %v5408
    %v5410 = vpop.f32.mrb[0].mxu0
    %v5411 = vadd.f32 %v5340, %v5410
    %5412 = vdwg.mxu0
    %5413 = vmatprep.subr.mxu0 %v2407
    %5414 = vmatpush1.msra.mxu0 %v2406
    %5415 = vmatprep.subr.mxu0 %v2415
    %5416 = vmatpush1.msra.mxu0 %v2414
    %5417 = vmatprep.subr.mxu0 %v2423
    %5418 = vmatpush1.msra.mxu0 %v2422
    %5419 = vmatprep.subr.mxu0 %v2431
    %5420 = vmatpush1.msra.mxu0 %v2430
    %5421 = vmatprep.subr.mxu0 %v2439
    %5422 = vmatpush1.msra.mxu0 %v2438
    %5423 = vmatprep.subr.mxu0 %v2447
    %5424 = vmatpush1.msra.mxu0 %v2446
    %5425 = vmatprep.subr.mxu0 %v2455
    %5426 = vmatpush1.msra.mxu0 %v2454
    %5427 = vmatprep.subr.mxu0 %v2463
    %5428 = vmatpush1.msra.mxu0 %v2462
    %5429 = vmatprep.subr.mxu0 %v2471
    %5430 = vmatpush1.msra.mxu0 %v2470
    %5431 = vmatprep.subr.mxu0 %v2479
    %5432 = vmatpush1.msra.mxu0 %v2478
    %5433 = vmatprep.subr.mxu0 %v2487
    %5434 = vmatpush1.msra.mxu0 %v2486
    %5435 = vmatprep.subr.mxu0 %v2495
    %5436 = vmatpush1.msra.mxu0 %v2494
    %5437 = vmatprep.subr.mxu0 %v2503
    %5438 = vmatpush1.msra.mxu0 %v2502
    %5439 = vmatprep.subr.mxu0 %v2511
    %5440 = vmatpush1.msra.mxu0 %v2510
    %5441 = vmatprep.subr.mxu0 %v2519
    %5442 = vmatpush1.msra.mxu0 %v2518
    %5443 = vmatprep.subr.mxu0 %v2527
    %5444 = vmatpush1.msra.mxu0 %v2526
    %5445 = vmatprep.subr.mxu0 %v2535
    %5446 = vmatpush1.msra.mxu0 %v2534
    %5447 = vmatprep.subr.mxu0 %v2543
    %5448 = vmatpush1.msra.mxu0 %v2542
    %5449 = vmatprep.subr.mxu0 %v2551
    %5450 = vmatpush1.msra.mxu0 %v2550
    %5451 = vmatprep.subr.mxu0 %v2559
    %5452 = vmatpush1.msra.mxu0 %v2558
    %5453 = vmatprep.subr.mxu0 %v2567
    %5454 = vmatpush1.msra.mxu0 %v2566
    %5455 = vmatprep.subr.mxu0 %v2575
    %5456 = vmatpush1.msra.mxu0 %v2574
    %5457 = vmatprep.subr.mxu0 %v2583
    %5458 = vmatpush1.msra.mxu0 %v2582
    %5459 = vmatprep.subr.mxu0 %v2591
    %5460 = vmatpush1.msra.mxu0 %v2590
    %5461 = vmatprep.subr.mxu0 %v2599
    %5462 = vmatpush1.msra.mxu0 %v2598
    %5463 = vmatprep.subr.mxu0 %v2607
    %5464 = vmatpush1.msra.mxu0 %v2606
    %5465 = vmatprep.subr.mxu0 %v2615
    %5466 = vmatpush1.msra.mxu0 %v2614
    %5467 = vmatprep.subr.mxu0 %v2623
    %5468 = vmatpush1.msra.mxu0 %v2622
    %5469 = vmatprep.subr.mxu0 %v2631
    %5470 = vmatpush1.msra.mxu0 %v2630
    %5471 = vmatprep.subr.mxu0 %v2639
    %5472 = vmatpush1.msra.mxu0 %v2638
    %5473 = vmatprep.subr.mxu0 %v2647
    %5474 = vmatpush1.msra.mxu0 %v2646
    %5475 = vmatprep.subr.mxu0 %v2655
    %5476 = vmatpush1.msra.mxu0 %v2654
    %5477 = vmatprep.mubr.f32.mxu0 %v1365
    %5478 = vmatmul.mubr.f32.gmra.mrb[0].mxu0 %v1364
    %v5479 = vpop.f32.mrb[0].mxu0
    %v5480 = vadd.f32 %v5409, %v5479
    %v5481 = vpop.f32.mrb[0].mxu0
    %v5482 = vadd.f32 %v5411, %v5481
    %5483 = vdwg.mxu0
    %5484 = vmatprep.subr.mxu0 %v2663
    %5485 = vmatpush1.msra.mxu0 %v2662
    %5486 = vmatprep.subr.mxu0 %v2671
    %5487 = vmatpush1.msra.mxu0 %v2670
    %5488 = vmatprep.subr.mxu0 %v2679
    %5489 = vmatpush1.msra.mxu0 %v2678
    %5490 = vmatprep.subr.mxu0 %v2687
    %5491 = vmatpush1.msra.mxu0 %v2686
    %5492 = vmatprep.subr.mxu0 %v2695
    %5493 = vmatpush1.msra.mxu0 %v2694
    %5494 = vmatprep.subr.mxu0 %v2703
    %5495 = vmatpush1.msra.mxu0 %v2702
    %5496 = vmatprep.subr.mxu0 %v2711
    %5497 = vmatpush1.msra.mxu0 %v2710
    %5498 = vmatprep.subr.mxu0 %v2719
    %5499 = vmatpush1.msra.mxu0 %v2718
    %5500 = vmatprep.subr.mxu0 %v2727
    %5501 = vmatpush1.msra.mxu0 %v2726
    %5502 = vmatprep.subr.mxu0 %v2735
    %5503 = vmatpush1.msra.mxu0 %v2734
    %5504 = vmatprep.subr.mxu0 %v2743
    %5505 = vmatpush1.msra.mxu0 %v2742
    %5506 = vmatprep.subr.mxu0 %v2751
    %5507 = vmatpush1.msra.mxu0 %v2750
    %5508 = vmatprep.subr.mxu0 %v2759
    %5509 = vmatpush1.msra.mxu0 %v2758
    %5510 = vmatprep.subr.mxu0 %v2767
    %5511 = vmatpush1.msra.mxu0 %v2766
    %5512 = vmatprep.subr.mxu0 %v2775
    %5513 = vmatpush1.msra.mxu0 %v2774
    %5514 = vmatprep.subr.mxu0 %v2783
    %5515 = vmatpush1.msra.mxu0 %v2782
    %5516 = vmatprep.subr.mxu0 %v2791
    %5517 = vmatpush1.msra.mxu0 %v2790
    %5518 = vmatprep.subr.mxu0 %v2799
    %5519 = vmatpush1.msra.mxu0 %v2798
    %5520 = vmatprep.subr.mxu0 %v2807
    %5521 = vmatpush1.msra.mxu0 %v2806
    %5522 = vmatprep.subr.mxu0 %v2815
    %5523 = vmatpush1.msra.mxu0 %v2814
    %5524 = vmatprep.subr.mxu0 %v2823
    %5525 = vmatpush1.msra.mxu0 %v2822
    %5526 = vmatprep.subr.mxu0 %v2831
    %5527 = vmatpush1.msra.mxu0 %v2830
    %5528 = vmatprep.subr.mxu0 %v2839
    %5529 = vmatpush1.msra.mxu0 %v2838
    %5530 = vmatprep.subr.mxu0 %v2847
    %5531 = vmatpush1.msra.mxu0 %v2846
    %5532 = vmatprep.subr.mxu0 %v2855
    %5533 = vmatpush1.msra.mxu0 %v2854
    %5534 = vmatprep.subr.mxu0 %v2863
    %5535 = vmatpush1.msra.mxu0 %v2862
    %5536 = vmatprep.subr.mxu0 %v2871
    %5537 = vmatpush1.msra.mxu0 %v2870
    %5538 = vmatprep.subr.mxu0 %v2879
    %5539 = vmatpush1.msra.mxu0 %v2878
    %5540 = vmatprep.subr.mxu0 %v2887
    %5541 = vmatpush1.msra.mxu0 %v2886
    %5542 = vmatprep.subr.mxu0 %v2895
    %5543 = vmatpush1.msra.mxu0 %v2894
    %5544 = vmatprep.subr.mxu0 %v2903
    %5545 = vmatpush1.msra.mxu0 %v2902
    %5546 = vmatprep.subr.mxu0 %v2911
    %5547 = vmatpush1.msra.mxu0 %v2910
    %5548 = vmatprep.mubr.f32.mxu0 %v1367
    %5549 = vmatmul.mubr.f32.gmra.mrb[0].mxu0 %v1366
    %v5550 = vpop.f32.mrb[0].mxu0
    %v5551 = vadd.f32 %v5480, %v5550
    %v5552 = vpop.f32.mrb[0].mxu0
    %v5553 = vadd.f32 %v5482, %v5552
    %5554 = vdwg.mxu0
    %5555 = vmatprep.subr.mxu0 %v2919
    %5556 = vmatpush1.msra.mxu0 %v2918
    %5557 = vmatprep.subr.mxu0 %v2927
    %5558 = vmatpush1.msra.mxu0 %v2926
    %5559 = vmatprep.subr.mxu0 %v2935
    %5560 = vmatpush1.msra.mxu0 %v2934
    %5561 = vmatprep.subr.mxu0 %v2943
    %5562 = vmatpush1.msra.mxu0 %v2942
    %5563 = vmatprep.subr.mxu0 %v2951
    %5564 = vmatpush1.msra.mxu0 %v2950
    %5565 = vmatprep.subr.mxu0 %v2959
    %5566 = vmatpush1.msra.mxu0 %v2958
    %5567 = vmatprep.subr.mxu0 %v2967
    %5568 = vmatpush1.msra.mxu0 %v2966
    %5569 = vmatprep.subr.mxu0 %v2975
    %5570 = vmatpush1.msra.mxu0 %v2974
    %5571 = vmatprep.subr.mxu0 %v2983
    %5572 = vmatpush1.msra.mxu0 %v2982
    %5573 = vmatprep.subr.mxu0 %v2991
    %5574 = vmatpush1.msra.mxu0 %v2990
    %5575 = vmatprep.subr.mxu0 %v2999
    %5576 = vmatpush1.msra.mxu0 %v2998
    %5577 = vmatprep.subr.mxu0 %v3007
    %5578 = vmatpush1.msra.mxu0 %v3006
    %5579 = vmatprep.subr.mxu0 %v3015
    %5580 = vmatpush1.msra.mxu0 %v3014
    %5581 = vmatprep.subr.mxu0 %v3023
    %5582 = vmatpush1.msra.mxu0 %v3022
    %5583 = vmatprep.subr.mxu0 %v3031
    %5584 = vmatpush1.msra.mxu0 %v3030
    %5585 = vmatprep.subr.mxu0 %v3039
    %5586 = vmatpush1.msra.mxu0 %v3038
    %5587 = vmatprep.subr.mxu0 %v3047
    %5588 = vmatpush1.msra.mxu0 %v3046
    %5589 = vmatprep.subr.mxu0 %v3055
    %5590 = vmatpush1.msra.mxu0 %v3054
    %5591 = vmatprep.subr.mxu0 %v3063
    %5592 = vmatpush1.msra.mxu0 %v3062
    %5593 = vmatprep.subr.mxu0 %v3071
    %5594 = vmatpush1.msra.mxu0 %v3070
    %5595 = vmatprep.subr.mxu0 %v3079
    %5596 = vmatpush1.msra.mxu0 %v3078
    %5597 = vmatprep.subr.mxu0 %v3087
    %5598 = vmatpush1.msra.mxu0 %v3086
    %5599 = vmatprep.subr.mxu0 %v3095
    %5600 = vmatpush1.msra.mxu0 %v3094
    %5601 = vmatprep.subr.mxu0 %v3103
    %5602 = vmatpush1.msra.mxu0 %v3102
    %5603 = vmatprep.subr.mxu0 %v3111
    %5604 = vmatpush1.msra.mxu0 %v3110
    %5605 = vmatprep.subr.mxu0 %v3119
    %5606 = vmatpush1.msra.mxu0 %v3118
    %5607 = vmatprep.subr.mxu0 %v3127
    %5608 = vmatpush1.msra.mxu0 %v3126
    %5609 = vmatprep.subr.mxu0 %v3135
    %5610 = vmatpush1.msra.mxu0 %v3134
    %5611 = vmatprep.subr.mxu0 %v3143
    %5612 = vmatpush1.msra.mxu0 %v3142
    %5613 = vmatprep.subr.mxu0 %v3151
    %5614 = vmatpush1.msra.mxu0 %v3150
    %5615 = vmatprep.subr.mxu0 %v3159
    %5616 = vmatpush1.msra.mxu0 %v3158
    %5617 = vmatprep.subr.mxu0 %v3167
    %5618 = vmatpush1.msra.mxu0 %v3166
    %5619 = vmatprep.mubr.f32.mxu0 %v1369
    %5620 = vmatmul.mubr.f32.gmra.mrb[0].mxu0 %v1368
    %v5621 = vpop.f32.mrb[0].mxu0
    %v5622 = vadd.f32 %v5551, %v5621
    %v5623 = vpop.f32.mrb[0].mxu0
    %v5624 = vadd.f32 %v5553, %v5623
    %5625 = vdwg.mxu0
    %5626 = vmatprep.subr.mxu0 %v3175
    %5627 = vmatpush1.msra.mxu0 %v3174
    %5628 = vmatprep.subr.mxu0 %v3183
    %5629 = vmatpush1.msra.mxu0 %v3182
    %5630 = vmatprep.subr.mxu0 %v3191
    %5631 = vmatpush1.msra.mxu0 %v3190
    %5632 = vmatprep.subr.mxu0 %v3199
    %5633 = vmatpush1.msra.mxu0 %v3198
    %5634 = vmatprep.subr.mxu0 %v3207
    %5635 = vmatpush1.msra.mxu0 %v3206
    %5636 = vmatprep.subr.mxu0 %v3215
    %5637 = vmatpush1.msra.mxu0 %v3214
    %5638 = vmatprep.subr.mxu0 %v3223
    %5639 = vmatpush1.msra.mxu0 %v3222
    %5640 = vmatprep.subr.mxu0 %v3231
    %5641 = vmatpush1.msra.mxu0 %v3230
    %5642 = vmatprep.subr.mxu0 %v3239
    %5643 = vmatpush1.msra.mxu0 %v3238
    %5644 = vmatprep.subr.mxu0 %v3247
    %5645 = vmatpush1.msra.mxu0 %v3246
    %5646 = vmatprep.subr.mxu0 %v3255
    %5647 = vmatpush1.msra.mxu0 %v3254
    %5648 = vmatprep.subr.mxu0 %v3263
    %5649 = vmatpush1.msra.mxu0 %v3262
    %5650 = vmatprep.subr.mxu0 %v3271
    %5651 = vmatpush1.msra.mxu0 %v3270
    %5652 = vmatprep.subr.mxu0 %v3279
    %5653 = vmatpush1.msra.mxu0 %v3278
    %5654 = vmatprep.subr.mxu0 %v3287
    %5655 = vmatpush1.msra.mxu0 %v3286
    %5656 = vmatprep.subr.mxu0 %v3295
    %5657 = vmatpush1.msra.mxu0 %v3294
    %5658 = vmatprep.subr.mxu0 %v3303
    %5659 = vmatpush1.msra.mxu0 %v3302
    %5660 = vmatprep.subr.mxu0 %v3311
    %5661 = vmatpush1.msra.mxu0 %v3310
    %5662 = vmatprep.subr.mxu0 %v3319
    %5663 = vmatpush1.msra.mxu0 %v3318
    %5664 = vmatprep.subr.mxu0 %v3327
    %5665 = vmatpush1.msra.mxu0 %v3326
    %5666 = vmatprep.subr.mxu0 %v3335
    %5667 = vmatpush1.msra.mxu0 %v3334
    %5668 = vmatprep.subr.mxu0 %v3343
    %5669 = vmatpush1.msra.mxu0 %v3342
    %5670 = vmatprep.subr.mxu0 %v3351
    %5671 = vmatpush1.msra.mxu0 %v3350
    %5672 = vmatprep.subr.mxu0 %v3359
    %5673 = vmatpush1.msra.mxu0 %v3358
    %5674 = vmatprep.subr.mxu0 %v3367
    %5675 = vmatpush1.msra.mxu0 %v3366
    %5676 = vmatprep.subr.mxu0 %v3375
    %5677 = vmatpush1.msra.mxu0 %v3374
    %5678 = vmatprep.subr.mxu0 %v3383
    %5679 = vmatpush1.msra.mxu0 %v3382
    %5680 = vmatprep.subr.mxu0 %v3391
    %5681 = vmatpush1.msra.mxu0 %v3390
    %5682 = vmatprep.subr.mxu0 %v3399
    %5683 = vmatpush1.msra.mxu0 %v3398
    %5684 = vmatprep.subr.mxu0 %v3407
    %5685 = vmatpush1.msra.mxu0 %v3406
    %5686 = vmatprep.subr.mxu0 %v3415
    %5687 = vmatpush1.msra.mxu0 %v3414
    %5688 = vmatprep.subr.mxu0 %v3423
    %5689 = vmatpush1.msra.mxu0 %v3422
    %5690 = vmatprep.mubr.f32.mxu0 %v1371
    %5691 = vmatmul.mubr.f32.gmra.mrb[0].mxu0 %v1370
    %v5692 = vpop.f32.mrb[0].mxu0
    %v5693 = vadd.f32 %v5622, %v5692
    %v5694 = vpop.f32.mrb[0].mxu0
    %v5695 = vadd.f32 %v5624, %v5694
    %5696 = vdwg.mxu0
    %v5698 = vlaneseq
    %v5699 = vshrl.u32 %v5698, 7
    %v5700 = vsub.s32 0, %v5699
    %v5701 = vrot.slane %v3424, %v5700
    %v5702 = vlaneseq
    %v5703 = vshrl.u32 %v5702, 7
    %v5704 = vsub.s32 1, %v5703
    %v5705 = vrot.slane %v3424, %v5704
    %v5706 = vlaneseq
    %v5707 = vshrl.u32 %v5706, 7
    %v5708 = vsub.s32 2, %v5707
    %v5709 = vrot.slane %v3424, %v5708
    %v5710 = vlaneseq
    %v5711 = vshrl.u32 %v5710, 7
    %v5712 = vsub.s32 3, %v5711
    %v5713 = vrot.slane %v3424, %v5712
    %v5714 = vlaneseq
    %v5715 = vshrl.u32 %v5714, 7
    %v5716 = vsub.s32 4, %v5715
    %v5717 = vrot.slane %v3424, %v5716
    %v5718 = vlaneseq
    %v5719 = vshrl.u32 %v5718, 7
    %v5720 = vsub.s32 5, %v5719
    %v5721 = vrot.slane %v3424, %v5720
    %v5722 = vlaneseq
    %v5723 = vshrl.u32 %v5722, 7
    %v5724 = vsub.s32 6, %v5723
    %v5725 = vrot.slane %v3424, %v5724
    %v5726 = vlaneseq
    %v5727 = vshrl.u32 %v5726, 7
    %v5728 = vsub.s32 7, %v5727
    %v5729 = vrot.slane %v3424, %v5728
    %5738 = vmatprep.subr.mxu0 %v3991
    %5739 = vmatpush1.msra.mxu0 %v3989
    %5740 = vmatprep.subr.mxu0 0.0
    %5741 = vmatpush1.msra.mxu0 0.0
    %5742 = vmatprep.subr.mxu0 0.0
    %5743 = vmatpush1.msra.mxu0 0.0
    %5744 = vmatprep.subr.mxu0 0.0
    %5745 = vmatpush1.msra.mxu0 0.0
    %5746 = vmatprep.subr.mxu0 0.0
    %5747 = vmatpush1.msra.mxu0 0.0
    %5748 = vmatprep.subr.mxu0 0.0
    %5749 = vmatpush1.msra.mxu0 0.0
    %5750 = vmatprep.subr.mxu0 0.0
    %5751 = vmatpush1.msra.mxu0 0.0
    %5752 = vmatprep.subr.mxu0 0.0
    %5753 = vmatpush1.msra.mxu0 0.0
    %5754 = vmatprep.subr.mxu0 0.0
    %5755 = vmatpush1.msra.mxu0 0.0
    %5756 = vmatprep.subr.mxu0 0.0
    %5757 = vmatpush1.msra.mxu0 0.0
    %5758 = vmatprep.subr.mxu0 0.0
    %5759 = vmatpush1.msra.mxu0 0.0
    %5760 = vmatprep.subr.mxu0 0.0
    %5761 = vmatpush1.msra.mxu0 0.0
    %5762 = vmatprep.subr.mxu0 0.0
    %5763 = vmatpush1.msra.mxu0 0.0
    %5764 = vmatprep.subr.mxu0 0.0
    %5765 = vmatpush1.msra.mxu0 0.0
    %5766 = vmatprep.subr.mxu0 0.0
    %5767 = vmatpush1.msra.mxu0 0.0
    %5768 = vmatprep.subr.mxu0 0.0
    %5769 = vmatpush1.msra.mxu0 0.0
    %5770 = vmatprep.subr.mxu0 0.0
    %5771 = vmatpush1.msra.mxu0 0.0
    %5772 = vmatprep.subr.mxu0 0.0
    %5773 = vmatpush1.msra.mxu0 0.0
    %5774 = vmatprep.subr.mxu0 0.0
    %5775 = vmatpush1.msra.mxu0 0.0
    %5776 = vmatprep.subr.mxu0 0.0
    %5777 = vmatpush1.msra.mxu0 0.0
    %5778 = vmatprep.subr.mxu0 0.0
    %5779 = vmatpush1.msra.mxu0 0.0
    %5780 = vmatprep.subr.mxu0 0.0
    %5781 = vmatpush1.msra.mxu0 0.0
    %5782 = vmatprep.subr.mxu0 0.0
    %5783 = vmatpush1.msra.mxu0 0.0
    %5784 = vmatprep.subr.mxu0 0.0
    %5785 = vmatpush1.msra.mxu0 0.0
    %5786 = vmatprep.subr.mxu0 0.0
    %5787 = vmatpush1.msra.mxu0 0.0
    %5788 = vmatprep.subr.mxu0 0.0
    %5789 = vmatpush1.msra.mxu0 0.0
    %5790 = vmatprep.subr.mxu0 0.0
    %5791 = vmatpush1.msra.mxu0 0.0
    %5792 = vmatprep.subr.mxu0 0.0
    %5793 = vmatpush1.msra.mxu0 0.0
    %5794 = vmatprep.subr.mxu0 0.0
    %5795 = vmatpush1.msra.mxu0 0.0
    %5796 = vmatprep.subr.mxu0 0.0
    %5797 = vmatpush1.msra.mxu0 0.0
    %5798 = vmatprep.subr.mxu0 0.0
    %5799 = vmatpush1.msra.mxu0 0.0
    %5800 = vmatprep.subr.mxu0 0.0
    %5801 = vmatpush1.msra.mxu0 0.0
    %5802 = vmatprep.mubr.f32.mxu0 0.0
    %5803 = vmatmul.mubr.f32.gmra.mrb[0].mxu0 %v592
    %v5804 = vpop.f32.mrb[0].mxu0
    %v5805 = vadd.f32 %v5701, %v5804
    %v5806 = vpop.f32.mrb[0].mxu0
    %v5807 = vadd.f32 %v5705, %v5806
    %5808 = vdwg.mxu0
    %5809 = vmatprep.subr.mxu0 %v4559
    %5810 = vmatpush1.msra.mxu0 %v4557
    %5811 = vmatprep.subr.mxu0 0.0
    %5812 = vmatpush1.msra.mxu0 0.0
    %5813 = vmatprep.subr.mxu0 0.0
    %5814 = vmatpush1.msra.mxu0 0.0
    %5815 = vmatprep.subr.mxu0 0.0
    %5816 = vmatpush1.msra.mxu0 0.0
    %5817 = vmatprep.subr.mxu0 0.0
    %5818 = vmatpush1.msra.mxu0 0.0
    %5819 = vmatprep.subr.mxu0 0.0
    %5820 = vmatpush1.msra.mxu0 0.0
    %5821 = vmatprep.subr.mxu0 0.0
    %5822 = vmatpush1.msra.mxu0 0.0
    %5823 = vmatprep.subr.mxu0 0.0
    %5824 = vmatpush1.msra.mxu0 0.0
    %5825 = vmatprep.subr.mxu0 0.0
    %5826 = vmatpush1.msra.mxu0 0.0
    %5827 = vmatprep.subr.mxu0 0.0
    %5828 = vmatpush1.msra.mxu0 0.0
    %5829 = vmatprep.subr.mxu0 0.0
    %5830 = vmatpush1.msra.mxu0 0.0
    %5831 = vmatprep.subr.mxu0 0.0
    %5832 = vmatpush1.msra.mxu0 0.0
    %5833 = vmatprep.subr.mxu0 0.0
    %5834 = vmatpush1.msra.mxu0 0.0
    %5835 = vmatprep.subr.mxu0 0.0
    %5836 = vmatpush1.msra.mxu0 0.0
    %5837 = vmatprep.subr.mxu0 0.0
    %5838 = vmatpush1.msra.mxu0 0.0
    %5839 = vmatprep.subr.mxu0 0.0
    %5840 = vmatpush1.msra.mxu0 0.0
    %5841 = vmatprep.subr.mxu0 0.0
    %5842 = vmatpush1.msra.mxu0 0.0
    %5843 = vmatprep.subr.mxu0 0.0
    %5844 = vmatpush1.msra.mxu0 0.0
    %5845 = vmatprep.subr.mxu0 0.0
    %5846 = vmatpush1.msra.mxu0 0.0
    %5847 = vmatprep.subr.mxu0 0.0
    %5848 = vmatpush1.msra.mxu0 0.0
    %5849 = vmatprep.subr.mxu0 0.0
    %5850 = vmatpush1.msra.mxu0 0.0
    %5851 = vmatprep.subr.mxu0 0.0
    %5852 = vmatpush1.msra.mxu0 0.0
    %5853 = vmatprep.subr.mxu0 0.0
    %5854 = vmatpush1.msra.mxu0 0.0
    %5855 = vmatprep.subr.mxu0 0.0
    %5856 = vmatpush1.msra.mxu0 0.0
    %5857 = vmatprep.subr.mxu0 0.0
    %5858 = vmatpush1.msra.mxu0 0.0
    %5859 = vmatprep.subr.mxu0 0.0
    %5860 = vmatpush1.msra.mxu0 0.0
    %5861 = vmatprep.subr.mxu0 0.0
    %5862 = vmatpush1.msra.mxu0 0.0
    %5863 = vmatprep.subr.mxu0 0.0
    %5864 = vmatpush1.msra.mxu0 0.0
    %5865 = vmatprep.subr.mxu0 0.0
    %5866 = vmatpush1.msra.mxu0 0.0
    %5867 = vmatprep.subr.mxu0 0.0
    %5868 = vmatpush1.msra.mxu0 0.0
    %5869 = vmatprep.subr.mxu0 0.0
    %5870 = vmatpush1.msra.mxu0 0.0
    %5871 = vmatprep.subr.mxu0 0.0
    %5872 = vmatpush1.msra.mxu0 0.0
    %5873 = vmatprep.mubr.f32.mxu0 0.0
    %5874 = vmatmul.mubr.f32.gmra.mrb[0].mxu0 %v592
    %v5875 = vpop.f32.mrb[0].mxu0
    %v5876 = vadd.f32 %v5709, %v5875
    %v5877 = vpop.f32.mrb[0].mxu0
    %v5878 = vadd.f32 %v5713, %v5877
    %5879 = vdwg.mxu0
    %5880 = vmatprep.subr.mxu0 %v5127
    %5881 = vmatpush1.msra.mxu0 %v5125
    %5882 = vmatprep.subr.mxu0 0.0
    %5883 = vmatpush1.msra.mxu0 0.0
    %5884 = vmatprep.subr.mxu0 0.0
    %5885 = vmatpush1.msra.mxu0 0.0
    %5886 = vmatprep.subr.mxu0 0.0
    %5887 = vmatpush1.msra.mxu0 0.0
    %5888 = vmatprep.subr.mxu0 0.0
    %5889 = vmatpush1.msra.mxu0 0.0
    %5890 = vmatprep.subr.mxu0 0.0
    %5891 = vmatpush1.msra.mxu0 0.0
    %5892 = vmatprep.subr.mxu0 0.0
    %5893 = vmatpush1.msra.mxu0 0.0
    %5894 = vmatprep.subr.mxu0 0.0
    %5895 = vmatpush1.msra.mxu0 0.0
    %5896 = vmatprep.subr.mxu0 0.0
    %5897 = vmatpush1.msra.mxu0 0.0
    %5898 = vmatprep.subr.mxu0 0.0
    %5899 = vmatpush1.msra.mxu0 0.0
    %5900 = vmatprep.subr.mxu0 0.0
    %5901 = vmatpush1.msra.mxu0 0.0
    %5902 = vmatprep.subr.mxu0 0.0
    %5903 = vmatpush1.msra.mxu0 0.0
    %5904 = vmatprep.subr.mxu0 0.0
    %5905 = vmatpush1.msra.mxu0 0.0
    %5906 = vmatprep.subr.mxu0 0.0
    %5907 = vmatpush1.msra.mxu0 0.0
    %5908 = vmatprep.subr.mxu0 0.0
    %5909 = vmatpush1.msra.mxu0 0.0
    %5910 = vmatprep.subr.mxu0 0.0
    %5911 = vmatpush1.msra.mxu0 0.0
    %5912 = vmatprep.subr.mxu0 0.0
    %5913 = vmatpush1.msra.mxu0 0.0
    %5914 = vmatprep.subr.mxu0 0.0
    %5915 = vmatpush1.msra.mxu0 0.0
    %5916 = vmatprep.subr.mxu0 0.0
    %5917 = vmatpush1.msra.mxu0 0.0
    %5918 = vmatprep.subr.mxu0 0.0
    %5919 = vmatpush1.msra.mxu0 0.0
    %5920 = vmatprep.subr.mxu0 0.0
    %5921 = vmatpush1.msra.mxu0 0.0
    %5922 = vmatprep.subr.mxu0 0.0
    %5923 = vmatpush1.msra.mxu0 0.0
    %5924 = vmatprep.subr.mxu0 0.0
    %5925 = vmatpush1.msra.mxu0 0.0
    %5926 = vmatprep.subr.mxu0 0.0
    %5927 = vmatpush1.msra.mxu0 0.0
    %5928 = vmatprep.subr.mxu0 0.0
    %5929 = vmatpush1.msra.mxu0 0.0
    %5930 = vmatprep.subr.mxu0 0.0
    %5931 = vmatpush1.msra.mxu0 0.0
    %5932 = vmatprep.subr.mxu0 0.0
    %5933 = vmatpush1.msra.mxu0 0.0
    %5934 = vmatprep.subr.mxu0 0.0
    %5935 = vmatpush1.msra.mxu0 0.0
    %5936 = vmatprep.subr.mxu0 0.0
    %5937 = vmatpush1.msra.mxu0 0.0
    %5938 = vmatprep.subr.mxu0 0.0
    %5939 = vmatpush1.msra.mxu0 0.0
    %5940 = vmatprep.subr.mxu0 0.0
    %5941 = vmatpush1.msra.mxu0 0.0
    %5942 = vmatprep.subr.mxu0 0.0
    %5943 = vmatpush1.msra.mxu0 0.0
    %5944 = vmatprep.mubr.f32.mxu0 0.0
    %5945 = vmatmul.mubr.f32.gmra.mrb[0].mxu0 %v592
    %v5946 = vpop.f32.mrb[0].mxu0
    %v5947 = vadd.f32 %v5717, %v5946
    %v5948 = vpop.f32.mrb[0].mxu0
    %v5949 = vadd.f32 %v5721, %v5948
    %5950 = vdwg.mxu0
    %5951 = vmatprep.subr.mxu0 %v5695
    %5952 = vmatpush1.msra.mxu0 %v5693
    %5953 = vmatprep.subr.mxu0 0.0
    %5954 = vmatpush1.msra.mxu0 0.0
    %5955 = vmatprep.subr.mxu0 0.0
    %5956 = vmatpush1.msra.mxu0 0.0
    %5957 = vmatprep.subr.mxu0 0.0
    %5958 = vmatpush1.msra.mxu0 0.0
    %5959 = vmatprep.subr.mxu0 0.0
    %5960 = vmatpush1.msra.mxu0 0.0
    %5961 = vmatprep.subr.mxu0 0.0
    %5962 = vmatpush1.msra.mxu0 0.0
    %5963 = vmatprep.subr.mxu0 0.0
    %5964 = vmatpush1.msra.mxu0 0.0
    %5965 = vmatprep.subr.mxu0 0.0
    %5966 = vmatpush1.msra.mxu0 0.0
    %5967 = vmatprep.subr.mxu0 0.0
    %5968 = vmatpush1.msra.mxu0 0.0
    %5969 = vmatprep.subr.mxu0 0.0
    %5970 = vmatpush1.msra.mxu0 0.0
    %5971 = vmatprep.subr.mxu0 0.0
    %5972 = vmatpush1.msra.mxu0 0.0
    %5973 = vmatprep.subr.mxu0 0.0
    %5974 = vmatpush1.msra.mxu0 0.0
    %5975 = vmatprep.subr.mxu0 0.0
    %5976 = vmatpush1.msra.mxu0 0.0
    %5977 = vmatprep.subr.mxu0 0.0
    %5978 = vmatpush1.msra.mxu0 0.0
    %5979 = vmatprep.subr.mxu0 0.0
    %5980 = vmatpush1.msra.mxu0 0.0
    %5981 = vmatprep.subr.mxu0 0.0
    %5982 = vmatpush1.msra.mxu0 0.0
    %5983 = vmatprep.subr.mxu0 0.0
    %5984 = vmatpush1.msra.mxu0 0.0
    %5985 = vmatprep.subr.mxu0 0.0
    %5986 = vmatpush1.msra.mxu0 0.0
    %5987 = vmatprep.subr.mxu0 0.0
    %5988 = vmatpush1.msra.mxu0 0.0
    %5989 = vmatprep.subr.mxu0 0.0
    %5990 = vmatpush1.msra.mxu0 0.0
    %5991 = vmatprep.subr.mxu0 0.0
    %5992 = vmatpush1.msra.mxu0 0.0
    %5993 = vmatprep.subr.mxu0 0.0
    %5994 = vmatpush1.msra.mxu0 0.0
    %5995 = vmatprep.subr.mxu0 0.0
    %5996 = vmatpush1.msra.mxu0 0.0
    %5997 = vmatprep.subr.mxu0 0.0
    %5998 = vmatpush1.msra.mxu0 0.0
    %5999 = vmatprep.subr.mxu0 0.0
    %6000 = vmatpush1.msra.mxu0 0.0
    %6001 = vmatprep.subr.mxu0 0.0
    %6002 = vmatpush1.msra.mxu0 0.0
    %6003 = vmatprep.subr.mxu0 0.0
    %6004 = vmatpush1.msra.mxu0 0.0
    %6005 = vmatprep.subr.mxu0 0.0
    %6006 = vmatpush1.msra.mxu0 0.0
    %6007 = vmatprep.subr.mxu0 0.0
    %6008 = vmatpush1.msra.mxu0 0.0
    %6009 = vmatprep.subr.mxu0 0.0
    %6010 = vmatpush1.msra.mxu0 0.0
    %6011 = vmatprep.subr.mxu0 0.0
    %6012 = vmatpush1.msra.mxu0 0.0
    %6013 = vmatprep.subr.mxu0 0.0
    %6014 = vmatpush1.msra.mxu0 0.0
    %6015 = vmatprep.mubr.f32.mxu0 0.0
    %6016 = vmatmul.mubr.f32.gmra.mrb[0].mxu0 %v592
    %v6017 = vpop.f32.mrb[0].mxu0
    %v6018 = vadd.f32 %v5725, %v6017
    %v6019 = vpop.f32.mrb[0].mxu0
    %v6020 = vadd.f32 %v5729, %v6019
    %6021 = vdwg.mxu0
    %v6022 = vmax.f32 %v5805, 0.0
    %v6023 = vmax.f32 %v5807, 0.0
    %v6024 = vmax.f32 %v5876, 0.0
    %v6025 = vmax.f32 %v5878, 0.0
    %v6026 = vmax.f32 %v5947, 0.0
    %v6027 = vmax.f32 %v5949, 0.0
    %v6028 = vmax.f32 %v6018, 0.0
    %v6029 = vmax.f32 %v6020, 0.0
    %s6030 = smul.u32 8, 128
    %s6031 = smul.u32 %s6030, 4
    %s6032 = sshll.u32 %s6031, 4
    %6033 = dma.done %s165, %s6032
    %v6034 = vld [vmem:[#allocation4] sm:$0xff]
    %v6035 = vld [vmem:[#allocation4 + $0x8] sm:$0xff]
    %v6036 = vld [vmem:[#allocation4 + $0x10] sm:$0xff]
    %v6037 = vld [vmem:[#allocation4 + $0x18] sm:$0xff]
    %v6038 = vld [vmem:[#allocation4 + $0x20] sm:$0xff]
    %v6039 = vld [vmem:[#allocation4 + $0x28] sm:$0xff]
    %v6040 = vld [vmem:[#allocation4 + $0x30] sm:$0xff]
    %v6041 = vld [vmem:[#allocation4 + $0x38] sm:$0xff]
    %v6042 = vld [vmem:[#allocation4 + $0x40] sm:$0xff]
    %v6043 = vld [vmem:[#allocation4 + $0x48] sm:$0xff]
    %v6044 = vld [vmem:[#allocation4 + $0x50] sm:$0xff]
    %v6045 = vld [vmem:[#allocation4 + $0x58] sm:$0xff]
    %v6046 = vld [vmem:[#allocation4 + $0x60] sm:$0xff]
    %v6047 = vld [vmem:[#allocation4 + $0x68] sm:$0xff]
    %v6048 = vld [vmem:[#allocation4 + $0x70] sm:$0xff]
    %v6049 = vld [vmem:[#allocation4 + $0x78] sm:$0xff]
    %v6050 = vld [vmem:[#allocation4 + $0x80] sm:$0xff]
    %v6051 = vld [vmem:[#allocation4 + $0x88] sm:$0xff]
    %v6052 = vld [vmem:[#allocation4 + $0x90] sm:$0xff]
    %v6053 = vld [vmem:[#allocation4 + $0x98] sm:$0xff]
    %v6054 = vld [vmem:[#allocation4 + $0xa0] sm:$0xff]
    %v6055 = vld [vmem:[#allocation4 + $0xa8] sm:$0xff]
    %v6056 = vld [vmem:[#allocation4 + $0xb0] sm:$0xff]
    %v6057 = vld [vmem:[#allocation4 + $0xb8] sm:$0xff]
    %v6058 = vld [vmem:[#allocation4 + $0xc0] sm:$0xff]
    %v6059 = vld [vmem:[#allocation4 + $0xc8] sm:$0xff]
    %v6060 = vld [vmem:[#allocation4 + $0xd0] sm:$0xff]
    %v6061 = vld [vmem:[#allocation4 + $0xd8] sm:$0xff]
    %v6062 = vld [vmem:[#allocation4 + $0xe0] sm:$0xff]
    %v6063 = vld [vmem:[#allocation4 + $0xe8] sm:$0xff]
    %v6064 = vld [vmem:[#allocation4 + $0xf0] sm:$0xff]
    %v6065 = vld [vmem:[#allocation4 + $0xf8] sm:$0xff]
    %v6066 = vld [vmem:[#allocation4 + $0x100] sm:$0xff]
    %v6067 = vld [vmem:[#allocation4 + $0x108] sm:$0xff]
    %v6068 = vld [vmem:[#allocation4 + $0x110] sm:$0xff]
    %v6069 = vld [vmem:[#allocation4 + $0x118] sm:$0xff]
    %v6070 = vld [vmem:[#allocation4 + $0x120] sm:$0xff]
    %v6071 = vld [vmem:[#allocation4 + $0x128] sm:$0xff]
    %v6072 = vld [vmem:[#allocation4 + $0x130] sm:$0xff]
    %v6073 = vld [vmem:[#allocation4 + $0x138] sm:$0xff]
    %v6074 = vld [vmem:[#allocation4 + $0x140] sm:$0xff]
    %v6075 = vld [vmem:[#allocation4 + $0x148] sm:$0xff]
    %v6076 = vld [vmem:[#allocation4 + $0x150] sm:$0xff]
    %v6077 = vld [vmem:[#allocation4 + $0x158] sm:$0xff]
    %v6078 = vld [vmem:[#allocation4 + $0x160] sm:$0xff]
    %v6079 = vld [vmem:[#allocation4 + $0x168] sm:$0xff]
    %v6080 = vld [vmem:[#allocation4 + $0x170] sm:$0xff]
    %v6081 = vld [vmem:[#allocation4 + $0x178] sm:$0xff]
    %v6082 = vld [vmem:[#allocation4 + $0x180] sm:$0xff]
    %v6083 = vld [vmem:[#allocation4 + $0x188] sm:$0xff]
    %v6084 = vld [vmem:[#allocation4 + $0x190] sm:$0xff]
    %v6085 = vld [vmem:[#allocation4 + $0x198] sm:$0xff]
    %v6086 = vld [vmem:[#allocation4 + $0x1a0] sm:$0xff]
    %v6087 = vld [vmem:[#allocation4 + $0x1a8] sm:$0xff]
    %v6088 = vld [vmem:[#allocation4 + $0x1b0] sm:$0xff]
    %v6089 = vld [vmem:[#allocation4 + $0x1b8] sm:$0xff]
    %v6090 = vld [vmem:[#allocation4 + $0x1c0] sm:$0xff]
    %v6091 = vld [vmem:[#allocation4 + $0x1c8] sm:$0xff]
    %v6092 = vld [vmem:[#allocation4 + $0x1d0] sm:$0xff]
    %v6093 = vld [vmem:[#allocation4 + $0x1d8] sm:$0xff]
    %v6094 = vld [vmem:[#allocation4 + $0x1e0] sm:$0xff]
    %v6095 = vld [vmem:[#allocation4 + $0x1e8] sm:$0xff]
    %v6096 = vld [vmem:[#allocation4 + $0x1f0] sm:$0xff]
    %v6097 = vld [vmem:[#allocation4 + $0x1f8] sm:$0xff]
    %v6098 = vld [vmem:[#allocation4 + $0x200] sm:$0xff]
    %v6099 = vld [vmem:[#allocation4 + $0x208] sm:$0xff]
    %v6100 = vld [vmem:[#allocation4 + $0x210] sm:$0xff]
    %v6101 = vld [vmem:[#allocation4 + $0x218] sm:$0xff]
    %v6102 = vld [vmem:[#allocation4 + $0x220] sm:$0xff]
    %v6103 = vld [vmem:[#allocation4 + $0x228] sm:$0xff]
    %v6104 = vld [vmem:[#allocation4 + $0x230] sm:$0xff]
    %v6105 = vld [vmem:[#allocation4 + $0x238] sm:$0xff]
    %v6106 = vld [vmem:[#allocation4 + $0x240] sm:$0xff]
    %v6107 = vld [vmem:[#allocation4 + $0x248] sm:$0xff]
    %v6108 = vld [vmem:[#allocation4 + $0x250] sm:$0xff]
    %v6109 = vld [vmem:[#allocation4 + $0x258] sm:$0xff]
    %v6110 = vld [vmem:[#allocation4 + $0x260] sm:$0xff]
    %v6111 = vld [vmem:[#allocation4 + $0x268] sm:$0xff]
    %v6112 = vld [vmem:[#allocation4 + $0x270] sm:$0xff]
    %v6113 = vld [vmem:[#allocation4 + $0x278] sm:$0xff]
    %v6114 = vld [vmem:[#allocation4 + $0x280] sm:$0xff]
    %v6115 = vld [vmem:[#allocation4 + $0x288] sm:$0xff]
    %v6116 = vld [vmem:[#allocation4 + $0x290] sm:$0xff]
    %v6117 = vld [vmem:[#allocation4 + $0x298] sm:$0xff]
    %v6118 = vld [vmem:[#allocation4 + $0x2a0] sm:$0xff]
    %v6119 = vld [vmem:[#allocation4 + $0x2a8] sm:$0xff]
    %v6120 = vld [vmem:[#allocation4 + $0x2b0] sm:$0xff]
    %v6121 = vld [vmem:[#allocation4 + $0x2b8] sm:$0xff]
    %v6122 = vld [vmem:[#allocation4 + $0x2c0] sm:$0xff]
    %v6123 = vld [vmem:[#allocation4 + $0x2c8] sm:$0xff]
    %v6124 = vld [vmem:[#allocation4 + $0x2d0] sm:$0xff]
    %v6125 = vld [vmem:[#allocation4 + $0x2d8] sm:$0xff]
    %v6126 = vld [vmem:[#allocation4 + $0x2e0] sm:$0xff]
    %v6127 = vld [vmem:[#allocation4 + $0x2e8] sm:$0xff]
    %v6128 = vld [vmem:[#allocation4 + $0x2f0] sm:$0xff]
    %v6129 = vld [vmem:[#allocation4 + $0x2f8] sm:$0xff]
    %v6130 = vld [vmem:[#allocation4 + $0x300] sm:$0xff]
    %v6131 = vld [vmem:[#allocation4 + $0x308] sm:$0xff]
    %v6132 = vld [vmem:[#allocation4 + $0x310] sm:$0xff]
    %v6133 = vld [vmem:[#allocation4 + $0x318] sm:$0xff]
    %v6134 = vld [vmem:[#allocation4 + $0x320] sm:$0xff]
    %v6135 = vld [vmem:[#allocation4 + $0x328] sm:$0xff]
    %v6136 = vld [vmem:[#allocation4 + $0x330] sm:$0xff]
    %v6137 = vld [vmem:[#allocation4 + $0x338] sm:$0xff]
    %v6138 = vld [vmem:[#allocation4 + $0x340] sm:$0xff]
    %v6139 = vld [vmem:[#allocation4 + $0x348] sm:$0xff]
    %v6140 = vld [vmem:[#allocation4 + $0x350] sm:$0xff]
    %v6141 = vld [vmem:[#allocation4 + $0x358] sm:$0xff]
    %v6142 = vld [vmem:[#allocation4 + $0x360] sm:$0xff]
    %v6143 = vld [vmem:[#allocation4 + $0x368] sm:$0xff]
    %v6144 = vld [vmem:[#allocation4 + $0x370] sm:$0xff]
    %v6145 = vld [vmem:[#allocation4 + $0x378] sm:$0xff]
    %v6146 = vld [vmem:[#allocation4 + $0x380] sm:$0xff]
    %v6147 = vld [vmem:[#allocation4 + $0x388] sm:$0xff]
    %v6148 = vld [vmem:[#allocation4 + $0x390] sm:$0xff]
    %v6149 = vld [vmem:[#allocation4 + $0x398] sm:$0xff]
    %v6150 = vld [vmem:[#allocation4 + $0x3a0] sm:$0xff]
    %v6151 = vld [vmem:[#allocation4 + $0x3a8] sm:$0xff]
    %v6152 = vld [vmem:[#allocation4 + $0x3b0] sm:$0xff]
    %v6153 = vld [vmem:[#allocation4 + $0x3b8] sm:$0xff]
    %v6154 = vld [vmem:[#allocation4 + $0x3c0] sm:$0xff]
    %v6155 = vld [vmem:[#allocation4 + $0x3c8] sm:$0xff]
    %v6156 = vld [vmem:[#allocation4 + $0x3d0] sm:$0xff]
    %v6157 = vld [vmem:[#allocation4 + $0x3d8] sm:$0xff]
    %v6158 = vld [vmem:[#allocation4 + $0x3e0] sm:$0xff]
    %v6159 = vld [vmem:[#allocation4 + $0x3e8] sm:$0xff]
    %v6160 = vld [vmem:[#allocation4 + $0x3f0] sm:$0xff]
    %v6161 = vld [vmem:[#allocation4 + $0x3f8] sm:$0xff]
    %v6162 = vld [vmem:[#allocation4 + $0x400] sm:$0xff]
    %v6163 = vld [vmem:[#allocation4 + $0x408] sm:$0xff]
    %v6164 = vld [vmem:[#allocation4 + $0x410] sm:$0xff]
    %v6165 = vld [vmem:[#allocation4 + $0x418] sm:$0xff]
    %v6166 = vld [vmem:[#allocation4 + $0x420] sm:$0xff]
    %v6167 = vld [vmem:[#allocation4 + $0x428] sm:$0xff]
    %v6168 = vld [vmem:[#allocation4 + $0x430] sm:$0xff]
    %v6169 = vld [vmem:[#allocation4 + $0x438] sm:$0xff]
    %v6170 = vld [vmem:[#allocation4 + $0x440] sm:$0xff]
    %v6171 = vld [vmem:[#allocation4 + $0x448] sm:$0xff]
    %v6172 = vld [vmem:[#allocation4 + $0x450] sm:$0xff]
    %v6173 = vld [vmem:[#allocation4 + $0x458] sm:$0xff]
    %v6174 = vld [vmem:[#allocation4 + $0x460] sm:$0xff]
    %v6175 = vld [vmem:[#allocation4 + $0x468] sm:$0xff]
    %v6176 = vld [vmem:[#allocation4 + $0x470] sm:$0xff]
    %v6177 = vld [vmem:[#allocation4 + $0x478] sm:$0xff]
    %v6178 = vld [vmem:[#allocation4 + $0x480] sm:$0xff]
    %v6179 = vld [vmem:[#allocation4 + $0x488] sm:$0xff]
    %v6180 = vld [vmem:[#allocation4 + $0x490] sm:$0xff]
    %v6181 = vld [vmem:[#allocation4 + $0x498] sm:$0xff]
    %v6182 = vld [vmem:[#allocation4 + $0x4a0] sm:$0xff]
    %v6183 = vld [vmem:[#allocation4 + $0x4a8] sm:$0xff]
    %v6184 = vld [vmem:[#allocation4 + $0x4b0] sm:$0xff]
    %v6185 = vld [vmem:[#allocation4 + $0x4b8] sm:$0xff]
    %v6186 = vld [vmem:[#allocation4 + $0x4c0] sm:$0xff]
    %v6187 = vld [vmem:[#allocation4 + $0x4c8] sm:$0xff]
    %v6188 = vld [vmem:[#allocation4 + $0x4d0] sm:$0xff]
    %v6189 = vld [vmem:[#allocation4 + $0x4d8] sm:$0xff]
    %v6190 = vld [vmem:[#allocation4 + $0x4e0] sm:$0xff]
    %v6191 = vld [vmem:[#allocation4 + $0x4e8] sm:$0xff]
    %v6192 = vld [vmem:[#allocation4 + $0x4f0] sm:$0xff]
    %v6193 = vld [vmem:[#allocation4 + $0x4f8] sm:$0xff]
    %v6194 = vld [vmem:[#allocation4 + $0x500] sm:$0xff]
    %v6195 = vld [vmem:[#allocation4 + $0x508] sm:$0xff]
    %v6196 = vld [vmem:[#allocation4 + $0x510] sm:$0xff]
    %v6197 = vld [vmem:[#allocation4 + $0x518] sm:$0xff]
    %v6198 = vld [vmem:[#allocation4 + $0x520] sm:$0xff]
    %v6199 = vld [vmem:[#allocation4 + $0x528] sm:$0xff]
    %v6200 = vld [vmem:[#allocation4 + $0x530] sm:$0xff]
    %v6201 = vld [vmem:[#allocation4 + $0x538] sm:$0xff]
    %v6202 = vld [vmem:[#allocation4 + $0x540] sm:$0xff]
    %v6203 = vld [vmem:[#allocation4 + $0x548] sm:$0xff]
    %v6204 = vld [vmem:[#allocation4 + $0x550] sm:$0xff]
    %v6205 = vld [vmem:[#allocation4 + $0x558] sm:$0xff]
    %v6206 = vld [vmem:[#allocation4 + $0x560] sm:$0xff]
    %v6207 = vld [vmem:[#allocation4 + $0x568] sm:$0xff]
    %v6208 = vld [vmem:[#allocation4 + $0x570] sm:$0xff]
    %v6209 = vld [vmem:[#allocation4 + $0x578] sm:$0xff]
    %v6210 = vld [vmem:[#allocation4 + $0x580] sm:$0xff]
    %v6211 = vld [vmem:[#allocation4 + $0x588] sm:$0xff]
    %v6212 = vld [vmem:[#allocation4 + $0x590] sm:$0xff]
    %v6213 = vld [vmem:[#allocation4 + $0x598] sm:$0xff]
    %v6214 = vld [vmem:[#allocation4 + $0x5a0] sm:$0xff]
    %v6215 = vld [vmem:[#allocation4 + $0x5a8] sm:$0xff]
    %v6216 = vld [vmem:[#allocation4 + $0x5b0] sm:$0xff]
    %v6217 = vld [vmem:[#allocation4 + $0x5b8] sm:$0xff]
    %v6218 = vld [vmem:[#allocation4 + $0x5c0] sm:$0xff]
    %v6219 = vld [vmem:[#allocation4 + $0x5c8] sm:$0xff]
    %v6220 = vld [vmem:[#allocation4 + $0x5d0] sm:$0xff]
    %v6221 = vld [vmem:[#allocation4 + $0x5d8] sm:$0xff]
    %v6222 = vld [vmem:[#allocation4 + $0x5e0] sm:$0xff]
    %v6223 = vld [vmem:[#allocation4 + $0x5e8] sm:$0xff]
    %v6224 = vld [vmem:[#allocation4 + $0x5f0] sm:$0xff]
    %v6225 = vld [vmem:[#allocation4 + $0x5f8] sm:$0xff]
    %v6226 = vld [vmem:[#allocation4 + $0x600] sm:$0xff]
    %v6227 = vld [vmem:[#allocation4 + $0x608] sm:$0xff]
    %v6228 = vld [vmem:[#allocation4 + $0x610] sm:$0xff]
    %v6229 = vld [vmem:[#allocation4 + $0x618] sm:$0xff]
    %v6230 = vld [vmem:[#allocation4 + $0x620] sm:$0xff]
    %v6231 = vld [vmem:[#allocation4 + $0x628] sm:$0xff]
    %v6232 = vld [vmem:[#allocation4 + $0x630] sm:$0xff]
    %v6233 = vld [vmem:[#allocation4 + $0x638] sm:$0xff]
    %v6234 = vld [vmem:[#allocation4 + $0x640] sm:$0xff]
    %v6235 = vld [vmem:[#allocation4 + $0x648] sm:$0xff]
    %v6236 = vld [vmem:[#allocation4 + $0x650] sm:$0xff]
    %v6237 = vld [vmem:[#allocation4 + $0x658] sm:$0xff]
    %v6238 = vld [vmem:[#allocation4 + $0x660] sm:$0xff]
    %v6239 = vld [vmem:[#allocation4 + $0x668] sm:$0xff]
    %v6240 = vld [vmem:[#allocation4 + $0x670] sm:$0xff]
    %v6241 = vld [vmem:[#allocation4 + $0x678] sm:$0xff]
    %v6242 = vld [vmem:[#allocation4 + $0x680] sm:$0xff]
    %v6243 = vld [vmem:[#allocation4 + $0x688] sm:$0xff]
    %v6244 = vld [vmem:[#allocation4 + $0x690] sm:$0xff]
    %v6245 = vld [vmem:[#allocation4 + $0x698] sm:$0xff]
    %v6246 = vld [vmem:[#allocation4 + $0x6a0] sm:$0xff]
    %v6247 = vld [vmem:[#allocation4 + $0x6a8] sm:$0xff]
    %v6248 = vld [vmem:[#allocation4 + $0x6b0] sm:$0xff]
    %v6249 = vld [vmem:[#allocation4 + $0x6b8] sm:$0xff]
    %v6250 = vld [vmem:[#allocation4 + $0x6c0] sm:$0xff]
    %v6251 = vld [vmem:[#allocation4 + $0x6c8] sm:$0xff]
    %v6252 = vld [vmem:[#allocation4 + $0x6d0] sm:$0xff]
    %v6253 = vld [vmem:[#allocation4 + $0x6d8] sm:$0xff]
    %v6254 = vld [vmem:[#allocation4 + $0x6e0] sm:$0xff]
    %v6255 = vld [vmem:[#allocation4 + $0x6e8] sm:$0xff]
    %v6256 = vld [vmem:[#allocation4 + $0x6f0] sm:$0xff]
    %v6257 = vld [vmem:[#allocation4 + $0x6f8] sm:$0xff]
    %v6258 = vld [vmem:[#allocation4 + $0x700] sm:$0xff]
    %v6259 = vld [vmem:[#allocation4 + $0x708] sm:$0xff]
    %v6260 = vld [vmem:[#allocation4 + $0x710] sm:$0xff]
    %v6261 = vld [vmem:[#allocation4 + $0x718] sm:$0xff]
    %v6262 = vld [vmem:[#allocation4 + $0x720] sm:$0xff]
    %v6263 = vld [vmem:[#allocation4 + $0x728] sm:$0xff]
    %v6264 = vld [vmem:[#allocation4 + $0x730] sm:$0xff]
    %v6265 = vld [vmem:[#allocation4 + $0x738] sm:$0xff]
    %v6266 = vld [vmem:[#allocation4 + $0x740] sm:$0xff]
    %v6267 = vld [vmem:[#allocation4 + $0x748] sm:$0xff]
    %v6268 = vld [vmem:[#allocation4 + $0x750] sm:$0xff]
    %v6269 = vld [vmem:[#allocation4 + $0x758] sm:$0xff]
    %v6270 = vld [vmem:[#allocation4 + $0x760] sm:$0xff]
    %v6271 = vld [vmem:[#allocation4 + $0x768] sm:$0xff]
    %v6272 = vld [vmem:[#allocation4 + $0x770] sm:$0xff]
    %v6273 = vld [vmem:[#allocation4 + $0x778] sm:$0xff]
    %v6274 = vld [vmem:[#allocation4 + $0x780] sm:$0xff]
    %v6275 = vld [vmem:[#allocation4 + $0x788] sm:$0xff]
    %v6276 = vld [vmem:[#allocation4 + $0x790] sm:$0xff]
    %v6277 = vld [vmem:[#allocation4 + $0x798] sm:$0xff]
    %v6278 = vld [vmem:[#allocation4 + $0x7a0] sm:$0xff]
    %v6279 = vld [vmem:[#allocation4 + $0x7a8] sm:$0xff]
    %v6280 = vld [vmem:[#allocation4 + $0x7b0] sm:$0xff]
    %v6281 = vld [vmem:[#allocation4 + $0x7b8] sm:$0xff]
    %v6282 = vld [vmem:[#allocation4 + $0x7c0] sm:$0xff]
    %v6283 = vld [vmem:[#allocation4 + $0x7c8] sm:$0xff]
    %v6284 = vld [vmem:[#allocation4 + $0x7d0] sm:$0xff]
    %v6285 = vld [vmem:[#allocation4 + $0x7d8] sm:$0xff]
    %v6286 = vld [vmem:[#allocation4 + $0x7e0] sm:$0xff]
    %v6287 = vld [vmem:[#allocation4 + $0x7e8] sm:$0xff]
    %v6288 = vld [vmem:[#allocation4 + $0x7f0] sm:$0xff]
    %v6289 = vld [vmem:[#allocation4 + $0x7f8] sm:$0xff]
    %v6290 = vld [vmem:[#allocation4 + $0x800] sm:$0xff]
    %v6291 = vld [vmem:[#allocation4 + $0x808] sm:$0xff]
    %v6292 = vld [vmem:[#allocation4 + $0x810] sm:$0xff]
    %v6293 = vld [vmem:[#allocation4 + $0x818] sm:$0xff]
    %v6294 = vld [vmem:[#allocation4 + $0x820] sm:$0xff]
    %v6295 = vld [vmem:[#allocation4 + $0x828] sm:$0xff]
    %v6296 = vld [vmem:[#allocation4 + $0x830] sm:$0xff]
    %v6297 = vld [vmem:[#allocation4 + $0x838] sm:$0xff]
    %v6298 = vld [vmem:[#allocation4 + $0x840] sm:$0xff]
    %v6299 = vld [vmem:[#allocation4 + $0x848] sm:$0xff]
    %v6300 = vld [vmem:[#allocation4 + $0x850] sm:$0xff]
    %v6301 = vld [vmem:[#allocation4 + $0x858] sm:$0xff]
    %v6302 = vld [vmem:[#allocation4 + $0x860] sm:$0xff]
    %v6303 = vld [vmem:[#allocation4 + $0x868] sm:$0xff]
    %v6304 = vld [vmem:[#allocation4 + $0x870] sm:$0xff]
    %v6305 = vld [vmem:[#allocation4 + $0x878] sm:$0xff]
    %v6306 = vld [vmem:[#allocation4 + $0x880] sm:$0xff]
    %v6307 = vld [vmem:[#allocation4 + $0x888] sm:$0xff]
    %v6308 = vld [vmem:[#allocation4 + $0x890] sm:$0xff]
    %v6309 = vld [vmem:[#allocation4 + $0x898] sm:$0xff]
    %v6310 = vld [vmem:[#allocation4 + $0x8a0] sm:$0xff]
    %v6311 = vld [vmem:[#allocation4 + $0x8a8] sm:$0xff]
    %v6312 = vld [vmem:[#allocation4 + $0x8b0] sm:$0xff]
    %v6313 = vld [vmem:[#allocation4 + $0x8b8] sm:$0xff]
    %v6314 = vld [vmem:[#allocation4 + $0x8c0] sm:$0xff]
    %v6315 = vld [vmem:[#allocation4 + $0x8c8] sm:$0xff]
    %v6316 = vld [vmem:[#allocation4 + $0x8d0] sm:$0xff]
    %v6317 = vld [vmem:[#allocation4 + $0x8d8] sm:$0xff]
    %v6318 = vld [vmem:[#allocation4 + $0x8e0] sm:$0xff]
    %v6319 = vld [vmem:[#allocation4 + $0x8e8] sm:$0xff]
    %v6320 = vld [vmem:[#allocation4 + $0x8f0] sm:$0xff]
    %v6321 = vld [vmem:[#allocation4 + $0x8f8] sm:$0xff]
    %v6322 = vld [vmem:[#allocation4 + $0x900] sm:$0xff]
    %v6323 = vld [vmem:[#allocation4 + $0x908] sm:$0xff]
    %v6324 = vld [vmem:[#allocation4 + $0x910] sm:$0xff]
    %v6325 = vld [vmem:[#allocation4 + $0x918] sm:$0xff]
    %v6326 = vld [vmem:[#allocation4 + $0x920] sm:$0xff]
    %v6327 = vld [vmem:[#allocation4 + $0x928] sm:$0xff]
    %v6328 = vld [vmem:[#allocation4 + $0x930] sm:$0xff]
    %v6329 = vld [vmem:[#allocation4 + $0x938] sm:$0xff]
    %v6330 = vld [vmem:[#allocation4 + $0x940] sm:$0xff]
    %v6331 = vld [vmem:[#allocation4 + $0x948] sm:$0xff]
    %v6332 = vld [vmem:[#allocation4 + $0x950] sm:$0xff]
    %v6333 = vld [vmem:[#allocation4 + $0x958] sm:$0xff]
    %v6334 = vld [vmem:[#allocation4 + $0x960] sm:$0xff]
    %v6335 = vld [vmem:[#allocation4 + $0x968] sm:$0xff]
    %v6336 = vld [vmem:[#allocation4 + $0x970] sm:$0xff]
    %v6337 = vld [vmem:[#allocation4 + $0x978] sm:$0xff]
    %v6338 = vld [vmem:[#allocation4 + $0x980] sm:$0xff]
    %v6339 = vld [vmem:[#allocation4 + $0x988] sm:$0xff]
    %v6340 = vld [vmem:[#allocation4 + $0x990] sm:$0xff]
    %v6341 = vld [vmem:[#allocation4 + $0x998] sm:$0xff]
    %v6342 = vld [vmem:[#allocation4 + $0x9a0] sm:$0xff]
    %v6343 = vld [vmem:[#allocation4 + $0x9a8] sm:$0xff]
    %v6344 = vld [vmem:[#allocation4 + $0x9b0] sm:$0xff]
    %v6345 = vld [vmem:[#allocation4 + $0x9b8] sm:$0xff]
    %v6346 = vld [vmem:[#allocation4 + $0x9c0] sm:$0xff]
    %v6347 = vld [vmem:[#allocation4 + $0x9c8] sm:$0xff]
    %v6348 = vld [vmem:[#allocation4 + $0x9d0] sm:$0xff]
    %v6349 = vld [vmem:[#allocation4 + $0x9d8] sm:$0xff]
    %v6350 = vld [vmem:[#allocation4 + $0x9e0] sm:$0xff]
    %v6351 = vld [vmem:[#allocation4 + $0x9e8] sm:$0xff]
    %v6352 = vld [vmem:[#allocation4 + $0x9f0] sm:$0xff]
    %v6353 = vld [vmem:[#allocation4 + $0x9f8] sm:$0xff]
    %v6354 = vld [vmem:[#allocation4 + $0xa00] sm:$0xff]
    %v6355 = vld [vmem:[#allocation4 + $0xa08] sm:$0xff]
    %v6356 = vld [vmem:[#allocation4 + $0xa10] sm:$0xff]
    %v6357 = vld [vmem:[#allocation4 + $0xa18] sm:$0xff]
    %v6358 = vld [vmem:[#allocation4 + $0xa20] sm:$0xff]
    %v6359 = vld [vmem:[#allocation4 + $0xa28] sm:$0xff]
    %v6360 = vld [vmem:[#allocation4 + $0xa30] sm:$0xff]
    %v6361 = vld [vmem:[#allocation4 + $0xa38] sm:$0xff]
    %v6362 = vld [vmem:[#allocation4 + $0xa40] sm:$0xff]
    %v6363 = vld [vmem:[#allocation4 + $0xa48] sm:$0xff]
    %v6364 = vld [vmem:[#allocation4 + $0xa50] sm:$0xff]
    %v6365 = vld [vmem:[#allocation4 + $0xa58] sm:$0xff]
    %v6366 = vld [vmem:[#allocation4 + $0xa60] sm:$0xff]
    %v6367 = vld [vmem:[#allocation4 + $0xa68] sm:$0xff]
    %v6368 = vld [vmem:[#allocation4 + $0xa70] sm:$0xff]
    %v6369 = vld [vmem:[#allocation4 + $0xa78] sm:$0xff]
    %v6370 = vld [vmem:[#allocation4 + $0xa80] sm:$0xff]
    %v6371 = vld [vmem:[#allocation4 + $0xa88] sm:$0xff]
    %v6372 = vld [vmem:[#allocation4 + $0xa90] sm:$0xff]
    %v6373 = vld [vmem:[#allocation4 + $0xa98] sm:$0xff]
    %v6374 = vld [vmem:[#allocation4 + $0xaa0] sm:$0xff]
    %v6375 = vld [vmem:[#allocation4 + $0xaa8] sm:$0xff]
    %v6376 = vld [vmem:[#allocation4 + $0xab0] sm:$0xff]
    %v6377 = vld [vmem:[#allocation4 + $0xab8] sm:$0xff]
    %v6378 = vld [vmem:[#allocation4 + $0xac0] sm:$0xff]
    %v6379 = vld [vmem:[#allocation4 + $0xac8] sm:$0xff]
    %v6380 = vld [vmem:[#allocation4 + $0xad0] sm:$0xff]
    %v6381 = vld [vmem:[#allocation4 + $0xad8] sm:$0xff]
    %v6382 = vld [vmem:[#allocation4 + $0xae0] sm:$0xff]
    %v6383 = vld [vmem:[#allocation4 + $0xae8] sm:$0xff]
    %v6384 = vld [vmem:[#allocation4 + $0xaf0] sm:$0xff]
    %v6385 = vld [vmem:[#allocation4 + $0xaf8] sm:$0xff]
    %v6386 = vld [vmem:[#allocation4 + $0xb00] sm:$0xff]
    %v6387 = vld [vmem:[#allocation4 + $0xb08] sm:$0xff]
    %v6388 = vld [vmem:[#allocation4 + $0xb10] sm:$0xff]
    %v6389 = vld [vmem:[#allocation4 + $0xb18] sm:$0xff]
    %v6390 = vld [vmem:[#allocation4 + $0xb20] sm:$0xff]
    %v6391 = vld [vmem:[#allocation4 + $0xb28] sm:$0xff]
    %v6392 = vld [vmem:[#allocation4 + $0xb30] sm:$0xff]
    %v6393 = vld [vmem:[#allocation4 + $0xb38] sm:$0xff]
    %v6394 = vld [vmem:[#allocation4 + $0xb40] sm:$0xff]
    %v6395 = vld [vmem:[#allocation4 + $0xb48] sm:$0xff]
    %v6396 = vld [vmem:[#allocation4 + $0xb50] sm:$0xff]
    %v6397 = vld [vmem:[#allocation4 + $0xb58] sm:$0xff]
    %v6398 = vld [vmem:[#allocation4 + $0xb60] sm:$0xff]
    %v6399 = vld [vmem:[#allocation4 + $0xb68] sm:$0xff]
    %v6400 = vld [vmem:[#allocation4 + $0xb70] sm:$0xff]
    %v6401 = vld [vmem:[#allocation4 + $0xb78] sm:$0xff]
    %v6402 = vld [vmem:[#allocation4 + $0xb80] sm:$0xff]
    %v6403 = vld [vmem:[#allocation4 + $0xb88] sm:$0xff]
    %v6404 = vld [vmem:[#allocation4 + $0xb90] sm:$0xff]
    %v6405 = vld [vmem:[#allocation4 + $0xb98] sm:$0xff]
    %v6406 = vld [vmem:[#allocation4 + $0xba0] sm:$0xff]
    %v6407 = vld [vmem:[#allocation4 + $0xba8] sm:$0xff]
    %v6408 = vld [vmem:[#allocation4 + $0xbb0] sm:$0xff]
    %v6409 = vld [vmem:[#allocation4 + $0xbb8] sm:$0xff]
    %v6410 = vld [vmem:[#allocation4 + $0xbc0] sm:$0xff]
    %v6411 = vld [vmem:[#allocation4 + $0xbc8] sm:$0xff]
    %v6412 = vld [vmem:[#allocation4 + $0xbd0] sm:$0xff]
    %v6413 = vld [vmem:[#allocation4 + $0xbd8] sm:$0xff]
    %v6414 = vld [vmem:[#allocation4 + $0xbe0] sm:$0xff]
    %v6415 = vld [vmem:[#allocation4 + $0xbe8] sm:$0xff]
    %v6416 = vld [vmem:[#allocation4 + $0xbf0] sm:$0xff]
    %v6417 = vld [vmem:[#allocation4 + $0xbf8] sm:$0xff]
    %v6418 = vld [vmem:[#allocation4 + $0xc00] sm:$0xff]
    %v6419 = vld [vmem:[#allocation4 + $0xc08] sm:$0xff]
    %v6420 = vld [vmem:[#allocation4 + $0xc10] sm:$0xff]
    %v6421 = vld [vmem:[#allocation4 + $0xc18] sm:$0xff]
    %v6422 = vld [vmem:[#allocation4 + $0xc20] sm:$0xff]
    %v6423 = vld [vmem:[#allocation4 + $0xc28] sm:$0xff]
    %v6424 = vld [vmem:[#allocation4 + $0xc30] sm:$0xff]
    %v6425 = vld [vmem:[#allocation4 + $0xc38] sm:$0xff]
    %v6426 = vld [vmem:[#allocation4 + $0xc40] sm:$0xff]
    %v6427 = vld [vmem:[#allocation4 + $0xc48] sm:$0xff]
    %v6428 = vld [vmem:[#allocation4 + $0xc50] sm:$0xff]
    %v6429 = vld [vmem:[#allocation4 + $0xc58] sm:$0xff]
    %v6430 = vld [vmem:[#allocation4 + $0xc60] sm:$0xff]
    %v6431 = vld [vmem:[#allocation4 + $0xc68] sm:$0xff]
    %v6432 = vld [vmem:[#allocation4 + $0xc70] sm:$0xff]
    %v6433 = vld [vmem:[#allocation4 + $0xc78] sm:$0xff]
    %v6434 = vld [vmem:[#allocation4 + $0xc80] sm:$0xff]
    %v6435 = vld [vmem:[#allocation4 + $0xc88] sm:$0xff]
    %v6436 = vld [vmem:[#allocation4 + $0xc90] sm:$0xff]
    %v6437 = vld [vmem:[#allocation4 + $0xc98] sm:$0xff]
    %v6438 = vld [vmem:[#allocation4 + $0xca0] sm:$0xff]
    %v6439 = vld [vmem:[#allocation4 + $0xca8] sm:$0xff]
    %v6440 = vld [vmem:[#allocation4 + $0xcb0] sm:$0xff]
    %v6441 = vld [vmem:[#allocation4 + $0xcb8] sm:$0xff]
    %v6442 = vld [vmem:[#allocation4 + $0xcc0] sm:$0xff]
    %v6443 = vld [vmem:[#allocation4 + $0xcc8] sm:$0xff]
    %v6444 = vld [vmem:[#allocation4 + $0xcd0] sm:$0xff]
    %v6445 = vld [vmem:[#allocation4 + $0xcd8] sm:$0xff]
    %v6446 = vld [vmem:[#allocation4 + $0xce0] sm:$0xff]
    %v6447 = vld [vmem:[#allocation4 + $0xce8] sm:$0xff]
    %v6448 = vld [vmem:[#allocation4 + $0xcf0] sm:$0xff]
    %v6449 = vld [vmem:[#allocation4 + $0xcf8] sm:$0xff]
    %v6450 = vld [vmem:[#allocation4 + $0xd00] sm:$0xff]
    %v6451 = vld [vmem:[#allocation4 + $0xd08] sm:$0xff]
    %v6452 = vld [vmem:[#allocation4 + $0xd10] sm:$0xff]
    %v6453 = vld [vmem:[#allocation4 + $0xd18] sm:$0xff]
    %v6454 = vld [vmem:[#allocation4 + $0xd20] sm:$0xff]
    %v6455 = vld [vmem:[#allocation4 + $0xd28] sm:$0xff]
    %v6456 = vld [vmem:[#allocation4 + $0xd30] sm:$0xff]
    %v6457 = vld [vmem:[#allocation4 + $0xd38] sm:$0xff]
    %v6458 = vld [vmem:[#allocation4 + $0xd40] sm:$0xff]
    %v6459 = vld [vmem:[#allocation4 + $0xd48] sm:$0xff]
    %v6460 = vld [vmem:[#allocation4 + $0xd50] sm:$0xff]
    %v6461 = vld [vmem:[#allocation4 + $0xd58] sm:$0xff]
    %v6462 = vld [vmem:[#allocation4 + $0xd60] sm:$0xff]
    %v6463 = vld [vmem:[#allocation4 + $0xd68] sm:$0xff]
    %v6464 = vld [vmem:[#allocation4 + $0xd70] sm:$0xff]
    %v6465 = vld [vmem:[#allocation4 + $0xd78] sm:$0xff]
    %v6466 = vld [vmem:[#allocation4 + $0xd80] sm:$0xff]
    %v6467 = vld [vmem:[#allocation4 + $0xd88] sm:$0xff]
    %v6468 = vld [vmem:[#allocation4 + $0xd90] sm:$0xff]
    %v6469 = vld [vmem:[#allocation4 + $0xd98] sm:$0xff]
    %v6470 = vld [vmem:[#allocation4 + $0xda0] sm:$0xff]
    %v6471 = vld [vmem:[#allocation4 + $0xda8] sm:$0xff]
    %v6472 = vld [vmem:[#allocation4 + $0xdb0] sm:$0xff]
    %v6473 = vld [vmem:[#allocation4 + $0xdb8] sm:$0xff]
    %v6474 = vld [vmem:[#allocation4 + $0xdc0] sm:$0xff]
    %v6475 = vld [vmem:[#allocation4 + $0xdc8] sm:$0xff]
    %v6476 = vld [vmem:[#allocation4 + $0xdd0] sm:$0xff]
    %v6477 = vld [vmem:[#allocation4 + $0xdd8] sm:$0xff]
    %v6478 = vld [vmem:[#allocation4 + $0xde0] sm:$0xff]
    %v6479 = vld [vmem:[#allocation4 + $0xde8] sm:$0xff]
    %v6480 = vld [vmem:[#allocation4 + $0xdf0] sm:$0xff]
    %v6481 = vld [vmem:[#allocation4 + $0xdf8] sm:$0xff]
    %v6482 = vld [vmem:[#allocation4 + $0xe00] sm:$0xff]
    %v6483 = vld [vmem:[#allocation4 + $0xe08] sm:$0xff]
    %v6484 = vld [vmem:[#allocation4 + $0xe10] sm:$0xff]
    %v6485 = vld [vmem:[#allocation4 + $0xe18] sm:$0xff]
    %v6486 = vld [vmem:[#allocation4 + $0xe20] sm:$0xff]
    %v6487 = vld [vmem:[#allocation4 + $0xe28] sm:$0xff]
    %v6488 = vld [vmem:[#allocation4 + $0xe30] sm:$0xff]
    %v6489 = vld [vmem:[#allocation4 + $0xe38] sm:$0xff]
    %v6490 = vld [vmem:[#allocation4 + $0xe40] sm:$0xff]
    %v6491 = vld [vmem:[#allocation4 + $0xe48] sm:$0xff]
    %v6492 = vld [vmem:[#allocation4 + $0xe50] sm:$0xff]
    %v6493 = vld [vmem:[#allocation4 + $0xe58] sm:$0xff]
    %v6494 = vld [vmem:[#allocation4 + $0xe60] sm:$0xff]
    %v6495 = vld [vmem:[#allocation4 + $0xe68] sm:$0xff]
    %v6496 = vld [vmem:[#allocation4 + $0xe70] sm:$0xff]
    %v6497 = vld [vmem:[#allocation4 + $0xe78] sm:$0xff]
    %v6498 = vld [vmem:[#allocation4 + $0xe80] sm:$0xff]
    %v6499 = vld [vmem:[#allocation4 + $0xe88] sm:$0xff]
    %v6500 = vld [vmem:[#allocation4 + $0xe90] sm:$0xff]
    %v6501 = vld [vmem:[#allocation4 + $0xe98] sm:$0xff]
    %v6502 = vld [vmem:[#allocation4 + $0xea0] sm:$0xff]
    %v6503 = vld [vmem:[#allocation4 + $0xea8] sm:$0xff]
    %v6504 = vld [vmem:[#allocation4 + $0xeb0] sm:$0xff]
    %v6505 = vld [vmem:[#allocation4 + $0xeb8] sm:$0xff]
    %v6506 = vld [vmem:[#allocation4 + $0xec0] sm:$0xff]
    %v6507 = vld [vmem:[#allocation4 + $0xec8] sm:$0xff]
    %v6508 = vld [vmem:[#allocation4 + $0xed0] sm:$0xff]
    %v6509 = vld [vmem:[#allocation4 + $0xed8] sm:$0xff]
    %v6510 = vld [vmem:[#allocation4 + $0xee0] sm:$0xff]
    %v6511 = vld [vmem:[#allocation4 + $0xee8] sm:$0xff]
    %v6512 = vld [vmem:[#allocation4 + $0xef0] sm:$0xff]
    %v6513 = vld [vmem:[#allocation4 + $0xef8] sm:$0xff]
    %v6514 = vld [vmem:[#allocation4 + $0xf00] sm:$0xff]
    %v6515 = vld [vmem:[#allocation4 + $0xf08] sm:$0xff]
    %v6516 = vld [vmem:[#allocation4 + $0xf10] sm:$0xff]
    %v6517 = vld [vmem:[#allocation4 + $0xf18] sm:$0xff]
    %v6518 = vld [vmem:[#allocation4 + $0xf20] sm:$0xff]
    %v6519 = vld [vmem:[#allocation4 + $0xf28] sm:$0xff]
    %v6520 = vld [vmem:[#allocation4 + $0xf30] sm:$0xff]
    %v6521 = vld [vmem:[#allocation4 + $0xf38] sm:$0xff]
    %v6522 = vld [vmem:[#allocation4 + $0xf40] sm:$0xff]
    %v6523 = vld [vmem:[#allocation4 + $0xf48] sm:$0xff]
    %v6524 = vld [vmem:[#allocation4 + $0xf50] sm:$0xff]
    %v6525 = vld [vmem:[#allocation4 + $0xf58] sm:$0xff]
    %v6526 = vld [vmem:[#allocation4 + $0xf60] sm:$0xff]
    %v6527 = vld [vmem:[#allocation4 + $0xf68] sm:$0xff]
    %v6528 = vld [vmem:[#allocation4 + $0xf70] sm:$0xff]
    %v6529 = vld [vmem:[#allocation4 + $0xf78] sm:$0xff]
    %v6530 = vld [vmem:[#allocation4 + $0xf80] sm:$0xff]
    %v6531 = vld [vmem:[#allocation4 + $0xf88] sm:$0xff]
    %v6532 = vld [vmem:[#allocation4 + $0xf90] sm:$0xff]
    %v6533 = vld [vmem:[#allocation4 + $0xf98] sm:$0xff]
    %v6534 = vld [vmem:[#allocation4 + $0xfa0] sm:$0xff]
    %v6535 = vld [vmem:[#allocation4 + $0xfa8] sm:$0xff]
    %v6536 = vld [vmem:[#allocation4 + $0xfb0] sm:$0xff]
    %v6537 = vld [vmem:[#allocation4 + $0xfb8] sm:$0xff]
    %v6538 = vld [vmem:[#allocation4 + $0xfc0] sm:$0xff]
    %v6539 = vld [vmem:[#allocation4 + $0xfc8] sm:$0xff]
    %v6540 = vld [vmem:[#allocation4 + $0xfd0] sm:$0xff]
    %v6541 = vld [vmem:[#allocation4 + $0xfd8] sm:$0xff]
    %v6542 = vld [vmem:[#allocation4 + $0xfe0] sm:$0xff]
    %v6543 = vld [vmem:[#allocation4 + $0xfe8] sm:$0xff]
    %v6544 = vld [vmem:[#allocation4 + $0xff0] sm:$0xff]
    %v6545 = vld [vmem:[#allocation4 + $0xff8] sm:$0xff]
    %v6546 = vld [vmem:[#allocation18] sm:$0xf]
    %6547 = vmatprep.subr.mxu0 %v6035
    %6548 = vmatpush1.msra.mxu0 %v6034
    %6549 = vmatprep.subr.mxu0 %v6039
    %6550 = vmatpush1.msra.mxu0 %v6038
    %6551 = vmatprep.subr.mxu0 %v6043
    %6552 = vmatpush1.msra.mxu0 %v6042
    %6553 = vmatprep.subr.mxu0 %v6047
    %6554 = vmatpush1.msra.mxu0 %v6046
    %6555 = vmatprep.subr.mxu0 %v6051
    %6556 = vmatpush1.msra.mxu0 %v6050
    %6557 = vmatprep.subr.mxu0 %v6055
    %6558 = vmatpush1.msra.mxu0 %v6054
    %6559 = vmatprep.subr.mxu0 %v6059
    %6560 = vmatpush1.msra.mxu0 %v6058
    %6561 = vmatprep.subr.mxu0 %v6063
    %6562 = vmatpush1.msra.mxu0 %v6062
    %6563 = vmatprep.subr.mxu0 %v6067
    %6564 = vmatpush1.msra.mxu0 %v6066
    %6565 = vmatprep.subr.mxu0 %v6071
    %6566 = vmatpush1.msra.mxu0 %v6070
    %6567 = vmatprep.subr.mxu0 %v6075
    %6568 = vmatpush1.msra.mxu0 %v6074
    %6569 = vmatprep.subr.mxu0 %v6079
    %6570 = vmatpush1.msra.mxu0 %v6078
    %6571 = vmatprep.subr.mxu0 %v6083
    %6572 = vmatpush1.msra.mxu0 %v6082
    %6573 = vmatprep.subr.mxu0 %v6087
    %6574 = vmatpush1.msra.mxu0 %v6086
    %6575 = vmatprep.subr.mxu0 %v6091
    %6576 = vmatpush1.msra.mxu0 %v6090
    %6577 = vmatprep.subr.mxu0 %v6095
    %6578 = vmatpush1.msra.mxu0 %v6094
    %6579 = vmatprep.subr.mxu0 %v6099
    %6580 = vmatpush1.msra.mxu0 %v6098
    %6581 = vmatprep.subr.mxu0 %v6103
    %6582 = vmatpush1.msra.mxu0 %v6102
    %6583 = vmatprep.subr.mxu0 %v6107
    %6584 = vmatpush1.msra.mxu0 %v6106
    %6585 = vmatprep.subr.mxu0 %v6111
    %6586 = vmatpush1.msra.mxu0 %v6110
    %6587 = vmatprep.subr.mxu0 %v6115
    %6588 = vmatpush1.msra.mxu0 %v6114
    %6589 = vmatprep.subr.mxu0 %v6119
    %6590 = vmatpush1.msra.mxu0 %v6118
    %6591 = vmatprep.subr.mxu0 %v6123
    %6592 = vmatpush1.msra.mxu0 %v6122
    %6593 = vmatprep.subr.mxu0 %v6127
    %6594 = vmatpush1.msra.mxu0 %v6126
    %6595 = vmatprep.subr.mxu0 %v6131
    %6596 = vmatpush1.msra.mxu0 %v6130
    %6597 = vmatprep.subr.mxu0 %v6135
    %6598 = vmatpush1.msra.mxu0 %v6134
    %6599 = vmatprep.subr.mxu0 %v6139
    %6600 = vmatpush1.msra.mxu0 %v6138
    %6601 = vmatprep.subr.mxu0 %v6143
    %6602 = vmatpush1.msra.mxu0 %v6142
    %6603 = vmatprep.subr.mxu0 %v6147
    %6604 = vmatpush1.msra.mxu0 %v6146
    %6605 = vmatprep.subr.mxu0 %v6151
    %6606 = vmatpush1.msra.mxu0 %v6150
    %6607 = vmatprep.subr.mxu0 %v6155
    %6608 = vmatpush1.msra.mxu0 %v6154
    %6609 = vmatprep.subr.mxu0 %v6159
    %6610 = vmatpush1.msra.mxu0 %v6158
    %6611 = vmatprep.mubr.f32.mxu0 %v6023
    %6612 = vmatmul.mubr.f32.gmra.mrb[0].mxu0 %v6022
    %v6613 = vpop.f32.mrb[0].mxu0
    %v6614 = vadd.f32 0.0, %v6613
    %v6615 = vpop.f32.mrb[0].mxu0
    %v6616 = vadd.f32 0.0, %v6615
    %6617 = vdwg.mxu0
    %6618 = vmatprep.subr.mxu0 %v6163
    %6619 = vmatpush1.msra.mxu0 %v6162
    %6620 = vmatprep.subr.mxu0 %v6167
    %6621 = vmatpush1.msra.mxu0 %v6166
    %6622 = vmatprep.subr.mxu0 %v6171
    %6623 = vmatpush1.msra.mxu0 %v6170
    %6624 = vmatprep.subr.mxu0 %v6175
    %6625 = vmatpush1.msra.mxu0 %v6174
    %6626 = vmatprep.subr.mxu0 %v6179
    %6627 = vmatpush1.msra.mxu0 %v6178
    %6628 = vmatprep.subr.mxu0 %v6183
    %6629 = vmatpush1.msra.mxu0 %v6182
    %6630 = vmatprep.subr.mxu0 %v6187
    %6631 = vmatpush1.msra.mxu0 %v6186
    %6632 = vmatprep.subr.mxu0 %v6191
    %6633 = vmatpush1.msra.mxu0 %v6190
    %6634 = vmatprep.subr.mxu0 %v6195
    %6635 = vmatpush1.msra.mxu0 %v6194
    %6636 = vmatprep.subr.mxu0 %v6199
    %6637 = vmatpush1.msra.mxu0 %v6198
    %6638 = vmatprep.subr.mxu0 %v6203
    %6639 = vmatpush1.msra.mxu0 %v6202
    %6640 = vmatprep.subr.mxu0 %v6207
    %6641 = vmatpush1.msra.mxu0 %v6206
    %6642 = vmatprep.subr.mxu0 %v6211
    %6643 = vmatpush1.msra.mxu0 %v6210
    %6644 = vmatprep.subr.mxu0 %v6215
    %6645 = vmatpush1.msra.mxu0 %v6214
    %6646 = vmatprep.subr.mxu0 %v6219
    %6647 = vmatpush1.msra.mxu0 %v6218
    %6648 = vmatprep.subr.mxu0 %v6223
    %6649 = vmatpush1.msra.mxu0 %v6222
    %6650 = vmatprep.subr.mxu0 %v6227
    %6651 = vmatpush1.msra.mxu0 %v6226
    %6652 = vmatprep.subr.mxu0 %v6231
    %6653 = vmatpush1.msra.mxu0 %v6230
    %6654 = vmatprep.subr.mxu0 %v6235
    %6655 = vmatpush1.msra.mxu0 %v6234
    %6656 = vmatprep.subr.mxu0 %v6239
    %6657 = vmatpush1.msra.mxu0 %v6238
    %6658 = vmatprep.subr.mxu0 %v6243
    %6659 = vmatpush1.msra.mxu0 %v6242
    %6660 = vmatprep.subr.mxu0 %v6247
    %6661 = vmatpush1.msra.mxu0 %v6246
    %6662 = vmatprep.subr.mxu0 %v6251
    %6663 = vmatpush1.msra.mxu0 %v6250
    %6664 = vmatprep.subr.mxu0 %v6255
    %6665 = vmatpush1.msra.mxu0 %v6254
    %6666 = vmatprep.subr.mxu0 %v6259
    %6667 = vmatpush1.msra.mxu0 %v6258
    %6668 = vmatprep.subr.mxu0 %v6263
    %6669 = vmatpush1.msra.mxu0 %v6262
    %6670 = vmatprep.subr.mxu0 %v6267
    %6671 = vmatpush1.msra.mxu0 %v6266
    %6672 = vmatprep.subr.mxu0 %v6271
    %6673 = vmatpush1.msra.mxu0 %v6270
    %6674 = vmatprep.subr.mxu0 %v6275
    %6675 = vmatpush1.msra.mxu0 %v6274
    %6676 = vmatprep.subr.mxu0 %v6279
    %6677 = vmatpush1.msra.mxu0 %v6278
    %6678 = vmatprep.subr.mxu0 %v6283
    %6679 = vmatpush1.msra.mxu0 %v6282
    %6680 = vmatprep.subr.mxu0 %v6287
    %6681 = vmatpush1.msra.mxu0 %v6286
    %6682 = vmatprep.mubr.f32.mxu0 %v6025
    %6683 = vmatmul.mubr.f32.gmra.mrb[0].mxu0 %v6024
    %v6684 = vpop.f32.mrb[0].mxu0
    %v6685 = vadd.f32 %v6614, %v6684
    %v6686 = vpop.f32.mrb[0].mxu0
    %v6687 = vadd.f32 %v6616, %v6686
    %6688 = vdwg.mxu0
    %6689 = vmatprep.subr.mxu0 %v6291
    %6690 = vmatpush1.msra.mxu0 %v6290
    %6691 = vmatprep.subr.mxu0 %v6295
    %6692 = vmatpush1.msra.mxu0 %v6294
    %6693 = vmatprep.subr.mxu0 %v6299
    %6694 = vmatpush1.msra.mxu0 %v6298
    %6695 = vmatprep.subr.mxu0 %v6303
    %6696 = vmatpush1.msra.mxu0 %v6302
    %6697 = vmatprep.subr.mxu0 %v6307
    %6698 = vmatpush1.msra.mxu0 %v6306
    %6699 = vmatprep.subr.mxu0 %v6311
    %6700 = vmatpush1.msra.mxu0 %v6310
    %6701 = vmatprep.subr.mxu0 %v6315
    %6702 = vmatpush1.msra.mxu0 %v6314
    %6703 = vmatprep.subr.mxu0 %v6319
    %6704 = vmatpush1.msra.mxu0 %v6318
    %6705 = vmatprep.subr.mxu0 %v6323
    %6706 = vmatpush1.msra.mxu0 %v6322
    %6707 = vmatprep.subr.mxu0 %v6327
    %6708 = vmatpush1.msra.mxu0 %v6326
    %6709 = vmatprep.subr.mxu0 %v6331
    %6710 = vmatpush1.msra.mxu0 %v6330
    %6711 = vmatprep.subr.mxu0 %v6335
    %6712 = vmatpush1.msra.mxu0 %v6334
    %6713 = vmatprep.subr.mxu0 %v6339
    %6714 = vmatpush1.msra.mxu0 %v6338
    %6715 = vmatprep.subr.mxu0 %v6343
    %6716 = vmatpush1.msra.mxu0 %v6342
    %6717 = vmatprep.subr.mxu0 %v6347
    %6718 = vmatpush1.msra.mxu0 %v6346
    %6719 = vmatprep.subr.mxu0 %v6351
    %6720 = vmatpush1.msra.mxu0 %v6350
    %6721 = vmatprep.subr.mxu0 %v6355
    %6722 = vmatpush1.msra.mxu0 %v6354
    %6723 = vmatprep.subr.mxu0 %v6359
    %6724 = vmatpush1.msra.mxu0 %v6358
    %6725 = vmatprep.subr.mxu0 %v6363
    %6726 = vmatpush1.msra.mxu0 %v6362
    %6727 = vmatprep.subr.mxu0 %v6367
    %6728 = vmatpush1.msra.mxu0 %v6366
    %6729 = vmatprep.subr.mxu0 %v6371
    %6730 = vmatpush1.msra.mxu0 %v6370
    %6731 = vmatprep.subr.mxu0 %v6375
    %6732 = vmatpush1.msra.mxu0 %v6374
    %6733 = vmatprep.subr.mxu0 %v6379
    %6734 = vmatpush1.msra.mxu0 %v6378
    %6735 = vmatprep.subr.mxu0 %v6383
    %6736 = vmatpush1.msra.mxu0 %v6382
    %6737 = vmatprep.subr.mxu0 %v6387
    %6738 = vmatpush1.msra.mxu0 %v6386
    %6739 = vmatprep.subr.mxu0 %v6391
    %6740 = vmatpush1.msra.mxu0 %v6390
    %6741 = vmatprep.subr.mxu0 %v6395
    %6742 = vmatpush1.msra.mxu0 %v6394
    %6743 = vmatprep.subr.mxu0 %v6399
    %6744 = vmatpush1.msra.mxu0 %v6398
    %6745 = vmatprep.subr.mxu0 %v6403
    %6746 = vmatpush1.msra.mxu0 %v6402
    %6747 = vmatprep.subr.mxu0 %v6407
    %6748 = vmatpush1.msra.mxu0 %v6406
    %6749 = vmatprep.subr.mxu0 %v6411
    %6750 = vmatpush1.msra.mxu0 %v6410
    %6751 = vmatprep.subr.mxu0 %v6415
    %6752 = vmatpush1.msra.mxu0 %v6414
    %6753 = vmatprep.mubr.f32.mxu0 %v6027
    %6754 = vmatmul.mubr.f32.gmra.mrb[0].mxu0 %v6026
    %v6755 = vpop.f32.mrb[0].mxu0
    %v6756 = vadd.f32 %v6685, %v6755
    %v6757 = vpop.f32.mrb[0].mxu0
    %v6758 = vadd.f32 %v6687, %v6757
    %6759 = vdwg.mxu0
    %6760 = vmatprep.subr.mxu0 %v6419
    %6761 = vmatpush1.msra.mxu0 %v6418
    %6762 = vmatprep.subr.mxu0 %v6423
    %6763 = vmatpush1.msra.mxu0 %v6422
    %6764 = vmatprep.subr.mxu0 %v6427
    %6765 = vmatpush1.msra.mxu0 %v6426
    %6766 = vmatprep.subr.mxu0 %v6431
    %6767 = vmatpush1.msra.mxu0 %v6430
    %6768 = vmatprep.subr.mxu0 %v6435
    %6769 = vmatpush1.msra.mxu0 %v6434
    %6770 = vmatprep.subr.mxu0 %v6439
    %6771 = vmatpush1.msra.mxu0 %v6438
    %6772 = vmatprep.subr.mxu0 %v6443
    %6773 = vmatpush1.msra.mxu0 %v6442
    %6774 = vmatprep.subr.mxu0 %v6447
    %6775 = vmatpush1.msra.mxu0 %v6446
    %6776 = vmatprep.subr.mxu0 %v6451
    %6777 = vmatpush1.msra.mxu0 %v6450
    %6778 = vmatprep.subr.mxu0 %v6455
    %6779 = vmatpush1.msra.mxu0 %v6454
    %6780 = vmatprep.subr.mxu0 %v6459
    %6781 = vmatpush1.msra.mxu0 %v6458
    %6782 = vmatprep.subr.mxu0 %v6463
    %6783 = vmatpush1.msra.mxu0 %v6462
    %6784 = vmatprep.subr.mxu0 %v6467
    %6785 = vmatpush1.msra.mxu0 %v6466
    %6786 = vmatprep.subr.mxu0 %v6471
    %6787 = vmatpush1.msra.mxu0 %v6470
    %6788 = vmatprep.subr.mxu0 %v6475
    %6789 = vmatpush1.msra.mxu0 %v6474
    %6790 = vmatprep.subr.mxu0 %v6479
    %6791 = vmatpush1.msra.mxu0 %v6478
    %6792 = vmatprep.subr.mxu0 %v6483
    %6793 = vmatpush1.msra.mxu0 %v6482
    %6794 = vmatprep.subr.mxu0 %v6487
    %6795 = vmatpush1.msra.mxu0 %v6486
    %6796 = vmatprep.subr.mxu0 %v6491
    %6797 = vmatpush1.msra.mxu0 %v6490
    %6798 = vmatprep.subr.mxu0 %v6495
    %6799 = vmatpush1.msra.mxu0 %v6494
    %6800 = vmatprep.subr.mxu0 %v6499
    %6801 = vmatpush1.msra.mxu0 %v6498
    %6802 = vmatprep.subr.mxu0 %v6503
    %6803 = vmatpush1.msra.mxu0 %v6502
    %6804 = vmatprep.subr.mxu0 %v6507
    %6805 = vmatpush1.msra.mxu0 %v6506
    %6806 = vmatprep.subr.mxu0 %v6511
    %6807 = vmatpush1.msra.mxu0 %v6510
    %6808 = vmatprep.subr.mxu0 %v6515
    %6809 = vmatpush1.msra.mxu0 %v6514
    %6810 = vmatprep.subr.mxu0 %v6519
    %6811 = vmatpush1.msra.mxu0 %v6518
    %6812 = vmatprep.subr.mxu0 %v6523
    %6813 = vmatpush1.msra.mxu0 %v6522
    %6814 = vmatprep.subr.mxu0 %v6527
    %6815 = vmatpush1.msra.mxu0 %v6526
    %6816 = vmatprep.subr.mxu0 %v6531
    %6817 = vmatpush1.msra.mxu0 %v6530
    %6818 = vmatprep.subr.mxu0 %v6535
    %6819 = vmatpush1.msra.mxu0 %v6534
    %6820 = vmatprep.subr.mxu0 %v6539
    %6821 = vmatpush1.msra.mxu0 %v6538
    %6822 = vmatprep.subr.mxu0 %v6543
    %6823 = vmatpush1.msra.mxu0 %v6542
    %6824 = vmatprep.mubr.f32.mxu0 %v6029
    %6825 = vmatmul.mubr.f32.gmra.mrb[0].mxu0 %v6028
    %v6826 = vpop.f32.mrb[0].mxu0
    %v6827 = vadd.f32 %v6756, %v6826
    %v6828 = vpop.f32.mrb[0].mxu0
    %v6829 = vadd.f32 %v6758, %v6828
    %6830 = vdwg.mxu0
    %6831 = vmatprep.subr.mxu0 %v6037
    %6832 = vmatpush1.msra.mxu0 %v6036
    %6833 = vmatprep.subr.mxu0 %v6041
    %6834 = vmatpush1.msra.mxu0 %v6040
    %6835 = vmatprep.subr.mxu0 %v6045
    %6836 = vmatpush1.msra.mxu0 %v6044
    %6837 = vmatprep.subr.mxu0 %v6049
    %6838 = vmatpush1.msra.mxu0 %v6048
    %6839 = vmatprep.subr.mxu0 %v6053
    %6840 = vmatpush1.msra.mxu0 %v6052
    %6841 = vmatprep.subr.mxu0 %v6057
    %6842 = vmatpush1.msra.mxu0 %v6056
    %6843 = vmatprep.subr.mxu0 %v6061
    %6844 = vmatpush1.msra.mxu0 %v6060
    %6845 = vmatprep.subr.mxu0 %v6065
    %6846 = vmatpush1.msra.mxu0 %v6064
    %6847 = vmatprep.subr.mxu0 %v6069
    %6848 = vmatpush1.msra.mxu0 %v6068
    %6849 = vmatprep.subr.mxu0 %v6073
    %6850 = vmatpush1.msra.mxu0 %v6072
    %6851 = vmatprep.subr.mxu0 %v6077
    %6852 = vmatpush1.msra.mxu0 %v6076
    %6853 = vmatprep.subr.mxu0 %v6081
    %6854 = vmatpush1.msra.mxu0 %v6080
    %6855 = vmatprep.subr.mxu0 %v6085
    %6856 = vmatpush1.msra.mxu0 %v6084
    %6857 = vmatprep.subr.mxu0 %v6089
    %6858 = vmatpush1.msra.mxu0 %v6088
    %6859 = vmatprep.subr.mxu0 %v6093
    %6860 = vmatpush1.msra.mxu0 %v6092
    %6861 = vmatprep.subr.mxu0 %v6097
    %6862 = vmatpush1.msra.mxu0 %v6096
    %6863 = vmatprep.subr.mxu0 %v6101
    %6864 = vmatpush1.msra.mxu0 %v6100
    %6865 = vmatprep.subr.mxu0 %v6105
    %6866 = vmatpush1.msra.mxu0 %v6104
    %6867 = vmatprep.subr.mxu0 %v6109
    %6868 = vmatpush1.msra.mxu0 %v6108
    %6869 = vmatprep.subr.mxu0 %v6113
    %6870 = vmatpush1.msra.mxu0 %v6112
    %6871 = vmatprep.subr.mxu0 %v6117
    %6872 = vmatpush1.msra.mxu0 %v6116
    %6873 = vmatprep.subr.mxu0 %v6121
    %6874 = vmatpush1.msra.mxu0 %v6120
    %6875 = vmatprep.subr.mxu0 %v6125
    %6876 = vmatpush1.msra.mxu0 %v6124
    %6877 = vmatprep.subr.mxu0 %v6129
    %6878 = vmatpush1.msra.mxu0 %v6128
    %6879 = vmatprep.subr.mxu0 %v6133
    %6880 = vmatpush1.msra.mxu0 %v6132
    %6881 = vmatprep.subr.mxu0 %v6137
    %6882 = vmatpush1.msra.mxu0 %v6136
    %6883 = vmatprep.subr.mxu0 %v6141
    %6884 = vmatpush1.msra.mxu0 %v6140
    %6885 = vmatprep.subr.mxu0 %v6145
    %6886 = vmatpush1.msra.mxu0 %v6144
    %6887 = vmatprep.subr.mxu0 %v6149
    %6888 = vmatpush1.msra.mxu0 %v6148
    %6889 = vmatprep.subr.mxu0 %v6153
    %6890 = vmatpush1.msra.mxu0 %v6152
    %6891 = vmatprep.subr.mxu0 %v6157
    %6892 = vmatpush1.msra.mxu0 %v6156
    %6893 = vmatprep.subr.mxu0 %v6161
    %6894 = vmatpush1.msra.mxu0 %v6160
    %6895 = vmatprep.mubr.f32.mxu0 %v6023
    %6896 = vmatmul.mubr.f32.gmra.mrb[0].mxu0 %v6022
    %v6897 = vpop.f32.mrb[0].mxu0
    %v6898 = vadd.f32 0.0, %v6897
    %v6899 = vpop.f32.mrb[0].mxu0
    %v6900 = vadd.f32 0.0, %v6899
    %6901 = vdwg.mxu0
    %6902 = vmatprep.subr.mxu0 %v6165
    %6903 = vmatpush1.msra.mxu0 %v6164
    %6904 = vmatprep.subr.mxu0 %v6169
    %6905 = vmatpush1.msra.mxu0 %v6168
    %6906 = vmatprep.subr.mxu0 %v6173
    %6907 = vmatpush1.msra.mxu0 %v6172
    %6908 = vmatprep.subr.mxu0 %v6177
    %6909 = vmatpush1.msra.mxu0 %v6176
    %6910 = vmatprep.subr.mxu0 %v6181
    %6911 = vmatpush1.msra.mxu0 %v6180
    %6912 = vmatprep.subr.mxu0 %v6185
    %6913 = vmatpush1.msra.mxu0 %v6184
    %6914 = vmatprep.subr.mxu0 %v6189
    %6915 = vmatpush1.msra.mxu0 %v6188
    %6916 = vmatprep.subr.mxu0 %v6193
    %6917 = vmatpush1.msra.mxu0 %v6192
    %6918 = vmatprep.subr.mxu0 %v6197
    %6919 = vmatpush1.msra.mxu0 %v6196
    %6920 = vmatprep.subr.mxu0 %v6201
    %6921 = vmatpush1.msra.mxu0 %v6200
    %6922 = vmatprep.subr.mxu0 %v6205
    %6923 = vmatpush1.msra.mxu0 %v6204
    %6924 = vmatprep.subr.mxu0 %v6209
    %6925 = vmatpush1.msra.mxu0 %v6208
    %6926 = vmatprep.subr.mxu0 %v6213
    %6927 = vmatpush1.msra.mxu0 %v6212
    %6928 = vmatprep.subr.mxu0 %v6217
    %6929 = vmatpush1.msra.mxu0 %v6216
    %6930 = vmatprep.subr.mxu0 %v6221
    %6931 = vmatpush1.msra.mxu0 %v6220
    %6932 = vmatprep.subr.mxu0 %v6225
    %6933 = vmatpush1.msra.mxu0 %v6224
    %6934 = vmatprep.subr.mxu0 %v6229
    %6935 = vmatpush1.msra.mxu0 %v6228
    %6936 = vmatprep.subr.mxu0 %v6233
    %6937 = vmatpush1.msra.mxu0 %v6232
    %6938 = vmatprep.subr.mxu0 %v6237
    %6939 = vmatpush1.msra.mxu0 %v6236
    %6940 = vmatprep.subr.mxu0 %v6241
    %6941 = vmatpush1.msra.mxu0 %v6240
    %6942 = vmatprep.subr.mxu0 %v6245
    %6943 = vmatpush1.msra.mxu0 %v6244
    %6944 = vmatprep.subr.mxu0 %v6249
    %6945 = vmatpush1.msra.mxu0 %v6248
    %6946 = vmatprep.subr.mxu0 %v6253
    %6947 = vmatpush1.msra.mxu0 %v6252
    %6948 = vmatprep.subr.mxu0 %v6257
    %6949 = vmatpush1.msra.mxu0 %v6256
    %6950 = vmatprep.subr.mxu0 %v6261
    %6951 = vmatpush1.msra.mxu0 %v6260
    %6952 = vmatprep.subr.mxu0 %v6265
    %6953 = vmatpush1.msra.mxu0 %v6264
    %6954 = vmatprep.subr.mxu0 %v6269
    %6955 = vmatpush1.msra.mxu0 %v6268
    %6956 = vmatprep.subr.mxu0 %v6273
    %6957 = vmatpush1.msra.mxu0 %v6272
    %6958 = vmatprep.subr.mxu0 %v6277
    %6959 = vmatpush1.msra.mxu0 %v6276
    %6960 = vmatprep.subr.mxu0 %v6281
    %6961 = vmatpush1.msra.mxu0 %v6280
    %6962 = vmatprep.subr.mxu0 %v6285
    %6963 = vmatpush1.msra.mxu0 %v6284
    %6964 = vmatprep.subr.mxu0 %v6289
    %6965 = vmatpush1.msra.mxu0 %v6288
    %6966 = vmatprep.mubr.f32.mxu0 %v6025
    %6967 = vmatmul.mubr.f32.gmra.mrb[0].mxu0 %v6024
    %v6968 = vpop.f32.mrb[0].mxu0
    %v6969 = vadd.f32 %v6898, %v6968
    %v6970 = vpop.f32.mrb[0].mxu0
    %v6971 = vadd.f32 %v6900, %v6970
    %6972 = vdwg.mxu0
    %6973 = vmatprep.subr.mxu0 %v6293
    %6974 = vmatpush1.msra.mxu0 %v6292
    %6975 = vmatprep.subr.mxu0 %v6297
    %6976 = vmatpush1.msra.mxu0 %v6296
    %6977 = vmatprep.subr.mxu0 %v6301
    %6978 = vmatpush1.msra.mxu0 %v6300
    %6979 = vmatprep.subr.mxu0 %v6305
    %6980 = vmatpush1.msra.mxu0 %v6304
    %6981 = vmatprep.subr.mxu0 %v6309
    %6982 = vmatpush1.msra.mxu0 %v6308
    %6983 = vmatprep.subr.mxu0 %v6313
    %6984 = vmatpush1.msra.mxu0 %v6312
    %6985 = vmatprep.subr.mxu0 %v6317
    %6986 = vmatpush1.msra.mxu0 %v6316
    %6987 = vmatprep.subr.mxu0 %v6321
    %6988 = vmatpush1.msra.mxu0 %v6320
    %6989 = vmatprep.subr.mxu0 %v6325
    %6990 = vmatpush1.msra.mxu0 %v6324
    %6991 = vmatprep.subr.mxu0 %v6329
    %6992 = vmatpush1.msra.mxu0 %v6328
    %6993 = vmatprep.subr.mxu0 %v6333
    %6994 = vmatpush1.msra.mxu0 %v6332
    %6995 = vmatprep.subr.mxu0 %v6337
    %6996 = vmatpush1.msra.mxu0 %v6336
    %6997 = vmatprep.subr.mxu0 %v6341
    %6998 = vmatpush1.msra.mxu0 %v6340
    %6999 = vmatprep.subr.mxu0 %v6345
    %7000 = vmatpush1.msra.mxu0 %v6344
    %7001 = vmatprep.subr.mxu0 %v6349
    %7002 = vmatpush1.msra.mxu0 %v6348
    %7003 = vmatprep.subr.mxu0 %v6353
    %7004 = vmatpush1.msra.mxu0 %v6352
    %7005 = vmatprep.subr.mxu0 %v6357
    %7006 = vmatpush1.msra.mxu0 %v6356
    %7007 = vmatprep.subr.mxu0 %v6361
    %7008 = vmatpush1.msra.mxu0 %v6360
    %7009 = vmatprep.subr.mxu0 %v6365
    %7010 = vmatpush1.msra.mxu0 %v6364
    %7011 = vmatprep.subr.mxu0 %v6369
    %7012 = vmatpush1.msra.mxu0 %v6368
    %7013 = vmatprep.subr.mxu0 %v6373
    %7014 = vmatpush1.msra.mxu0 %v6372
    %7015 = vmatprep.subr.mxu0 %v6377
    %7016 = vmatpush1.msra.mxu0 %v6376
    %7017 = vmatprep.subr.mxu0 %v6381
    %7018 = vmatpush1.msra.mxu0 %v6380
    %7019 = vmatprep.subr.mxu0 %v6385
    %7020 = vmatpush1.msra.mxu0 %v6384
    %7021 = vmatprep.subr.mxu0 %v6389
    %7022 = vmatpush1.msra.mxu0 %v6388
    %7023 = vmatprep.subr.mxu0 %v6393
    %7024 = vmatpush1.msra.mxu0 %v6392
    %7025 = vmatprep.subr.mxu0 %v6397
    %7026 = vmatpush1.msra.mxu0 %v6396
    %7027 = vmatprep.subr.mxu0 %v6401
    %7028 = vmatpush1.msra.mxu0 %v6400
    %7029 = vmatprep.subr.mxu0 %v6405
    %7030 = vmatpush1.msra.mxu0 %v6404
    %7031 = vmatprep.subr.mxu0 %v6409
    %7032 = vmatpush1.msra.mxu0 %v6408
    %7033 = vmatprep.subr.mxu0 %v6413
    %7034 = vmatpush1.msra.mxu0 %v6412
    %7035 = vmatprep.subr.mxu0 %v6417
    %7036 = vmatpush1.msra.mxu0 %v6416
    %7037 = vmatprep.mubr.f32.mxu0 %v6027
    %7038 = vmatmul.mubr.f32.gmra.mrb[0].mxu0 %v6026
    %v7039 = vpop.f32.mrb[0].mxu0
    %v7040 = vadd.f32 %v6969, %v7039
    %v7041 = vpop.f32.mrb[0].mxu0
    %v7042 = vadd.f32 %v6971, %v7041
    %7043 = vdwg.mxu0
    %7044 = vmatprep.subr.mxu0 %v6421
    %7045 = vmatpush1.msra.mxu0 %v6420
    %7046 = vmatprep.subr.mxu0 %v6425
    %7047 = vmatpush1.msra.mxu0 %v6424
    %7048 = vmatprep.subr.mxu0 %v6429
    %7049 = vmatpush1.msra.mxu0 %v6428
    %7050 = vmatprep.subr.mxu0 %v6433
    %7051 = vmatpush1.msra.mxu0 %v6432
    %7052 = vmatprep.subr.mxu0 %v6437
    %7053 = vmatpush1.msra.mxu0 %v6436
    %7054 = vmatprep.subr.mxu0 %v6441
    %7055 = vmatpush1.msra.mxu0 %v6440
    %7056 = vmatprep.subr.mxu0 %v6445
    %7057 = vmatpush1.msra.mxu0 %v6444
    %7058 = vmatprep.subr.mxu0 %v6449
    %7059 = vmatpush1.msra.mxu0 %v6448
    %7060 = vmatprep.subr.mxu0 %v6453
    %7061 = vmatpush1.msra.mxu0 %v6452
    %7062 = vmatprep.subr.mxu0 %v6457
    %7063 = vmatpush1.msra.mxu0 %v6456
    %7064 = vmatprep.subr.mxu0 %v6461
    %7065 = vmatpush1.msra.mxu0 %v6460
    %7066 = vmatprep.subr.mxu0 %v6465
    %7067 = vmatpush1.msra.mxu0 %v6464
    %7068 = vmatprep.subr.mxu0 %v6469
    %7069 = vmatpush1.msra.mxu0 %v6468
    %7070 = vmatprep.subr.mxu0 %v6473
    %7071 = vmatpush1.msra.mxu0 %v6472
    %7072 = vmatprep.subr.mxu0 %v6477
    %7073 = vmatpush1.msra.mxu0 %v6476
    %7074 = vmatprep.subr.mxu0 %v6481
    %7075 = vmatpush1.msra.mxu0 %v6480
    %7076 = vmatprep.subr.mxu0 %v6485
    %7077 = vmatpush1.msra.mxu0 %v6484
    %7078 = vmatprep.subr.mxu0 %v6489
    %7079 = vmatpush1.msra.mxu0 %v6488
    %7080 = vmatprep.subr.mxu0 %v6493
    %7081 = vmatpush1.msra.mxu0 %v6492
    %7082 = vmatprep.subr.mxu0 %v6497
    %7083 = vmatpush1.msra.mxu0 %v6496
    %7084 = vmatprep.subr.mxu0 %v6501
    %7085 = vmatpush1.msra.mxu0 %v6500
    %7086 = vmatprep.subr.mxu0 %v6505
    %7087 = vmatpush1.msra.mxu0 %v6504
    %7088 = vmatprep.subr.mxu0 %v6509
    %7089 = vmatpush1.msra.mxu0 %v6508
    %7090 = vmatprep.subr.mxu0 %v6513
    %7091 = vmatpush1.msra.mxu0 %v6512
    %7092 = vmatprep.subr.mxu0 %v6517
    %7093 = vmatpush1.msra.mxu0 %v6516
    %7094 = vmatprep.subr.mxu0 %v6521
    %7095 = vmatpush1.msra.mxu0 %v6520
    %7096 = vmatprep.subr.mxu0 %v6525
    %7097 = vmatpush1.msra.mxu0 %v6524
    %7098 = vmatprep.subr.mxu0 %v6529
    %7099 = vmatpush1.msra.mxu0 %v6528
    %7100 = vmatprep.subr.mxu0 %v6533
    %7101 = vmatpush1.msra.mxu0 %v6532
    %7102 = vmatprep.subr.mxu0 %v6537
    %7103 = vmatpush1.msra.mxu0 %v6536
    %7104 = vmatprep.subr.mxu0 %v6541
    %7105 = vmatpush1.msra.mxu0 %v6540
    %7106 = vmatprep.subr.mxu0 %v6545
    %7107 = vmatpush1.msra.mxu0 %v6544
    %7108 = vmatprep.mubr.f32.mxu0 %v6029
    %7109 = vmatmul.mubr.f32.gmra.mrb[0].mxu0 %v6028
    %v7110 = vpop.f32.mrb[0].mxu0
    %v7111 = vadd.f32 %v7040, %v7110
    %v7112 = vpop.f32.mrb[0].mxu0
    %v7113 = vadd.f32 %v7042, %v7112
    %7114 = vdwg.mxu0
    %v7116 = vlaneseq
    %v7117 = vshrl.u32 %v7116, 7
    %v7118 = vsub.s32 0, %v7117
    %v7119 = vrot.slane %v6546, %v7118
    %v7120 = vlaneseq
    %v7121 = vshrl.u32 %v7120, 7
    %v7122 = vsub.s32 1, %v7121
    %v7123 = vrot.slane %v6546, %v7122
    %v7124 = vlaneseq
    %v7125 = vshrl.u32 %v7124, 7
    %v7126 = vsub.s32 2, %v7125
    %v7127 = vrot.slane %v6546, %v7126
    %v7128 = vlaneseq
    %v7129 = vshrl.u32 %v7128, 7
    %v7130 = vsub.s32 3, %v7129
    %v7131 = vrot.slane %v6546, %v7130
    %7136 = vmatprep.subr.mxu0 %v6829
    %7137 = vmatpush1.msra.mxu0 %v6827
    %7138 = vmatprep.subr.mxu0 0.0
    %7139 = vmatpush1.msra.mxu0 0.0
    %7140 = vmatprep.subr.mxu0 0.0
    %7141 = vmatpush1.msra.mxu0 0.0
    %7142 = vmatprep.subr.mxu0 0.0
    %7143 = vmatpush1.msra.mxu0 0.0
    %7144 = vmatprep.subr.mxu0 0.0
    %7145 = vmatpush1.msra.mxu0 0.0
    %7146 = vmatprep.subr.mxu0 0.0
    %7147 = vmatpush1.msra.mxu0 0.0
    %7148 = vmatprep.subr.mxu0 0.0
    %7149 = vmatpush1.msra.mxu0 0.0
    %7150 = vmatprep.subr.mxu0 0.0
    %7151 = vmatpush1.msra.mxu0 0.0
    %7152 = vmatprep.subr.mxu0 0.0
    %7153 = vmatpush1.msra.mxu0 0.0
    %7154 = vmatprep.subr.mxu0 0.0
    %7155 = vmatpush1.msra.mxu0 0.0
    %7156 = vmatprep.subr.mxu0 0.0
    %7157 = vmatpush1.msra.mxu0 0.0
    %7158 = vmatprep.subr.mxu0 0.0
    %7159 = vmatpush1.msra.mxu0 0.0
    %7160 = vmatprep.subr.mxu0 0.0
    %7161 = vmatpush1.msra.mxu0 0.0
    %7162 = vmatprep.subr.mxu0 0.0
    %7163 = vmatpush1.msra.mxu0 0.0
    %7164 = vmatprep.subr.mxu0 0.0
    %7165 = vmatpush1.msra.mxu0 0.0
    %7166 = vmatprep.subr.mxu0 0.0
    %7167 = vmatpush1.msra.mxu0 0.0
    %7168 = vmatprep.subr.mxu0 0.0
    %7169 = vmatpush1.msra.mxu0 0.0
    %7170 = vmatprep.subr.mxu0 0.0
    %7171 = vmatpush1.msra.mxu0 0.0
    %7172 = vmatprep.subr.mxu0 0.0
    %7173 = vmatpush1.msra.mxu0 0.0
    %7174 = vmatprep.subr.mxu0 0.0
    %7175 = vmatpush1.msra.mxu0 0.0
    %7176 = vmatprep.subr.mxu0 0.0
    %7177 = vmatpush1.msra.mxu0 0.0
    %7178 = vmatprep.subr.mxu0 0.0
    %7179 = vmatpush1.msra.mxu0 0.0
    %7180 = vmatprep.subr.mxu0 0.0
    %7181 = vmatpush1.msra.mxu0 0.0
    %7182 = vmatprep.subr.mxu0 0.0
    %7183 = vmatpush1.msra.mxu0 0.0
    %7184 = vmatprep.subr.mxu0 0.0
    %7185 = vmatpush1.msra.mxu0 0.0
    %7186 = vmatprep.subr.mxu0 0.0
    %7187 = vmatpush1.msra.mxu0 0.0
    %7188 = vmatprep.subr.mxu0 0.0
    %7189 = vmatpush1.msra.mxu0 0.0
    %7190 = vmatprep.subr.mxu0 0.0
    %7191 = vmatpush1.msra.mxu0 0.0
    %7192 = vmatprep.subr.mxu0 0.0
    %7193 = vmatpush1.msra.mxu0 0.0
    %7194 = vmatprep.subr.mxu0 0.0
    %7195 = vmatpush1.msra.mxu0 0.0
    %7196 = vmatprep.subr.mxu0 0.0
    %7197 = vmatpush1.msra.mxu0 0.0
    %7198 = vmatprep.subr.mxu0 0.0
    %7199 = vmatpush1.msra.mxu0 0.0
    %7200 = vmatprep.mubr.f32.mxu0 0.0
    %7201 = vmatmul.mubr.f32.gmra.mrb[0].mxu0 %v592
    %v7202 = vpop.f32.mrb[0].mxu0
    %v7203 = vadd.f32 %v7119, %v7202
    %v7204 = vpop.f32.mrb[0].mxu0
    %v7205 = vadd.f32 %v7123, %v7204
    %7206 = vdwg.mxu0
    %7207 = vmatprep.subr.mxu0 %v7113
    %7208 = vmatpush1.msra.mxu0 %v7111
    %7209 = vmatprep.subr.mxu0 0.0
    %7210 = vmatpush1.msra.mxu0 0.0
    %7211 = vmatprep.subr.mxu0 0.0
    %7212 = vmatpush1.msra.mxu0 0.0
    %7213 = vmatprep.subr.mxu0 0.0
    %7214 = vmatpush1.msra.mxu0 0.0
    %7215 = vmatprep.subr.mxu0 0.0
    %7216 = vmatpush1.msra.mxu0 0.0
    %7217 = vmatprep.subr.mxu0 0.0
    %7218 = vmatpush1.msra.mxu0 0.0
    %7219 = vmatprep.subr.mxu0 0.0
    %7220 = vmatpush1.msra.mxu0 0.0
    %7221 = vmatprep.subr.mxu0 0.0
    %7222 = vmatpush1.msra.mxu0 0.0
    %7223 = vmatprep.subr.mxu0 0.0
    %7224 = vmatpush1.msra.mxu0 0.0
    %7225 = vmatprep.subr.mxu0 0.0
    %7226 = vmatpush1.msra.mxu0 0.0
    %7227 = vmatprep.subr.mxu0 0.0
    %7228 = vmatpush1.msra.mxu0 0.0
    %7229 = vmatprep.subr.mxu0 0.0
    %7230 = vmatpush1.msra.mxu0 0.0
    %7231 = vmatprep.subr.mxu0 0.0
    %7232 = vmatpush1.msra.mxu0 0.0
    %7233 = vmatprep.subr.mxu0 0.0
    %7234 = vmatpush1.msra.mxu0 0.0
    %7235 = vmatprep.subr.mxu0 0.0
    %7236 = vmatpush1.msra.mxu0 0.0
    %7237 = vmatprep.subr.mxu0 0.0
    %7238 = vmatpush1.msra.mxu0 0.0
    %7239 = vmatprep.subr.mxu0 0.0
    %7240 = vmatpush1.msra.mxu0 0.0
    %7241 = vmatprep.subr.mxu0 0.0
    %7242 = vmatpush1.msra.mxu0 0.0
    %7243 = vmatprep.subr.mxu0 0.0
    %7244 = vmatpush1.msra.mxu0 0.0
    %7245 = vmatprep.subr.mxu0 0.0
    %7246 = vmatpush1.msra.mxu0 0.0
    %7247 = vmatprep.subr.mxu0 0.0
    %7248 = vmatpush1.msra.mxu0 0.0
    %7249 = vmatprep.subr.mxu0 0.0
    %7250 = vmatpush1.msra.mxu0 0.0
    %7251 = vmatprep.subr.mxu0 0.0
    %7252 = vmatpush1.msra.mxu0 0.0
    %7253 = vmatprep.subr.mxu0 0.0
    %7254 = vmatpush1.msra.mxu0 0.0
    %7255 = vmatprep.subr.mxu0 0.0
    %7256 = vmatpush1.msra.mxu0 0.0
    %7257 = vmatprep.subr.mxu0 0.0
    %7258 = vmatpush1.msra.mxu0 0.0
    %7259 = vmatprep.subr.mxu0 0.0
    %7260 = vmatpush1.msra.mxu0 0.0
    %7261 = vmatprep.subr.mxu0 0.0
    %7262 = vmatpush1.msra.mxu0 0.0
    %7263 = vmatprep.subr.mxu0 0.0
    %7264 = vmatpush1.msra.mxu0 0.0
    %7265 = vmatprep.subr.mxu0 0.0
    %7266 = vmatpush1.msra.mxu0 0.0
    %7267 = vmatprep.subr.mxu0 0.0
    %7268 = vmatpush1.msra.mxu0 0.0
    %7269 = vmatprep.subr.mxu0 0.0
    %7270 = vmatpush1.msra.mxu0 0.0
    %7271 = vmatprep.mubr.f32.mxu0 0.0
    %7272 = vmatmul.mubr.f32.gmra.mrb[0].mxu0 %v592
    %v7273 = vpop.f32.mrb[0].mxu0
    %v7274 = vadd.f32 %v7127, %v7273
    %v7275 = vpop.f32.mrb[0].mxu0
    %v7276 = vadd.f32 %v7131, %v7275
    %7277 = vdwg.mxu0
    %v7278 = vmax.f32 %v7203, 0.0
    %v7279 = vmax.f32 %v7205, 0.0
    %v7280 = vmax.f32 %v7274, 0.0
    %v7281 = vmax.f32 %v7276, 0.0
    %s7282 = smul.u32 512, 1
    %s7283 = sshll.u32 %s7282, 4
    %7284 = dma.done %s177, %s7283
    %v7285 = vld [vmem:[#allocation5] sm:$0xff]
    %v7286 = vld [vmem:[#allocation5 + $0x8] sm:$0xff]
    %v7287 = vld [vmem:[#allocation5 + $0x10] sm:$0xff]
    %v7288 = vld [vmem:[#allocation5 + $0x18] sm:$0xff]
    %v7289 = vld [vmem:[#allocation5 + $0x20] sm:$0xff]
    %v7290 = vld [vmem:[#allocation5 + $0x28] sm:$0xff]
    %v7291 = vld [vmem:[#allocation5 + $0x30] sm:$0xff]
    %v7292 = vld [vmem:[#allocation5 + $0x38] sm:$0xff]
    %v7293 = vld [vmem:[#allocation5 + $0x40] sm:$0xff]
    %v7294 = vld [vmem:[#allocation5 + $0x48] sm:$0xff]
    %v7295 = vld [vmem:[#allocation5 + $0x50] sm:$0xff]
    %v7296 = vld [vmem:[#allocation5 + $0x58] sm:$0xff]
    %v7297 = vld [vmem:[#allocation5 + $0x60] sm:$0xff]
    %v7298 = vld [vmem:[#allocation5 + $0x68] sm:$0xff]
    %v7299 = vld [vmem:[#allocation5 + $0x70] sm:$0xff]
    %v7300 = vld [vmem:[#allocation5 + $0x78] sm:$0xff]
    %v7301 = vld [vmem:[#allocation5 + $0x80] sm:$0xff]
    %v7302 = vld [vmem:[#allocation5 + $0x88] sm:$0xff]
    %v7303 = vld [vmem:[#allocation5 + $0x90] sm:$0xff]
    %v7304 = vld [vmem:[#allocation5 + $0x98] sm:$0xff]
    %v7305 = vld [vmem:[#allocation5 + $0xa0] sm:$0xff]
    %v7306 = vld [vmem:[#allocation5 + $0xa8] sm:$0xff]
    %v7307 = vld [vmem:[#allocation5 + $0xb0] sm:$0xff]
    %v7308 = vld [vmem:[#allocation5 + $0xb8] sm:$0xff]
    %v7309 = vld [vmem:[#allocation5 + $0xc0] sm:$0xff]
    %v7310 = vld [vmem:[#allocation5 + $0xc8] sm:$0xff]
    %v7311 = vld [vmem:[#allocation5 + $0xd0] sm:$0xff]
    %v7312 = vld [vmem:[#allocation5 + $0xd8] sm:$0xff]
    %v7313 = vld [vmem:[#allocation5 + $0xe0] sm:$0xff]
    %v7314 = vld [vmem:[#allocation5 + $0xe8] sm:$0xff]
    %v7315 = vld [vmem:[#allocation5 + $0xf0] sm:$0xff]
    %v7316 = vld [vmem:[#allocation5 + $0xf8] sm:$0xff]
    %v7317 = vld [vmem:[#allocation5 + $0x100] sm:$0xff]
    %v7318 = vld [vmem:[#allocation5 + $0x108] sm:$0xff]
    %v7319 = vld [vmem:[#allocation5 + $0x110] sm:$0xff]
    %v7320 = vld [vmem:[#allocation5 + $0x118] sm:$0xff]
    %v7321 = vld [vmem:[#allocation5 + $0x120] sm:$0xff]
    %v7322 = vld [vmem:[#allocation5 + $0x128] sm:$0xff]
    %v7323 = vld [vmem:[#allocation5 + $0x130] sm:$0xff]
    %v7324 = vld [vmem:[#allocation5 + $0x138] sm:$0xff]
    %v7325 = vld [vmem:[#allocation5 + $0x140] sm:$0xff]
    %v7326 = vld [vmem:[#allocation5 + $0x148] sm:$0xff]
    %v7327 = vld [vmem:[#allocation5 + $0x150] sm:$0xff]
    %v7328 = vld [vmem:[#allocation5 + $0x158] sm:$0xff]
    %v7329 = vld [vmem:[#allocation5 + $0x160] sm:$0xff]
    %v7330 = vld [vmem:[#allocation5 + $0x168] sm:$0xff]
    %v7331 = vld [vmem:[#allocation5 + $0x170] sm:$0xff]
    %v7332 = vld [vmem:[#allocation5 + $0x178] sm:$0xff]
    %v7333 = vld [vmem:[#allocation5 + $0x180] sm:$0xff]
    %v7334 = vld [vmem:[#allocation5 + $0x188] sm:$0xff]
    %v7335 = vld [vmem:[#allocation5 + $0x190] sm:$0xff]
    %v7336 = vld [vmem:[#allocation5 + $0x198] sm:$0xff]
    %v7337 = vld [vmem:[#allocation5 + $0x1a0] sm:$0xff]
    %v7338 = vld [vmem:[#allocation5 + $0x1a8] sm:$0xff]
    %v7339 = vld [vmem:[#allocation5 + $0x1b0] sm:$0xff]
    %v7340 = vld [vmem:[#allocation5 + $0x1b8] sm:$0xff]
    %v7341 = vld [vmem:[#allocation5 + $0x1c0] sm:$0xff]
    %v7342 = vld [vmem:[#allocation5 + $0x1c8] sm:$0xff]
    %v7343 = vld [vmem:[#allocation5 + $0x1d0] sm:$0xff]
    %v7344 = vld [vmem:[#allocation5 + $0x1d8] sm:$0xff]
    %v7345 = vld [vmem:[#allocation5 + $0x1e0] sm:$0xff]
    %v7346 = vld [vmem:[#allocation5 + $0x1e8] sm:$0xff]
    %v7347 = vld [vmem:[#allocation5 + $0x1f0] sm:$0xff]
    %v7348 = vld [vmem:[#allocation5 + $0x1f8] sm:$0xff]
    %v7349 = vld [vmem:[#allocation20] sm:$0x1]
    %7350 = vmatprep.subr.mxu0 0.0
    %7351 = vmatpush1.msra.mxu0 %v7285
    %7352 = vmatprep.subr.mxu0 0.0
    %7353 = vmatpush1.msra.mxu0 %v7286
    %7354 = vmatprep.subr.mxu0 0.0
    %7355 = vmatpush1.msra.mxu0 %v7287
    %7356 = vmatprep.subr.mxu0 0.0
    %7357 = vmatpush1.msra.mxu0 %v7288
    %7358 = vmatprep.subr.mxu0 0.0
    %7359 = vmatpush1.msra.mxu0 %v7289
    %7360 = vmatprep.subr.mxu0 0.0
    %7361 = vmatpush1.msra.mxu0 %v7290
    %7362 = vmatprep.subr.mxu0 0.0
    %7363 = vmatpush1.msra.mxu0 %v7291
    %7364 = vmatprep.subr.mxu0 0.0
    %7365 = vmatpush1.msra.mxu0 %v7292
    %7366 = vmatprep.subr.mxu0 0.0
    %7367 = vmatpush1.msra.mxu0 %v7293
    %7368 = vmatprep.subr.mxu0 0.0
    %7369 = vmatpush1.msra.mxu0 %v7294
    %7370 = vmatprep.subr.mxu0 0.0
    %7371 = vmatpush1.msra.mxu0 %v7295
    %7372 = vmatprep.subr.mxu0 0.0
    %7373 = vmatpush1.msra.mxu0 %v7296
    %7374 = vmatprep.subr.mxu0 0.0
    %7375 = vmatpush1.msra.mxu0 %v7297
    %7376 = vmatprep.subr.mxu0 0.0
    %7377 = vmatpush1.msra.mxu0 %v7298
    %7378 = vmatprep.subr.mxu0 0.0
    %7379 = vmatpush1.msra.mxu0 %v7299
    %7380 = vmatprep.subr.mxu0 0.0
    %7381 = vmatpush1.msra.mxu0 %v7300
    %7382 = vmatprep.subr.mxu0 0.0
    %7383 = vmatpush1.msra.mxu0 %v7301
    %7384 = vmatprep.subr.mxu0 0.0
    %7385 = vmatpush1.msra.mxu0 %v7302
    %7386 = vmatprep.subr.mxu0 0.0
    %7387 = vmatpush1.msra.mxu0 %v7303
    %7388 = vmatprep.subr.mxu0 0.0
    %7389 = vmatpush1.msra.mxu0 %v7304
    %7390 = vmatprep.subr.mxu0 0.0
    %7391 = vmatpush1.msra.mxu0 %v7305
    %7392 = vmatprep.subr.mxu0 0.0
    %7393 = vmatpush1.msra.mxu0 %v7306
    %7394 = vmatprep.subr.mxu0 0.0
    %7395 = vmatpush1.msra.mxu0 %v7307
    %7396 = vmatprep.subr.mxu0 0.0
    %7397 = vmatpush1.msra.mxu0 %v7308
    %7398 = vmatprep.subr.mxu0 0.0
    %7399 = vmatpush1.msra.mxu0 %v7309
    %7400 = vmatprep.subr.mxu0 0.0
    %7401 = vmatpush1.msra.mxu0 %v7310
    %7402 = vmatprep.subr.mxu0 0.0
    %7403 = vmatpush1.msra.mxu0 %v7311
    %7404 = vmatprep.subr.mxu0 0.0
    %7405 = vmatpush1.msra.mxu0 %v7312
    %7406 = vmatprep.subr.mxu0 0.0
    %7407 = vmatpush1.msra.mxu0 %v7313
    %7408 = vmatprep.subr.mxu0 0.0
    %7409 = vmatpush1.msra.mxu0 %v7314
    %7410 = vmatprep.subr.mxu0 0.0
    %7411 = vmatpush1.msra.mxu0 %v7315
    %7412 = vmatprep.subr.mxu0 0.0
    %7413 = vmatpush1.msra.mxu0 %v7316
    %7414 = vmatprep.mubr.f32.mxu0 %v7279
    %7415 = vmatmul.mubr.f32.gmra.mrb[0].mxu0 %v7278
    %v7416 = vpop.f32.mrb[0].mxu0
    %v7417 = vadd.f32 0.0, %v7416
    %v7418 = vpop.f32.mrb[0].mxu0
    %7419 = vdwg.mxu0
    %7420 = vmatprep.subr.mxu0 0.0
    %7421 = vmatpush1.msra.mxu0 %v7317
    %7422 = vmatprep.subr.mxu0 0.0
    %7423 = vmatpush1.msra.mxu0 %v7318
    %7424 = vmatprep.subr.mxu0 0.0
    %7425 = vmatpush1.msra.mxu0 %v7319
    %7426 = vmatprep.subr.mxu0 0.0
    %7427 = vmatpush1.msra.mxu0 %v7320
    %7428 = vmatprep.subr.mxu0 0.0
    %7429 = vmatpush1.msra.mxu0 %v7321
    %7430 = vmatprep.subr.mxu0 0.0
    %7431 = vmatpush1.msra.mxu0 %v7322
    %7432 = vmatprep.subr.mxu0 0.0
    %7433 = vmatpush1.msra.mxu0 %v7323
    %7434 = vmatprep.subr.mxu0 0.0
    %7435 = vmatpush1.msra.mxu0 %v7324
    %7436 = vmatprep.subr.mxu0 0.0
    %7437 = vmatpush1.msra.mxu0 %v7325
    %7438 = vmatprep.subr.mxu0 0.0
    %7439 = vmatpush1.msra.mxu0 %v7326
    %7440 = vmatprep.subr.mxu0 0.0
    %7441 = vmatpush1.msra.mxu0 %v7327
    %7442 = vmatprep.subr.mxu0 0.0
    %7443 = vmatpush1.msra.mxu0 %v7328
    %7444 = vmatprep.subr.mxu0 0.0
    %7445 = vmatpush1.msra.mxu0 %v7329
    %7446 = vmatprep.subr.mxu0 0.0
    %7447 = vmatpush1.msra.mxu0 %v7330
    %7448 = vmatprep.subr.mxu0 0.0
    %7449 = vmatpush1.msra.mxu0 %v7331
    %7450 = vmatprep.subr.mxu0 0.0
    %7451 = vmatpush1.msra.mxu0 %v7332
    %7452 = vmatprep.subr.mxu0 0.0
    %7453 = vmatpush1.msra.mxu0 %v7333
    %7454 = vmatprep.subr.mxu0 0.0
    %7455 = vmatpush1.msra.mxu0 %v7334
    %7456 = vmatprep.subr.mxu0 0.0
    %7457 = vmatpush1.msra.mxu0 %v7335
    %7458 = vmatprep.subr.mxu0 0.0
    %7459 = vmatpush1.msra.mxu0 %v7336
    %7460 = vmatprep.subr.mxu0 0.0
    %7461 = vmatpush1.msra.mxu0 %v7337
    %7462 = vmatprep.subr.mxu0 0.0
    %7463 = vmatpush1.msra.mxu0 %v7338
    %7464 = vmatprep.subr.mxu0 0.0
    %7465 = vmatpush1.msra.mxu0 %v7339
    %7466 = vmatprep.subr.mxu0 0.0
    %7467 = vmatpush1.msra.mxu0 %v7340
    %7468 = vmatprep.subr.mxu0 0.0
    %7469 = vmatpush1.msra.mxu0 %v7341
    %7470 = vmatprep.subr.mxu0 0.0
    %7471 = vmatpush1.msra.mxu0 %v7342
    %7472 = vmatprep.subr.mxu0 0.0
    %7473 = vmatpush1.msra.mxu0 %v7343
    %7474 = vmatprep.subr.mxu0 0.0
    %7475 = vmatpush1.msra.mxu0 %v7344
    %7476 = vmatprep.subr.mxu0 0.0
    %7477 = vmatpush1.msra.mxu0 %v7345
    %7478 = vmatprep.subr.mxu0 0.0
    %7479 = vmatpush1.msra.mxu0 %v7346
    %7480 = vmatprep.subr.mxu0 0.0
    %7481 = vmatpush1.msra.mxu0 %v7347
    %7482 = vmatprep.subr.mxu0 0.0
    %7483 = vmatpush1.msra.mxu0 %v7348
    %7484 = vmatprep.mubr.f32.mxu0 %v7281
    %7485 = vmatmul.mubr.f32.gmra.mrb[0].mxu0 %v7280
    %v7486 = vpop.f32.mrb[0].mxu0
    %v7487 = vadd.f32 %v7417, %v7486
    %v7488 = vpop.f32.mrb[0].mxu0
    %7489 = vdwg.mxu0
    %v7491 = vlaneseq
    %v7492 = vshrl.u32 %v7491, 7
    %v7493 = vsub.s32 0, %v7492
    %v7494 = vrot.slane %v7349, %v7493
    %7496 = vmatprep.subr.mxu0 0.0
    %7497 = vmatpush1.msra.mxu0 %v7487
    %7498 = vmatprep.subr.mxu0 0.0
    %7499 = vmatpush1.msra.mxu0 0.0
    %7500 = vmatprep.subr.mxu0 0.0
    %7501 = vmatpush1.msra.mxu0 0.0
    %7502 = vmatprep.subr.mxu0 0.0
    %7503 = vmatpush1.msra.mxu0 0.0
    %7504 = vmatprep.subr.mxu0 0.0
    %7505 = vmatpush1.msra.mxu0 0.0
    %7506 = vmatprep.subr.mxu0 0.0
    %7507 = vmatpush1.msra.mxu0 0.0
    %7508 = vmatprep.subr.mxu0 0.0
    %7509 = vmatpush1.msra.mxu0 0.0
    %7510 = vmatprep.subr.mxu0 0.0
    %7511 = vmatpush1.msra.mxu0 0.0
    %7512 = vmatprep.subr.mxu0 0.0
    %7513 = vmatpush1.msra.mxu0 0.0
    %7514 = vmatprep.subr.mxu0 0.0
    %7515 = vmatpush1.msra.mxu0 0.0
    %7516 = vmatprep.subr.mxu0 0.0
    %7517 = vmatpush1.msra.mxu0 0.0
    %7518 = vmatprep.subr.mxu0 0.0
    %7519 = vmatpush1.msra.mxu0 0.0
    %7520 = vmatprep.subr.mxu0 0.0
    %7521 = vmatpush1.msra.mxu0 0.0
    %7522 = vmatprep.subr.mxu0 0.0
    %7523 = vmatpush1.msra.mxu0 0.0
    %7524 = vmatprep.subr.mxu0 0.0
    %7525 = vmatpush1.msra.mxu0 0.0
    %7526 = vmatprep.subr.mxu0 0.0
    %7527 = vmatpush1.msra.mxu0 0.0
    %7528 = vmatprep.subr.mxu0 0.0
    %7529 = vmatpush1.msra.mxu0 0.0
    %7530 = vmatprep.subr.mxu0 0.0
    %7531 = vmatpush1.msra.mxu0 0.0
    %7532 = vmatprep.subr.mxu0 0.0
    %7533 = vmatpush1.msra.mxu0 0.0
    %7534 = vmatprep.subr.mxu0 0.0
    %7535 = vmatpush1.msra.mxu0 0.0
    %7536 = vmatprep.subr.mxu0 0.0
    %7537 = vmatpush1.msra.mxu0 0.0
    %7538 = vmatprep.subr.mxu0 0.0
    %7539 = vmatpush1.msra.mxu0 0.0
    %7540 = vmatprep.subr.mxu0 0.0
    %7541 = vmatpush1.msra.mxu0 0.0
    %7542 = vmatprep.subr.mxu0 0.0
    %7543 = vmatpush1.msra.mxu0 0.0
    %7544 = vmatprep.subr.mxu0 0.0
    %7545 = vmatpush1.msra.mxu0 0.0
    %7546 = vmatprep.subr.mxu0 0.0
    %7547 = vmatpush1.msra.mxu0 0.0
    %7548 = vmatprep.subr.mxu0 0.0
    %7549 = vmatpush1.msra.mxu0 0.0
    %7550 = vmatprep.subr.mxu0 0.0
    %7551 = vmatpush1.msra.mxu0 0.0
    %7552 = vmatprep.subr.mxu0 0.0
    %7553 = vmatpush1.msra.mxu0 0.0
    %7554 = vmatprep.subr.mxu0 0.0
    %7555 = vmatpush1.msra.mxu0 0.0
    %7556 = vmatprep.subr.mxu0 0.0
    %7557 = vmatpush1.msra.mxu0 0.0
    %7558 = vmatprep.subr.mxu0 0.0
    %7559 = vmatpush1.msra.mxu0 0.0
    %7560 = vmatprep.mubr.f32.mxu0 0.0
    %7561 = vmatmul.mubr.f32.gmra.mrb[0].mxu0 %v592
    %v7562 = vpop.f32.mrb[0].mxu0
    %v7563 = vadd.f32 %v7494, %v7562
    %v7564 = vpop.f32.mrb[0].mxu0
    %7565 = vdwg.mxu0
    %v7566 = vmax.f32 %v7563, 0.0
    %s7567 = smul.u32 128, 1
    %s7568 = sshll.u32 %s7567, 4
    %7569 = dma.done %s189, %s7568
    %v7570 = vld [vmem:[#allocation6] sm:$0xff]
    %v7571 = vld [vmem:[#allocation6 + $0x8] sm:$0xff]
    %v7572 = vld [vmem:[#allocation6 + $0x10] sm:$0xff]
    %v7573 = vld [vmem:[#allocation6 + $0x18] sm:$0xff]
    %v7574 = vld [vmem:[#allocation6 + $0x20] sm:$0xff]
    %v7575 = vld [vmem:[#allocation6 + $0x28] sm:$0xff]
    %v7576 = vld [vmem:[#allocation6 + $0x30] sm:$0xff]
    %v7577 = vld [vmem:[#allocation6 + $0x38] sm:$0xff]
    %v7578 = vld [vmem:[#allocation6 + $0x40] sm:$0xff]
    %v7579 = vld [vmem:[#allocation6 + $0x48] sm:$0xff]
    %v7580 = vld [vmem:[#allocation6 + $0x50] sm:$0xff]
    %v7581 = vld [vmem:[#allocation6 + $0x58] sm:$0xff]
    %v7582 = vld [vmem:[#allocation6 + $0x60] sm:$0xff]
    %v7583 = vld [vmem:[#allocation6 + $0x68] sm:$0xff]
    %v7584 = vld [vmem:[#allocation6 + $0x70] sm:$0xff]
    %v7585 = vld [vmem:[#allocation6 + $0x78] sm:$0xff]
    %v7586 = vld [vmem:[#allocation21] sm:$0x1]
    %7587 = vmatprep.subr.mxu0 0.0
    %7588 = vmatpush1.msra.mxu0 %v7570
    %7589 = vmatprep.subr.mxu0 0.0
    %7590 = vmatpush1.msra.mxu0 %v7571
    %7591 = vmatprep.subr.mxu0 0.0
    %7592 = vmatpush1.msra.mxu0 %v7572
    %7593 = vmatprep.subr.mxu0 0.0
    %7594 = vmatpush1.msra.mxu0 %v7573
    %7595 = vmatprep.subr.mxu0 0.0
    %7596 = vmatpush1.msra.mxu0 %v7574
    %7597 = vmatprep.subr.mxu0 0.0
    %7598 = vmatpush1.msra.mxu0 %v7575
    %7599 = vmatprep.subr.mxu0 0.0
    %7600 = vmatpush1.msra.mxu0 %v7576
    %7601 = vmatprep.subr.mxu0 0.0
    %7602 = vmatpush1.msra.mxu0 %v7577
    %7603 = vmatprep.subr.mxu0 0.0
    %7604 = vmatpush1.msra.mxu0 %v7578
    %7605 = vmatprep.subr.mxu0 0.0
    %7606 = vmatpush1.msra.mxu0 %v7579
    %7607 = vmatprep.subr.mxu0 0.0
    %7608 = vmatpush1.msra.mxu0 %v7580
    %7609 = vmatprep.subr.mxu0 0.0
    %7610 = vmatpush1.msra.mxu0 %v7581
    %7611 = vmatprep.subr.mxu0 0.0
    %7612 = vmatpush1.msra.mxu0 %v7582
    %7613 = vmatprep.subr.mxu0 0.0
    %7614 = vmatpush1.msra.mxu0 %v7583
    %7615 = vmatprep.subr.mxu0 0.0
    %7616 = vmatpush1.msra.mxu0 %v7584
    %7617 = vmatprep.subr.mxu0 0.0
    %7618 = vmatpush1.msra.mxu0 %v7585
    %7619 = vmatprep.subr.mxu0 0.0
    %7620 = vmatpush1.msra.mxu0 0.0
    %7621 = vmatprep.subr.mxu0 0.0
    %7622 = vmatpush1.msra.mxu0 0.0
    %7623 = vmatprep.subr.mxu0 0.0
    %7624 = vmatpush1.msra.mxu0 0.0
    %7625 = vmatprep.subr.mxu0 0.0
    %7626 = vmatpush1.msra.mxu0 0.0
    %7627 = vmatprep.subr.mxu0 0.0
    %7628 = vmatpush1.msra.mxu0 0.0
    %7629 = vmatprep.subr.mxu0 0.0
    %7630 = vmatpush1.msra.mxu0 0.0
    %7631 = vmatprep.subr.mxu0 0.0
    %7632 = vmatpush1.msra.mxu0 0.0
    %7633 = vmatprep.subr.mxu0 0.0
    %7634 = vmatpush1.msra.mxu0 0.0
    %7635 = vmatprep.subr.mxu0 0.0
    %7636 = vmatpush1.msra.mxu0 0.0
    %7637 = vmatprep.subr.mxu0 0.0
    %7638 = vmatpush1.msra.mxu0 0.0
    %7639 = vmatprep.subr.mxu0 0.0
    %7640 = vmatpush1.msra.mxu0 0.0
    %7641 = vmatprep.subr.mxu0 0.0
    %7642 = vmatpush1.msra.mxu0 0.0
    %7643 = vmatprep.subr.mxu0 0.0
    %7644 = vmatpush1.msra.mxu0 0.0
    %7645 = vmatprep.subr.mxu0 0.0
    %7646 = vmatpush1.msra.mxu0 0.0
    %7647 = vmatprep.subr.mxu0 0.0
    %7648 = vmatpush1.msra.mxu0 0.0
    %7649 = vmatprep.subr.mxu0 0.0
    %7650 = vmatpush1.msra.mxu0 0.0
    %7651 = vmatprep.mubr.f32.mxu0 0.0
    %7652 = vmatmul.mubr.f32.gmra.mrb[0].mxu0 %v7566
    %v7653 = vpop.f32.mrb[0].mxu0
    %v7654 = vadd.f32 0.0, %v7653
    %v7655 = vpop.f32.mrb[0].mxu0
    %7656 = vdwg.mxu0
    %v7658 = vlaneseq
    %v7659 = vshrl.u32 %v7658, 7
    %v7660 = vsub.s32 0, %v7659
    %v7661 = vrot.slane %v7586, %v7660
    %7663 = vmatprep.subr.mxu0 0.0
    %7664 = vmatpush1.msra.mxu0 %v7654
    %7665 = vmatprep.subr.mxu0 0.0
    %7666 = vmatpush1.msra.mxu0 0.0
    %7667 = vmatprep.subr.mxu0 0.0
    %7668 = vmatpush1.msra.mxu0 0.0
    %7669 = vmatprep.subr.mxu0 0.0
    %7670 = vmatpush1.msra.mxu0 0.0
    %7671 = vmatprep.subr.mxu0 0.0
    %7672 = vmatpush1.msra.mxu0 0.0
    %7673 = vmatprep.subr.mxu0 0.0
    %7674 = vmatpush1.msra.mxu0 0.0
    %7675 = vmatprep.subr.mxu0 0.0
    %7676 = vmatpush1.msra.mxu0 0.0
    %7677 = vmatprep.subr.mxu0 0.0
    %7678 = vmatpush1.msra.mxu0 0.0
    %7679 = vmatprep.subr.mxu0 0.0
    %7680 = vmatpush1.msra.mxu0 0.0
    %7681 = vmatprep.subr.mxu0 0.0
    %7682 = vmatpush1.msra.mxu0 0.0
    %7683 = vmatprep.subr.mxu0 0.0
    %7684 = vmatpush1.msra.mxu0 0.0
    %7685 = vmatprep.subr.mxu0 0.0
    %7686 = vmatpush1.msra.mxu0 0.0
    %7687 = vmatprep.subr.mxu0 0.0
    %7688 = vmatpush1.msra.mxu0 0.0
    %7689 = vmatprep.subr.mxu0 0.0
    %7690 = vmatpush1.msra.mxu0 0.0
    %7691 = vmatprep.subr.mxu0 0.0
    %7692 = vmatpush1.msra.mxu0 0.0
    %7693 = vmatprep.subr.mxu0 0.0
    %7694 = vmatpush1.msra.mxu0 0.0
    %7695 = vmatprep.subr.mxu0 0.0
    %7696 = vmatpush1.msra.mxu0 0.0
    %7697 = vmatprep.subr.mxu0 0.0
    %7698 = vmatpush1.msra.mxu0 0.0
    %7699 = vmatprep.subr.mxu0 0.0
    %7700 = vmatpush1.msra.mxu0 0.0
    %7701 = vmatprep.subr.mxu0 0.0
    %7702 = vmatpush1.msra.mxu0 0.0
    %7703 = vmatprep.subr.mxu0 0.0
    %7704 = vmatpush1.msra.mxu0 0.0
    %7705 = vmatprep.subr.mxu0 0.0
    %7706 = vmatpush1.msra.mxu0 0.0
    %7707 = vmatprep.subr.mxu0 0.0
    %7708 = vmatpush1.msra.mxu0 0.0
    %7709 = vmatprep.subr.mxu0 0.0
    %7710 = vmatpush1.msra.mxu0 0.0
    %7711 = vmatprep.subr.mxu0 0.0
    %7712 = vmatpush1.msra.mxu0 0.0
    %7713 = vmatprep.subr.mxu0 0.0
    %7714 = vmatpush1.msra.mxu0 0.0
    %7715 = vmatprep.subr.mxu0 0.0
    %7716 = vmatpush1.msra.mxu0 0.0
    %7717 = vmatprep.subr.mxu0 0.0
    %7718 = vmatpush1.msra.mxu0 0.0
    %7719 = vmatprep.subr.mxu0 0.0
    %7720 = vmatpush1.msra.mxu0 0.0
    %7721 = vmatprep.subr.mxu0 0.0
    %7722 = vmatpush1.msra.mxu0 0.0
    %7723 = vmatprep.subr.mxu0 0.0
    %7724 = vmatpush1.msra.mxu0 0.0
    %7725 = vmatprep.subr.mxu0 0.0
    %7726 = vmatpush1.msra.mxu0 0.0
    %7727 = vmatprep.mubr.f32.mxu0 0.0
    %7728 = vmatmul.mubr.f32.gmra.mrb[0].mxu0 %v592
    %v7729 = vpop.f32.mrb[0].mxu0
    %v7730 = vadd.f32 %v7661, %v7729
    %v7731 = vpop.f32.mrb[0].mxu0
    %7732 = vdwg.mxu0
    %v7733 = vmax.f32 %v7730, 0.0
    %s7734 = smul.u32 64, 1
    %s7735 = sshll.u32 %s7734, 4
    %7736 = dma.done %s262, %s7735
    %v7737 = vld [vmem:[#allocation7] sm:$0xff]
    %v7738 = vld [vmem:[#allocation7 + $0x8] sm:$0xff]
    %v7739 = vld [vmem:[#allocation7 + $0x10] sm:$0xff]
    %v7740 = vld [vmem:[#allocation7 + $0x18] sm:$0xff]
    %v7741 = vld [vmem:[#allocation7 + $0x20] sm:$0xff]
    %v7742 = vld [vmem:[#allocation7 + $0x28] sm:$0xff]
    %v7743 = vld [vmem:[#allocation7 + $0x30] sm:$0xff]
    %v7744 = vld [vmem:[#allocation7 + $0x38] sm:$0xff]
    %v7745 = vld [vmem:[#allocation23] sm:$0x1]
    %v7747 = vlaneseq
    %v7748 = vshrl.u32 %v7747, 7
    %v7749 = vsub.s32 0, %v7748
    %v7750 = vrot.slane %v7745, %v7749
    %vm7752 = vcmask 523264
    %v7754 = vsel %vm7752, %v7733, 0
    %7756 = vmatprep.subr.mxu0 0.0
    %7757 = vmatpush1.msra.mxu0 %v7737
    %7758 = vmatprep.subr.mxu0 0.0
    %7759 = vmatpush1.msra.mxu0 %v7738
    %7760 = vmatprep.subr.mxu0 0.0
    %7761 = vmatpush1.msra.mxu0 %v7739
    %7762 = vmatprep.subr.mxu0 0.0
    %7763 = vmatpush1.msra.mxu0 %v7740
    %7764 = vmatprep.subr.mxu0 0.0
    %7765 = vmatpush1.msra.mxu0 %v7741
    %7766 = vmatprep.subr.mxu0 0.0
    %7767 = vmatpush1.msra.mxu0 %v7742
    %7768 = vmatprep.subr.mxu0 0.0
    %7769 = vmatpush1.msra.mxu0 %v7743
    %7770 = vmatprep.subr.mxu0 0.0
    %7771 = vmatpush1.msra.mxu0 %v7744
    %7772 = vmatprep.subr.mxu0 0.0
    %7773 = vmatpush1.msra.mxu0 0.0
    %7774 = vmatprep.subr.mxu0 0.0
    %7775 = vmatpush1.msra.mxu0 0.0
    %7776 = vmatprep.subr.mxu0 0.0
    %7777 = vmatpush1.msra.mxu0 0.0
    %7778 = vmatprep.subr.mxu0 0.0
    %7779 = vmatpush1.msra.mxu0 0.0
    %7780 = vmatprep.subr.mxu0 0.0
    %7781 = vmatpush1.msra.mxu0 0.0
    %7782 = vmatprep.subr.mxu0 0.0
    %7783 = vmatpush1.msra.mxu0 0.0
    %7784 = vmatprep.subr.mxu0 0.0
    %7785 = vmatpush1.msra.mxu0 0.0
    %7786 = vmatprep.subr.mxu0 0.0
    %7787 = vmatpush1.msra.mxu0 0.0
    %7788 = vmatprep.subr.mxu0 0.0
    %7789 = vmatpush1.msra.mxu0 0.0
    %7790 = vmatprep.subr.mxu0 0.0
    %7791 = vmatpush1.msra.mxu0 0.0
    %7792 = vmatprep.subr.mxu0 0.0
    %7793 = vmatpush1.msra.mxu0 0.0
    %7794 = vmatprep.subr.mxu0 0.0
    %7795 = vmatpush1.msra.mxu0 0.0
    %7796 = vmatprep.subr.mxu0 0.0
    %7797 = vmatpush1.msra.mxu0 0.0
    %7798 = vmatprep.subr.mxu0 0.0
    %7799 = vmatpush1.msra.mxu0 0.0
    %7800 = vmatprep.subr.mxu0 0.0
    %7801 = vmatpush1.msra.mxu0 0.0
    %7802 = vmatprep.subr.mxu0 0.0
    %7803 = vmatpush1.msra.mxu0 0.0
    %7804 = vmatprep.subr.mxu0 0.0
    %7805 = vmatpush1.msra.mxu0 0.0
    %7806 = vmatprep.subr.mxu0 0.0
    %7807 = vmatpush1.msra.mxu0 0.0
    %7808 = vmatprep.subr.mxu0 0.0
    %7809 = vmatpush1.msra.mxu0 0.0
    %7810 = vmatprep.subr.mxu0 0.0
    %7811 = vmatpush1.msra.mxu0 0.0
    %7812 = vmatprep.subr.mxu0 0.0
    %7813 = vmatpush1.msra.mxu0 0.0
    %7814 = vmatprep.subr.mxu0 0.0
    %7815 = vmatpush1.msra.mxu0 0.0
    %7816 = vmatprep.subr.mxu0 0.0
    %7817 = vmatpush1.msra.mxu0 0.0
    %7818 = vmatprep.subr.mxu0 0.0
    %7819 = vmatpush1.msra.mxu0 0.0
    %7820 = vmatprep.mubr.f32.mxu0 0.0
    %7821 = vmatmul.mubr.f32.gmra.mrb[0].mxu0 %v7754
    %v7822 = vpop.f32.mrb[0].mxu0
    %v7823 = vadd.f32 %v7750, %v7822
    %v7824 = vpop.f32.mrb[0].mxu0
    %7825 = vdwg.mxu0
    %vm7826 = vcmask 23552
    %7827 = vst.msk [vmem:[%s15] sm:$0xff] %vm7826, %v7823
    // Predicated region
    $region158: #{_forward_impl.1} parent=1 // pred_check
      _
    $region159: #{_forward_impl.1} parent=1 // pred_check_branch
      %7829 = sbr.rel (0) target = $region161
    $region160: #{_forward_impl.1} parent=1 // pred_region
      _
    $region161: #{_forward_impl.1} parent=1 // pred_fallthru
      _
    // Predicated region
    $region162: #{_forward_impl.1} parent=1 // pred_check
      _
    $region163: #{_forward_impl.1} parent=1 // pred_check_branch
      %7831 = sbr.rel (0) target = $region165
    $region164: #{_forward_impl.1} parent=1 // pred_region
      _
    $region165: #{_forward_impl.1} parent=1 // pred_fallthru
      _
    %7832 = vsyncpa [#allocation10], 1
    %7833 = vsyncpa [#allocation16], 1
    %7834 = vsyncpa [#allocation19], 1
    %7835 = vsyncpa [#allocation22], 1
    %7836 = vsyncpa [#allocation11], 1
    %7837 = vsyncpa [#allocation12], 1
  %7838 = vsyncmov [#allocation8]
  %s7839 = vpop.sfrf %7838
  %p7840 = scmp.eq.s32.totalorder %s7839, 0
  %p7841 = pneg %p7840
  %7843 = shalt.err (%p7841)
  %s7844 = scalar_lea.sflag [#allocation8], 1
  %7845 = vsyncmov %s7844
  %s7846 = vpop.sfrf %7845
  %p7847 = scmp.eq.s32.totalorder %s7846, 0
  %p7848 = pneg %p7847
  %7850 = shalt.err (%p7848)
  %s7851 = scalar_lea.sflag [#allocation8], 2
  %7852 = vsyncmov %s7851
  %s7853 = vpop.sfrf %7852
  %p7854 = scmp.eq.s32.totalorder %s7853, 0
  %p7855 = pneg %p7854
  %7857 = shalt.err (%p7855)
  %s7858 = scalar_lea.sflag [#allocation8], 3
  %7859 = vsyncmov %s7858
  %s7860 = vpop.sfrf %7859
  %p7861 = scmp.eq.s32.totalorder %s7860, 0
  %p7862 = pneg %p7861
  %7864 = shalt.err (%p7862)
  %s7865 = scalar_lea.sflag [#allocation8], 4
  %7866 = vsyncmov %s7865
  %s7867 = vpop.sfrf %7866
  %p7868 = scmp.eq.s32.totalorder %s7867, 0
  %p7869 = pneg %p7868
  %7871 = shalt.err (%p7869)
  %s7872 = scalar_lea.sflag [#allocation8], 5
  %7873 = vsyncmov %s7872
  %s7874 = vpop.sfrf %7873
  %p7875 = scmp.eq.s32.totalorder %s7874, 0
  %p7876 = pneg %p7875
  %7878 = shalt.err (%p7876)

</llo_original>
